<compile_context>
chip_gen: v7x
topology: tpu7x:2x2x1
jax: 0.10.0
libtpu: 0.0.40
codegen_flags: <defaults>
</compile_context>

<pallas_src>
import functools

import jax
import jax.numpy as jnp
import numpy as np
from jax.experimental import pallas as pl
from jax.experimental.pallas import tpu as pltpu

_EPS = 1e-5


# --------------------------------- tiling helpers ---------------------------------
def _round_up(x, m):
    return ((x + m - 1) // m) * m


def _pick_row_tile(m, pref=512, min_tiles=4):
    """Row (sublane) tile: multiple of 8 dividing m, <= pref, preferring >= min_tiles
    grid steps so megacore / pipelining has work per core."""
    if m % 8 != 0:
        return m
    divs = [t for t in range(8, min(pref, m) + 1, 8) if m % t == 0]
    if not divs:
        return m
    good = [t for t in divs if m // t >= min_tiles]
    return max(good) if good else max(divs)


def _pick_k_tile(k, pref=512):
    if k % 128 != 0:
        return k
    t = min(pref, k) - (min(pref, k) % 128)
    while k % t != 0:
        t -= 128
    return t


# --------------------- 1x1 conv (matmul) + BN stats (+ fused BN-in) ----------------
def _mm_stats_kernel(*refs, bn_in, count_in):
    if bn_in:
        (a_ref, psum_ref, psq_ref, g_ref, b_ref, w_ref,
         y_ref, osum_ref, osq_ref, acc_ref) = refs
    else:
        a_ref, w_ref, y_ref, osum_ref, osq_ref, acc_ref = refs
    k = pl.program_id(1)

    @pl.when(k == 0)
    def _():
        acc_ref[...] = jnp.zeros_like(acc_ref)

    a = a_ref[...]
    if bn_in:
        # BatchNorm(+ReLU) of the previous layer applied on the fly to this K-slice.
        inv_n = 1.0 / count_in
        s = jnp.sum(psum_ref[...], axis=0)                       # (1, tk)
        ss = jnp.sum(psq_ref[...], axis=0)
        mean = s * inv_n
        var = jnp.maximum(ss * inv_n - mean * mean, 0.0)
        scale = g_ref[...] * jax.lax.rsqrt(var + _EPS)
        shift = b_ref[...] - mean * scale
        a = jnp.maximum(a.astype(jnp.float32) * scale + shift, 0.0).astype(jnp.bfloat16)

    acc_ref[...] += jnp.dot(a, w_ref[...], preferred_element_type=jnp.float32)

    @pl.when(k == pl.num_programs(1) - 1)
    def _():
        acc = acc_ref[...]
        y_ref[...] = acc.astype(y_ref.dtype)
        n = acc.shape[1]
        osum_ref[...] = jnp.sum(acc, axis=0, keepdims=True).reshape(1, 1, n)
        osq_ref[...] = jnp.sum(acc * acc, axis=0, keepdims=True).reshape(1, 1, n)


def matmul_bn_stats(a, w, *, bn_in=None, tm_pref=512, tk_pref=512):
    """y = a @ w (bf16 MXU operands, f32 VMEM accumulation, bf16 output) plus per-M-tile
    BatchNorm partial stats of y.  `bn_in=(psum, psq, gamma, beta, count)` additionally
    fuses the previous layer's BN + ReLU onto `a` inside the kernel."""
    M, K = a.shape
    K2, N = w.shape
    assert K == K2
    tm = _pick_row_tile(M, tm_pref)
    tk = _pick_k_tile(K, tk_pref)
    nm, nk = M // tm, K // tk

    if bn_in is not None:
        psum, psq, gamma, beta, cnt = bn_in
        npart = psum.shape[0]
        operands = [a, psum, psq,
                    gamma.reshape(1, K).astype(jnp.float32),
                    beta.reshape(1, K).astype(jnp.float32), w]
        in_specs = [
            pl.BlockSpec((tm, tk), lambda i, k: (i, k)),
            pl.BlockSpec((npart, 1, tk), lambda i, k: (0, 0, k)),
            pl.BlockSpec((npart, 1, tk), lambda i, k: (0, 0, k)),
            pl.BlockSpec((1, tk), lambda i, k: (0, k)),
            pl.BlockSpec((1, tk), lambda i, k: (0, k)),
            pl.BlockSpec((tk, N), lambda i, k: (k, 0)),
        ]
        count_in = float(cnt)
    else:
        operands = [a, w]
        in_specs = [
            pl.BlockSpec((tm, tk), lambda i, k: (i, k)),
            pl.BlockSpec((tk, N), lambda i, k: (k, 0)),
        ]
        count_in = 1.0

    y, sums, sqs = pl.pallas_call(
        functools.partial(_mm_stats_kernel, bn_in=bn_in is not None, count_in=count_in),
        out_shape=(jax.ShapeDtypeStruct((M, N), jnp.bfloat16),
                   jax.ShapeDtypeStruct((nm, 1, N), jnp.float32),
                   jax.ShapeDtypeStruct((nm, 1, N), jnp.float32)),
        grid_spec=pltpu.PrefetchScalarGridSpec(
            num_scalar_prefetch=0,
            grid=(nm, nk),
            in_specs=in_specs,
            out_specs=(pl.BlockSpec((tm, N), lambda i, k: (i, 0)),
                       pl.BlockSpec((1, 1, N), lambda i, k: (i, 0, 0)),
                       pl.BlockSpec((1, 1, N), lambda i, k: (i, 0, 0))),
            scratch_shapes=[pltpu.VMEM((tm, N), jnp.float32)],
        ),
        compiler_params=pltpu.CompilerParams(
            dimension_semantics=("parallel", "arbitrary")),
    )(*operands)
    return y, sums, sqs


# ------------------- 3x3 conv with fused BN1-apply + ReLU + BN2 stats --------------
def _conv3x3_bn_kernel(x_ref, psum_ref, psq_ref, g_ref, b_ref, w_ref,
                       y_ref, osum_ref, osq_ref,
                       slab_ref, sh_ref, acc_ref, *, H, W, C, CO, count_in):
    # BN1 scale/shift from the producer's partial stats (tiny VPU work).
    inv_n = 1.0 / count_in
    s = jnp.sum(psum_ref[...], axis=0, keepdims=True)            # (1, 1, C)
    ss = jnp.sum(psq_ref[...], axis=0, keepdims=True)
    mean = s * inv_n
    var = jnp.maximum(ss * inv_n - mean * mean, 0.0)
    scale = g_ref[...] * jax.lax.rsqrt(var + _EPS)               # (1, 1, C)
    shift = b_ref[...] - mean * scale

    x = x_ref[0].astype(jnp.float32)                             # (H, W, C)
    act = jnp.maximum(x * scale + shift, 0.0)                    # BN1 + ReLU, f32

    # Padded slab built in VMEM (conv padding must be zeros of the post-BN activation).
    slab_ref[...] = jnp.zeros_like(slab_ref)
    slab_ref[1:H + 1, 1:W + 1, :] = act

    # Three column-shifted bf16 copies so every tap slice below is tile-aligned
    # (one relayout per dj instead of one per (di, dj)).
    for dj in range(3):
        sh_ref[dj] = slab_ref[:, dj:dj + W, :].astype(jnp.bfloat16)

    # 9 shifted-window matmuls accumulated in a VMEM scratch (no vreg spill churn).
    # TODO(synk): collapse taps into a deeper-K matmul / tile H with a halo for large
    # spatial sizes (v7x megacore); whole-image blocks are fine at these shapes.
    acc_ref[...] = jnp.zeros_like(acc_ref)
    for di in range(3):
        for dj in range(3):
            a = sh_ref[dj, di:di + H].reshape(H * W, C)
            acc_ref[...] += jnp.dot(a, w_ref[di, dj],
                                    preferred_element_type=jnp.float32)

    acc = acc_ref[...]
    y_ref[...] = acc.reshape(1, H, W, CO).astype(y_ref.dtype)
    osum_ref[...] = jnp.sum(acc, axis=0, keepdims=True).reshape(1, 1, CO)
    osq_ref[...] = jnp.sum(acc * acc, axis=0, keepdims=True).reshape(1, 1, CO)


def conv3x3_bn(x_nhwc, psum, psq, gamma, beta, w, *, count):
    """3x3 conv (pad=1, stride=1, groups=1) on the *raw* previous-layer output; the
    previous BN + ReLU is applied inside the kernel.  Emits bf16 output + BN stats."""
    n, h, wd, c = x_nhwc.shape
    kh, kw, c2, co = w.shape
    assert (kh, kw) == (3, 3) and c == c2
    npart = psum.shape[0]

    y, sums, sqs = pl.pallas_call(
        functools.partial(_conv3x3_bn_kernel, H=h, W=wd, C=c, CO=co,
                          count_in=float(count)),
        out_shape=(jax.ShapeDtypeStruct((n, h, wd, co), jnp.bfloat16),
                   jax.ShapeDtypeStruct((n, 1, co), jnp.float32),
                   jax.ShapeDtypeStruct((n, 1, co), jnp.float32)),
        grid_spec=pltpu.PrefetchScalarGridSpec(
            num_scalar_prefetch=0,
            grid=(n,),
            in_specs=[
                pl.BlockSpec((1, h, wd, c), lambda i: (i, 0, 0, 0)),
                pl.BlockSpec((npart, 1, c), lambda i: (0, 0, 0)),
                pl.BlockSpec((npart, 1, c), lambda i: (0, 0, 0)),
                pl.BlockSpec((1, c), lambda i: (0, 0)),
                pl.BlockSpec((1, c), lambda i: (0, 0)),
                pl.BlockSpec((3, 3, c, co), lambda i: (0, 0, 0, 0)),
            ],
            out_specs=(pl.BlockSpec((1, h, wd, co), lambda i: (i, 0, 0, 0)),
                       pl.BlockSpec((1, 1, co), lambda i: (i, 0, 0)),
                       pl.BlockSpec((1, 1, co), lambda i: (i, 0, 0))),
            scratch_shapes=[
                pltpu.VMEM((h + 2, wd + 2, c), jnp.float32),      # padded slab
                pltpu.VMEM((3, h + 2, wd, c), jnp.bfloat16),      # dj-shifted copies
                pltpu.VMEM((h * wd, co), jnp.float32),            # MXU accumulator
            ],
        ),
        compiler_params=pltpu.CompilerParams(dimension_semantics=("parallel",)),
    )(x_nhwc, psum, psq,
      gamma.reshape(1, c).astype(jnp.float32),
      beta.reshape(1, c).astype(jnp.float32), w)
    return y, sums, sqs


# ----------------------- final BN-apply + residual add + ReLU ----------------------
def _bn_res_kernel(y_ref, psum_ref, psq_ref, g_ref, b_ref, r_ref, o_ref, *, count_in):
    inv_n = 1.0 / count_in
    s = jnp.sum(psum_ref[...], axis=0)                            # (1, C)
    ss = jnp.sum(psq_ref[...], axis=0)
    mean = s * inv_n
    var = jnp.maximum(ss * inv_n - mean * mean, 0.0)
    scale = g_ref[...] * jax.lax.rsqrt(var + _EPS)
    shift = b_ref[...] - mean * scale
    y = y_ref[...].astype(jnp.float32) * scale + shift + r_ref[...]
    o_ref[...] = jnp.maximum(y, 0.0)


def bn_apply_residual(y, psum, psq, gamma, beta, residual, *, count, tm_pref=512):
    m, c = y.shape
    tm = _pick_row_tile(m, tm_pref)
    nm = m // tm
    npart = psum.shape[0]
    return pl.pallas_call(
        functools.partial(_bn_res_kernel, count_in=float(count)),
        out_shape=jax.ShapeDtypeStruct((m, c), jnp.float32),
        grid_spec=pltpu.PrefetchScalarGridSpec(
            num_scalar_prefetch=0,
            grid=(nm,),
            in_specs=[
                pl.BlockSpec((tm, c), lambda i: (i, 0)),
                pl.BlockSpec((npart, 1, c), lambda i: (0, 0, 0)),
                pl.BlockSpec((npart, 1, c), lambda i: (0, 0, 0)),
                pl.BlockSpec((1, c), lambda i: (0, 0)),
                pl.BlockSpec((1, c), lambda i: (0, 0)),
                pl.BlockSpec((tm, c), lambda i: (i, 0)),
            ],
            out_specs=pl.BlockSpec((tm, c), lambda i: (i, 0)),
        ),
        compiler_params=pltpu.CompilerParams(dimension_semantics=("parallel",)),
    )(y, psum, psq,
      gamma.reshape(1, c).astype(jnp.float32),
      beta.reshape(1, c).astype(jnp.float32), residual)


# ----------------------------------- forward pass ----------------------------------
def bottleneck_forward(params, x_nchw, stride=1):
    """BottleneckOrigin.forward with downsample=None, groups=1 (torch defaults)."""
    assert stride == 1, "downsample=None requires stride=1 for the residual add"
    n, cin, h, w = x_nchw.shape
    m = n * h * w
    xt = jnp.transpose(x_nchw, (0, 2, 3, 1)).reshape(m, cin)     # NHWC rows, f32
    a0 = xt.astype(jnp.bfloat16)                                  # conv1 A operand

    wp = params["w1"].shape[1]
    cout = params["w3"].shape[1]
    assert cout == cin, "identity add requires planes*4 == inplanes when downsample=None"

    # conv1 (1x1) + bn1 partial stats
    y1, s1, q1 = matmul_bn_stats(a0, params["w1"])

    # conv2 (3x3, pad=1) with bn1-apply + relu fused in; emits bn2 partial stats
    y2, s2, q2 = conv3x3_bn(y1.reshape(n, h, w, wp), s1, q1,
                            params["bn1_g"], params["bn1_b"], params["w2"], count=m)

    # conv3 (1x1) with bn2-apply + relu fused in; emits bn3 partial stats
    y3, s3, q3 = matmul_bn_stats(
        y2.reshape(m, wp), params["w3"],
        bn_in=(s2, q2, params["bn2_g"], params["bn2_b"], m))

    # bn3-apply + identity add + relu
    out = bn_apply_residual(y3, s3, q3, params["bn3_g"], params["bn3_b"], xt, count=m)
    return jnp.transpose(out.reshape(n, h, w, cout), (0, 3, 1, 2))


# -------------------------------------- init ----------------------------------------
def init_params(key, inplanes, planes, base_width=64, groups=1):
    assert groups == 1  # TODO(synk): grouped conv3x3 not implemented (torch default groups=1)
    width = int(planes * (base_width / 64.0)) * groups
    cout = planes * 4
    wp = _round_up(width, 128)          # lane-dense channel padding of the bottleneck width
    k1, k2, k3 = jax.random.split(key, 3)

    def conv_w(k, o, i, kh, kw):
        std = float(np.sqrt(2.0 / (i * kh * kw)))
        return jax.random.normal(k, (o, i, kh, kw), jnp.float32) * std

    w1 = conv_w(k1, width, inplanes, 1, 1)     # OIHW (torch layout) for the reference
    w2 = conv_w(k2, width, width, 3, 3)
    w3 = conv_w(k3, cout, width, 1, 1)

    # Kernel-ready layouts, zero-padded on the width axis, pre-cast to bf16 once.
    w1k = jnp.zeros((inplanes, wp), jnp.float32).at[:, :width].set(
        jnp.transpose(w1[:, :, 0, 0], (1, 0))).astype(jnp.bfloat16)
    w2k = jnp.zeros((3, 3, wp, wp), jnp.float32).at[:, :, :width, :width].set(
        jnp.transpose(w2, (2, 3, 1, 0))).astype(jnp.bfloat16)
    w3k = jnp.zeros((wp, cout), jnp.float32).at[:width, :].set(
        jnp.transpose(w3[:, :, 0, 0], (1, 0))).astype(jnp.bfloat16)

    def pad_gamma(nvalid, ntotal):
        return jnp.zeros((ntotal,), jnp.float32).at[:nvalid].set(1.0)

    params = {
        "w1": w1k, "w2": w2k, "w3": w3k,
        # padded channels get gamma=0 / beta=0 so they stay exactly zero after BN.
        "bn1_g": pad_gamma(width, wp), "bn1_b": jnp.zeros((wp,), jnp.float32),
        "bn2_g": pad_gamma(width, wp), "bn2_b": jnp.zeros((wp,), jnp.float32),
        "bn3_g": jnp.ones((cout,), jnp.float32), "bn3_b": jnp.zeros((cout,), jnp.float32),
    }
    ref_w = {"w1": w1, "w2": w2, "w3": w3}
    return params, ref_w


# ----------------------------- pure-JAX f32 reference -------------------------------
def reference_forward(ref_w, x_nchw, stride=1, eps=_EPS):
    def conv(x, wgt, s=1, p=0):
        return jax.lax.conv_general_dilated(
            x, wgt, (s, s), [(p, p), (p, p)],
            dimension_numbers=("NCHW", "OIHW", "NCHW"))

    def bn(x):  # training-mode batch stats, gamma=1, beta=0 (fresh torch module)
        mean = jnp.mean(x, axis=(0, 2, 3), keepdims=True)
        var = jnp.mean((x - mean) ** 2, axis=(0, 2, 3), keepdims=True)
        return (x - mean) * jax.lax.rsqrt(var + eps)

    out = jax.nn.relu(bn(conv(x_nchw, ref_w["w1"])))
    out = jax.nn.relu(bn(conv(out, ref_w["w2"], stride, 1)))
    out = bn(conv(out, ref_w["w3"]))
    return jax.nn.relu(out + x_nchw)


if __name__ == "__main__":
    key = jax.random.PRNGKey(0)
    kp, kx = jax.random.split(key)
    # planes * expansion(4) == inplanes and stride=1  ->  downsample=None (torch default)
    inplanes, planes = 128, 32
    params, ref_w = init_params(kp, inplanes, planes)
    x = jax.random.normal(kx, (2, inplanes, 16, 16), jnp.float32)   # NCHW like PyTorch

    fwd = jax.jit(bottleneck_forward)
    out = jax.block_until_ready(fwd(params, x))
    assert out.shape == (2, inplanes, 16, 16)
    assert bool(jnp.all(jnp.isfinite(out)))

    ref = jax.block_until_ready(reference_forward(ref_w, x))
    max_err = float(jnp.max(jnp.abs(out - ref)))
    assert max_err < 0.25, f"mismatch vs f32 reference: {max_err}"
    print("KERNEL_OK")
</pallas_src>

<mosaic_0001>
module attributes {stable_mosaic.version = 11 : i64} {
  func.func @_mm_stats_kernel(%arg0: i32, %arg1: i32, %arg2: memref<128x128xbf16, #tpu.memory_space<vmem>>, %arg3: memref<2x1x128xf32, #tpu.memory_space<vmem>>, %arg4: memref<2x1x128xf32, #tpu.memory_space<vmem>>, %arg5: memref<1x128xf32, #tpu.memory_space<vmem>>, %arg6: memref<1x128xf32, #tpu.memory_space<vmem>>, %arg7: memref<128x128xbf16, #tpu.memory_space<vmem>>, %arg8: memref<128x128xbf16, #tpu.memory_space<vmem>>, %arg9: memref<1x1x128xf32, #tpu.memory_space<vmem>>, %arg10: memref<1x1x128xf32, #tpu.memory_space<vmem>>, %arg11: memref<128x128xf32, #tpu.memory_space<vmem>>) attributes {dimension_semantics = [#tpu.dimension_semantics<parallel>, #tpu.dimension_semantics<arbitrary>], iteration_bounds = array<i64: 4, 1>, scalar_prefetch = 0 : i64, scratch_operands = 1 : i64, tpu.core_type = #tpu.core_type<tc>, window_params = [{transform_indices = @transform_0, window_bounds = array<i64: 128, 128>}, {transform_indices = @transform_1, window_bounds = array<i64: 2, 1, 128>}, {transform_indices = @transform_2, window_bounds = array<i64: 2, 1, 128>}, {transform_indices = @transform_3, window_bounds = array<i64: 1, 128>}, {transform_indices = @transform_4, window_bounds = array<i64: 1, 128>}, {transform_indices = @transform_5, window_bounds = array<i64: 128, 128>}, {transform_indices = @transform_6, window_bounds = array<i64: 128, 128>}, {transform_indices = @transform_7, window_bounds = array<i64: 1, 1, 128>}, {transform_indices = @transform_8, window_bounds = array<i64: 1, 1, 128>}]} {
    %c0_i32 = arith.constant 0 : i32
    %0 = arith.cmpi eq, %arg1, %c0_i32 : i32
    %1 = arith.extui %0 : i1 to i32
    %c0_i32_0 = arith.constant 0 : i32
    %2 = arith.cmpi ne, %1, %c0_i32_0 : i32
    scf.if %2 {
      %cst_27 = arith.constant 0.000000e+00 : f32
      %40 = vector.broadcast %cst_27 : f32 to vector<128x128xf32>
      %c0_28 = arith.constant 0 : index
      %c0_29 = arith.constant 0 : index
      %41 = vector.load %arg11[%c0_28, %c0_29] : memref<128x128xf32, #tpu.memory_space<vmem>>, vector<128x128xf32>
      tpu.vector_store %arg11[%c0_28, %c0_29], %40 {strides = array<i32>} : memref<128x128xf32, #tpu.memory_space<vmem>>, vector<128x128xf32>,
    } else {
    }
    %c0 = arith.constant 0 : index
    %c0_1 = arith.constant 0 : index
    %3 = vector.load %arg2[%c0, %c0_1] : memref<128x128xbf16, #tpu.memory_space<vmem>>, vector<128x128xbf16>
    %c0_2 = arith.constant 0 : index
    %c0_3 = arith.constant 0 : index
    %c0_4 = arith.constant 0 : index
    %4 = vector.load %arg3[%c0_2, %c0_3, %c0_4] : memref<2x1x128xf32, #tpu.memory_space<vmem>>, vector<2x1x128xf32>
    %cst = arith.constant dense<0.000000e+00> : vector<1x128xf32>
    %5 = vector.multi_reduction <add>, %4, %cst [0] : vector<2x1x128xf32> to vector<1x128xf32>
    %c0_5 = arith.constant 0 : index
    %c0_6 = arith.constant 0 : index
    %c0_7 = arith.constant 0 : index
    %6 = vector.load %arg4[%c0_5, %c0_6, %c0_7] : memref<2x1x128xf32, #tpu.memory_space<vmem>>, vector<2x1x128xf32>
    %cst_8 = arith.constant dense<0.000000e+00> : vector<1x128xf32>
    %7 = vector.multi_reduction <add>, %6, %cst_8 [0] : vector<2x1x128xf32> to vector<1x128xf32>
    %cst_9 = arith.constant 0.001953125 : f32
    %8 = vector.broadcast %cst_9 : f32 to vector<1x128xf32>
    %9 = arith.mulf %5, %8 : vector<1x128xf32>
    %cst_10 = arith.constant 0.001953125 : f32
    %10 = vector.broadcast %cst_10 : f32 to vector<1x128xf32>
    %11 = arith.mulf %7, %10 : vector<1x128xf32>
    %12 = arith.mulf %9, %9 : vector<1x128xf32>
    %13 = arith.subf %11, %12 : vector<1x128xf32>
    %cst_11 = arith.constant 0.000000e+00 : f32
    %14 = vector.broadcast %cst_11 : f32 to vector<1x128xf32>
    %15 = arith.maximumf %13, %14 : vector<1x128xf32>
    %c0_12 = arith.constant 0 : index
    %c0_13 = arith.constant 0 : index
    %16 = vector.load %arg5[%c0_12, %c0_13] : memref<1x128xf32, #tpu.memory_space<vmem>>, vector<1x128xf32>
    %cst_14 = arith.constant 9.99999974E-6 : f32
    %17 = vector.broadcast %cst_14 : f32 to vector<1x128xf32>
    %18 = arith.addf %15, %17 : vector<1x128xf32>
    %19 = math.rsqrt %18 : vector<1x128xf32>
    %20 = arith.mulf %16, %19 : vector<1x128xf32>
    %c0_15 = arith.constant 0 : index
    %c0_16 = arith.constant 0 : index
    %21 = vector.load %arg6[%c0_15, %c0_16] : memref<1x128xf32, #tpu.memory_space<vmem>>, vector<1x128xf32>
    %22 = arith.mulf %9, %20 : vector<1x128xf32>
    %23 = arith.subf %21, %22 : vector<1x128xf32>
    %24 = arith.extf %3 : vector<128x128xbf16> to vector<128x128xf32>
    %25 = vector.broadcast %20 : vector<1x128xf32> to vector<128x128xf32>
    %26 = arith.mulf %24, %25 : vector<128x128xf32>
    %27 = vector.broadcast %23 : vector<1x128xf32> to vector<128x128xf32>
    %28 = arith.addf %26, %27 : vector<128x128xf32>
    %cst_17 = arith.constant 0.000000e+00 : f32
    %29 = vector.broadcast %cst_17 : f32 to vector<128x128xf32>
    %30 = arith.maximumf %28, %29 : vector<128x128xf32>
    %31 = arith.truncf %30 : vector<128x128xf32> to vector<128x128xbf16>
    %c0_18 = arith.constant 0 : index
    %c0_19 = arith.constant 0 : index
    %32 = vector.load %arg11[%c0_18, %c0_19] : memref<128x128xf32, #tpu.memory_space<vmem>>, vector<128x128xf32>
    %c0_20 = arith.constant 0 : index
    %c0_21 = arith.constant 0 : index
    %33 = vector.load %arg7[%c0_20, %c0_21] : memref<128x128xbf16, #tpu.memory_space<vmem>>, vector<128x128xbf16>
    %cst_22 = arith.constant dense<0.000000e+00> : vector<128x128xf32>
    %34 = tpu.matmul %31, %33, %cst_22 {dimension_numbers = #tpu.dot_dimension_numbers<[1], [0], [0], [1], [0, 0, 1, 1], [], []>} : vector<128x128xbf16>, vector<128x128xbf16>, vector<128x128xf32> -> vector<128x128xf32>
    %35 = arith.addf %32, %34 : vector<128x128xf32>
    %c0_23 = arith.constant 0 : index
    %c0_24 = arith.constant 0 : index
    %36 = vector.load %arg11[%c0_23, %c0_24] : memref<128x128xf32, #tpu.memory_space<vmem>>, vector<128x128xf32>
    tpu.vector_store %arg11[%c0_23, %c0_24], %35 {strides = array<i32>} : memref<128x128xf32, #tpu.memory_space<vmem>>, vector<128x128xf32>,
    %c0_i32_25 = arith.constant 0 : i32
    %37 = arith.cmpi eq, %arg1, %c0_i32_25 : i32
    %38 = arith.extui %37 : i1 to i32
    %c0_i32_26 = arith.constant 0 : i32
    %39 = arith.cmpi ne, %38, %c0_i32_26 : i32
    scf.if %39 {
      %c0_27 = arith.constant 0 : index
      %c0_28 = arith.constant 0 : index
      %40 = vector.load %arg11[%c0_27, %c0_28] : memref<128x128xf32, #tpu.memory_space<vmem>>, vector<128x128xf32>
      %41 = arith.truncf %40 : vector<128x128xf32> to vector<128x128xbf16>
      %c0_29 = arith.constant 0 : index
      %c0_30 = arith.constant 0 : index
      %42 = vector.load %arg8[%c0_29, %c0_30] : memref<128x128xbf16, #tpu.memory_space<vmem>>, vector<128x128xbf16>
      tpu.vector_store %arg8[%c0_29, %c0_30], %41 {strides = array<i32>} : memref<128x128xbf16, #tpu.memory_space<vmem>>, vector<128x128xbf16>,
      %cst_31 = arith.constant dense<0.000000e+00> : vector<128xf32>
      %43 = vector.multi_reduction <add>, %40, %cst_31 [0] : vector<128x128xf32> to vector<128xf32>
      %44 = vector.shape_cast %43 : vector<128xf32> to vector<1x128xf32>
      %45 = vector.shape_cast %44 : vector<1x128xf32> to vector<1x1x128xf32>
      %c0_32 = arith.constant 0 : index
      %c0_33 = arith.constant 0 : index
      %c0_34 = arith.constant 0 : index
      %46 = vector.load %arg9[%c0_32, %c0_33, %c0_34] : memref<1x1x128xf32, #tpu.memory_space<vmem>>, vector<1x1x128xf32>
      tpu.vector_store %arg9[%c0_32, %c0_33, %c0_34], %45 {strides = array<i32>} : memref<1x1x128xf32, #tpu.memory_space<vmem>>, vector<1x1x128xf32>,
      %47 = arith.mulf %40, %40 : vector<128x128xf32>
      %cst_35 = arith.constant dense<0.000000e+00> : vector<128xf32>
      %48 = vector.multi_reduction <add>, %47, %cst_35 [0] : vector<128x128xf32> to vector<128xf32>
      %49 = vector.shape_cast %48 : vector<128xf32> to vector<1x128xf32>
      %50 = vector.shape_cast %49 : vector<1x128xf32> to vector<1x1x128xf32>
      %c0_36 = arith.constant 0 : index
      %c0_37 = arith.constant 0 : index
      %c0_38 = arith.constant 0 : index
      %51 = vector.load %arg10[%c0_36, %c0_37, %c0_38] : memref<1x1x128xf32, #tpu.memory_space<vmem>>, vector<1x1x128xf32>
      tpu.vector_store %arg10[%c0_36, %c0_37, %c0_38], %50 {strides = array<i32>} : memref<1x1x128xf32, #tpu.memory_space<vmem>>, vector<1x1x128xf32>,
    } else {
    }
    return
  }
  func.func @transform_0(%arg0: i32, %arg1: i32) -> (i32, i32) {
    %c0_i32 = arith.constant 0 : i32
    return %arg0, %arg1 : i32, i32
  }
  func.func @transform_1(%arg0: i32, %arg1: i32) -> (i32, i32, i32) {
    %c0_i32 = arith.constant 0 : i32
    %c0_i32_0 = arith.constant 0 : i32
    %c0_i32_1 = arith.constant 0 : i32
    return %c0_i32, %c0_i32_0, %arg1 : i32, i32, i32
  }
  func.func @transform_2(%arg0: i32, %arg1: i32) -> (i32, i32, i32) {
    %c0_i32 = arith.constant 0 : i32
    %c0_i32_0 = arith.constant 0 : i32
    %c0_i32_1 = arith.constant 0 : i32
    return %c0_i32, %c0_i32_0, %arg1 : i32, i32, i32
  }
  func.func @transform_3(%arg0: i32, %arg1: i32) -> (i32, i32) {
    %c0_i32 = arith.constant 0 : i32
    %c0_i32_0 = arith.constant 0 : i32
    return %c0_i32, %arg1 : i32, i32
  }
  func.func @transform_4(%arg0: i32, %arg1: i32) -> (i32, i32) {
    %c0_i32 = arith.constant 0 : i32
    %c0_i32_0 = arith.constant 0 : i32
    return %c0_i32, %arg1 : i32, i32
  }
  func.func @transform_5(%arg0: i32, %arg1: i32) -> (i32, i32) {
    %c0_i32 = arith.constant 0 : i32
    %c0_i32_0 = arith.constant 0 : i32
    return %arg1, %c0_i32 : i32, i32
  }
  func.func @transform_6(%arg0: i32, %arg1: i32) -> (i32, i32) {
    %c0_i32 = arith.constant 0 : i32
    %c0_i32_0 = arith.constant 0 : i32
    return %arg0, %c0_i32 : i32, i32
  }
  func.func @transform_7(%arg0: i32, %arg1: i32) -> (i32, i32, i32) {
    %c0_i32 = arith.constant 0 : i32
    %c0_i32_0 = arith.constant 0 : i32
    %c0_i32_1 = arith.constant 0 : i32
    return %arg0, %c0_i32, %c0_i32_0 : i32, i32, i32
  }
  func.func @transform_8(%arg0: i32, %arg1: i32) -> (i32, i32, i32) {
    %c0_i32 = arith.constant 0 : i32
    %c0_i32_0 = arith.constant 0 : i32
    %c0_i32_1 = arith.constant 0 : i32
    return %arg0, %c0_i32, %c0_i32_0 : i32, i32, i32
  }
}

module attributes {stable_mosaic.version = 11 : i64} {
  func.func @_mm_stats_kernel(%arg0: i32, %arg1: i32, %arg2: memref<128x128xbf16, #tpu.memory_space<vmem>>, %arg3: memref<128x128xbf16, #tpu.memory_space<vmem>>, %arg4: memref<128x128xbf16, #tpu.memory_space<vmem>>, %arg5: memref<1x1x128xf32, #tpu.memory_space<vmem>>, %arg6: memref<1x1x128xf32, #tpu.memory_space<vmem>>, %arg7: memref<128x128xf32, #tpu.memory_space<vmem>>) attributes {dimension_semantics = [#tpu.dimension_semantics<parallel>, #tpu.dimension_semantics<arbitrary>], iteration_bounds = array<i64: 4, 1>, scalar_prefetch = 0 : i64, scratch_operands = 1 : i64, tpu.core_type = #tpu.core_type<tc>, window_params = [{transform_indices = @transform_0, window_bounds = array<i64: 128, 128>}, {transform_indices = @transform_1, window_bounds = array<i64: 128, 128>}, {transform_indices = @transform_2, window_bounds = array<i64: 128, 128>}, {transform_indices = @transform_3, window_bounds = array<i64: 1, 1, 128>}, {transform_indices = @transform_4, window_bounds = array<i64: 1, 1, 128>}]} {
    %c0_i32 = arith.constant 0 : i32
    %0 = arith.cmpi eq, %arg1, %c0_i32 : i32
    %1 = arith.extui %0 : i1 to i32
    %c0_i32_0 = arith.constant 0 : i32
    %2 = arith.cmpi ne, %1, %c0_i32_0 : i32
    scf.if %2 {
      %cst_10 = arith.constant 0.000000e+00 : f32
      %12 = vector.broadcast %cst_10 : f32 to vector<128x128xf32>
      %c0_11 = arith.constant 0 : index
      %c0_12 = arith.constant 0 : index
      %13 = vector.load %arg7[%c0_11, %c0_12] : memref<128x128xf32, #tpu.memory_space<vmem>>, vector<128x128xf32>
      tpu.vector_store %arg7[%c0_11, %c0_12], %12 {strides = array<i32>} : memref<128x128xf32, #tpu.memory_space<vmem>>, vector<128x128xf32>,
    } else {
    }
    %c0 = arith.constant 0 : index
    %c0_1 = arith.constant 0 : index
    %3 = vector.load %arg2[%c0, %c0_1] : memref<128x128xbf16, #tpu.memory_space<vmem>>, vector<128x128xbf16>
    %c0_2 = arith.constant 0 : index
    %c0_3 = arith.constant 0 : index
    %4 = vector.load %arg7[%c0_2, %c0_3] : memref<128x128xf32, #tpu.memory_space<vmem>>, vector<128x128xf32>
    %c0_4 = arith.constant 0 : index
    %c0_5 = arith.constant 0 : index
    %5 = vector.load %arg3[%c0_4, %c0_5] : memref<128x128xbf16, #tpu.memory_space<vmem>>, vector<128x128xbf16>
    %cst = arith.constant dense<0.000000e+00> : vector<128x128xf32>
    %6 = tpu.matmul %3, %5, %cst {dimension_numbers = #tpu.dot_dimension_numbers<[1], [0], [0], [1], [0, 0, 1, 1], [], []>} : vector<128x128xbf16>, vector<128x128xbf16>, vector<128x128xf32> -> vector<128x128xf32>
    %7 = arith.addf %4, %6 : vector<128x128xf32>
    %c0_6 = arith.constant 0 : index
    %c0_7 = arith.constant 0 : index
    %8 = vector.load %arg7[%c0_6, %c0_7] : memref<128x128xf32, #tpu.memory_space<vmem>>, vector<128x128xf32>
    tpu.vector_store %arg7[%c0_6, %c0_7], %7 {strides = array<i32>} : memref<128x128xf32, #tpu.memory_space<vmem>>, vector<128x128xf32>,
    %c0_i32_8 = arith.constant 0 : i32
    %9 = arith.cmpi eq, %arg1, %c0_i32_8 : i32
    %10 = arith.extui %9 : i1 to i32
    %c0_i32_9 = arith.constant 0 : i32
    %11 = arith.cmpi ne, %10, %c0_i32_9 : i32
    scf.if %11 {
      %c0_10 = arith.constant 0 : index
      %c0_11 = arith.constant 0 : index
      %12 = vector.load %arg7[%c0_10, %c0_11] : memref<128x128xf32, #tpu.memory_space<vmem>>, vector<128x128xf32>
      %13 = arith.truncf %12 : vector<128x128xf32> to vector<128x128xbf16>
      %c0_12 = arith.constant 0 : index
      %c0_13 = arith.constant 0 : index
      %14 = vector.load %arg4[%c0_12, %c0_13] : memref<128x128xbf16, #tpu.memory_space<vmem>>, vector<128x128xbf16>
      tpu.vector_store %arg4[%c0_12, %c0_13], %13 {strides = array<i32>} : memref<128x128xbf16, #tpu.memory_space<vmem>>, vector<128x128xbf16>,
      %cst_14 = arith.constant dense<0.000000e+00> : vector<128xf32>
      %15 = vector.multi_reduction <add>, %12, %cst_14 [0] : vector<128x128xf32> to vector<128xf32>
      %16 = vector.shape_cast %15 : vector<128xf32> to vector<1x128xf32>
      %17 = vector.shape_cast %16 : vector<1x128xf32> to vector<1x1x128xf32>
      %c0_15 = arith.constant 0 : index
      %c0_16 = arith.constant 0 : index
      %c0_17 = arith.constant 0 : index
      %18 = vector.load %arg5[%c0_15, %c0_16, %c0_17] : memref<1x1x128xf32, #tpu.memory_space<vmem>>, vector<1x1x128xf32>
      tpu.vector_store %arg5[%c0_15, %c0_16, %c0_17], %17 {strides = array<i32>} : memref<1x1x128xf32, #tpu.memory_space<vmem>>, vector<1x1x128xf32>,
      %19 = arith.mulf %12, %12 : vector<128x128xf32>
      %cst_18 = arith.constant dense<0.000000e+00> : vector<128xf32>
      %20 = vector.multi_reduction <add>, %19, %cst_18 [0] : vector<128x128xf32> to vector<128xf32>
      %21 = vector.shape_cast %20 : vector<128xf32> to vector<1x128xf32>
      %22 = vector.shape_cast %21 : vector<1x128xf32> to vector<1x1x128xf32>
      %c0_19 = arith.constant 0 : index
      %c0_20 = arith.constant 0 : index
      %c0_21 = arith.constant 0 : index
      %23 = vector.load %arg6[%c0_19, %c0_20, %c0_21] : memref<1x1x128xf32, #tpu.memory_space<vmem>>, vector<1x1x128xf32>
      tpu.vector_store %arg6[%c0_19, %c0_20, %c0_21], %22 {strides = array<i32>} : memref<1x1x128xf32, #tpu.memory_space<vmem>>, vector<1x1x128xf32>,
    } else {
    }
    return
  }
  func.func @transform_0(%arg0: i32, %arg1: i32) -> (i32, i32) {
    %c0_i32 = arith.constant 0 : i32
    return %arg0, %arg1 : i32, i32
  }
  func.func @transform_1(%arg0: i32, %arg1: i32) -> (i32, i32) {
    %c0_i32 = arith.constant 0 : i32
    %c0_i32_0 = arith.constant 0 : i32
    return %arg1, %c0_i32 : i32, i32
  }
  func.func @transform_2(%arg0: i32, %arg1: i32) -> (i32, i32) {
    %c0_i32 = arith.constant 0 : i32
    %c0_i32_0 = arith.constant 0 : i32
    return %arg0, %c0_i32 : i32, i32
  }
  func.func @transform_3(%arg0: i32, %arg1: i32) -> (i32, i32, i32) {
    %c0_i32 = arith.constant 0 : i32
    %c0_i32_0 = arith.constant 0 : i32
    %c0_i32_1 = arith.constant 0 : i32
    return %arg0, %c0_i32, %c0_i32_0 : i32, i32, i32
  }
  func.func @transform_4(%arg0: i32, %arg1: i32) -> (i32, i32, i32) {
    %c0_i32 = arith.constant 0 : i32
    %c0_i32_0 = arith.constant 0 : i32
    %c0_i32_1 = arith.constant 0 : i32
    return %arg0, %c0_i32, %c0_i32_0 : i32, i32, i32
  }
}

module attributes {stable_mosaic.version = 11 : i64} {
  func.func @_conv3x3_bn_kernel(%arg0: i32, %arg1: memref<1x16x16x128xbf16, #tpu.memory_space<vmem>>, %arg2: memref<4x1x128xf32, #tpu.memory_space<vmem>>, %arg3: memref<4x1x128xf32, #tpu.memory_space<vmem>>, %arg4: memref<1x128xf32, #tpu.memory_space<vmem>>, %arg5: memref<1x128xf32, #tpu.memory_space<vmem>>, %arg6: memref<3x3x128x128xbf16, #tpu.memory_space<vmem>>, %arg7: memref<1x16x16x128xbf16, #tpu.memory_space<vmem>>, %arg8: memref<1x1x128xf32, #tpu.memory_space<vmem>>, %arg9: memref<1x1x128xf32, #tpu.memory_space<vmem>>, %arg10: memref<18x18x128xf32, #tpu.memory_space<vmem>>, %arg11: memref<3x18x16x128xbf16, #tpu.memory_space<vmem>>, %arg12: memref<256x128xf32, #tpu.memory_space<vmem>>) attributes {dimension_semantics = [#tpu.dimension_semantics<parallel>], iteration_bounds = array<i64: 2>, scalar_prefetch = 0 : i64, scratch_operands = 3 : i64, tpu.core_type = #tpu.core_type<tc>, window_params = [{transform_indices = @transform_0, window_bounds = array<i64: 1, 16, 16, 128>}, {pipeline_mode = #tpu.pipeline_mode<synchronous>, transform_indices = @transform_1, window_bounds = array<i64: 4, 1, 128>}, {pipeline_mode = #tpu.pipeline_mode<synchronous>, transform_indices = @transform_2, window_bounds = array<i64: 4, 1, 128>}, {pipeline_mode = #tpu.pipeline_mode<synchronous>, transform_indices = @transform_3, window_bounds = array<i64: 1, 128>}, {pipeline_mode = #tpu.pipeline_mode<synchronous>, transform_indices = @transform_4, window_bounds = array<i64: 1, 128>}, {pipeline_mode = #tpu.pipeline_mode<synchronous>, transform_indices = @transform_5, window_bounds = array<i64: 3, 3, 128, 128>}, {transform_indices = @transform_6, window_bounds = array<i64: 1, 16, 16, 128>}, {transform_indices = @transform_7, window_bounds = array<i64: 1, 1, 128>}, {transform_indices = @transform_8, window_bounds = array<i64: 1, 1, 128>}]} {
    %c0 = arith.constant 0 : index
    %c0_0 = arith.constant 0 : index
    %c0_1 = arith.constant 0 : index
    %0 = vector.load %arg2[%c0, %c0_0, %c0_1] : memref<4x1x128xf32, #tpu.memory_space<vmem>>, vector<4x1x128xf32>
    %cst = arith.constant dense<0.000000e+00> : vector<1x128xf32>
    %1 = vector.multi_reduction <add>, %0, %cst [0] : vector<4x1x128xf32> to vector<1x128xf32>
    %2 = vector.shape_cast %1 : vector<1x128xf32> to vector<1x1x128xf32>
    %c0_2 = arith.constant 0 : index
    %c0_3 = arith.constant 0 : index
    %c0_4 = arith.constant 0 : index
    %3 = vector.load %arg3[%c0_2, %c0_3, %c0_4] : memref<4x1x128xf32, #tpu.memory_space<vmem>>, vector<4x1x128xf32>
    %cst_5 = arith.constant dense<0.000000e+00> : vector<1x128xf32>
    %4 = vector.multi_reduction <add>, %3, %cst_5 [0] : vector<4x1x128xf32> to vector<1x128xf32>
    %5 = vector.shape_cast %4 : vector<1x128xf32> to vector<1x1x128xf32>
    %cst_6 = arith.constant 0.001953125 : f32
    %6 = vector.broadcast %cst_6 : f32 to vector<1x1x128xf32>
    %7 = arith.mulf %2, %6 : vector<1x1x128xf32>
    %cst_7 = arith.constant 0.001953125 : f32
    %8 = vector.broadcast %cst_7 : f32 to vector<1x1x128xf32>
    %9 = arith.mulf %5, %8 : vector<1x1x128xf32>
    %10 = arith.mulf %7, %7 : vector<1x1x128xf32>
    %11 = arith.subf %9, %10 : vector<1x1x128xf32>
    %cst_8 = arith.constant 0.000000e+00 : f32
    %12 = vector.broadcast %cst_8 : f32 to vector<1x1x128xf32>
    %13 = arith.maximumf %11, %12 : vector<1x1x128xf32>
    %c0_9 = arith.constant 0 : index
    %c0_10 = arith.constant 0 : index
    %14 = vector.load %arg4[%c0_9, %c0_10] : memref<1x128xf32, #tpu.memory_space<vmem>>, vector<1x128xf32>
    %cst_11 = arith.constant 9.99999974E-6 : f32
    %15 = vector.broadcast %cst_11 : f32 to vector<1x1x128xf32>
    %16 = arith.addf %13, %15 : vector<1x1x128xf32>
    %17 = math.rsqrt %16 : vector<1x1x128xf32>
    %18 = vector.shape_cast %14 : vector<1x128xf32> to vector<1x1x128xf32>
    %19 = arith.mulf %18, %17 : vector<1x1x128xf32>
    %c0_12 = arith.constant 0 : index
    %c0_13 = arith.constant 0 : index
    %20 = vector.load %arg5[%c0_12, %c0_13] : memref<1x128xf32, #tpu.memory_space<vmem>>, vector<1x128xf32>
    %21 = arith.mulf %7, %19 : vector<1x1x128xf32>
    %22 = vector.shape_cast %20 : vector<1x128xf32> to vector<1x1x128xf32>
    %23 = arith.subf %22, %21 : vector<1x1x128xf32>
    %c0_14 = arith.constant 0 : index
    %c0_15 = arith.constant 0 : index
    %c0_16 = arith.constant 0 : index
    %c0_17 = arith.constant 0 : index
    %24 = vector.load %arg1[%c0_14, %c0_15, %c0_16, %c0_17] : memref<1x16x16x128xbf16, #tpu.memory_space<vmem>>, vector<1x16x16x128xbf16>
    %25 = vector.shape_cast %24 : vector<1x16x16x128xbf16> to vector<16x16x128xbf16>
    %26 = arith.extf %25 : vector<16x16x128xbf16> to vector<16x16x128xf32>
    %27 = vector.broadcast %19 : vector<1x1x128xf32> to vector<16x16x128xf32>
    %28 = arith.mulf %26, %27 : vector<16x16x128xf32>
    %29 = vector.broadcast %23 : vector<1x1x128xf32> to vector<16x16x128xf32>
    %30 = arith.addf %28, %29 : vector<16x16x128xf32>
    %cst_18 = arith.constant 0.000000e+00 : f32
    %31 = vector.broadcast %cst_18 : f32 to vector<16x16x128xf32>
    %32 = arith.maximumf %30, %31 : vector<16x16x128xf32>
    %cst_19 = arith.constant 0.000000e+00 : f32
    %33 = vector.broadcast %cst_19 : f32 to vector<18x18x128xf32>
    %c0_20 = arith.constant 0 : index
    %c0_21 = arith.constant 0 : index
    %c0_22 = arith.constant 0 : index
    %34 = vector.load %arg10[%c0_20, %c0_21, %c0_22] : memref<18x18x128xf32, #tpu.memory_space<vmem>>, vector<18x18x128xf32>
    tpu.vector_store %arg10[%c0_20, %c0_21, %c0_22], %33 {strides = array<i32>} : memref<18x18x128xf32, #tpu.memory_space<vmem>>, vector<18x18x128xf32>,
    %c1 = arith.constant 1 : index
    %c1_23 = arith.constant 1 : index
    %c0_24 = arith.constant 0 : index
    %35 = vector.load %arg10[%c1, %c1_23, %c0_24] : memref<18x18x128xf32, #tpu.memory_space<vmem>>, vector<16x16x128xf32>
    tpu.vector_store %arg10[%c1, %c1_23, %c0_24], %32 {strides = array<i32>} : memref<18x18x128xf32, #tpu.memory_space<vmem>>, vector<16x16x128xf32>,
    %c0_25 = arith.constant 0 : index
    %c0_26 = arith.constant 0 : index
    %c0_27 = arith.constant 0 : index
    %36 = vector.load %arg10[%c0_25, %c0_26, %c0_27] : memref<18x18x128xf32, #tpu.memory_space<vmem>>, vector<18x16x128xf32>
    %37 = arith.truncf %36 : vector<18x16x128xf32> to vector<18x16x128xbf16>
    %c0_28 = arith.constant 0 : index
    %c0_29 = arith.constant 0 : index
    %c0_30 = arith.constant 0 : index
    %c0_31 = arith.constant 0 : index
    %38 = vector.load %arg11[%c0_28, %c0_29, %c0_30, %c0_31] : memref<3x18x16x128xbf16, #tpu.memory_space<vmem>>, vector<1x18x16x128xbf16>
    %39 = vector.shape_cast %38 : vector<1x18x16x128xbf16> to vector<18x16x128xbf16>
    %40 = vector.shape_cast %37 : vector<18x16x128xbf16> to vector<1x18x16x128xbf16>
    tpu.vector_store %arg11[%c0_28, %c0_29, %c0_30, %c0_31], %40 {strides = array<i32>} : memref<3x18x16x128xbf16, #tpu.memory_space<vmem>>, vector<1x18x16x128xbf16>,
    %c0_32 = arith.constant 0 : index
    %c1_33 = arith.constant 1 : index
    %c0_34 = arith.constant 0 : index
    %41 = vector.load %arg10[%c0_32, %c1_33, %c0_34] : memref<18x18x128xf32, #tpu.memory_space<vmem>>, vector<18x16x128xf32>
    %42 = arith.truncf %41 : vector<18x16x128xf32> to vector<18x16x128xbf16>
    %c1_35 = arith.constant 1 : index
    %c0_36 = arith.constant 0 : index
    %c0_37 = arith.constant 0 : index
    %c0_38 = arith.constant 0 : index
    %43 = vector.load %arg11[%c1_35, %c0_36, %c0_37, %c0_38] : memref<3x18x16x128xbf16, #tpu.memory_space<vmem>>, vector<1x18x16x128xbf16>
    %44 = vector.shape_cast %43 : vector<1x18x16x128xbf16> to vector<18x16x128xbf16>
    %45 = vector.shape_cast %42 : vector<18x16x128xbf16> to vector<1x18x16x128xbf16>
    tpu.vector_store %arg11[%c1_35, %c0_36, %c0_37, %c0_38], %45 {strides = array<i32>} : memref<3x18x16x128xbf16, #tpu.memory_space<vmem>>, vector<1x18x16x128xbf16>,
    %c0_39 = arith.constant 0 : index
    %c2 = arith.constant 2 : index
    %c0_40 = arith.constant 0 : index
    %46 = vector.load %arg10[%c0_39, %c2, %c0_40] : memref<18x18x128xf32, #tpu.memory_space<vmem>>, vector<18x16x128xf32>
    %47 = arith.truncf %46 : vector<18x16x128xf32> to vector<18x16x128xbf16>
    %c2_41 = arith.constant 2 : index
    %c0_42 = arith.constant 0 : index
    %c0_43 = arith.constant 0 : index
    %c0_44 = arith.constant 0 : index
    %48 = vector.load %arg11[%c2_41, %c0_42, %c0_43, %c0_44] : memref<3x18x16x128xbf16, #tpu.memory_space<vmem>>, vector<1x18x16x128xbf16>
    %49 = vector.shape_cast %48 : vector<1x18x16x128xbf16> to vector<18x16x128xbf16>
    %50 = vector.shape_cast %47 : vector<18x16x128xbf16> to vector<1x18x16x128xbf16>
    tpu.vector_store %arg11[%c2_41, %c0_42, %c0_43, %c0_44], %50 {strides = array<i32>} : memref<3x18x16x128xbf16, #tpu.memory_space<vmem>>, vector<1x18x16x128xbf16>,
    %cst_45 = arith.constant 0.000000e+00 : f32
    %51 = vector.broadcast %cst_45 : f32 to vector<256x128xf32>
    %c0_46 = arith.constant 0 : index
    %c0_47 = arith.constant 0 : index
    %52 = vector.load %arg12[%c0_46, %c0_47] : memref<256x128xf32, #tpu.memory_space<vmem>>, vector<256x128xf32>
    tpu.vector_store %arg12[%c0_46, %c0_47], %51 {strides = array<i32>} : memref<256x128xf32, #tpu.memory_space<vmem>>, vector<256x128xf32>,
    %c0_48 = arith.constant 0 : index
    %c0_49 = arith.constant 0 : index
    %c0_50 = arith.constant 0 : index
    %c0_51 = arith.constant 0 : index
    %53 = vector.load %arg11[%c0_48, %c0_49, %c0_50, %c0_51] : memref<3x18x16x128xbf16, #tpu.memory_space<vmem>>, vector<1x16x16x128xbf16>
    %54 = vector.shape_cast %53 : vector<1x16x16x128xbf16> to vector<16x16x128xbf16>
    %55 = vector.shape_cast %54 : vector<16x16x128xbf16> to vector<256x128xbf16>
    %c0_52 = arith.constant 0 : index
    %c0_53 = arith.constant 0 : index
    %56 = vector.load %arg12[%c0_52, %c0_53] : memref<256x128xf32, #tpu.memory_space<vmem>>, vector<256x128xf32>
    %c0_54 = arith.constant 0 : index
    %c0_55 = arith.constant 0 : index
    %c0_56 = arith.constant 0 : index
    %c0_57 = arith.constant 0 : index
    %57 = vector.load %arg6[%c0_54, %c0_55, %c0_56, %c0_57] : memref<3x3x128x128xbf16, #tpu.memory_space<vmem>>, vector<1x1x128x128xbf16>
    %58 = vector.shape_cast %57 : vector<1x1x128x128xbf16> to vector<128x128xbf16>
    %cst_58 = arith.constant dense<0.000000e+00> : vector<256x128xf32>
    %59 = tpu.matmul %55, %58, %cst_58 {dimension_numbers = #tpu.dot_dimension_numbers<[1], [0], [0], [1], [0, 0, 1, 1], [], []>} : vector<256x128xbf16>, vector<128x128xbf16>, vector<256x128xf32> -> vector<256x128xf32>
    %60 = arith.addf %56, %59 : vector<256x128xf32>
    %c0_59 = arith.constant 0 : index
    %c0_60 = arith.constant 0 : index
    %61 = vector.load %arg12[%c0_59, %c0_60] : memref<256x128xf32, #tpu.memory_space<vmem>>, vector<256x128xf32>
    tpu.vector_store %arg12[%c0_59, %c0_60], %60 {strides = array<i32>} : memref<256x128xf32, #tpu.memory_space<vmem>>, vector<256x128xf32>,
    %c1_61 = arith.constant 1 : index
    %c0_62 = arith.constant 0 : index
    %c0_63 = arith.constant 0 : index
    %c0_64 = arith.constant 0 : index
    %62 = vector.load %arg11[%c1_61, %c0_62, %c0_63, %c0_64] : memref<3x18x16x128xbf16, #tpu.memory_space<vmem>>, vector<1x16x16x128xbf16>
    %63 = vector.shape_cast %62 : vector<1x16x16x128xbf16> to vector<16x16x128xbf16>
    %64 = vector.shape_cast %63 : vector<16x16x128xbf16> to vector<256x128xbf16>
    %c0_65 = arith.constant 0 : index
    %c0_66 = arith.constant 0 : index
    %65 = vector.load %arg12[%c0_65, %c0_66] : memref<256x128xf32, #tpu.memory_space<vmem>>, vector<256x128xf32>
    %c0_67 = arith.constant 0 : index
    %c1_68 = arith.constant 1 : index
    %c0_69 = arith.constant 0 : index
    %c0_70 = arith.constant 0 : index
    %66 = vector.load %arg6[%c0_67, %c1_68, %c0_69, %c0_70] : memref<3x3x128x128xbf16, #tpu.memory_space<vmem>>, vector<1x1x128x128xbf16>
    %67 = vector.shape_cast %66 : vector<1x1x128x128xbf16> to vector<128x128xbf16>
    %cst_71 = arith.constant dense<0.000000e+00> : vector<256x128xf32>
    %68 = tpu.matmul %64, %67, %cst_71 {dimension_numbers = #tpu.dot_dimension_numbers<[1], [0], [0], [1], [0, 0, 1, 1], [], []>} : vector<256x128xbf16>, vector<128x128xbf16>, vector<256x128xf32> -> vector<256x128xf32>
    %69 = arith.addf %65, %68 : vector<256x128xf32>
    %c0_72 = arith.constant 0 : index
    %c0_73 = arith.constant 0 : index
    %70 = vector.load %arg12[%c0_72, %c0_73] : memref<256x128xf32, #tpu.memory_space<vmem>>, vector<256x128xf32>
    tpu.vector_store %arg12[%c0_72, %c0_73], %69 {strides = array<i32>} : memref<256x128xf32, #tpu.memory_space<vmem>>, vector<256x128xf32>,
    %c2_74 = arith.constant 2 : index
    %c0_75 = arith.constant 0 : index
    %c0_76 = arith.constant 0 : index
    %c0_77 = arith.constant 0 : index
    %71 = vector.load %arg11[%c2_74, %c0_75, %c0_76, %c0_77] : memref<3x18x16x128xbf16, #tpu.memory_space<vmem>>, vector<1x16x16x128xbf16>
    %72 = vector.shape_cast %71 : vector<1x16x16x128xbf16> to vector<16x16x128xbf16>
    %73 = vector.shape_cast %72 : vector<16x16x128xbf16> to vector<256x128xbf16>
    %c0_78 = arith.constant 0 : index
    %c0_79 = arith.constant 0 : index
    %74 = vector.load %arg12[%c0_78, %c0_79] : memref<256x128xf32, #tpu.memory_space<vmem>>, vector<256x128xf32>
    %c0_80 = arith.constant 0 : index
    %c2_81 = arith.constant 2 : index
    %c0_82 = arith.constant 0 : index
    %c0_83 = arith.constant 0 : index
    %75 = vector.load %arg6[%c0_80, %c2_81, %c0_82, %c0_83] : memref<3x3x128x128xbf16, #tpu.memory_space<vmem>>, vector<1x1x128x128xbf16>
    %76 = vector.shape_cast %75 : vector<1x1x128x128xbf16> to vector<128x128xbf16>
    %cst_84 = arith.constant dense<0.000000e+00> : vector<256x128xf32>
    %77 = tpu.matmul %73, %76, %cst_84 {dimension_numbers = #tpu.dot_dimension_numbers<[1], [0], [0], [1], [0, 0, 1, 1], [], []>} : vector<256x128xbf16>, vector<128x128xbf16>, vector<256x128xf32> -> vector<256x128xf32>
    %78 = arith.addf %74, %77 : vector<256x128xf32>
    %c0_85 = arith.constant 0 : index
    %c0_86 = arith.constant 0 : index
    %79 = vector.load %arg12[%c0_85, %c0_86] : memref<256x128xf32, #tpu.memory_space<vmem>>, vector<256x128xf32>
    tpu.vector_store %arg12[%c0_85, %c0_86], %78 {strides = array<i32>} : memref<256x128xf32, #tpu.memory_space<vmem>>, vector<256x128xf32>,
    %c0_87 = arith.constant 0 : index
    %c1_88 = arith.constant 1 : index
    %c0_89 = arith.constant 0 : index
    %c0_90 = arith.constant 0 : index
    %80 = vector.load %arg11[%c0_87, %c1_88, %c0_89, %c0_90] : memref<3x18x16x128xbf16, #tpu.memory_space<vmem>>, vector<1x16x16x128xbf16>
    %81 = vector.shape_cast %80 : vector<1x16x16x128xbf16> to vector<16x16x128xbf16>
    %82 = vector.shape_cast %81 : vector<16x16x128xbf16> to vector<256x128xbf16>
    %c0_91 = arith.constant 0 : index
    %c0_92 = arith.constant 0 : index
    %83 = vector.load %arg12[%c0_91, %c0_92] : memref<256x128xf32, #tpu.memory_space<vmem>>, vector<256x128xf32>
    %c1_93 = arith.constant 1 : index
    %c0_94 = arith.constant 0 : index
    %c0_95 = arith.constant 0 : index
    %c0_96 = arith.constant 0 : index
    %84 = vector.load %arg6[%c1_93, %c0_94, %c0_95, %c0_96] : memref<3x3x128x128xbf16, #tpu.memory_space<vmem>>, vector<1x1x128x128xbf16>
    %85 = vector.shape_cast %84 : vector<1x1x128x128xbf16> to vector<128x128xbf16>
    %cst_97 = arith.constant dense<0.000000e+00> : vector<256x128xf32>
    %86 = tpu.matmul %82, %85, %cst_97 {dimension_numbers = #tpu.dot_dimension_numbers<[1], [0], [0], [1], [0, 0, 1, 1], [], []>} : vector<256x128xbf16>, vector<128x128xbf16>, vector<256x128xf32> -> vector<256x128xf32>
    %87 = arith.addf %83, %86 : vector<256x128xf32>
    %c0_98 = arith.constant 0 : index
    %c0_99 = arith.constant 0 : index
    %88 = vector.load %arg12[%c0_98, %c0_99] : memref<256x128xf32, #tpu.memory_space<vmem>>, vector<256x128xf32>
    tpu.vector_store %arg12[%c0_98, %c0_99], %87 {strides = array<i32>} : memref<256x128xf32, #tpu.memory_space<vmem>>, vector<256x128xf32>,
    %c1_100 = arith.constant 1 : index
    %c1_101 = arith.constant 1 : index
    %c0_102 = arith.constant 0 : index
    %c0_103 = arith.constant 0 : index
    %89 = vector.load %arg11[%c1_100, %c1_101, %c0_102, %c0_103] : memref<3x18x16x128xbf16, #tpu.memory_space<vmem>>, vector<1x16x16x128xbf16>
    %90 = vector.shape_cast %89 : vector<1x16x16x128xbf16> to vector<16x16x128xbf16>
    %91 = vector.shape_cast %90 : vector<16x16x128xbf16> to vector<256x128xbf16>
    %c0_104 = arith.constant 0 : index
    %c0_105 = arith.constant 0 : index
    %92 = vector.load %arg12[%c0_104, %c0_105] : memref<256x128xf32, #tpu.memory_space<vmem>>, vector<256x128xf32>
    %c1_106 = arith.constant 1 : index
    %c1_107 = arith.constant 1 : index
    %c0_108 = arith.constant 0 : index
    %c0_109 = arith.constant 0 : index
    %93 = vector.load %arg6[%c1_106, %c1_107, %c0_108, %c0_109] : memref<3x3x128x128xbf16, #tpu.memory_space<vmem>>, vector<1x1x128x128xbf16>
    %94 = vector.shape_cast %93 : vector<1x1x128x128xbf16> to vector<128x128xbf16>
    %cst_110 = arith.constant dense<0.000000e+00> : vector<256x128xf32>
    %95 = tpu.matmul %91, %94, %cst_110 {dimension_numbers = #tpu.dot_dimension_numbers<[1], [0], [0], [1], [0, 0, 1, 1], [], []>} : vector<256x128xbf16>, vector<128x128xbf16>, vector<256x128xf32> -> vector<256x128xf32>
    %96 = arith.addf %92, %95 : vector<256x128xf32>
    %c0_111 = arith.constant 0 : index
    %c0_112 = arith.constant 0 : index
    %97 = vector.load %arg12[%c0_111, %c0_112] : memref<256x128xf32, #tpu.memory_space<vmem>>, vector<256x128xf32>
    tpu.vector_store %arg12[%c0_111, %c0_112], %96 {strides = array<i32>} : memref<256x128xf32, #tpu.memory_space<vmem>>, vector<256x128xf32>,
    %c2_113 = arith.constant 2 : index
    %c1_114 = arith.constant 1 : index
    %c0_115 = arith.constant 0 : index
    %c0_116 = arith.constant 0 : index
    %98 = vector.load %arg11[%c2_113, %c1_114, %c0_115, %c0_116] : memref<3x18x16x128xbf16, #tpu.memory_space<vmem>>, vector<1x16x16x128xbf16>
    %99 = vector.shape_cast %98 : vector<1x16x16x128xbf16> to vector<16x16x128xbf16>
    %100 = vector.shape_cast %99 : vector<16x16x128xbf16> to vector<256x128xbf16>
    %c0_117 = arith.constant 0 : index
    %c0_118 = arith.constant 0 : index
    %101 = vector.load %arg12[%c0_117, %c0_118] : memref<256x128xf32, #tpu.memory_space<vmem>>, vector<256x128xf32>
    %c1_119 = arith.constant 1 : index
    %c2_120 = arith.constant 2 : index
    %c0_121 = arith.constant 0 : index
    %c0_122 = arith.constant 0 : index
    %102 = vector.load %arg6[%c1_119, %c2_120, %c0_121, %c0_122] : memref<3x3x128x128xbf16, #tpu.memory_space<vmem>>, vector<1x1x128x128xbf16>
    %103 = vector.shape_cast %102 : vector<1x1x128x128xbf16> to vector<128x128xbf16>
    %cst_123 = arith.constant dense<0.000000e+00> : vector<256x128xf32>
    %104 = tpu.matmul %100, %103, %cst_123 {dimension_numbers = #tpu.dot_dimension_numbers<[1], [0], [0], [1], [0, 0, 1, 1], [], []>} : vector<256x128xbf16>, vector<128x128xbf16>, vector<256x128xf32> -> vector<256x128xf32>
    %105 = arith.addf %101, %104 : vector<256x128xf32>
    %c0_124 = arith.constant 0 : index
    %c0_125 = arith.constant 0 : index
    %106 = vector.load %arg12[%c0_124, %c0_125] : memref<256x128xf32, #tpu.memory_space<vmem>>, vector<256x128xf32>
    tpu.vector_store %arg12[%c0_124, %c0_125], %105 {strides = array<i32>} : memref<256x128xf32, #tpu.memory_space<vmem>>, vector<256x128xf32>,
    %c0_126 = arith.constant 0 : index
    %c2_127 = arith.constant 2 : index
    %c0_128 = arith.constant 0 : index
    %c0_129 = arith.constant 0 : index
    %107 = vector.load %arg11[%c0_126, %c2_127, %c0_128, %c0_129] : memref<3x18x16x128xbf16, #tpu.memory_space<vmem>>, vector<1x16x16x128xbf16>
    %108 = vector.shape_cast %107 : vector<1x16x16x128xbf16> to vector<16x16x128xbf16>
    %109 = vector.shape_cast %108 : vector<16x16x128xbf16> to vector<256x128xbf16>
    %c0_130 = arith.constant 0 : index
    %c0_131 = arith.constant 0 : index
    %110 = vector.load %arg12[%c0_130, %c0_131] : memref<256x128xf32, #tpu.memory_space<vmem>>, vector<256x128xf32>
    %c2_132 = arith.constant 2 : index
    %c0_133 = arith.constant 0 : index
    %c0_134 = arith.constant 0 : index
    %c0_135 = arith.constant 0 : index
    %111 = vector.load %arg6[%c2_132, %c0_133, %c0_134, %c0_135] : memref<3x3x128x128xbf16, #tpu.memory_space<vmem>>, vector<1x1x128x128xbf16>
    %112 = vector.shape_cast %111 : vector<1x1x128x128xbf16> to vector<128x128xbf16>
    %cst_136 = arith.constant dense<0.000000e+00> : vector<256x128xf32>
    %113 = tpu.matmul %109, %112, %cst_136 {dimension_numbers = #tpu.dot_dimension_numbers<[1], [0], [0], [1], [0, 0, 1, 1], [], []>} : vector<256x128xbf16>, vector<128x128xbf16>, vector<256x128xf32> -> vector<256x128xf32>
    %114 = arith.addf %110, %113 : vector<256x128xf32>
    %c0_137 = arith.constant 0 : index
    %c0_138 = arith.constant 0 : index
    %115 = vector.load %arg12[%c0_137, %c0_138] : memref<256x128xf32, #tpu.memory_space<vmem>>, vector<256x128xf32>
    tpu.vector_store %arg12[%c0_137, %c0_138], %114 {strides = array<i32>} : memref<256x128xf32, #tpu.memory_space<vmem>>, vector<256x128xf32>,
    %c1_139 = arith.constant 1 : index
    %c2_140 = arith.constant 2 : index
    %c0_141 = arith.constant 0 : index
    %c0_142 = arith.constant 0 : index
    %116 = vector.load %arg11[%c1_139, %c2_140, %c0_141, %c0_142] : memref<3x18x16x128xbf16, #tpu.memory_space<vmem>>, vector<1x16x16x128xbf16>
    %117 = vector.shape_cast %116 : vector<1x16x16x128xbf16> to vector<16x16x128xbf16>
    %118 = vector.shape_cast %117 : vector<16x16x128xbf16> to vector<256x128xbf16>
    %c0_143 = arith.constant 0 : index
    %c0_144 = arith.constant 0 : index
    %119 = vector.load %arg12[%c0_143, %c0_144] : memref<256x128xf32, #tpu.memory_space<vmem>>, vector<256x128xf32>
    %c2_145 = arith.constant 2 : index
    %c1_146 = arith.constant 1 : index
    %c0_147 = arith.constant 0 : index
    %c0_148 = arith.constant 0 : index
    %120 = vector.load %arg6[%c2_145, %c1_146, %c0_147, %c0_148] : memref<3x3x128x128xbf16, #tpu.memory_space<vmem>>, vector<1x1x128x128xbf16>
    %121 = vector.shape_cast %120 : vector<1x1x128x128xbf16> to vector<128x128xbf16>
    %cst_149 = arith.constant dense<0.000000e+00> : vector<256x128xf32>
    %122 = tpu.matmul %118, %121, %cst_149 {dimension_numbers = #tpu.dot_dimension_numbers<[1], [0], [0], [1], [0, 0, 1, 1], [], []>} : vector<256x128xbf16>, vector<128x128xbf16>, vector<256x128xf32> -> vector<256x128xf32>
    %123 = arith.addf %119, %122 : vector<256x128xf32>
    %c0_150 = arith.constant 0 : index
    %c0_151 = arith.constant 0 : index
    %124 = vector.load %arg12[%c0_150, %c0_151] : memref<256x128xf32, #tpu.memory_space<vmem>>, vector<256x128xf32>
    tpu.vector_store %arg12[%c0_150, %c0_151], %123 {strides = array<i32>} : memref<256x128xf32, #tpu.memory_space<vmem>>, vector<256x128xf32>,
    %c2_152 = arith.constant 2 : index
    %c2_153 = arith.constant 2 : index
    %c0_154 = arith.constant 0 : index
    %c0_155 = arith.constant 0 : index
    %125 = vector.load %arg11[%c2_152, %c2_153, %c0_154, %c0_155] : memref<3x18x16x128xbf16, #tpu.memory_space<vmem>>, vector<1x16x16x128xbf16>
    %126 = vector.shape_cast %125 : vector<1x16x16x128xbf16> to vector<16x16x128xbf16>
    %127 = vector.shape_cast %126 : vector<16x16x128xbf16> to vector<256x128xbf16>
    %c0_156 = arith.constant 0 : index
    %c0_157 = arith.constant 0 : index
    %128 = vector.load %arg12[%c0_156, %c0_157] : memref<256x128xf32, #tpu.memory_space<vmem>>, vector<256x128xf32>
    %c2_158 = arith.constant 2 : index
    %c2_159 = arith.constant 2 : index
    %c0_160 = arith.constant 0 : index
    %c0_161 = arith.constant 0 : index
    %129 = vector.load %arg6[%c2_158, %c2_159, %c0_160, %c0_161] : memref<3x3x128x128xbf16, #tpu.memory_space<vmem>>, vector<1x1x128x128xbf16>
    %130 = vector.shape_cast %129 : vector<1x1x128x128xbf16> to vector<128x128xbf16>
    %cst_162 = arith.constant dense<0.000000e+00> : vector<256x128xf32>
    %131 = tpu.matmul %127, %130, %cst_162 {dimension_numbers = #tpu.dot_dimension_numbers<[1], [0], [0], [1], [0, 0, 1, 1], [], []>} : vector<256x128xbf16>, vector<128x128xbf16>, vector<256x128xf32> -> vector<256x128xf32>
    %132 = arith.addf %128, %131 : vector<256x128xf32>
    %c0_163 = arith.constant 0 : index
    %c0_164 = arith.constant 0 : index
    %133 = vector.load %arg12[%c0_163, %c0_164] : memref<256x128xf32, #tpu.memory_space<vmem>>, vector<256x128xf32>
    tpu.vector_store %arg12[%c0_163, %c0_164], %132 {strides = array<i32>} : memref<256x128xf32, #tpu.memory_space<vmem>>, vector<256x128xf32>,
    %c0_165 = arith.constant 0 : index
    %c0_166 = arith.constant 0 : index
    %134 = vector.load %arg12[%c0_165, %c0_166] : memref<256x128xf32, #tpu.memory_space<vmem>>, vector<256x128xf32>
    %135 = vector.shape_cast %134 : vector<256x128xf32> to vector<1x16x16x128xf32>
    %136 = arith.truncf %135 : vector<1x16x16x128xf32> to vector<1x16x16x128xbf16>
    %c0_167 = arith.constant 0 : index
    %c0_168 = arith.constant 0 : index
    %c0_169 = arith.constant 0 : index
    %c0_170 = arith.constant 0 : index
    %137 = vector.load %arg7[%c0_167, %c0_168, %c0_169, %c0_170] : memref<1x16x16x128xbf16, #tpu.memory_space<vmem>>, vector<1x16x16x128xbf16>
    tpu.vector_store %arg7[%c0_167, %c0_168, %c0_169, %c0_170], %136 {strides = array<i32>} : memref<1x16x16x128xbf16, #tpu.memory_space<vmem>>, vector<1x16x16x128xbf16>,
    %cst_171 = arith.constant dense<0.000000e+00> : vector<128xf32>
    %138 = vector.multi_reduction <add>, %134, %cst_171 [0] : vector<256x128xf32> to vector<128xf32>
    %139 = vector.shape_cast %138 : vector<128xf32> to vector<1x128xf32>
    %140 = vector.shape_cast %139 : vector<1x128xf32> to vector<1x1x128xf32>
    %c0_172 = arith.constant 0 : index
    %c0_173 = arith.constant 0 : index
    %c0_174 = arith.constant 0 : index
    %141 = vector.load %arg8[%c0_172, %c0_173, %c0_174] : memref<1x1x128xf32, #tpu.memory_space<vmem>>, vector<1x1x128xf32>
    tpu.vector_store %arg8[%c0_172, %c0_173, %c0_174], %140 {strides = array<i32>} : memref<1x1x128xf32, #tpu.memory_space<vmem>>, vector<1x1x128xf32>,
    %142 = arith.mulf %134, %134 : vector<256x128xf32>
    %cst_175 = arith.constant dense<0.000000e+00> : vector<128xf32>
    %143 = vector.multi_reduction <add>, %142, %cst_175 [0] : vector<256x128xf32> to vector<128xf32>
    %144 = vector.shape_cast %143 : vector<128xf32> to vector<1x128xf32>
    %145 = vector.shape_cast %144 : vector<1x128xf32> to vector<1x1x128xf32>
    %c0_176 = arith.constant 0 : index
    %c0_177 = arith.constant 0 : index
    %c0_178 = arith.constant 0 : index
    %146 = vector.load %arg9[%c0_176, %c0_177, %c0_178] : memref<1x1x128xf32, #tpu.memory_space<vmem>>, vector<1x1x128xf32>
    tpu.vector_store %arg9[%c0_176, %c0_177, %c0_178], %145 {strides = array<i32>} : memref<1x1x128xf32, #tpu.memory_space<vmem>>, vector<1x1x128xf32>,
    return
  }
  func.func @transform_0(%arg0: i32) -> (i32, i32, i32, i32) {
    %c0_i32 = arith.constant 0 : i32
    %c0_i32_0 = arith.constant 0 : i32
    %c0_i32_1 = arith.constant 0 : i32
    %c0_i32_2 = arith.constant 0 : i32
    return %arg0, %c0_i32, %c0_i32_0, %c0_i32_1 : i32, i32, i32, i32
  }
  func.func @transform_1(%arg0: i32) -> (i32, i32, i32) {
    %c0_i32 = arith.constant 0 : i32
    %c0_i32_0 = arith.constant 0 : i32
    %c0_i32_1 = arith.constant 0 : i32
    %c0_i32_2 = arith.constant 0 : i32
    return %c0_i32, %c0_i32_0, %c0_i32_1 : i32, i32, i32
  }
  func.func @transform_2(%arg0: i32) -> (i32, i32, i32) {
    %c0_i32 = arith.constant 0 : i32
    %c0_i32_0 = arith.constant 0 : i32
    %c0_i32_1 = arith.constant 0 : i32
    %c0_i32_2 = arith.constant 0 : i32
    return %c0_i32, %c0_i32_0, %c0_i32_1 : i32, i32, i32
  }
  func.func @transform_3(%arg0: i32) -> (i32, i32) {
    %c0_i32 = arith.constant 0 : i32
    %c0_i32_0 = arith.constant 0 : i32
    %c0_i32_1 = arith.constant 0 : i32
    return %c0_i32, %c0_i32_0 : i32, i32
  }
  func.func @transform_4(%arg0: i32) -> (i32, i32) {
    %c0_i32 = arith.constant 0 : i32
    %c0_i32_0 = arith.constant 0 : i32
    %c0_i32_1 = arith.constant 0 : i32
    return %c0_i32, %c0_i32_0 : i32, i32
  }
  func.func @transform_5(%arg0: i32) -> (i32, i32, i32, i32) {
    %c0_i32 = arith.constant 0 : i32
    %c0_i32_0 = arith.constant 0 : i32
    %c0_i32_1 = arith.constant 0 : i32
    %c0_i32_2 = arith.constant 0 : i32
    %c0_i32_3 = arith.constant 0 : i32
    return %c0_i32, %c0_i32_0, %c0_i32_1, %c0_i32_2 : i32, i32, i32, i32
  }
  func.func @transform_6(%arg0: i32) -> (i32, i32, i32, i32) {
    %c0_i32 = arith.constant 0 : i32
    %c0_i32_0 = arith.constant 0 : i32
    %c0_i32_1 = arith.constant 0 : i32
    %c0_i32_2 = arith.constant 0 : i32
    return %arg0, %c0_i32, %c0_i32_0, %c0_i32_1 : i32, i32, i32, i32
  }
  func.func @transform_7(%arg0: i32) -> (i32, i32, i32) {
    %c0_i32 = arith.constant 0 : i32
    %c0_i32_0 = arith.constant 0 : i32
    %c0_i32_1 = arith.constant 0 : i32
    return %arg0, %c0_i32, %c0_i32_0 : i32, i32, i32
  }
  func.func @transform_8(%arg0: i32) -> (i32, i32, i32) {
    %c0_i32 = arith.constant 0 : i32
    %c0_i32_0 = arith.constant 0 : i32
    %c0_i32_1 = arith.constant 0 : i32
    return %arg0, %c0_i32, %c0_i32_0 : i32, i32, i32
  }
}

module attributes {stable_mosaic.version = 11 : i64} {
  func.func @_bn_res_kernel(%arg0: i32, %arg1: memref<128x128xbf16, #tpu.memory_space<vmem>>, %arg2: memref<4x1x128xf32, #tpu.memory_space<vmem>>, %arg3: memref<4x1x128xf32, #tpu.memory_space<vmem>>, %arg4: memref<1x128xf32, #tpu.memory_space<vmem>>, %arg5: memref<1x128xf32, #tpu.memory_space<vmem>>, %arg6: memref<128x128xf32, #tpu.memory_space<vmem>>, %arg7: memref<128x128xf32, #tpu.memory_space<vmem>>) attributes {dimension_semantics = [#tpu.dimension_semantics<parallel>], iteration_bounds = array<i64: 4>, scalar_prefetch = 0 : i64, scratch_operands = 0 : i64, tpu.core_type = #tpu.core_type<tc>, window_params = [{transform_indices = @transform_0, window_bounds = array<i64: 128, 128>}, {pipeline_mode = #tpu.pipeline_mode<synchronous>, transform_indices = @transform_1, window_bounds = array<i64: 4, 1, 128>}, {pipeline_mode = #tpu.pipeline_mode<synchronous>, transform_indices = @transform_2, window_bounds = array<i64: 4, 1, 128>}, {pipeline_mode = #tpu.pipeline_mode<synchronous>, transform_indices = @transform_3, window_bounds = array<i64: 1, 128>}, {pipeline_mode = #tpu.pipeline_mode<synchronous>, transform_indices = @transform_4, window_bounds = array<i64: 1, 128>}, {transform_indices = @transform_5, window_bounds = array<i64: 128, 128>}, {transform_indices = @transform_6, window_bounds = array<i64: 128, 128>}]} {
    %c0 = arith.constant 0 : index
    %c0_0 = arith.constant 0 : index
    %c0_1 = arith.constant 0 : index
    %0 = vector.load %arg2[%c0, %c0_0, %c0_1] : memref<4x1x128xf32, #tpu.memory_space<vmem>>, vector<4x1x128xf32>
    %cst = arith.constant dense<0.000000e+00> : vector<1x128xf32>
    %1 = vector.multi_reduction <add>, %0, %cst [0] : vector<4x1x128xf32> to vector<1x128xf32>
    %c0_2 = arith.constant 0 : index
    %c0_3 = arith.constant 0 : index
    %c0_4 = arith.constant 0 : index
    %2 = vector.load %arg3[%c0_2, %c0_3, %c0_4] : memref<4x1x128xf32, #tpu.memory_space<vmem>>, vector<4x1x128xf32>
    %cst_5 = arith.constant dense<0.000000e+00> : vector<1x128xf32>
    %3 = vector.multi_reduction <add>, %2, %cst_5 [0] : vector<4x1x128xf32> to vector<1x128xf32>
    %cst_6 = arith.constant 0.001953125 : f32
    %4 = vector.broadcast %cst_6 : f32 to vector<1x128xf32>
    %5 = arith.mulf %1, %4 : vector<1x128xf32>
    %cst_7 = arith.constant 0.001953125 : f32
    %6 = vector.broadcast %cst_7 : f32 to vector<1x128xf32>
    %7 = arith.mulf %3, %6 : vector<1x128xf32>
    %8 = arith.mulf %5, %5 : vector<1x128xf32>
    %9 = arith.subf %7, %8 : vector<1x128xf32>
    %cst_8 = arith.constant 0.000000e+00 : f32
    %10 = vector.broadcast %cst_8 : f32 to vector<1x128xf32>
    %11 = arith.maximumf %9, %10 : vector<1x128xf32>
    %c0_9 = arith.constant 0 : index
    %c0_10 = arith.constant 0 : index
    %12 = vector.load %arg4[%c0_9, %c0_10] : memref<1x128xf32, #tpu.memory_space<vmem>>, vector<1x128xf32>
    %cst_11 = arith.constant 9.99999974E-6 : f32
    %13 = vector.broadcast %cst_11 : f32 to vector<1x128xf32>
    %14 = arith.addf %11, %13 : vector<1x128xf32>
    %15 = math.rsqrt %14 : vector<1x128xf32>
    %16 = arith.mulf %12, %15 : vector<1x128xf32>
    %c0_12 = arith.constant 0 : index
    %c0_13 = arith.constant 0 : index
    %17 = vector.load %arg5[%c0_12, %c0_13] : memref<1x128xf32, #tpu.memory_space<vmem>>, vector<1x128xf32>
    %18 = arith.mulf %5, %16 : vector<1x128xf32>
    %19 = arith.subf %17, %18 : vector<1x128xf32>
    %c0_14 = arith.constant 0 : index
    %c0_15 = arith.constant 0 : index
    %20 = vector.load %arg1[%c0_14, %c0_15] : memref<128x128xbf16, #tpu.memory_space<vmem>>, vector<128x128xbf16>
    %21 = arith.extf %20 : vector<128x128xbf16> to vector<128x128xf32>
    %22 = vector.broadcast %16 : vector<1x128xf32> to vector<128x128xf32>
    %23 = arith.mulf %21, %22 : vector<128x128xf32>
    %24 = vector.broadcast %19 : vector<1x128xf32> to vector<128x128xf32>
    %25 = arith.addf %23, %24 : vector<128x128xf32>
    %c0_16 = arith.constant 0 : index
    %c0_17 = arith.constant 0 : index
    %26 = vector.load %arg6[%c0_16, %c0_17] : memref<128x128xf32, #tpu.memory_space<vmem>>, vector<128x128xf32>
    %27 = arith.addf %25, %26 : vector<128x128xf32>
    %cst_18 = arith.constant 0.000000e+00 : f32
    %28 = vector.broadcast %cst_18 : f32 to vector<128x128xf32>
    %29 = arith.maximumf %27, %28 : vector<128x128xf32>
    %c0_19 = arith.constant 0 : index
    %c0_20 = arith.constant 0 : index
    %30 = vector.load %arg7[%c0_19, %c0_20] : memref<128x128xf32, #tpu.memory_space<vmem>>, vector<128x128xf32>
    tpu.vector_store %arg7[%c0_19, %c0_20], %29 {strides = array<i32>} : memref<128x128xf32, #tpu.memory_space<vmem>>, vector<128x128xf32>,
    return
  }
  func.func @transform_0(%arg0: i32) -> (i32, i32) {
    %c0_i32 = arith.constant 0 : i32
    %c0_i32_0 = arith.constant 0 : i32
    return %arg0, %c0_i32 : i32, i32
  }
  func.func @transform_1(%arg0: i32) -> (i32, i32, i32) {
    %c0_i32 = arith.constant 0 : i32
    %c0_i32_0 = arith.constant 0 : i32
    %c0_i32_1 = arith.constant 0 : i32
    %c0_i32_2 = arith.constant 0 : i32
    return %c0_i32, %c0_i32_0, %c0_i32_1 : i32, i32, i32
  }
  func.func @transform_2(%arg0: i32) -> (i32, i32, i32) {
    %c0_i32 = arith.constant 0 : i32
    %c0_i32_0 = arith.constant 0 : i32
    %c0_i32_1 = arith.constant 0 : i32
    %c0_i32_2 = arith.constant 0 : i32
    return %c0_i32, %c0_i32_0, %c0_i32_1 : i32, i32, i32
  }
  func.func @transform_3(%arg0: i32) -> (i32, i32) {
    %c0_i32 = arith.constant 0 : i32
    %c0_i32_0 = arith.constant 0 : i32
    %c0_i32_1 = arith.constant 0 : i32
    return %c0_i32, %c0_i32_0 : i32, i32
  }
  func.func @transform_4(%arg0: i32) -> (i32, i32) {
    %c0_i32 = arith.constant 0 : i32
    %c0_i32_0 = arith.constant 0 : i32
    %c0_i32_1 = arith.constant 0 : i32
    return %c0_i32, %c0_i32_0 : i32, i32
  }
  func.func @transform_5(%arg0: i32) -> (i32, i32) {
    %c0_i32 = arith.constant 0 : i32
    %c0_i32_0 = arith.constant 0 : i32
    return %arg0, %c0_i32 : i32, i32
  }
  func.func @transform_6(%arg0: i32) -> (i32, i32) {
    %c0_i32 = arith.constant 0 : i32
    %c0_i32_0 = arith.constant 0 : i32
    return %arg0, %c0_i32 : i32, i32
  }
}

</mosaic_0001>

<llo_original>
// kernel: bottleneck_forward.6
$region0: #{bottleneck_forward.6}
  #allocation0 [shape = 'u32[]', space=smem, size = 0x4, offset = 0x4, fixed_abs, tag = 'smem constant byte address 0x4 - core index']
  #allocation1 [shape = 'u32[144,128]{1,0:T(1,128)}', space=vmem, size = 0x12000, scoped, tag = 'internal scratch']
  #allocation2 [shape = 'f32[128,128]{1,0:T(8,128)}', space=vmem, size = 0x10000, scoped, tag = 'scratch operand']
  %s0 = inlined_call_operand.vmem [shape: bf16[512,128], index: 0, kind: input, shape index: {}]
  %s1 = inlined_call_operand.vmem [shape: f32[2,1,128], index: 1, kind: input, shape index: {}]
  %s2 = inlined_call_operand.vmem [shape: f32[2,1,128], index: 2, kind: input, shape index: {}]
  %s3 = inlined_call_operand.vmem [shape: f32[1,128], index: 3, kind: input, shape index: {}]
  %s4 = inlined_call_operand.vmem [shape: f32[1,128], index: 4, kind: input, shape index: {}]
  %s5 = inlined_call_operand.vmem [shape: bf16[128,128], index: 5, kind: input, shape index: {}]
  %s6 = inlined_call_operand.vmem [shape: bf16[512,128], index: 6, kind: output, shape index: {0}]
  %s7 = inlined_call_operand.vmem [shape: f32[4,1,128], index: 7, kind: output, shape index: {1}]
  %s8 = inlined_call_operand.vmem [shape: f32[4,1,128], index: 8, kind: output, shape index: {2}]
  %9 = xla_tuple %s6, %s7, %s8
  %s10 = sld [smem:[#allocation0]]
  $region81: #{bottleneck_forward.6} parent=0
    _
  %s12 = ssub.s32 1, %s10
  %s13 = scalar_select 0, %s12, %s10
  loop: start=0, step=1, limit=6
  $region2: #{bottleneck_forward.6} parent=0 // loop_pre_header
    _
  $region3: #{bottleneck_forward.6} parent=0 // loop_header
    %s15 = sphi 0, %s19
    %p16 = scmp.ge.s32.totalorder %s15, 6
    %s22 = sphi 0, %s34
    %s23 = sphi 0, %s30
    %s24 = sphi 0, %s22
    %s25 = sphi 0, %s23
    %s26 = sphi 0, %s24
    %s27 = sphi 0, %s25
    %s39 = sphi 0, %s41
    %s42 = sphi 0, %s39
    %s43 = sphi 0, %s42
    %s59 = sphi 0, %s43
    %s65 = sphi 0, %s67
    %s68 = sphi 0, %s65
    %s69 = sphi 0, %s68
    %s85 = sphi 0, %s69
    %s91 = sphi 0, %s93
    %s94 = sphi 0, %s91
    %s95 = sphi 0, %s94
    %s111 = sphi 0, %s95
    %s117 = sphi 0, %s119
    %s120 = sphi 0, %s117
    %s121 = sphi 0, %s120
    %s137 = sphi 0, %s121
    %s143 = sphi 0, %s145
    %s146 = sphi 0, %s143
    %s147 = sphi 0, %s146
    %s163 = sphi 0, %s147
    %s169 = sphi 0, %s171
    %s172 = sphi 0, %s169
    %s173 = sphi 0, %s172
    %s189 = sphi 0, %s173
    %s195 = sphi 0, %s197
    %s198 = sphi 0, %s195
    %s199 = sphi 0, %s198
    %s215 = sphi 0, %s199
    %s221 = sphi 0, %s223
    %s224 = sphi 0, %s221
    %s225 = sphi 0, %s224
    %s241 = sphi 0, %s225
    %s247 = sphi 0, %s249
    %s250 = sphi 0, %s247
    %s251 = sphi 0, %s250
    %s267 = sphi 0, %s251
  $region4: #{bottleneck_forward.6} parent=0 // loop_header_branch
    %18 = sbr.rel (%p16) target = $region8
  $region5: #{bottleneck_forward.6} parent=0 // loop_body
    %s20 = ssub.s32 %s15, 1
    %s21 = ssub.s32 %s15, 2
    %s28 = sadd.s32 1, %s23
    %p29 = scmp.ge.s32.totalorder %s28, 1
    %s30 = scalar_select %p29, 0, %s28
    %s31 = sadd.s32 1, %s22
    %s32 = scalar_select %p29, %s31, %s22
    %p33 = scmp.ge.s32.totalorder %s32, 4
    %s34 = scalar_select %p33, 0, %s32
    %s35 = ssub.s32 %s22, %s34
    %s36 = ssub.s32 %s23, %s30
    %s37 = sor.u32 %s35, %s36
    %p38 = scmp.eq.s32.totalorder %s37, 0
    %s40 = sadd.s32 %s39, 1
    %s41 = scalar_select %p38, %s39, %s40
    %p44 = pneg %p38
    %p45 = scmp.eq.s32.totalorder %s15, 3
    %p46 = por %p44, %p45
    %p47 = scmp.ne.s32.totalorder %s39, %s42
    %p48 = scmp.eq.s32.totalorder %s15, 0
    %p49 = por %p47, %p48
    %p50 = scmp.ne.s32.totalorder %s39, %s42
    %p51 = scmp.eq.s32.totalorder %s20, 3
    %p52 = por %p50, %p51
    %p53 = scmp.ne.s32.totalorder %s42, %s43
    %p54 = scmp.eq.s32.totalorder %s20, 0
    %p55 = por %p53, %p54
    %p56 = scmp.ne.s32.totalorder %s42, %s43
    %p57 = scmp.eq.s32.totalorder %s21, 3
    %p58 = por %p56, %p57
    %p60 = scmp.ne.s32.totalorder %s43, %s59
    %p61 = scmp.eq.s32.totalorder %s21, 0
    %p62 = por %p60, %p61
    %s63 = ssub.s32 %s23, %s30
    %p64 = scmp.eq.s32.totalorder %s63, 0
    %s66 = sadd.s32 %s65, 1
    %s67 = scalar_select %p64, %s65, %s66
    %p70 = pneg %p64
    %p71 = scmp.eq.s32.totalorder %s15, 3
    %p72 = por %p70, %p71
    %p73 = scmp.ne.s32.totalorder %s65, %s68
    %p74 = scmp.eq.s32.totalorder %s15, 0
    %p75 = por %p73, %p74
    %p76 = scmp.ne.s32.totalorder %s65, %s68
    %p77 = scmp.eq.s32.totalorder %s20, 3
    %p78 = por %p76, %p77
    %p79 = scmp.ne.s32.totalorder %s68, %s69
    %p80 = scmp.eq.s32.totalorder %s20, 0
    %p81 = por %p79, %p80
    %p82 = scmp.ne.s32.totalorder %s68, %s69
    %p83 = scmp.eq.s32.totalorder %s21, 3
    %p84 = por %p82, %p83
    %p86 = scmp.ne.s32.totalorder %s69, %s85
    %p87 = scmp.eq.s32.totalorder %s21, 0
    %p88 = por %p86, %p87
    %s89 = ssub.s32 %s23, %s30
    %p90 = scmp.eq.s32.totalorder %s89, 0
    %s92 = sadd.s32 %s91, 1
    %s93 = scalar_select %p90, %s91, %s92
    %p96 = pneg %p90
    %p97 = scmp.eq.s32.totalorder %s15, 3
    %p98 = por %p96, %p97
    %p99 = scmp.ne.s32.totalorder %s91, %s94
    %p100 = scmp.eq.s32.totalorder %s15, 0
    %p101 = por %p99, %p100
    %p102 = scmp.ne.s32.totalorder %s91, %s94
    %p103 = scmp.eq.s32.totalorder %s20, 3
    %p104 = por %p102, %p103
    %p105 = scmp.ne.s32.totalorder %s94, %s95
    %p106 = scmp.eq.s32.totalorder %s20, 0
    %p107 = por %p105, %p106
    %p108 = scmp.ne.s32.totalorder %s94, %s95
    %p109 = scmp.eq.s32.totalorder %s21, 3
    %p110 = por %p108, %p109
    %p112 = scmp.ne.s32.totalorder %s95, %s111
    %p113 = scmp.eq.s32.totalorder %s21, 0
    %p114 = por %p112, %p113
    %s115 = ssub.s32 %s23, %s30
    %p116 = scmp.eq.s32.totalorder %s115, 0
    %s118 = sadd.s32 %s117, 1
    %s119 = scalar_select %p116, %s117, %s118
    %p122 = pneg %p116
    %p123 = scmp.eq.s32.totalorder %s15, 3
    %p124 = por %p122, %p123
    %p125 = scmp.ne.s32.totalorder %s117, %s120
    %p126 = scmp.eq.s32.totalorder %s15, 0
    %p127 = por %p125, %p126
    %p128 = scmp.ne.s32.totalorder %s117, %s120
    %p129 = scmp.eq.s32.totalorder %s20, 3
    %p130 = por %p128, %p129
    %p131 = scmp.ne.s32.totalorder %s120, %s121
    %p132 = scmp.eq.s32.totalorder %s20, 0
    %p133 = por %p131, %p132
    %p134 = scmp.ne.s32.totalorder %s120, %s121
    %p135 = scmp.eq.s32.totalorder %s21, 3
    %p136 = por %p134, %p135
    %p138 = scmp.ne.s32.totalorder %s121, %s137
    %p139 = scmp.eq.s32.totalorder %s21, 0
    %p140 = por %p138, %p139
    %s141 = ssub.s32 %s23, %s30
    %p142 = scmp.eq.s32.totalorder %s141, 0
    %s144 = sadd.s32 %s143, 1
    %s145 = scalar_select %p142, %s143, %s144
    %p148 = pneg %p142
    %p149 = scmp.eq.s32.totalorder %s15, 3
    %p150 = por %p148, %p149
    %p151 = scmp.ne.s32.totalorder %s143, %s146
    %p152 = scmp.eq.s32.totalorder %s15, 0
    %p153 = por %p151, %p152
    %p154 = scmp.ne.s32.totalorder %s143, %s146
    %p155 = scmp.eq.s32.totalorder %s20, 3
    %p156 = por %p154, %p155
    %p157 = scmp.ne.s32.totalorder %s146, %s147
    %p158 = scmp.eq.s32.totalorder %s20, 0
    %p159 = por %p157, %p158
    %p160 = scmp.ne.s32.totalorder %s146, %s147
    %p161 = scmp.eq.s32.totalorder %s21, 3
    %p162 = por %p160, %p161
    %p164 = scmp.ne.s32.totalorder %s147, %s163
    %p165 = scmp.eq.s32.totalorder %s21, 0
    %p166 = por %p164, %p165
    %s167 = ssub.s32 %s23, %s30
    %p168 = scmp.eq.s32.totalorder %s167, 0
    %s170 = sadd.s32 %s169, 1
    %s171 = scalar_select %p168, %s169, %s170
    %p174 = pneg %p168
    %p175 = scmp.eq.s32.totalorder %s15, 3
    %p176 = por %p174, %p175
    %p177 = scmp.ne.s32.totalorder %s169, %s172
    %p178 = scmp.eq.s32.totalorder %s15, 0
    %p179 = por %p177, %p178
    %p180 = scmp.ne.s32.totalorder %s169, %s172
    %p181 = scmp.eq.s32.totalorder %s20, 3
    %p182 = por %p180, %p181
    %p183 = scmp.ne.s32.totalorder %s172, %s173
    %p184 = scmp.eq.s32.totalorder %s20, 0
    %p185 = por %p183, %p184
    %p186 = scmp.ne.s32.totalorder %s172, %s173
    %p187 = scmp.eq.s32.totalorder %s21, 3
    %p188 = por %p186, %p187
    %p190 = scmp.ne.s32.totalorder %s173, %s189
    %p191 = scmp.eq.s32.totalorder %s21, 0
    %p192 = por %p190, %p191
    %s193 = ssub.s32 %s22, %s34
    %p194 = scmp.eq.s32.totalorder %s193, 0
    %s196 = sadd.s32 %s195, 1
    %s197 = scalar_select %p194, %s195, %s196
    %p200 = pneg %p194
    %p201 = scmp.eq.s32.totalorder %s15, 3
    %p202 = por %p200, %p201
    %p203 = scmp.ne.s32.totalorder %s195, %s198
    %p204 = scmp.eq.s32.totalorder %s15, 0
    %p205 = por %p203, %p204
    %p206 = scmp.ne.s32.totalorder %s195, %s198
    %p207 = scmp.eq.s32.totalorder %s20, 3
    %p208 = por %p206, %p207
    %p209 = scmp.ne.s32.totalorder %s198, %s199
    %p210 = scmp.eq.s32.totalorder %s20, 0
    %p211 = por %p209, %p210
    %p212 = scmp.ne.s32.totalorder %s198, %s199
    %p213 = scmp.eq.s32.totalorder %s21, 3
    %p214 = por %p212, %p213
    %p216 = scmp.ne.s32.totalorder %s199, %s215
    %p217 = scmp.eq.s32.totalorder %s21, 0
    %p218 = por %p216, %p217
    %s219 = ssub.s32 %s22, %s34
    %p220 = scmp.eq.s32.totalorder %s219, 0
    %s222 = sadd.s32 %s221, 1
    %s223 = scalar_select %p220, %s221, %s222
    %p226 = pneg %p220
    %p227 = scmp.eq.s32.totalorder %s15, 3
    %p228 = por %p226, %p227
    %p229 = scmp.ne.s32.totalorder %s221, %s224
    %p230 = scmp.eq.s32.totalorder %s15, 0
    %p231 = por %p229, %p230
    %p232 = scmp.ne.s32.totalorder %s221, %s224
    %p233 = scmp.eq.s32.totalorder %s20, 3
    %p234 = por %p232, %p233
    %p235 = scmp.ne.s32.totalorder %s224, %s225
    %p236 = scmp.eq.s32.totalorder %s20, 0
    %p237 = por %p235, %p236
    %p238 = scmp.ne.s32.totalorder %s224, %s225
    %p239 = scmp.eq.s32.totalorder %s21, 3
    %p240 = por %p238, %p239
    %p242 = scmp.ne.s32.totalorder %s225, %s241
    %p243 = scmp.eq.s32.totalorder %s21, 0
    %p244 = por %p242, %p243
    %s245 = ssub.s32 %s22, %s34
    %p246 = scmp.eq.s32.totalorder %s245, 0
    %s248 = sadd.s32 %s247, 1
    %s249 = scalar_select %p246, %s247, %s248
    %p252 = pneg %p246
    %p253 = scmp.eq.s32.totalorder %s15, 3
    %p254 = por %p252, %p253
    %p255 = scmp.ne.s32.totalorder %s247, %s250
    %p256 = scmp.eq.s32.totalorder %s15, 0
    %p257 = por %p255, %p256
    %p258 = scmp.ne.s32.totalorder %s247, %s250
    %p259 = scmp.eq.s32.totalorder %s20, 3
    %p260 = por %p258, %p259
    %p261 = scmp.ne.s32.totalorder %s250, %s251
    %p262 = scmp.eq.s32.totalorder %s20, 0
    %p263 = por %p261, %p262
    %p264 = scmp.ne.s32.totalorder %s250, %s251
    %p265 = scmp.eq.s32.totalorder %s21, 3
    %p266 = por %p264, %p265
    %p268 = scmp.ne.s32.totalorder %s251, %s267
    %p269 = scmp.eq.s32.totalorder %s21, 0
    %p270 = por %p268, %p269
    %p271 = scmp.le.s32.totalorder 1, %s15
    %p272 = scmp.lt.s32.totalorder %s15, 5
    %p273 = pnand %p271, %p272
    %p274 = pneg %p273
    // Predicated region
    $region9: #{bottleneck_forward.6} parent=5 // pred_check
      _
    $region10: #{bottleneck_forward.6} parent=5 // pred_check_branch
      %276 = sbr.rel (%p273) target = $region12
    $region11: #{bottleneck_forward.6} parent=5 // pred_region
      %s277 = ssub.s32 %s15, 1
      // Predicated region
      $region13: #{bottleneck_forward.6} parent=11 // pred_check
        %p278 = pneg %p81
      $region14: #{bottleneck_forward.6} parent=11 // pred_check_branch
        %280 = sbr.rel (%p278) target = $region16
      $region15: #{bottleneck_forward.6} parent=11 // pred_region
        %p281 = scmp.lt.s32.totalorder %s25, 0
        %s282 = scalar_select %p281, %s25, 0
        %s283 = scalar_lea.vmem %s1, %s282
      $region16: #{bottleneck_forward.6} parent=11 // pred_fallthru
        _
      // Predicated region
      $region17: #{bottleneck_forward.6} parent=11 // pred_check
        %p284 = pneg %p107
      $region18: #{bottleneck_forward.6} parent=11 // pred_check_branch
        %286 = sbr.rel (%p284) target = $region20
      $region19: #{bottleneck_forward.6} parent=11 // pred_region
        %p287 = scmp.lt.s32.totalorder %s25, 0
        %s288 = scalar_select %p287, %s25, 0
        %s289 = scalar_lea.vmem %s2, %s288
      $region20: #{bottleneck_forward.6} parent=11 // pred_fallthru
        _
      // Predicated region
      $region21: #{bottleneck_forward.6} parent=11 // pred_check
        %p290 = pneg %p133
      $region22: #{bottleneck_forward.6} parent=11 // pred_check_branch
        %292 = sbr.rel (%p290) target = $region24
      $region23: #{bottleneck_forward.6} parent=11 // pred_region
        %p293 = scmp.lt.s32.totalorder %s25, 0
        %s294 = scalar_select %p293, %s25, 0
        %s295 = scalar_lea.vmem %s3, %s294
      $region24: #{bottleneck_forward.6} parent=11 // pred_fallthru
        _
      // Predicated region
      $region25: #{bottleneck_forward.6} parent=11 // pred_check
        %p296 = pneg %p159
      $region26: #{bottleneck_forward.6} parent=11 // pred_check_branch
        %298 = sbr.rel (%p296) target = $region28
      $region27: #{bottleneck_forward.6} parent=11 // pred_region
        %p299 = scmp.lt.s32.totalorder %s25, 0
        %s300 = scalar_select %p299, %s25, 0
        %s301 = scalar_lea.vmem %s4, %s300
      $region28: #{bottleneck_forward.6} parent=11 // pred_fallthru
        _
      // Predicated region
      $region29: #{bottleneck_forward.6} parent=11 // pred_check
        %p302 = pneg %p185
      $region30: #{bottleneck_forward.6} parent=11 // pred_check_branch
        %304 = sbr.rel (%p302) target = $region32
      $region31: #{bottleneck_forward.6} parent=11 // pred_region
        %s305 = smul.u32 16, %s25
        %p306 = scmp.lt.s32.totalorder %s305, 15
        %s307 = scalar_select %p306, %s305, 15
        %s308 = smul.addr %s307, 4
        %s309 = scalar_lea.vmem %s5, %s308
        %s310 = smul.u32 16, %s25
      $region32: #{bottleneck_forward.6} parent=11 // pred_fallthru
        _
    $region12: #{bottleneck_forward.6} parent=5 // pred_fallthru
      _
    %p311 = scmp.lt.s32.totalorder %s15, 4
    // Predicated region
    $region33: #{bottleneck_forward.6} parent=5 // pred_check
      %p312 = pneg %p311
    $region34: #{bottleneck_forward.6} parent=5 // pred_check_branch
      %314 = sbr.rel (%p312) target = $region36
    $region35: #{bottleneck_forward.6} parent=5 // pred_region
      // Predicated region
      $region37: #{bottleneck_forward.6} parent=35 // pred_check
        %p315 = pneg %p49
      $region38: #{bottleneck_forward.6} parent=35 // pred_check_branch
        %317 = sbr.rel (%p315) target = $region40
      $region39: #{bottleneck_forward.6} parent=35 // pred_region
        %s318 = smul.u32 16, %s22
        %p319 = scmp.lt.s32.totalorder %s318, 63
        %s320 = scalar_select %p319, %s318, 63
        %p321 = scmp.lt.s32.totalorder %s23, 0
        %s322 = scalar_select %p321, %s23, 0
        %s323 = sadd.s32 %s322, %s320
        %s324 = smul.addr %s323, 4
        %s325 = scalar_lea.vmem %s0, %s324
        %s326 = smul.u32 16, %s22
      $region40: #{bottleneck_forward.6} parent=35 // pred_fallthru
        _
    $region36: #{bottleneck_forward.6} parent=5 // pred_fallthru
      _
    %p327 = scmp.le.s32.totalorder 1, %s15
    %p328 = scmp.lt.s32.totalorder %s15, 5
    %p329 = pnand %p327, %p328
    %p330 = pneg %p329
    // Predicated region
    $region41: #{bottleneck_forward.6} parent=5 // pred_check
      _
    $region42: #{bottleneck_forward.6} parent=5 // pred_check_branch
      %332 = sbr.rel (%p329) target = $region44
    $region43: #{bottleneck_forward.6} parent=5 // pred_region
      %s333 = ssub.s32 %s15, 1
      %s334 = smul.u32 16, %s24
      %p335 = scmp.lt.s32.totalorder %s334, 63
      %s336 = scalar_select %p335, %s334, 63
      %p337 = scmp.lt.s32.totalorder %s25, 0
      %s338 = scalar_select %p337, %s25, 0
      %s339 = sadd.s32 %s338, %s336
      %s340 = smul.addr %s339, 4
      %s341 = scalar_lea.vmem %s0, %s340
      %p342 = pneg %p55
      %p343 = pneg %p52
      %p344 = scmp.lt.s32.totalorder %s25, 0
      %s345 = scalar_select %p344, %s25, 0
      %s346 = scalar_lea.vmem %s1, %s345
      %p347 = pneg %p81
      %p348 = pneg %p78
      %p349 = scmp.lt.s32.totalorder %s25, 0
      %s350 = scalar_select %p349, %s25, 0
      %s351 = scalar_lea.vmem %s2, %s350
      %p352 = pneg %p107
      %p353 = pneg %p104
      %p354 = scmp.lt.s32.totalorder %s25, 0
      %s355 = scalar_select %p354, %s25, 0
      %s356 = scalar_lea.vmem %s3, %s355
      %p357 = pneg %p133
      %p358 = pneg %p130
      %p359 = scmp.lt.s32.totalorder %s25, 0
      %s360 = scalar_select %p359, %s25, 0
      %s361 = scalar_lea.vmem %s4, %s360
      %p362 = pneg %p159
      %p363 = pneg %p156
      %s364 = smul.u32 16, %s25
      %p365 = scmp.lt.s32.totalorder %s364, 15
      %s366 = scalar_select %p365, %s364, 15
      %s367 = smul.addr %s366, 4
      %s368 = scalar_lea.vmem %s5, %s367
      %p369 = pneg %p185
      %p370 = pneg %p182
      %p371 = pneg %p211
      %p372 = pneg %p208
      %s373 = smul.u32 16, %s24
      %p374 = scmp.lt.s32.totalorder %s373, 63
      %s375 = scalar_select %p374, %s373, 63
      %s376 = smul.addr %s375, 4
      %s377 = scalar_lea.vmem %s6, %s376
      %p378 = pneg %p237
      %p379 = pneg %p234
      %p380 = scmp.lt.s32.totalorder %s24, 3
      %s381 = scalar_select %p380, %s24, 3
      %s382 = scalar_lea.vmem %s7, %s381
      %p383 = pneg %p263
      %p384 = pneg %p260
      %p385 = scmp.lt.s32.totalorder %s24, 3
      %s386 = scalar_select %p385, %s24, 3
      %s387 = scalar_lea.vmem %s8, %s386
      %s388 = smul.u32 16, %s24
      %p389 = scmp.lt.s32.totalorder %s388, 63
      %s390 = scalar_select %p389, %s388, 63
      %p391 = scmp.lt.s32.totalorder %s25, 0
      %s392 = scalar_select %p391, %s25, 0
      %s393 = sadd.s32 %s392, %s390
      %s394 = smul.addr %s393, 4
      %s395 = scalar_lea.vmem %s0, %s394
      %s396 = smul.u32 16, %s24
      %p397 = scmp.lt.s32.totalorder %s25, 0
      %s398 = scalar_select %p397, %s25, 0
      %s399 = scalar_lea.vmem %s1, %s398
      %p400 = scmp.lt.s32.totalorder %s25, 0
      %s401 = scalar_select %p400, %s25, 0
      %s402 = scalar_lea.vmem %s2, %s401
      %p403 = scmp.lt.s32.totalorder %s25, 0
      %s404 = scalar_select %p403, %s25, 0
      %s405 = scalar_lea.vmem %s3, %s404
      %p406 = scmp.lt.s32.totalorder %s25, 0
      %s407 = scalar_select %p406, %s25, 0
      %s408 = scalar_lea.vmem %s4, %s407
      %s409 = smul.u32 16, %s25
      %p410 = scmp.lt.s32.totalorder %s409, 15
      %s411 = scalar_select %p410, %s409, 15
      %s412 = smul.addr %s411, 4
      %s413 = scalar_lea.vmem %s5, %s412
      %s414 = smul.u32 16, %s25
      %s415 = smul.u32 16, %s24
      %p416 = scmp.lt.s32.totalorder %s415, 63
      %s417 = scalar_select %p416, %s415, 63
      %s418 = smul.addr %s417, 4
      %s419 = scalar_lea.vmem %s6, %s418
      %s420 = smul.u32 16, %s24
      %p421 = scmp.lt.s32.totalorder %s24, 3
      %s422 = scalar_select %p421, %s24, 3
      %s423 = scalar_lea.vmem %s7, %s422
      %p424 = scmp.lt.s32.totalorder %s24, 3
      %s425 = scalar_select %p424, %s24, 3
      %s426 = scalar_lea.vmem %s8, %s425
      %p428 = scmp.eq.s32.totalorder %s25, 0
      // Predicated region
      $region45: #{bottleneck_forward.6} parent=43 // pred_check
        %p429 = pneg %p428
      $region46: #{bottleneck_forward.6} parent=43 // pred_check_branch
        %431 = sbr.rel (%p429) target = $region48
      $region47: #{bottleneck_forward.6} parent=43 // pred_region
        %432 = vst [vmem:[#allocation2] sm:$0xff] 0.0
        %433 = vst [vmem:[#allocation2 + $0x8] sm:$0xff] 0.0
        %434 = vst [vmem:[#allocation2 + $0x10] sm:$0xff] 0.0
        %435 = vst [vmem:[#allocation2 + $0x18] sm:$0xff] 0.0
        %436 = vst [vmem:[#allocation2 + $0x20] sm:$0xff] 0.0
        %437 = vst [vmem:[#allocation2 + $0x28] sm:$0xff] 0.0
        %438 = vst [vmem:[#allocation2 + $0x30] sm:$0xff] 0.0
        %439 = vst [vmem:[#allocation2 + $0x38] sm:$0xff] 0.0
        %440 = vst [vmem:[#allocation2 + $0x40] sm:$0xff] 0.0
        %441 = vst [vmem:[#allocation2 + $0x48] sm:$0xff] 0.0
        %442 = vst [vmem:[#allocation2 + $0x50] sm:$0xff] 0.0
        %443 = vst [vmem:[#allocation2 + $0x58] sm:$0xff] 0.0
        %444 = vst [vmem:[#allocation2 + $0x60] sm:$0xff] 0.0
        %445 = vst [vmem:[#allocation2 + $0x68] sm:$0xff] 0.0
        %446 = vst [vmem:[#allocation2 + $0x70] sm:$0xff] 0.0
        %447 = vst [vmem:[#allocation2 + $0x78] sm:$0xff] 0.0
      $region48: #{bottleneck_forward.6} parent=43 // pred_fallthru
        _
      %v448 = vld [vmem:[%s395] sm:$0xf]
      %v449 = vld [vmem:[%s395 + $0x4] sm:$0xf]
      %v450 = vld [vmem:[%s395 + $0x8] sm:$0xf]
      %v451 = vld [vmem:[%s395 + $0xc] sm:$0xf]
      %v452 = vld [vmem:[%s395 + $0x10] sm:$0xf]
      %v453 = vld [vmem:[%s395 + $0x14] sm:$0xf]
      %v454 = vld [vmem:[%s395 + $0x18] sm:$0xf]
      %v455 = vld [vmem:[%s395 + $0x1c] sm:$0xf]
      %v456 = vld [vmem:[%s395 + $0x20] sm:$0xf]
      %v457 = vld [vmem:[%s395 + $0x24] sm:$0xf]
      %v458 = vld [vmem:[%s395 + $0x28] sm:$0xf]
      %v459 = vld [vmem:[%s395 + $0x2c] sm:$0xf]
      %v460 = vld [vmem:[%s395 + $0x30] sm:$0xf]
      %v461 = vld [vmem:[%s395 + $0x34] sm:$0xf]
      %v462 = vld [vmem:[%s395 + $0x38] sm:$0xf]
      %v463 = vld [vmem:[%s395 + $0x3c] sm:$0xf]
      %v464 = vld [vmem:[%s399] sm:$0x1]
      %v465 = vld [vmem:[%s399 + $0x1] sm:$0x1]
      %vm466 = vcmask 1040384
      %v467 = vsel %vm466, %v464, 0.0
      %v468 = vsel %vm466, %v465, 0.0
      %v469 = vadd.f32 %v467, %v468
      %v470 = vld [vmem:[%s402] sm:$0x1]
      %v471 = vld [vmem:[%s402 + $0x1] sm:$0x1]
      %v472 = vsel %vm466, %v470, 0.0
      %v473 = vsel %vm466, %v471, 0.0
      %v474 = vadd.f32 %v472, %v473
      %v475 = vmul.f32 %v469, 0.001953125
      %v476 = vmul.f32 %v474, 0.001953125
      %v477 = vmul.f32 %v475, %v475
      %v478 = vsub.f32 %v476, %v477
      %v479 = vmax.f32 %v478, 0.0
      %v480 = vld [vmem:[%s405] sm:$0x1]
      %v481 = vadd.f32 %v479, 1e-05
      %v482 = vrsqrt.pop %v481
      %v483 = vmul.f32 %v480, %v482
      %v484 = vld [vmem:[%s408] sm:$0x1]
      %v485 = vmul.f32 %v475, %v483
      %v486 = vsub.f32 %v484, %v485
      %v487 = vunpack.c.l.bf16 %v448
      %v488 = vunpack.c.l.bf16 %v449
      %v489 = vunpack.c.l.bf16 %v450
      %v490 = vunpack.c.l.bf16 %v451
      %v491 = vunpack.c.l.bf16 %v452
      %v492 = vunpack.c.l.bf16 %v453
      %v493 = vunpack.c.l.bf16 %v454
      %v494 = vunpack.c.l.bf16 %v455
      %v495 = vunpack.c.l.bf16 %v456
      %v496 = vunpack.c.l.bf16 %v457
      %v497 = vunpack.c.l.bf16 %v458
      %v498 = vunpack.c.l.bf16 %v459
      %v499 = vunpack.c.l.bf16 %v460
      %v500 = vunpack.c.l.bf16 %v461
      %v501 = vunpack.c.l.bf16 %v462
      %v502 = vunpack.c.l.bf16 %v463
      %v504 = vlaneseq
      %v505 = vshrl.u32 %v504, 7
      %v506 = vsub.s32 0, %v505
      %v507 = vrot.slane %v483, %v506
      %v509 = vmul.f32 %v487, %v507
      %v510 = vmul.f32 %v488, %v507
      %v511 = vmul.f32 %v489, %v507
      %v512 = vmul.f32 %v490, %v507
      %v513 = vmul.f32 %v491, %v507
      %v514 = vmul.f32 %v492, %v507
      %v515 = vmul.f32 %v493, %v507
      %v516 = vmul.f32 %v494, %v507
      %v517 = vmul.f32 %v495, %v507
      %v518 = vmul.f32 %v496, %v507
      %v519 = vmul.f32 %v497, %v507
      %v520 = vmul.f32 %v498, %v507
      %v521 = vmul.f32 %v499, %v507
      %v522 = vmul.f32 %v500, %v507
      %v523 = vmul.f32 %v501, %v507
      %v524 = vmul.f32 %v502, %v507
      %v526 = vlaneseq
      %v527 = vshrl.u32 %v526, 7
      %v528 = vsub.s32 0, %v527
      %v529 = vrot.slane %v486, %v528
      %v531 = vadd.f32 %v509, %v529
      %v532 = vadd.f32 %v510, %v529
      %v533 = vadd.f32 %v511, %v529
      %v534 = vadd.f32 %v512, %v529
      %v535 = vadd.f32 %v513, %v529
      %v536 = vadd.f32 %v514, %v529
      %v537 = vadd.f32 %v515, %v529
      %v538 = vadd.f32 %v516, %v529
      %v539 = vadd.f32 %v517, %v529
      %v540 = vadd.f32 %v518, %v529
      %v541 = vadd.f32 %v519, %v529
      %v542 = vadd.f32 %v520, %v529
      %v543 = vadd.f32 %v521, %v529
      %v544 = vadd.f32 %v522, %v529
      %v545 = vadd.f32 %v523, %v529
      %v546 = vadd.f32 %v524, %v529
      %v547 = vmax.f32 %v531, 0.0
      %v548 = vmax.f32 %v532, 0.0
      %v549 = vmax.f32 %v533, 0.0
      %v550 = vmax.f32 %v534, 0.0
      %v551 = vmax.f32 %v535, 0.0
      %v552 = vmax.f32 %v536, 0.0
      %v553 = vmax.f32 %v537, 0.0
      %v554 = vmax.f32 %v538, 0.0
      %v555 = vmax.f32 %v539, 0.0
      %v556 = vmax.f32 %v540, 0.0
      %v557 = vmax.f32 %v541, 0.0
      %v558 = vmax.f32 %v542, 0.0
      %v559 = vmax.f32 %v543, 0.0
      %v560 = vmax.f32 %v544, 0.0
      %v561 = vmax.f32 %v545, 0.0
      %v562 = vmax.f32 %v546, 0.0
      %v563 = vpack.c.bf16 %v548, %v547
      %v564 = vpack.c.bf16 %v550, %v549
      %v565 = vpack.c.bf16 %v552, %v551
      %v566 = vpack.c.bf16 %v554, %v553
      %v567 = vpack.c.bf16 %v556, %v555
      %v568 = vpack.c.bf16 %v558, %v557
      %v569 = vpack.c.bf16 %v560, %v559
      %v570 = vpack.c.bf16 %v562, %v561
      %v571 = vld [vmem:[#allocation2] sm:$0xff]
      %v572 = vld [vmem:[#allocation2 + $0x8] sm:$0xff]
      %v573 = vld [vmem:[#allocation2 + $0x10] sm:$0xff]
      %v574 = vld [vmem:[#allocation2 + $0x18] sm:$0xff]
      %v575 = vld [vmem:[#allocation2 + $0x20] sm:$0xff]
      %v576 = vld [vmem:[#allocation2 + $0x28] sm:$0xff]
      %v577 = vld [vmem:[#allocation2 + $0x30] sm:$0xff]
      %v578 = vld [vmem:[#allocation2 + $0x38] sm:$0xff]
      %v579 = vld [vmem:[#allocation2 + $0x40] sm:$0xff]
      %v580 = vld [vmem:[#allocation2 + $0x48] sm:$0xff]
      %v581 = vld [vmem:[#allocation2 + $0x50] sm:$0xff]
      %v582 = vld [vmem:[#allocation2 + $0x58] sm:$0xff]
      %v583 = vld [vmem:[#allocation2 + $0x60] sm:$0xff]
      %v584 = vld [vmem:[#allocation2 + $0x68] sm:$0xff]
      %v585 = vld [vmem:[#allocation2 + $0x70] sm:$0xff]
      %v586 = vld [vmem:[#allocation2 + $0x78] sm:$0xff]
      %v587 = vld [vmem:[%s413] sm:$0xf]
      %v588 = vld [vmem:[%s413 + $0x4] sm:$0xf]
      %v589 = vld [vmem:[%s413 + $0x8] sm:$0xf]
      %v590 = vld [vmem:[%s413 + $0xc] sm:$0xf]
      %v591 = vld [vmem:[%s413 + $0x10] sm:$0xf]
      %v592 = vld [vmem:[%s413 + $0x14] sm:$0xf]
      %v593 = vld [vmem:[%s413 + $0x18] sm:$0xf]
      %v594 = vld [vmem:[%s413 + $0x1c] sm:$0xf]
      %v595 = vld [vmem:[%s413 + $0x20] sm:$0xf]
      %v596 = vld [vmem:[%s413 + $0x24] sm:$0xf]
      %v597 = vld [vmem:[%s413 + $0x28] sm:$0xf]
      %v598 = vld [vmem:[%s413 + $0x2c] sm:$0xf]
      %v599 = vld [vmem:[%s413 + $0x30] sm:$0xf]
      %v600 = vld [vmem:[%s413 + $0x34] sm:$0xf]
      %v601 = vld [vmem:[%s413 + $0x38] sm:$0xf]
      %v602 = vld [vmem:[%s413 + $0x3c] sm:$0xf]
      %v619 = vunpack.c.l.b16 %v587
      %v620 = vunpack.c.l.b16 %v588
      %v621 = vunpack.c.l.b16 %v589
      %v622 = vunpack.c.l.b16 %v590
      %v623 = vunpack.c.l.b16 %v591
      %v624 = vunpack.c.l.b16 %v592
      %v625 = vunpack.c.l.b16 %v593
      %v626 = vunpack.c.l.b16 %v594
      %v627 = vunpack.c.l.b16 %v595
      %v628 = vunpack.c.l.b16 %v596
      %v629 = vunpack.c.l.b16 %v597
      %v630 = vunpack.c.l.b16 %v598
      %v631 = vunpack.c.l.b16 %v599
      %v632 = vunpack.c.l.b16 %v600
      %v633 = vunpack.c.l.b16 %v601
      %v634 = vunpack.c.l.b16 %v602
      %v635 = vpack.c.b16 %v620, %v619
      %v636 = vpack.c.b16 %v622, %v621
      %v637 = vpack.c.b16 %v624, %v623
      %v638 = vpack.c.b16 %v626, %v625
      %v639 = vpack.c.b16 %v628, %v627
      %v640 = vpack.c.b16 %v630, %v629
      %v641 = vpack.c.b16 %v632, %v631
      %v642 = vpack.c.b16 %v634, %v633
      %651 = vmatprep.subr.bf16.mxu0 0
      %652 = vmatpush1.bf16.msra.mxu0 %v635
      %653 = vmatprep.subr.bf16.mxu0 0
      %654 = vmatpush1.bf16.msra.mxu0 %v636
      %655 = vmatprep.subr.bf16.mxu0 0
      %656 = vmatpush1.bf16.msra.mxu0 %v637
      %657 = vmatprep.subr.bf16.mxu0 0
      %658 = vmatpush1.bf16.msra.mxu0 %v638
      %659 = vmatprep.subr.bf16.mxu0 0
      %660 = vmatpush1.bf16.msra.mxu0 %v639
      %661 = vmatprep.subr.bf16.mxu0 0
      %662 = vmatpush1.bf16.msra.mxu0 %v640
      %663 = vmatprep.subr.bf16.mxu0 0
      %664 = vmatpush1.bf16.msra.mxu0 %v641
      %665 = vmatprep.subr.bf16.mxu0 0
      %666 = vmatpush1.bf16.msra.mxu0 %v642
      %667 = vmatprep.subr.bf16.mxu0 0
      %668 = vmatpush1.bf16.msra.mxu0 0
      %669 = vmatprep.subr.bf16.mxu0 0
      %670 = vmatpush1.bf16.msra.mxu0 0
      %671 = vmatprep.subr.bf16.mxu0 0
      %672 = vmatpush1.bf16.msra.mxu0 0
      %673 = vmatprep.subr.bf16.mxu0 0
      %674 = vmatpush1.bf16.msra.mxu0 0
      %675 = vmatprep.subr.bf16.mxu0 0
      %676 = vmatpush1.bf16.msra.mxu0 0
      %677 = vmatprep.subr.bf16.mxu0 0
      %678 = vmatpush1.bf16.msra.mxu0 0
      %679 = vmatprep.subr.bf16.mxu0 0
      %680 = vmatpush1.bf16.msra.mxu0 0
      %681 = vmatprep.subr.bf16.mxu0 0
      %682 = vmatpush1.bf16.msra.mxu0 0
      %683 = vmatprep.mubr.bf16.mxu0 0
      %684 = vmatmul.mubr.bf16.gmra.mrb[0].mxu0 %v563
      %v685 = vpop.f32.mrb[0].mxu0
      %v686 = vadd.f32 0.0, %v685
      %v687 = vpop.f32.mrb[0].mxu0
      %v688 = vpop.f32.mrb[0].mxu0
      %v689 = vadd.f32 0.0, %v688
      %v690 = vpop.f32.mrb[0].mxu0
      %691 = vmatprep.mubr.bf16.mxu0 0
      %692 = vmatmul.mubr.bf16.gmra.mrb[0].mxu0 %v564
      %v693 = vpop.f32.mrb[0].mxu0
      %v694 = vadd.f32 0.0, %v693
      %v695 = vpop.f32.mrb[0].mxu0
      %v696 = vpop.f32.mrb[0].mxu0
      %v697 = vadd.f32 0.0, %v696
      %v698 = vpop.f32.mrb[0].mxu0
      %699 = vmatprep.mubr.bf16.mxu0 0
      %700 = vmatmul.mubr.bf16.gmra.mrb[0].mxu0 %v565
      %v701 = vpop.f32.mrb[0].mxu0
      %v702 = vadd.f32 0.0, %v701
      %v703 = vpop.f32.mrb[0].mxu0
      %v704 = vpop.f32.mrb[0].mxu0
      %v705 = vadd.f32 0.0, %v704
      %v706 = vpop.f32.mrb[0].mxu0
      %707 = vmatprep.mubr.bf16.mxu0 0
      %708 = vmatmul.mubr.bf16.gmra.mrb[0].mxu0 %v566
      %v709 = vpop.f32.mrb[0].mxu0
      %v710 = vadd.f32 0.0, %v709
      %v711 = vpop.f32.mrb[0].mxu0
      %v712 = vpop.f32.mrb[0].mxu0
      %v713 = vadd.f32 0.0, %v712
      %v714 = vpop.f32.mrb[0].mxu0
      %715 = vmatprep.mubr.bf16.mxu0 0
      %716 = vmatmul.mubr.bf16.gmra.mrb[0].mxu0 %v567
      %v717 = vpop.f32.mrb[0].mxu0
      %v718 = vadd.f32 0.0, %v717
      %v719 = vpop.f32.mrb[0].mxu0
      %v720 = vpop.f32.mrb[0].mxu0
      %v721 = vadd.f32 0.0, %v720
      %v722 = vpop.f32.mrb[0].mxu0
      %723 = vmatprep.mubr.bf16.mxu0 0
      %724 = vmatmul.mubr.bf16.gmra.mrb[0].mxu0 %v568
      %v725 = vpop.f32.mrb[0].mxu0
      %v726 = vadd.f32 0.0, %v725
      %v727 = vpop.f32.mrb[0].mxu0
      %v728 = vpop.f32.mrb[0].mxu0
      %v729 = vadd.f32 0.0, %v728
      %v730 = vpop.f32.mrb[0].mxu0
      %731 = vmatprep.mubr.bf16.mxu0 0
      %732 = vmatmul.mubr.bf16.gmra.mrb[0].mxu0 %v569
      %v733 = vpop.f32.mrb[0].mxu0
      %v734 = vadd.f32 0.0, %v733
      %v735 = vpop.f32.mrb[0].mxu0
      %v736 = vpop.f32.mrb[0].mxu0
      %v737 = vadd.f32 0.0, %v736
      %v738 = vpop.f32.mrb[0].mxu0
      %739 = vmatprep.mubr.bf16.mxu0 0
      %740 = vmatmul.mubr.bf16.gmra.mrb[0].mxu0 %v570
      %v741 = vpop.f32.mrb[0].mxu0
      %v742 = vadd.f32 0.0, %v741
      %v743 = vpop.f32.mrb[0].mxu0
      %v744 = vpop.f32.mrb[0].mxu0
      %v745 = vadd.f32 0.0, %v744
      %v746 = vpop.f32.mrb[0].mxu0
      %747 = vdwg.mxu0
      %v748 = vadd.f32 %v571, %v686
      %v749 = vadd.f32 %v572, %v689
      %v750 = vadd.f32 %v573, %v694
      %v751 = vadd.f32 %v574, %v697
      %v752 = vadd.f32 %v575, %v702
      %v753 = vadd.f32 %v576, %v705
      %v754 = vadd.f32 %v577, %v710
      %v755 = vadd.f32 %v578, %v713
      %v756 = vadd.f32 %v579, %v718
      %v757 = vadd.f32 %v580, %v721
      %v758 = vadd.f32 %v581, %v726
      %v759 = vadd.f32 %v582, %v729
      %v760 = vadd.f32 %v583, %v734
      %v761 = vadd.f32 %v584, %v737
      %v762 = vadd.f32 %v585, %v742
      %v763 = vadd.f32 %v586, %v745
      %764 = vst [vmem:[#allocation2] sm:$0xff] %v748
      %765 = vst [vmem:[#allocation2 + $0x8] sm:$0xff] %v749
      %766 = vst [vmem:[#allocation2 + $0x10] sm:$0xff] %v750
      %767 = vst [vmem:[#allocation2 + $0x18] sm:$0xff] %v751
      %768 = vst [vmem:[#allocation2 + $0x20] sm:$0xff] %v752
      %769 = vst [vmem:[#allocation2 + $0x28] sm:$0xff] %v753
      %770 = vst [vmem:[#allocation2 + $0x30] sm:$0xff] %v754
      %771 = vst [vmem:[#allocation2 + $0x38] sm:$0xff] %v755
      %772 = vst [vmem:[#allocation2 + $0x40] sm:$0xff] %v756
      %773 = vst [vmem:[#allocation2 + $0x48] sm:$0xff] %v757
      %774 = vst [vmem:[#allocation2 + $0x50] sm:$0xff] %v758
      %775 = vst [vmem:[#allocation2 + $0x58] sm:$0xff] %v759
      %776 = vst [vmem:[#allocation2 + $0x60] sm:$0xff] %v760
      %777 = vst [vmem:[#allocation2 + $0x68] sm:$0xff] %v761
      %778 = vst [vmem:[#allocation2 + $0x70] sm:$0xff] %v762
      %779 = vst [vmem:[#allocation2 + $0x78] sm:$0xff] %v763
      // Predicated region
      $region49: #{bottleneck_forward.6} parent=43 // pred_check
        %p780 = pneg %p428
      $region50: #{bottleneck_forward.6} parent=43 // pred_check_branch
        %782 = sbr.rel (%p780) target = $region52
      $region51: #{bottleneck_forward.6} parent=43 // pred_region
        %v783 = vld [vmem:[#allocation2] sm:$0xff]
        %v784 = vld [vmem:[#allocation2 + $0x8] sm:$0xff]
        %v785 = vld [vmem:[#allocation2 + $0x10] sm:$0xff]
        %v786 = vld [vmem:[#allocation2 + $0x18] sm:$0xff]
        %v787 = vld [vmem:[#allocation2 + $0x20] sm:$0xff]
        %v788 = vld [vmem:[#allocation2 + $0x28] sm:$0xff]
        %v789 = vld [vmem:[#allocation2 + $0x30] sm:$0xff]
        %v790 = vld [vmem:[#allocation2 + $0x38] sm:$0xff]
        %v791 = vld [vmem:[#allocation2 + $0x40] sm:$0xff]
        %v792 = vld [vmem:[#allocation2 + $0x48] sm:$0xff]
        %v793 = vld [vmem:[#allocation2 + $0x50] sm:$0xff]
        %v794 = vld [vmem:[#allocation2 + $0x58] sm:$0xff]
        %v795 = vld [vmem:[#allocation2 + $0x60] sm:$0xff]
        %v796 = vld [vmem:[#allocation2 + $0x68] sm:$0xff]
        %v797 = vld [vmem:[#allocation2 + $0x70] sm:$0xff]
        %v798 = vld [vmem:[#allocation2 + $0x78] sm:$0xff]
        %v799 = vpack.c.bf16 %v784, %v783
        %v800 = vpack.c.bf16 %v786, %v785
        %v801 = vpack.c.bf16 %v788, %v787
        %v802 = vpack.c.bf16 %v790, %v789
        %v803 = vpack.c.bf16 %v792, %v791
        %v804 = vpack.c.bf16 %v794, %v793
        %v805 = vpack.c.bf16 %v796, %v795
        %v806 = vpack.c.bf16 %v798, %v797
        %v815 = vunpack.c.l.b16 %v799
        %v816 = vunpack.c.h.b16 %v799
        %v817 = vunpack.c.l.b16 %v800
        %v818 = vunpack.c.h.b16 %v800
        %v819 = vunpack.c.l.b16 %v801
        %v820 = vunpack.c.h.b16 %v801
        %v821 = vunpack.c.l.b16 %v802
        %v822 = vunpack.c.h.b16 %v802
        %v823 = vunpack.c.l.b16 %v803
        %v824 = vunpack.c.h.b16 %v803
        %v825 = vunpack.c.l.b16 %v804
        %v826 = vunpack.c.h.b16 %v804
        %v827 = vunpack.c.l.b16 %v805
        %v828 = vunpack.c.h.b16 %v805
        %v829 = vunpack.c.l.b16 %v806
        %v830 = vunpack.c.h.b16 %v806
        %v831 = vpack.c.b16 %v815, %v815
        %v832 = vpack.c.b16 %v816, %v816
        %v833 = vpack.c.b16 %v817, %v817
        %v834 = vpack.c.b16 %v818, %v818
        %v835 = vpack.c.b16 %v819, %v819
        %v836 = vpack.c.b16 %v820, %v820
        %v837 = vpack.c.b16 %v821, %v821
        %v838 = vpack.c.b16 %v822, %v822
        %v839 = vpack.c.b16 %v823, %v823
        %v840 = vpack.c.b16 %v824, %v824
        %v841 = vpack.c.b16 %v825, %v825
        %v842 = vpack.c.b16 %v826, %v826
        %v843 = vpack.c.b16 %v827, %v827
        %v844 = vpack.c.b16 %v828, %v828
        %v845 = vpack.c.b16 %v829, %v829
        %v846 = vpack.c.b16 %v830, %v830
        %863 = vst [vmem:[%s419] sm:$0xf] %v831
        %864 = vst [vmem:[%s419 + $0x4] sm:$0xf] %v832
        %865 = vst [vmem:[%s419 + $0x8] sm:$0xf] %v833
        %866 = vst [vmem:[%s419 + $0xc] sm:$0xf] %v834
        %867 = vst [vmem:[%s419 + $0x10] sm:$0xf] %v835
        %868 = vst [vmem:[%s419 + $0x14] sm:$0xf] %v836
        %869 = vst [vmem:[%s419 + $0x18] sm:$0xf] %v837
        %870 = vst [vmem:[%s419 + $0x1c] sm:$0xf] %v838
        %871 = vst [vmem:[%s419 + $0x20] sm:$0xf] %v839
        %872 = vst [vmem:[%s419 + $0x24] sm:$0xf] %v840
        %873 = vst [vmem:[%s419 + $0x28] sm:$0xf] %v841
        %874 = vst [vmem:[%s419 + $0x2c] sm:$0xf] %v842
        %875 = vst [vmem:[%s419 + $0x30] sm:$0xf] %v843
        %876 = vst [vmem:[%s419 + $0x34] sm:$0xf] %v844
        %877 = vst [vmem:[%s419 + $0x38] sm:$0xf] %v845
        %878 = vst [vmem:[%s419 + $0x3c] sm:$0xf] %v846
        %v879 = vadd.f32 %v783, %v784
        %v880 = vadd.f32 %v879, %v785
        %v881 = vadd.f32 %v880, %v786
        %v882 = vadd.f32 %v881, %v787
        %v883 = vadd.f32 %v882, %v788
        %v884 = vadd.f32 %v883, %v789
        %v885 = vadd.f32 %v884, %v790
        %v886 = vadd.f32 %v885, %v791
        %v887 = vadd.f32 %v886, %v792
        %v888 = vadd.f32 %v887, %v793
        %v889 = vadd.f32 %v888, %v794
        %v890 = vadd.f32 %v889, %v795
        %v891 = vadd.f32 %v890, %v796
        %v892 = vadd.f32 %v891, %v797
        %v893 = vadd.f32 %v892, %v798
        %v894 = vrot.slane %v893, 4
        %v895 = vadd.f32 %v893, %v894
        %v896 = vrot.slane %v895, 2
        %v897 = vadd.f32 %v895, %v896
        %v898 = vrot.slane %v897, 1
        %v899 = vadd.f32 %v897, %v898
        %900 = vst [vmem:[%s423] sm:$0x1] %v899
        %v901 = vmul.f32 %v783, %v783
        %v902 = vmul.f32 %v784, %v784
        %v903 = vmul.f32 %v785, %v785
        %v904 = vmul.f32 %v786, %v786
        %v905 = vmul.f32 %v787, %v787
        %v906 = vmul.f32 %v788, %v788
        %v907 = vmul.f32 %v789, %v789
        %v908 = vmul.f32 %v790, %v790
        %v909 = vmul.f32 %v791, %v791
        %v910 = vmul.f32 %v792, %v792
        %v911 = vmul.f32 %v793, %v793
        %v912 = vmul.f32 %v794, %v794
        %v913 = vmul.f32 %v795, %v795
        %v914 = vmul.f32 %v796, %v796
        %v915 = vmul.f32 %v797, %v797
        %v916 = vmul.f32 %v798, %v798
        %v917 = vadd.f32 %v901, %v902
        %v918 = vadd.f32 %v917, %v903
        %v919 = vadd.f32 %v918, %v904
        %v920 = vadd.f32 %v919, %v905
        %v921 = vadd.f32 %v920, %v906
        %v922 = vadd.f32 %v921, %v907
        %v923 = vadd.f32 %v922, %v908
        %v924 = vadd.f32 %v923, %v909
        %v925 = vadd.f32 %v924, %v910
        %v926 = vadd.f32 %v925, %v911
        %v927 = vadd.f32 %v926, %v912
        %v928 = vadd.f32 %v927, %v913
        %v929 = vadd.f32 %v928, %v914
        %v930 = vadd.f32 %v929, %v915
        %v931 = vadd.f32 %v930, %v916
        %v932 = vrot.slane %v931, 4
        %v933 = vadd.f32 %v931, %v932
        %v934 = vrot.slane %v933, 2
        %v935 = vadd.f32 %v933, %v934
        %v936 = vrot.slane %v935, 1
        %v937 = vadd.f32 %v935, %v936
        %938 = vst [vmem:[%s426] sm:$0x1] %v937
      $region52: #{bottleneck_forward.6} parent=43 // pred_fallthru
        _
      %s939 = smul.u32 16, %s24
      %p940 = scmp.lt.s32.totalorder %s939, 63
      %s941 = scalar_select %p940, %s939, 63
      %s942 = smul.addr %s941, 4
      %s943 = scalar_lea.vmem %s6, %s942
      %p944 = scmp.lt.s32.totalorder %s24, 3
      %s945 = scalar_select %p944, %s24, 3
      %s946 = scalar_lea.vmem %s7, %s945
      %p947 = scmp.lt.s32.totalorder %s24, 3
      %s948 = scalar_select %p947, %s24, 3
      %s949 = scalar_lea.vmem %s8, %s948
      // Predicated region
      $region53: #{bottleneck_forward.6} parent=43 // pred_check
        %p950 = pneg %p208
      $region54: #{bottleneck_forward.6} parent=43 // pred_check_branch
        %952 = sbr.rel (%p950) target = $region56
      $region55: #{bottleneck_forward.6} parent=43 // pred_region
        %s953 = smul.u32 16, %s24
      $region56: #{bottleneck_forward.6} parent=43 // pred_fallthru
        _
      // Predicated region
      $region57: #{bottleneck_forward.6} parent=43 // pred_check
        %p954 = pneg %p234
      $region58: #{bottleneck_forward.6} parent=43 // pred_check_branch
        %956 = sbr.rel (%p954) target = $region60
      $region59: #{bottleneck_forward.6} parent=43 // pred_region
        _
      $region60: #{bottleneck_forward.6} parent=43 // pred_fallthru
        _
      // Predicated region
      $region61: #{bottleneck_forward.6} parent=43 // pred_check
        %p957 = pneg %p260
      $region62: #{bottleneck_forward.6} parent=43 // pred_check_branch
        %959 = sbr.rel (%p957) target = $region64
      $region63: #{bottleneck_forward.6} parent=43 // pred_region
        _
      $region64: #{bottleneck_forward.6} parent=43 // pred_fallthru
        _
    $region44: #{bottleneck_forward.6} parent=5 // pred_fallthru
      _
    %p960 = scmp.le.s32.totalorder 2, %s15
    // Predicated region
    $region65: #{bottleneck_forward.6} parent=5 // pred_check
      %p961 = pneg %p960
    $region66: #{bottleneck_forward.6} parent=5 // pred_check_branch
      %963 = sbr.rel (%p961) target = $region68
    $region67: #{bottleneck_forward.6} parent=5 // pred_region
      %s964 = ssub.s32 %s15, 2
      // Predicated region
      $region69: #{bottleneck_forward.6} parent=67 // pred_check
        %p965 = pneg %p214
      $region70: #{bottleneck_forward.6} parent=67 // pred_check_branch
        %967 = sbr.rel (%p965) target = $region72
      $region71: #{bottleneck_forward.6} parent=67 // pred_region
        %s968 = smul.u32 16, %s26
        %p969 = scmp.lt.s32.totalorder %s968, 63
        %s970 = scalar_select %p969, %s968, 63
        %s971 = smul.addr %s970, 4
        %s972 = scalar_lea.vmem %s6, %s971
      $region72: #{bottleneck_forward.6} parent=67 // pred_fallthru
        _
      // Predicated region
      $region73: #{bottleneck_forward.6} parent=67 // pred_check
        %p973 = pneg %p240
      $region74: #{bottleneck_forward.6} parent=67 // pred_check_branch
        %975 = sbr.rel (%p973) target = $region76
      $region75: #{bottleneck_forward.6} parent=67 // pred_region
        %p976 = scmp.lt.s32.totalorder %s26, 3
        %s977 = scalar_select %p976, %s26, 3
        %s978 = scalar_lea.vmem %s7, %s977
      $region76: #{bottleneck_forward.6} parent=67 // pred_fallthru
        _
      // Predicated region
      $region77: #{bottleneck_forward.6} parent=67 // pred_check
        %p979 = pneg %p266
      $region78: #{bottleneck_forward.6} parent=67 // pred_check_branch
        %981 = sbr.rel (%p979) target = $region80
      $region79: #{bottleneck_forward.6} parent=67 // pred_region
        %p982 = scmp.lt.s32.totalorder %s26, 3
        %s983 = scalar_select %p982, %s26, 3
        %s984 = scalar_lea.vmem %s8, %s983
      $region80: #{bottleneck_forward.6} parent=67 // pred_fallthru
        _
    $region68: #{bottleneck_forward.6} parent=5 // pred_fallthru
      _
  $region6: #{bottleneck_forward.6} parent=0 // loop_footer
    %s19 = sadd.s32 1, %s15
  $region7: #{bottleneck_forward.6} parent=0 // loop_footer_branch
    %14 = sbr.rel target = $region3
  $region8: #{bottleneck_forward.6} parent=0 // loop_exit
    _

// kernel: bottleneck_forward.4
$region0: #{bottleneck_forward.4}
  #allocation0 [shape = 'u32[]', space=smem, size = 0x4, offset = 0x4, fixed_abs, tag = 'smem constant byte address 0x4 - core index']
  #allocation1 [shape = 'u32[144,128]{1,0:T(1,128)}', space=vmem, size = 0x12000, scoped, tag = 'internal scratch']
  #allocation2 [shape = 'f32[128,128]{1,0:T(8,128)}', space=vmem, size = 0x10000, scoped, tag = 'scratch operand']
  %s0 = inlined_call_operand.vmem [shape: bf16[512,128], index: 0, kind: input, shape index: {}]
  %s1 = inlined_call_operand.vmem [shape: bf16[128,128], index: 1, kind: input, shape index: {}]
  %s2 = inlined_call_operand.vmem [shape: bf16[512,128], index: 2, kind: output, shape index: {0}]
  %s3 = inlined_call_operand.vmem [shape: f32[4,1,128], index: 3, kind: output, shape index: {1}]
  %s4 = inlined_call_operand.vmem [shape: f32[4,1,128], index: 4, kind: output, shape index: {2}]
  %5 = xla_tuple %s2, %s3, %s4
  %s6 = sld [smem:[#allocation0]]
  $region65: #{bottleneck_forward.4} parent=0
    _
  %s8 = ssub.s32 1, %s6
  %s9 = scalar_select 0, %s8, %s6
  loop: start=0, step=1, limit=6
  $region2: #{bottleneck_forward.4} parent=0 // loop_pre_header
    _
  $region3: #{bottleneck_forward.4} parent=0 // loop_header
    %s11 = sphi 0, %s15
    %p12 = scmp.ge.s32.totalorder %s11, 6
    %s18 = sphi 0, %s30
    %s19 = sphi 0, %s26
    %s20 = sphi 0, %s18
    %s21 = sphi 0, %s19
    %s22 = sphi 0, %s20
    %s23 = sphi 0, %s21
    %s35 = sphi 0, %s37
    %s38 = sphi 0, %s35
    %s39 = sphi 0, %s38
    %s55 = sphi 0, %s39
    %s61 = sphi 0, %s63
    %s64 = sphi 0, %s61
    %s65 = sphi 0, %s64
    %s81 = sphi 0, %s65
    %s87 = sphi 0, %s89
    %s90 = sphi 0, %s87
    %s91 = sphi 0, %s90
    %s107 = sphi 0, %s91
    %s113 = sphi 0, %s115
    %s116 = sphi 0, %s113
    %s117 = sphi 0, %s116
    %s133 = sphi 0, %s117
    %s139 = sphi 0, %s141
    %s142 = sphi 0, %s139
    %s143 = sphi 0, %s142
    %s159 = sphi 0, %s143
  $region4: #{bottleneck_forward.4} parent=0 // loop_header_branch
    %14 = sbr.rel (%p12) target = $region8
  $region5: #{bottleneck_forward.4} parent=0 // loop_body
    %s16 = ssub.s32 %s11, 1
    %s17 = ssub.s32 %s11, 2
    %s24 = sadd.s32 1, %s19
    %p25 = scmp.ge.s32.totalorder %s24, 1
    %s26 = scalar_select %p25, 0, %s24
    %s27 = sadd.s32 1, %s18
    %s28 = scalar_select %p25, %s27, %s18
    %p29 = scmp.ge.s32.totalorder %s28, 4
    %s30 = scalar_select %p29, 0, %s28
    %s31 = ssub.s32 %s18, %s30
    %s32 = ssub.s32 %s19, %s26
    %s33 = sor.u32 %s31, %s32
    %p34 = scmp.eq.s32.totalorder %s33, 0
    %s36 = sadd.s32 %s35, 1
    %s37 = scalar_select %p34, %s35, %s36
    %p40 = pneg %p34
    %p41 = scmp.eq.s32.totalorder %s11, 3
    %p42 = por %p40, %p41
    %p43 = scmp.ne.s32.totalorder %s35, %s38
    %p44 = scmp.eq.s32.totalorder %s11, 0
    %p45 = por %p43, %p44
    %p46 = scmp.ne.s32.totalorder %s35, %s38
    %p47 = scmp.eq.s32.totalorder %s16, 3
    %p48 = por %p46, %p47
    %p49 = scmp.ne.s32.totalorder %s38, %s39
    %p50 = scmp.eq.s32.totalorder %s16, 0
    %p51 = por %p49, %p50
    %p52 = scmp.ne.s32.totalorder %s38, %s39
    %p53 = scmp.eq.s32.totalorder %s17, 3
    %p54 = por %p52, %p53
    %p56 = scmp.ne.s32.totalorder %s39, %s55
    %p57 = scmp.eq.s32.totalorder %s17, 0
    %p58 = por %p56, %p57
    %s59 = ssub.s32 %s19, %s26
    %p60 = scmp.eq.s32.totalorder %s59, 0
    %s62 = sadd.s32 %s61, 1
    %s63 = scalar_select %p60, %s61, %s62
    %p66 = pneg %p60
    %p67 = scmp.eq.s32.totalorder %s11, 3
    %p68 = por %p66, %p67
    %p69 = scmp.ne.s32.totalorder %s61, %s64
    %p70 = scmp.eq.s32.totalorder %s11, 0
    %p71 = por %p69, %p70
    %p72 = scmp.ne.s32.totalorder %s61, %s64
    %p73 = scmp.eq.s32.totalorder %s16, 3
    %p74 = por %p72, %p73
    %p75 = scmp.ne.s32.totalorder %s64, %s65
    %p76 = scmp.eq.s32.totalorder %s16, 0
    %p77 = por %p75, %p76
    %p78 = scmp.ne.s32.totalorder %s64, %s65
    %p79 = scmp.eq.s32.totalorder %s17, 3
    %p80 = por %p78, %p79
    %p82 = scmp.ne.s32.totalorder %s65, %s81
    %p83 = scmp.eq.s32.totalorder %s17, 0
    %p84 = por %p82, %p83
    %s85 = ssub.s32 %s18, %s30
    %p86 = scmp.eq.s32.totalorder %s85, 0
    %s88 = sadd.s32 %s87, 1
    %s89 = scalar_select %p86, %s87, %s88
    %p92 = pneg %p86
    %p93 = scmp.eq.s32.totalorder %s11, 3
    %p94 = por %p92, %p93
    %p95 = scmp.ne.s32.totalorder %s87, %s90
    %p96 = scmp.eq.s32.totalorder %s11, 0
    %p97 = por %p95, %p96
    %p98 = scmp.ne.s32.totalorder %s87, %s90
    %p99 = scmp.eq.s32.totalorder %s16, 3
    %p100 = por %p98, %p99
    %p101 = scmp.ne.s32.totalorder %s90, %s91
    %p102 = scmp.eq.s32.totalorder %s16, 0
    %p103 = por %p101, %p102
    %p104 = scmp.ne.s32.totalorder %s90, %s91
    %p105 = scmp.eq.s32.totalorder %s17, 3
    %p106 = por %p104, %p105
    %p108 = scmp.ne.s32.totalorder %s91, %s107
    %p109 = scmp.eq.s32.totalorder %s17, 0
    %p110 = por %p108, %p109
    %s111 = ssub.s32 %s18, %s30
    %p112 = scmp.eq.s32.totalorder %s111, 0
    %s114 = sadd.s32 %s113, 1
    %s115 = scalar_select %p112, %s113, %s114
    %p118 = pneg %p112
    %p119 = scmp.eq.s32.totalorder %s11, 3
    %p120 = por %p118, %p119
    %p121 = scmp.ne.s32.totalorder %s113, %s116
    %p122 = scmp.eq.s32.totalorder %s11, 0
    %p123 = por %p121, %p122
    %p124 = scmp.ne.s32.totalorder %s113, %s116
    %p125 = scmp.eq.s32.totalorder %s16, 3
    %p126 = por %p124, %p125
    %p127 = scmp.ne.s32.totalorder %s116, %s117
    %p128 = scmp.eq.s32.totalorder %s16, 0
    %p129 = por %p127, %p128
    %p130 = scmp.ne.s32.totalorder %s116, %s117
    %p131 = scmp.eq.s32.totalorder %s17, 3
    %p132 = por %p130, %p131
    %p134 = scmp.ne.s32.totalorder %s117, %s133
    %p135 = scmp.eq.s32.totalorder %s17, 0
    %p136 = por %p134, %p135
    %s137 = ssub.s32 %s18, %s30
    %p138 = scmp.eq.s32.totalorder %s137, 0
    %s140 = sadd.s32 %s139, 1
    %s141 = scalar_select %p138, %s139, %s140
    %p144 = pneg %p138
    %p145 = scmp.eq.s32.totalorder %s11, 3
    %p146 = por %p144, %p145
    %p147 = scmp.ne.s32.totalorder %s139, %s142
    %p148 = scmp.eq.s32.totalorder %s11, 0
    %p149 = por %p147, %p148
    %p150 = scmp.ne.s32.totalorder %s139, %s142
    %p151 = scmp.eq.s32.totalorder %s16, 3
    %p152 = por %p150, %p151
    %p153 = scmp.ne.s32.totalorder %s142, %s143
    %p154 = scmp.eq.s32.totalorder %s16, 0
    %p155 = por %p153, %p154
    %p156 = scmp.ne.s32.totalorder %s142, %s143
    %p157 = scmp.eq.s32.totalorder %s17, 3
    %p158 = por %p156, %p157
    %p160 = scmp.ne.s32.totalorder %s143, %s159
    %p161 = scmp.eq.s32.totalorder %s17, 0
    %p162 = por %p160, %p161
    %p163 = scmp.le.s32.totalorder 1, %s11
    %p164 = scmp.lt.s32.totalorder %s11, 5
    %p165 = pnand %p163, %p164
    %p166 = pneg %p165
    // Predicated region
    $region9: #{bottleneck_forward.4} parent=5 // pred_check
      _
    $region10: #{bottleneck_forward.4} parent=5 // pred_check_branch
      %168 = sbr.rel (%p165) target = $region12
    $region11: #{bottleneck_forward.4} parent=5 // pred_region
      %s169 = ssub.s32 %s11, 1
      // Predicated region
      $region13: #{bottleneck_forward.4} parent=11 // pred_check
        %p170 = pneg %p77
      $region14: #{bottleneck_forward.4} parent=11 // pred_check_branch
        %172 = sbr.rel (%p170) target = $region16
      $region15: #{bottleneck_forward.4} parent=11 // pred_region
        %s173 = smul.u32 16, %s21
        %p174 = scmp.lt.s32.totalorder %s173, 15
        %s175 = scalar_select %p174, %s173, 15
        %s176 = smul.addr %s175, 4
        %s177 = scalar_lea.vmem %s1, %s176
        %s178 = smul.u32 16, %s21
      $region16: #{bottleneck_forward.4} parent=11 // pred_fallthru
        _
    $region12: #{bottleneck_forward.4} parent=5 // pred_fallthru
      _
    %p179 = scmp.lt.s32.totalorder %s11, 4
    // Predicated region
    $region17: #{bottleneck_forward.4} parent=5 // pred_check
      %p180 = pneg %p179
    $region18: #{bottleneck_forward.4} parent=5 // pred_check_branch
      %182 = sbr.rel (%p180) target = $region20
    $region19: #{bottleneck_forward.4} parent=5 // pred_region
      // Predicated region
      $region21: #{bottleneck_forward.4} parent=19 // pred_check
        %p183 = pneg %p45
      $region22: #{bottleneck_forward.4} parent=19 // pred_check_branch
        %185 = sbr.rel (%p183) target = $region24
      $region23: #{bottleneck_forward.4} parent=19 // pred_region
        %s186 = smul.u32 16, %s18
        %p187 = scmp.lt.s32.totalorder %s186, 63
        %s188 = scalar_select %p187, %s186, 63
        %p189 = scmp.lt.s32.totalorder %s19, 0
        %s190 = scalar_select %p189, %s19, 0
        %s191 = sadd.s32 %s190, %s188
        %s192 = smul.addr %s191, 4
        %s193 = scalar_lea.vmem %s0, %s192
        %s194 = smul.u32 16, %s18
      $region24: #{bottleneck_forward.4} parent=19 // pred_fallthru
        _
    $region20: #{bottleneck_forward.4} parent=5 // pred_fallthru
      _
    %p195 = scmp.le.s32.totalorder 1, %s11
    %p196 = scmp.lt.s32.totalorder %s11, 5
    %p197 = pnand %p195, %p196
    %p198 = pneg %p197
    // Predicated region
    $region25: #{bottleneck_forward.4} parent=5 // pred_check
      _
    $region26: #{bottleneck_forward.4} parent=5 // pred_check_branch
      %200 = sbr.rel (%p197) target = $region28
    $region27: #{bottleneck_forward.4} parent=5 // pred_region
      %s201 = ssub.s32 %s11, 1
      %s202 = smul.u32 16, %s20
      %p203 = scmp.lt.s32.totalorder %s202, 63
      %s204 = scalar_select %p203, %s202, 63
      %p205 = scmp.lt.s32.totalorder %s21, 0
      %s206 = scalar_select %p205, %s21, 0
      %s207 = sadd.s32 %s206, %s204
      %s208 = smul.addr %s207, 4
      %s209 = scalar_lea.vmem %s0, %s208
      %p210 = pneg %p51
      %p211 = pneg %p48
      %s212 = smul.u32 16, %s21
      %p213 = scmp.lt.s32.totalorder %s212, 15
      %s214 = scalar_select %p213, %s212, 15
      %s215 = smul.addr %s214, 4
      %s216 = scalar_lea.vmem %s1, %s215
      %p217 = pneg %p77
      %p218 = pneg %p74
      %p219 = pneg %p103
      %p220 = pneg %p100
      %s221 = smul.u32 16, %s20
      %p222 = scmp.lt.s32.totalorder %s221, 63
      %s223 = scalar_select %p222, %s221, 63
      %s224 = smul.addr %s223, 4
      %s225 = scalar_lea.vmem %s2, %s224
      %p226 = pneg %p129
      %p227 = pneg %p126
      %p228 = scmp.lt.s32.totalorder %s20, 3
      %s229 = scalar_select %p228, %s20, 3
      %s230 = scalar_lea.vmem %s3, %s229
      %p231 = pneg %p155
      %p232 = pneg %p152
      %p233 = scmp.lt.s32.totalorder %s20, 3
      %s234 = scalar_select %p233, %s20, 3
      %s235 = scalar_lea.vmem %s4, %s234
      %s236 = smul.u32 16, %s20
      %p237 = scmp.lt.s32.totalorder %s236, 63
      %s238 = scalar_select %p237, %s236, 63
      %p239 = scmp.lt.s32.totalorder %s21, 0
      %s240 = scalar_select %p239, %s21, 0
      %s241 = sadd.s32 %s240, %s238
      %s242 = smul.addr %s241, 4
      %s243 = scalar_lea.vmem %s0, %s242
      %s244 = smul.u32 16, %s20
      %s245 = smul.u32 16, %s21
      %p246 = scmp.lt.s32.totalorder %s245, 15
      %s247 = scalar_select %p246, %s245, 15
      %s248 = smul.addr %s247, 4
      %s249 = scalar_lea.vmem %s1, %s248
      %s250 = smul.u32 16, %s21
      %s251 = smul.u32 16, %s20
      %p252 = scmp.lt.s32.totalorder %s251, 63
      %s253 = scalar_select %p252, %s251, 63
      %s254 = smul.addr %s253, 4
      %s255 = scalar_lea.vmem %s2, %s254
      %s256 = smul.u32 16, %s20
      %p257 = scmp.lt.s32.totalorder %s20, 3
      %s258 = scalar_select %p257, %s20, 3
      %s259 = scalar_lea.vmem %s3, %s258
      %p260 = scmp.lt.s32.totalorder %s20, 3
      %s261 = scalar_select %p260, %s20, 3
      %s262 = scalar_lea.vmem %s4, %s261
      %p264 = scmp.eq.s32.totalorder %s21, 0
      // Predicated region
      $region29: #{bottleneck_forward.4} parent=27 // pred_check
        %p265 = pneg %p264
      $region30: #{bottleneck_forward.4} parent=27 // pred_check_branch
        %267 = sbr.rel (%p265) target = $region32
      $region31: #{bottleneck_forward.4} parent=27 // pred_region
        %268 = vst [vmem:[#allocation2] sm:$0xff] 0.0
        %269 = vst [vmem:[#allocation2 + $0x8] sm:$0xff] 0.0
        %270 = vst [vmem:[#allocation2 + $0x10] sm:$0xff] 0.0
        %271 = vst [vmem:[#allocation2 + $0x18] sm:$0xff] 0.0
        %272 = vst [vmem:[#allocation2 + $0x20] sm:$0xff] 0.0
        %273 = vst [vmem:[#allocation2 + $0x28] sm:$0xff] 0.0
        %274 = vst [vmem:[#allocation2 + $0x30] sm:$0xff] 0.0
        %275 = vst [vmem:[#allocation2 + $0x38] sm:$0xff] 0.0
        %276 = vst [vmem:[#allocation2 + $0x40] sm:$0xff] 0.0
        %277 = vst [vmem:[#allocation2 + $0x48] sm:$0xff] 0.0
        %278 = vst [vmem:[#allocation2 + $0x50] sm:$0xff] 0.0
        %279 = vst [vmem:[#allocation2 + $0x58] sm:$0xff] 0.0
        %280 = vst [vmem:[#allocation2 + $0x60] sm:$0xff] 0.0
        %281 = vst [vmem:[#allocation2 + $0x68] sm:$0xff] 0.0
        %282 = vst [vmem:[#allocation2 + $0x70] sm:$0xff] 0.0
        %283 = vst [vmem:[#allocation2 + $0x78] sm:$0xff] 0.0
      $region32: #{bottleneck_forward.4} parent=27 // pred_fallthru
        _
      %v284 = vld [vmem:[%s243] sm:$0xf]
      %v285 = vld [vmem:[%s243 + $0x4] sm:$0xf]
      %v286 = vld [vmem:[%s243 + $0x8] sm:$0xf]
      %v287 = vld [vmem:[%s243 + $0xc] sm:$0xf]
      %v288 = vld [vmem:[%s243 + $0x10] sm:$0xf]
      %v289 = vld [vmem:[%s243 + $0x14] sm:$0xf]
      %v290 = vld [vmem:[%s243 + $0x18] sm:$0xf]
      %v291 = vld [vmem:[%s243 + $0x1c] sm:$0xf]
      %v292 = vld [vmem:[%s243 + $0x20] sm:$0xf]
      %v293 = vld [vmem:[%s243 + $0x24] sm:$0xf]
      %v294 = vld [vmem:[%s243 + $0x28] sm:$0xf]
      %v295 = vld [vmem:[%s243 + $0x2c] sm:$0xf]
      %v296 = vld [vmem:[%s243 + $0x30] sm:$0xf]
      %v297 = vld [vmem:[%s243 + $0x34] sm:$0xf]
      %v298 = vld [vmem:[%s243 + $0x38] sm:$0xf]
      %v299 = vld [vmem:[%s243 + $0x3c] sm:$0xf]
      %v300 = vld [vmem:[#allocation2] sm:$0xff]
      %v301 = vld [vmem:[#allocation2 + $0x8] sm:$0xff]
      %v302 = vld [vmem:[#allocation2 + $0x10] sm:$0xff]
      %v303 = vld [vmem:[#allocation2 + $0x18] sm:$0xff]
      %v304 = vld [vmem:[#allocation2 + $0x20] sm:$0xff]
      %v305 = vld [vmem:[#allocation2 + $0x28] sm:$0xff]
      %v306 = vld [vmem:[#allocation2 + $0x30] sm:$0xff]
      %v307 = vld [vmem:[#allocation2 + $0x38] sm:$0xff]
      %v308 = vld [vmem:[#allocation2 + $0x40] sm:$0xff]
      %v309 = vld [vmem:[#allocation2 + $0x48] sm:$0xff]
      %v310 = vld [vmem:[#allocation2 + $0x50] sm:$0xff]
      %v311 = vld [vmem:[#allocation2 + $0x58] sm:$0xff]
      %v312 = vld [vmem:[#allocation2 + $0x60] sm:$0xff]
      %v313 = vld [vmem:[#allocation2 + $0x68] sm:$0xff]
      %v314 = vld [vmem:[#allocation2 + $0x70] sm:$0xff]
      %v315 = vld [vmem:[#allocation2 + $0x78] sm:$0xff]
      %v316 = vld [vmem:[%s249] sm:$0xf]
      %v317 = vld [vmem:[%s249 + $0x4] sm:$0xf]
      %v318 = vld [vmem:[%s249 + $0x8] sm:$0xf]
      %v319 = vld [vmem:[%s249 + $0xc] sm:$0xf]
      %v320 = vld [vmem:[%s249 + $0x10] sm:$0xf]
      %v321 = vld [vmem:[%s249 + $0x14] sm:$0xf]
      %v322 = vld [vmem:[%s249 + $0x18] sm:$0xf]
      %v323 = vld [vmem:[%s249 + $0x1c] sm:$0xf]
      %v324 = vld [vmem:[%s249 + $0x20] sm:$0xf]
      %v325 = vld [vmem:[%s249 + $0x24] sm:$0xf]
      %v326 = vld [vmem:[%s249 + $0x28] sm:$0xf]
      %v327 = vld [vmem:[%s249 + $0x2c] sm:$0xf]
      %v328 = vld [vmem:[%s249 + $0x30] sm:$0xf]
      %v329 = vld [vmem:[%s249 + $0x34] sm:$0xf]
      %v330 = vld [vmem:[%s249 + $0x38] sm:$0xf]
      %v331 = vld [vmem:[%s249 + $0x3c] sm:$0xf]
      %v348 = vunpack.c.l.b16 %v284
      %v349 = vunpack.c.l.b16 %v285
      %v350 = vunpack.c.l.b16 %v286
      %v351 = vunpack.c.l.b16 %v287
      %v352 = vunpack.c.l.b16 %v288
      %v353 = vunpack.c.l.b16 %v289
      %v354 = vunpack.c.l.b16 %v290
      %v355 = vunpack.c.l.b16 %v291
      %v356 = vunpack.c.l.b16 %v292
      %v357 = vunpack.c.l.b16 %v293
      %v358 = vunpack.c.l.b16 %v294
      %v359 = vunpack.c.l.b16 %v295
      %v360 = vunpack.c.l.b16 %v296
      %v361 = vunpack.c.l.b16 %v297
      %v362 = vunpack.c.l.b16 %v298
      %v363 = vunpack.c.l.b16 %v299
      %v364 = vpack.c.b16 %v349, %v348
      %v365 = vpack.c.b16 %v351, %v350
      %v366 = vpack.c.b16 %v353, %v352
      %v367 = vpack.c.b16 %v355, %v354
      %v368 = vpack.c.b16 %v357, %v356
      %v369 = vpack.c.b16 %v359, %v358
      %v370 = vpack.c.b16 %v361, %v360
      %v371 = vpack.c.b16 %v363, %v362
      %v396 = vunpack.c.l.b16 %v316
      %v397 = vunpack.c.l.b16 %v317
      %v398 = vunpack.c.l.b16 %v318
      %v399 = vunpack.c.l.b16 %v319
      %v400 = vunpack.c.l.b16 %v320
      %v401 = vunpack.c.l.b16 %v321
      %v402 = vunpack.c.l.b16 %v322
      %v403 = vunpack.c.l.b16 %v323
      %v404 = vunpack.c.l.b16 %v324
      %v405 = vunpack.c.l.b16 %v325
      %v406 = vunpack.c.l.b16 %v326
      %v407 = vunpack.c.l.b16 %v327
      %v408 = vunpack.c.l.b16 %v328
      %v409 = vunpack.c.l.b16 %v329
      %v410 = vunpack.c.l.b16 %v330
      %v411 = vunpack.c.l.b16 %v331
      %v412 = vpack.c.b16 %v397, %v396
      %v413 = vpack.c.b16 %v399, %v398
      %v414 = vpack.c.b16 %v401, %v400
      %v415 = vpack.c.b16 %v403, %v402
      %v416 = vpack.c.b16 %v405, %v404
      %v417 = vpack.c.b16 %v407, %v406
      %v418 = vpack.c.b16 %v409, %v408
      %v419 = vpack.c.b16 %v411, %v410
      %428 = vmatprep.subr.bf16.mxu0 0
      %429 = vmatpush1.bf16.msra.mxu0 %v412
      %430 = vmatprep.subr.bf16.mxu0 0
      %431 = vmatpush1.bf16.msra.mxu0 %v413
      %432 = vmatprep.subr.bf16.mxu0 0
      %433 = vmatpush1.bf16.msra.mxu0 %v414
      %434 = vmatprep.subr.bf16.mxu0 0
      %435 = vmatpush1.bf16.msra.mxu0 %v415
      %436 = vmatprep.subr.bf16.mxu0 0
      %437 = vmatpush1.bf16.msra.mxu0 %v416
      %438 = vmatprep.subr.bf16.mxu0 0
      %439 = vmatpush1.bf16.msra.mxu0 %v417
      %440 = vmatprep.subr.bf16.mxu0 0
      %441 = vmatpush1.bf16.msra.mxu0 %v418
      %442 = vmatprep.subr.bf16.mxu0 0
      %443 = vmatpush1.bf16.msra.mxu0 %v419
      %444 = vmatprep.subr.bf16.mxu0 0
      %445 = vmatpush1.bf16.msra.mxu0 0
      %446 = vmatprep.subr.bf16.mxu0 0
      %447 = vmatpush1.bf16.msra.mxu0 0
      %448 = vmatprep.subr.bf16.mxu0 0
      %449 = vmatpush1.bf16.msra.mxu0 0
      %450 = vmatprep.subr.bf16.mxu0 0
      %451 = vmatpush1.bf16.msra.mxu0 0
      %452 = vmatprep.subr.bf16.mxu0 0
      %453 = vmatpush1.bf16.msra.mxu0 0
      %454 = vmatprep.subr.bf16.mxu0 0
      %455 = vmatpush1.bf16.msra.mxu0 0
      %456 = vmatprep.subr.bf16.mxu0 0
      %457 = vmatpush1.bf16.msra.mxu0 0
      %458 = vmatprep.subr.bf16.mxu0 0
      %459 = vmatpush1.bf16.msra.mxu0 0
      %460 = vmatprep.mubr.bf16.mxu0 0
      %461 = vmatmul.mubr.bf16.gmra.mrb[0].mxu0 %v364
      %v462 = vpop.f32.mrb[0].mxu0
      %v463 = vadd.f32 0.0, %v462
      %v464 = vpop.f32.mrb[0].mxu0
      %v465 = vpop.f32.mrb[0].mxu0
      %v466 = vadd.f32 0.0, %v465
      %v467 = vpop.f32.mrb[0].mxu0
      %468 = vmatprep.mubr.bf16.mxu0 0
      %469 = vmatmul.mubr.bf16.gmra.mrb[0].mxu0 %v365
      %v470 = vpop.f32.mrb[0].mxu0
      %v471 = vadd.f32 0.0, %v470
      %v472 = vpop.f32.mrb[0].mxu0
      %v473 = vpop.f32.mrb[0].mxu0
      %v474 = vadd.f32 0.0, %v473
      %v475 = vpop.f32.mrb[0].mxu0
      %476 = vmatprep.mubr.bf16.mxu0 0
      %477 = vmatmul.mubr.bf16.gmra.mrb[0].mxu0 %v366
      %v478 = vpop.f32.mrb[0].mxu0
      %v479 = vadd.f32 0.0, %v478
      %v480 = vpop.f32.mrb[0].mxu0
      %v481 = vpop.f32.mrb[0].mxu0
      %v482 = vadd.f32 0.0, %v481
      %v483 = vpop.f32.mrb[0].mxu0
      %484 = vmatprep.mubr.bf16.mxu0 0
      %485 = vmatmul.mubr.bf16.gmra.mrb[0].mxu0 %v367
      %v486 = vpop.f32.mrb[0].mxu0
      %v487 = vadd.f32 0.0, %v486
      %v488 = vpop.f32.mrb[0].mxu0
      %v489 = vpop.f32.mrb[0].mxu0
      %v490 = vadd.f32 0.0, %v489
      %v491 = vpop.f32.mrb[0].mxu0
      %492 = vmatprep.mubr.bf16.mxu0 0
      %493 = vmatmul.mubr.bf16.gmra.mrb[0].mxu0 %v368
      %v494 = vpop.f32.mrb[0].mxu0
      %v495 = vadd.f32 0.0, %v494
      %v496 = vpop.f32.mrb[0].mxu0
      %v497 = vpop.f32.mrb[0].mxu0
      %v498 = vadd.f32 0.0, %v497
      %v499 = vpop.f32.mrb[0].mxu0
      %500 = vmatprep.mubr.bf16.mxu0 0
      %501 = vmatmul.mubr.bf16.gmra.mrb[0].mxu0 %v369
      %v502 = vpop.f32.mrb[0].mxu0
      %v503 = vadd.f32 0.0, %v502
      %v504 = vpop.f32.mrb[0].mxu0
      %v505 = vpop.f32.mrb[0].mxu0
      %v506 = vadd.f32 0.0, %v505
      %v507 = vpop.f32.mrb[0].mxu0
      %508 = vmatprep.mubr.bf16.mxu0 0
      %509 = vmatmul.mubr.bf16.gmra.mrb[0].mxu0 %v370
      %v510 = vpop.f32.mrb[0].mxu0
      %v511 = vadd.f32 0.0, %v510
      %v512 = vpop.f32.mrb[0].mxu0
      %v513 = vpop.f32.mrb[0].mxu0
      %v514 = vadd.f32 0.0, %v513
      %v515 = vpop.f32.mrb[0].mxu0
      %516 = vmatprep.mubr.bf16.mxu0 0
      %517 = vmatmul.mubr.bf16.gmra.mrb[0].mxu0 %v371
      %v518 = vpop.f32.mrb[0].mxu0
      %v519 = vadd.f32 0.0, %v518
      %v520 = vpop.f32.mrb[0].mxu0
      %v521 = vpop.f32.mrb[0].mxu0
      %v522 = vadd.f32 0.0, %v521
      %v523 = vpop.f32.mrb[0].mxu0
      %524 = vdwg.mxu0
      %v525 = vadd.f32 %v300, %v463
      %v526 = vadd.f32 %v301, %v466
      %v527 = vadd.f32 %v302, %v471
      %v528 = vadd.f32 %v303, %v474
      %v529 = vadd.f32 %v304, %v479
      %v530 = vadd.f32 %v305, %v482
      %v531 = vadd.f32 %v306, %v487
      %v532 = vadd.f32 %v307, %v490
      %v533 = vadd.f32 %v308, %v495
      %v534 = vadd.f32 %v309, %v498
      %v535 = vadd.f32 %v310, %v503
      %v536 = vadd.f32 %v311, %v506
      %v537 = vadd.f32 %v312, %v511
      %v538 = vadd.f32 %v313, %v514
      %v539 = vadd.f32 %v314, %v519
      %v540 = vadd.f32 %v315, %v522
      %541 = vst [vmem:[#allocation2] sm:$0xff] %v525
      %542 = vst [vmem:[#allocation2 + $0x8] sm:$0xff] %v526
      %543 = vst [vmem:[#allocation2 + $0x10] sm:$0xff] %v527
      %544 = vst [vmem:[#allocation2 + $0x18] sm:$0xff] %v528
      %545 = vst [vmem:[#allocation2 + $0x20] sm:$0xff] %v529
      %546 = vst [vmem:[#allocation2 + $0x28] sm:$0xff] %v530
      %547 = vst [vmem:[#allocation2 + $0x30] sm:$0xff] %v531
      %548 = vst [vmem:[#allocation2 + $0x38] sm:$0xff] %v532
      %549 = vst [vmem:[#allocation2 + $0x40] sm:$0xff] %v533
      %550 = vst [vmem:[#allocation2 + $0x48] sm:$0xff] %v534
      %551 = vst [vmem:[#allocation2 + $0x50] sm:$0xff] %v535
      %552 = vst [vmem:[#allocation2 + $0x58] sm:$0xff] %v536
      %553 = vst [vmem:[#allocation2 + $0x60] sm:$0xff] %v537
      %554 = vst [vmem:[#allocation2 + $0x68] sm:$0xff] %v538
      %555 = vst [vmem:[#allocation2 + $0x70] sm:$0xff] %v539
      %556 = vst [vmem:[#allocation2 + $0x78] sm:$0xff] %v540
      // Predicated region
      $region33: #{bottleneck_forward.4} parent=27 // pred_check
        %p557 = pneg %p264
      $region34: #{bottleneck_forward.4} parent=27 // pred_check_branch
        %559 = sbr.rel (%p557) target = $region36
      $region35: #{bottleneck_forward.4} parent=27 // pred_region
        %v560 = vld [vmem:[#allocation2] sm:$0xff]
        %v561 = vld [vmem:[#allocation2 + $0x8] sm:$0xff]
        %v562 = vld [vmem:[#allocation2 + $0x10] sm:$0xff]
        %v563 = vld [vmem:[#allocation2 + $0x18] sm:$0xff]
        %v564 = vld [vmem:[#allocation2 + $0x20] sm:$0xff]
        %v565 = vld [vmem:[#allocation2 + $0x28] sm:$0xff]
        %v566 = vld [vmem:[#allocation2 + $0x30] sm:$0xff]
        %v567 = vld [vmem:[#allocation2 + $0x38] sm:$0xff]
        %v568 = vld [vmem:[#allocation2 + $0x40] sm:$0xff]
        %v569 = vld [vmem:[#allocation2 + $0x48] sm:$0xff]
        %v570 = vld [vmem:[#allocation2 + $0x50] sm:$0xff]
        %v571 = vld [vmem:[#allocation2 + $0x58] sm:$0xff]
        %v572 = vld [vmem:[#allocation2 + $0x60] sm:$0xff]
        %v573 = vld [vmem:[#allocation2 + $0x68] sm:$0xff]
        %v574 = vld [vmem:[#allocation2 + $0x70] sm:$0xff]
        %v575 = vld [vmem:[#allocation2 + $0x78] sm:$0xff]
        %v576 = vpack.c.bf16 %v561, %v560
        %v577 = vpack.c.bf16 %v563, %v562
        %v578 = vpack.c.bf16 %v565, %v564
        %v579 = vpack.c.bf16 %v567, %v566
        %v580 = vpack.c.bf16 %v569, %v568
        %v581 = vpack.c.bf16 %v571, %v570
        %v582 = vpack.c.bf16 %v573, %v572
        %v583 = vpack.c.bf16 %v575, %v574
        %v592 = vunpack.c.l.b16 %v576
        %v593 = vunpack.c.h.b16 %v576
        %v594 = vunpack.c.l.b16 %v577
        %v595 = vunpack.c.h.b16 %v577
        %v596 = vunpack.c.l.b16 %v578
        %v597 = vunpack.c.h.b16 %v578
        %v598 = vunpack.c.l.b16 %v579
        %v599 = vunpack.c.h.b16 %v579
        %v600 = vunpack.c.l.b16 %v580
        %v601 = vunpack.c.h.b16 %v580
        %v602 = vunpack.c.l.b16 %v581
        %v603 = vunpack.c.h.b16 %v581
        %v604 = vunpack.c.l.b16 %v582
        %v605 = vunpack.c.h.b16 %v582
        %v606 = vunpack.c.l.b16 %v583
        %v607 = vunpack.c.h.b16 %v583
        %v608 = vpack.c.b16 %v592, %v592
        %v609 = vpack.c.b16 %v593, %v593
        %v610 = vpack.c.b16 %v594, %v594
        %v611 = vpack.c.b16 %v595, %v595
        %v612 = vpack.c.b16 %v596, %v596
        %v613 = vpack.c.b16 %v597, %v597
        %v614 = vpack.c.b16 %v598, %v598
        %v615 = vpack.c.b16 %v599, %v599
        %v616 = vpack.c.b16 %v600, %v600
        %v617 = vpack.c.b16 %v601, %v601
        %v618 = vpack.c.b16 %v602, %v602
        %v619 = vpack.c.b16 %v603, %v603
        %v620 = vpack.c.b16 %v604, %v604
        %v621 = vpack.c.b16 %v605, %v605
        %v622 = vpack.c.b16 %v606, %v606
        %v623 = vpack.c.b16 %v607, %v607
        %640 = vst [vmem:[%s255] sm:$0xf] %v608
        %641 = vst [vmem:[%s255 + $0x4] sm:$0xf] %v609
        %642 = vst [vmem:[%s255 + $0x8] sm:$0xf] %v610
        %643 = vst [vmem:[%s255 + $0xc] sm:$0xf] %v611
        %644 = vst [vmem:[%s255 + $0x10] sm:$0xf] %v612
        %645 = vst [vmem:[%s255 + $0x14] sm:$0xf] %v613
        %646 = vst [vmem:[%s255 + $0x18] sm:$0xf] %v614
        %647 = vst [vmem:[%s255 + $0x1c] sm:$0xf] %v615
        %648 = vst [vmem:[%s255 + $0x20] sm:$0xf] %v616
        %649 = vst [vmem:[%s255 + $0x24] sm:$0xf] %v617
        %650 = vst [vmem:[%s255 + $0x28] sm:$0xf] %v618
        %651 = vst [vmem:[%s255 + $0x2c] sm:$0xf] %v619
        %652 = vst [vmem:[%s255 + $0x30] sm:$0xf] %v620
        %653 = vst [vmem:[%s255 + $0x34] sm:$0xf] %v621
        %654 = vst [vmem:[%s255 + $0x38] sm:$0xf] %v622
        %655 = vst [vmem:[%s255 + $0x3c] sm:$0xf] %v623
        %v656 = vadd.f32 %v560, %v561
        %v657 = vadd.f32 %v656, %v562
        %v658 = vadd.f32 %v657, %v563
        %v659 = vadd.f32 %v658, %v564
        %v660 = vadd.f32 %v659, %v565
        %v661 = vadd.f32 %v660, %v566
        %v662 = vadd.f32 %v661, %v567
        %v663 = vadd.f32 %v662, %v568
        %v664 = vadd.f32 %v663, %v569
        %v665 = vadd.f32 %v664, %v570
        %v666 = vadd.f32 %v665, %v571
        %v667 = vadd.f32 %v666, %v572
        %v668 = vadd.f32 %v667, %v573
        %v669 = vadd.f32 %v668, %v574
        %v670 = vadd.f32 %v669, %v575
        %v671 = vrot.slane %v670, 4
        %v672 = vadd.f32 %v670, %v671
        %v673 = vrot.slane %v672, 2
        %v674 = vadd.f32 %v672, %v673
        %v675 = vrot.slane %v674, 1
        %v676 = vadd.f32 %v674, %v675
        %677 = vst [vmem:[%s259] sm:$0x1] %v676
        %v678 = vmul.f32 %v560, %v560
        %v679 = vmul.f32 %v561, %v561
        %v680 = vmul.f32 %v562, %v562
        %v681 = vmul.f32 %v563, %v563
        %v682 = vmul.f32 %v564, %v564
        %v683 = vmul.f32 %v565, %v565
        %v684 = vmul.f32 %v566, %v566
        %v685 = vmul.f32 %v567, %v567
        %v686 = vmul.f32 %v568, %v568
        %v687 = vmul.f32 %v569, %v569
        %v688 = vmul.f32 %v570, %v570
        %v689 = vmul.f32 %v571, %v571
        %v690 = vmul.f32 %v572, %v572
        %v691 = vmul.f32 %v573, %v573
        %v692 = vmul.f32 %v574, %v574
        %v693 = vmul.f32 %v575, %v575
        %v694 = vadd.f32 %v678, %v679
        %v695 = vadd.f32 %v694, %v680
        %v696 = vadd.f32 %v695, %v681
        %v697 = vadd.f32 %v696, %v682
        %v698 = vadd.f32 %v697, %v683
        %v699 = vadd.f32 %v698, %v684
        %v700 = vadd.f32 %v699, %v685
        %v701 = vadd.f32 %v700, %v686
        %v702 = vadd.f32 %v701, %v687
        %v703 = vadd.f32 %v702, %v688
        %v704 = vadd.f32 %v703, %v689
        %v705 = vadd.f32 %v704, %v690
        %v706 = vadd.f32 %v705, %v691
        %v707 = vadd.f32 %v706, %v692
        %v708 = vadd.f32 %v707, %v693
        %v709 = vrot.slane %v708, 4
        %v710 = vadd.f32 %v708, %v709
        %v711 = vrot.slane %v710, 2
        %v712 = vadd.f32 %v710, %v711
        %v713 = vrot.slane %v712, 1
        %v714 = vadd.f32 %v712, %v713
        %715 = vst [vmem:[%s262] sm:$0x1] %v714
      $region36: #{bottleneck_forward.4} parent=27 // pred_fallthru
        _
      %s716 = smul.u32 16, %s20
      %p717 = scmp.lt.s32.totalorder %s716, 63
      %s718 = scalar_select %p717, %s716, 63
      %s719 = smul.addr %s718, 4
      %s720 = scalar_lea.vmem %s2, %s719
      %p721 = scmp.lt.s32.totalorder %s20, 3
      %s722 = scalar_select %p721, %s20, 3
      %s723 = scalar_lea.vmem %s3, %s722
      %p724 = scmp.lt.s32.totalorder %s20, 3
      %s725 = scalar_select %p724, %s20, 3
      %s726 = scalar_lea.vmem %s4, %s725
      // Predicated region
      $region37: #{bottleneck_forward.4} parent=27 // pred_check
        %p727 = pneg %p100
      $region38: #{bottleneck_forward.4} parent=27 // pred_check_branch
        %729 = sbr.rel (%p727) target = $region40
      $region39: #{bottleneck_forward.4} parent=27 // pred_region
        %s730 = smul.u32 16, %s20
      $region40: #{bottleneck_forward.4} parent=27 // pred_fallthru
        _
      // Predicated region
      $region41: #{bottleneck_forward.4} parent=27 // pred_check
        %p731 = pneg %p126
      $region42: #{bottleneck_forward.4} parent=27 // pred_check_branch
        %733 = sbr.rel (%p731) target = $region44
      $region43: #{bottleneck_forward.4} parent=27 // pred_region
        _
      $region44: #{bottleneck_forward.4} parent=27 // pred_fallthru
        _
      // Predicated region
      $region45: #{bottleneck_forward.4} parent=27 // pred_check
        %p734 = pneg %p152
      $region46: #{bottleneck_forward.4} parent=27 // pred_check_branch
        %736 = sbr.rel (%p734) target = $region48
      $region47: #{bottleneck_forward.4} parent=27 // pred_region
        _
      $region48: #{bottleneck_forward.4} parent=27 // pred_fallthru
        _
    $region28: #{bottleneck_forward.4} parent=5 // pred_fallthru
      _
    %p737 = scmp.le.s32.totalorder 2, %s11
    // Predicated region
    $region49: #{bottleneck_forward.4} parent=5 // pred_check
      %p738 = pneg %p737
    $region50: #{bottleneck_forward.4} parent=5 // pred_check_branch
      %740 = sbr.rel (%p738) target = $region52
    $region51: #{bottleneck_forward.4} parent=5 // pred_region
      %s741 = ssub.s32 %s11, 2
      // Predicated region
      $region53: #{bottleneck_forward.4} parent=51 // pred_check
        %p742 = pneg %p106
      $region54: #{bottleneck_forward.4} parent=51 // pred_check_branch
        %744 = sbr.rel (%p742) target = $region56
      $region55: #{bottleneck_forward.4} parent=51 // pred_region
        %s745 = smul.u32 16, %s22
        %p746 = scmp.lt.s32.totalorder %s745, 63
        %s747 = scalar_select %p746, %s745, 63
        %s748 = smul.addr %s747, 4
        %s749 = scalar_lea.vmem %s2, %s748
      $region56: #{bottleneck_forward.4} parent=51 // pred_fallthru
        _
      // Predicated region
      $region57: #{bottleneck_forward.4} parent=51 // pred_check
        %p750 = pneg %p132
      $region58: #{bottleneck_forward.4} parent=51 // pred_check_branch
        %752 = sbr.rel (%p750) target = $region60
      $region59: #{bottleneck_forward.4} parent=51 // pred_region
        %p753 = scmp.lt.s32.totalorder %s22, 3
        %s754 = scalar_select %p753, %s22, 3
        %s755 = scalar_lea.vmem %s3, %s754
      $region60: #{bottleneck_forward.4} parent=51 // pred_fallthru
        _
      // Predicated region
      $region61: #{bottleneck_forward.4} parent=51 // pred_check
        %p756 = pneg %p158
      $region62: #{bottleneck_forward.4} parent=51 // pred_check_branch
        %758 = sbr.rel (%p756) target = $region64
      $region63: #{bottleneck_forward.4} parent=51 // pred_region
        %p759 = scmp.lt.s32.totalorder %s22, 3
        %s760 = scalar_select %p759, %s22, 3
        %s761 = scalar_lea.vmem %s4, %s760
      $region64: #{bottleneck_forward.4} parent=51 // pred_fallthru
        _
    $region52: #{bottleneck_forward.4} parent=5 // pred_fallthru
      _
  $region6: #{bottleneck_forward.4} parent=0 // loop_footer
    %s15 = sadd.s32 1, %s11
  $region7: #{bottleneck_forward.4} parent=0 // loop_footer_branch
    %10 = sbr.rel target = $region3
  $region8: #{bottleneck_forward.4} parent=0 // loop_exit
    _

// kernel: bottleneck_forward.7
$region0: #{bottleneck_forward.7}
  #allocation0 [shape = 'u32[]', space=smem, size = 0x4, offset = 0x4, fixed_abs, tag = 'smem constant byte address 0x4 - core index']
  #allocation1 [shape = 'u32[144,128]{1,0:T(1,128)}', space=vmem, size = 0x12000, scoped, tag = 'internal scratch']
  %s0 = inlined_call_operand.vmem [shape: bf16[512,128], index: 0, kind: input, shape index: {}]
  %s1 = inlined_call_operand.vmem [shape: f32[4,1,128], index: 1, kind: input, shape index: {}]
  %s2 = inlined_call_operand.vmem [shape: f32[4,1,128], index: 2, kind: input, shape index: {}]
  %s3 = inlined_call_operand.vmem [shape: f32[1,128], index: 3, kind: input, shape index: {}]
  %s4 = inlined_call_operand.vmem [shape: f32[1,128], index: 4, kind: input, shape index: {}]
  %s5 = inlined_call_operand.vmem [shape: f32[512,128], index: 5, kind: input, shape index: {}]
  %s6 = inlined_call_operand.hbm [shape: f32[512,128], index: 6, kind: output, shape index: {}]
  %s7 = sld [smem:[#allocation0]]
  $region57: #{bottleneck_forward.7} parent=0
    _
  %s9 = ssub.s32 1, %s7
  %s10 = scalar_select 0, %s9, %s7
  $region1: #{bottleneck_forward.7} parent=0
    #allocation2 [shape = 'u8[131072]{0}', space=vmem, size = 0x20000, scoped, tag = 'output window, operand 0']
    #allocation3 [shape = 's32[2]{0}', space=sflag, size = 0x8, scoped, tag = 'scoped memory for bottleneck_forward.7']
    %11 = vsyncpa [#allocation3], 0
    %s12 = scalar_lea.sflag [#allocation3], 1
    %13 = vsyncpa %s12, 0
    loop: start=0, step=1, limit=6
    $region2: #{bottleneck_forward.7} parent=1 // loop_pre_header
      _
    $region3: #{bottleneck_forward.7} parent=1 // loop_header
      %s15 = sphi 0, %s19
      %p16 = scmp.ge.s32.totalorder %s15, 6
      %s25 = sphi 0, %s27
      %s28 = sphi 0, %s25
      %s29 = sphi 0, %s28
      %s45 = sphi 0, %s29
      %s49 = sphi 0, %s49
      %s51 = sphi 0, %s49
      %s52 = sphi 0, %s51
      %s66 = sphi 0, %s52
      %s70 = sphi 0, %s70
      %s72 = sphi 0, %s70
      %s73 = sphi 0, %s72
      %s87 = sphi 0, %s73
      %s91 = sphi 0, %s91
      %s93 = sphi 0, %s91
      %s94 = sphi 0, %s93
      %s108 = sphi 0, %s94
      %s112 = sphi 0, %s112
      %s114 = sphi 0, %s112
      %s115 = sphi 0, %s114
      %s129 = sphi 0, %s115
      %s135 = sphi 0, %s137
      %s138 = sphi 0, %s135
      %s139 = sphi 0, %s138
      %s155 = sphi 0, %s139
      %s161 = sphi 0, %s163
      %s164 = sphi 0, %s161
      %s165 = sphi 0, %s164
      %s181 = sphi 0, %s165
    $region4: #{bottleneck_forward.7} parent=1 // loop_header_branch
      %18 = sbr.rel (%p16) target = $region8
    $region5: #{bottleneck_forward.7} parent=1 // loop_body
      %s20 = ssub.s32 %s15, 1
      %s21 = ssub.s32 %s15, 2
      %s22 = sadd.s32 %s15, 1
      %s23 = ssub.s32 %s15, %s22
      %p24 = scmp.eq.s32.totalorder %s23, 0
      %s26 = sadd.s32 %s25, 1
      %s27 = scalar_select %p24, %s25, %s26
      %p30 = pneg %p24
      %p31 = scmp.eq.s32.totalorder %s15, 3
      %p32 = por %p30, %p31
      %p33 = scmp.ne.s32.totalorder %s25, %s28
      %p34 = scmp.eq.s32.totalorder %s15, 0
      %p35 = por %p33, %p34
      %p36 = scmp.ne.s32.totalorder %s25, %s28
      %p37 = scmp.eq.s32.totalorder %s20, 3
      %p38 = por %p36, %p37
      %p39 = scmp.ne.s32.totalorder %s28, %s29
      %p40 = scmp.eq.s32.totalorder %s20, 0
      %p41 = por %p39, %p40
      %p42 = scmp.ne.s32.totalorder %s28, %s29
      %p43 = scmp.eq.s32.totalorder %s21, 3
      %p44 = por %p42, %p43
      %p46 = scmp.ne.s32.totalorder %s29, %s45
      %p47 = scmp.eq.s32.totalorder %s21, 0
      %p48 = por %p46, %p47
      %s50 = sadd.s32 %s49, 1
      %p53 = scmp.eq.s32.totalorder %s15, 3
      %p54 = scmp.ne.s32.totalorder %s49, %s51
      %p55 = scmp.eq.s32.totalorder %s15, 0
      %p56 = por %p54, %p55
      %p57 = scmp.ne.s32.totalorder %s49, %s51
      %p58 = scmp.eq.s32.totalorder %s20, 3
      %p59 = por %p57, %p58
      %p60 = scmp.ne.s32.totalorder %s51, %s52
      %p61 = scmp.eq.s32.totalorder %s20, 0
      %p62 = por %p60, %p61
      %p63 = scmp.ne.s32.totalorder %s51, %s52
      %p64 = scmp.eq.s32.totalorder %s21, 3
      %p65 = por %p63, %p64
      %p67 = scmp.ne.s32.totalorder %s52, %s66
      %p68 = scmp.eq.s32.totalorder %s21, 0
      %p69 = por %p67, %p68
      %s71 = sadd.s32 %s70, 1
      %p74 = scmp.eq.s32.totalorder %s15, 3
      %p75 = scmp.ne.s32.totalorder %s70, %s72
      %p76 = scmp.eq.s32.totalorder %s15, 0
      %p77 = por %p75, %p76
      %p78 = scmp.ne.s32.totalorder %s70, %s72
      %p79 = scmp.eq.s32.totalorder %s20, 3
      %p80 = por %p78, %p79
      %p81 = scmp.ne.s32.totalorder %s72, %s73
      %p82 = scmp.eq.s32.totalorder %s20, 0
      %p83 = por %p81, %p82
      %p84 = scmp.ne.s32.totalorder %s72, %s73
      %p85 = scmp.eq.s32.totalorder %s21, 3
      %p86 = por %p84, %p85
      %p88 = scmp.ne.s32.totalorder %s73, %s87
      %p89 = scmp.eq.s32.totalorder %s21, 0
      %p90 = por %p88, %p89
      %s92 = sadd.s32 %s91, 1
      %p95 = scmp.eq.s32.totalorder %s15, 3
      %p96 = scmp.ne.s32.totalorder %s91, %s93
      %p97 = scmp.eq.s32.totalorder %s15, 0
      %p98 = por %p96, %p97
      %p99 = scmp.ne.s32.totalorder %s91, %s93
      %p100 = scmp.eq.s32.totalorder %s20, 3
      %p101 = por %p99, %p100
      %p102 = scmp.ne.s32.totalorder %s93, %s94
      %p103 = scmp.eq.s32.totalorder %s20, 0
      %p104 = por %p102, %p103
      %p105 = scmp.ne.s32.totalorder %s93, %s94
      %p106 = scmp.eq.s32.totalorder %s21, 3
      %p107 = por %p105, %p106
      %p109 = scmp.ne.s32.totalorder %s94, %s108
      %p110 = scmp.eq.s32.totalorder %s21, 0
      %p111 = por %p109, %p110
      %s113 = sadd.s32 %s112, 1
      %p116 = scmp.eq.s32.totalorder %s15, 3
      %p117 = scmp.ne.s32.totalorder %s112, %s114
      %p118 = scmp.eq.s32.totalorder %s15, 0
      %p119 = por %p117, %p118
      %p120 = scmp.ne.s32.totalorder %s112, %s114
      %p121 = scmp.eq.s32.totalorder %s20, 3
      %p122 = por %p120, %p121
      %p123 = scmp.ne.s32.totalorder %s114, %s115
      %p124 = scmp.eq.s32.totalorder %s20, 0
      %p125 = por %p123, %p124
      %p126 = scmp.ne.s32.totalorder %s114, %s115
      %p127 = scmp.eq.s32.totalorder %s21, 3
      %p128 = por %p126, %p127
      %p130 = scmp.ne.s32.totalorder %s115, %s129
      %p131 = scmp.eq.s32.totalorder %s21, 0
      %p132 = por %p130, %p131
      %s133 = ssub.s32 %s15, %s22
      %p134 = scmp.eq.s32.totalorder %s133, 0
      %s136 = sadd.s32 %s135, 1
      %s137 = scalar_select %p134, %s135, %s136
      %p140 = pneg %p134
      %p141 = scmp.eq.s32.totalorder %s15, 3
      %p142 = por %p140, %p141
      %p143 = scmp.ne.s32.totalorder %s135, %s138
      %p144 = scmp.eq.s32.totalorder %s15, 0
      %p145 = por %p143, %p144
      %p146 = scmp.ne.s32.totalorder %s135, %s138
      %p147 = scmp.eq.s32.totalorder %s20, 3
      %p148 = por %p146, %p147
      %p149 = scmp.ne.s32.totalorder %s138, %s139
      %p150 = scmp.eq.s32.totalorder %s20, 0
      %p151 = por %p149, %p150
      %p152 = scmp.ne.s32.totalorder %s138, %s139
      %p153 = scmp.eq.s32.totalorder %s21, 3
      %p154 = por %p152, %p153
      %p156 = scmp.ne.s32.totalorder %s139, %s155
      %p157 = scmp.eq.s32.totalorder %s21, 0
      %p158 = por %p156, %p157
      %s159 = ssub.s32 %s15, %s22
      %p160 = scmp.eq.s32.totalorder %s159, 0
      %s162 = sadd.s32 %s161, 1
      %s163 = scalar_select %p160, %s161, %s162
      %p166 = pneg %p160
      %p167 = scmp.eq.s32.totalorder %s15, 3
      %p168 = por %p166, %p167
      %p169 = scmp.ne.s32.totalorder %s161, %s164
      %p170 = scmp.eq.s32.totalorder %s15, 0
      %p171 = por %p169, %p170
      %p172 = scmp.ne.s32.totalorder %s161, %s164
      %p173 = scmp.eq.s32.totalorder %s20, 3
      %p174 = por %p172, %p173
      %p175 = scmp.ne.s32.totalorder %s164, %s165
      %p176 = scmp.eq.s32.totalorder %s20, 0
      %p177 = por %p175, %p176
      %p178 = scmp.ne.s32.totalorder %s164, %s165
      %p179 = scmp.eq.s32.totalorder %s21, 3
      %p180 = por %p178, %p179
      %p182 = scmp.ne.s32.totalorder %s165, %s181
      %p183 = scmp.eq.s32.totalorder %s21, 0
      %p184 = por %p182, %p183
      %p185 = scmp.le.s32.totalorder 1, %s15
      %p186 = scmp.lt.s32.totalorder %s15, 5
      %p187 = pnand %p185, %p186
      %p188 = pneg %p187
      // Predicated region
      $region9: #{bottleneck_forward.7} parent=5 // pred_check
        _
      $region10: #{bottleneck_forward.7} parent=5 // pred_check_branch
        %190 = sbr.rel (%p187) target = $region12
      $region11: #{bottleneck_forward.7} parent=5 // pred_region
        %s191 = ssub.s32 %s15, 1
        // Predicated region
        $region13: #{bottleneck_forward.7} parent=11 // pred_check
          %p192 = pneg %p62
        $region14: #{bottleneck_forward.7} parent=11 // pred_check_branch
          %194 = sbr.rel (%p192) target = $region16
        $region15: #{bottleneck_forward.7} parent=11 // pred_region
          _
        $region16: #{bottleneck_forward.7} parent=11 // pred_fallthru
          _
        // Predicated region
        $region17: #{bottleneck_forward.7} parent=11 // pred_check
          %p195 = pneg %p83
        $region18: #{bottleneck_forward.7} parent=11 // pred_check_branch
          %197 = sbr.rel (%p195) target = $region20
        $region19: #{bottleneck_forward.7} parent=11 // pred_region
          _
        $region20: #{bottleneck_forward.7} parent=11 // pred_fallthru
          _
        // Predicated region
        $region21: #{bottleneck_forward.7} parent=11 // pred_check
          %p198 = pneg %p104
        $region22: #{bottleneck_forward.7} parent=11 // pred_check_branch
          %200 = sbr.rel (%p198) target = $region24
        $region23: #{bottleneck_forward.7} parent=11 // pred_region
          _
        $region24: #{bottleneck_forward.7} parent=11 // pred_fallthru
          _
        // Predicated region
        $region25: #{bottleneck_forward.7} parent=11 // pred_check
          %p201 = pneg %p125
        $region26: #{bottleneck_forward.7} parent=11 // pred_check_branch
          %203 = sbr.rel (%p201) target = $region28
        $region27: #{bottleneck_forward.7} parent=11 // pred_region
          _
        $region28: #{bottleneck_forward.7} parent=11 // pred_fallthru
          _
      $region12: #{bottleneck_forward.7} parent=5 // pred_fallthru
        _
      %p204 = scmp.lt.s32.totalorder %s15, 4
      // Predicated region
      $region29: #{bottleneck_forward.7} parent=5 // pred_check
        %p205 = pneg %p204
      $region30: #{bottleneck_forward.7} parent=5 // pred_check_branch
        %207 = sbr.rel (%p205) target = $region32
      $region31: #{bottleneck_forward.7} parent=5 // pred_region
        // Predicated region
        $region33: #{bottleneck_forward.7} parent=31 // pred_check
          %p208 = pneg %p35
        $region34: #{bottleneck_forward.7} parent=31 // pred_check_branch
          %210 = sbr.rel (%p208) target = $region36
        $region35: #{bottleneck_forward.7} parent=31 // pred_region
          %s211 = smul.u32 16, %s15
          %p212 = scmp.lt.s32.totalorder %s211, 63
          %s213 = scalar_select %p212, %s211, 63
          %s214 = smul.addr %s213, 4
          %s215 = scalar_lea.vmem %s0, %s214
          %s216 = smul.u32 16, %s15
        $region36: #{bottleneck_forward.7} parent=31 // pred_fallthru
          _
        // Predicated region
        $region37: #{bottleneck_forward.7} parent=31 // pred_check
          %p217 = pneg %p145
        $region38: #{bottleneck_forward.7} parent=31 // pred_check_branch
          %219 = sbr.rel (%p217) target = $region40
        $region39: #{bottleneck_forward.7} parent=31 // pred_region
          %s220 = smul.u32 16, %s15
          %p221 = scmp.lt.s32.totalorder %s220, 63
          %s222 = scalar_select %p221, %s220, 63
          %s223 = smul.addr %s222, 8
          %s224 = scalar_lea.vmem %s5, %s223
          %s225 = smul.u32 16, %s15
        $region40: #{bottleneck_forward.7} parent=31 // pred_fallthru
          _
      $region32: #{bottleneck_forward.7} parent=5 // pred_fallthru
        _
      %p226 = scmp.le.s32.totalorder 1, %s15
      %p227 = scmp.lt.s32.totalorder %s15, 5
      %p228 = pnand %p226, %p227
      %p229 = pneg %p228
      // Predicated region
      $region41: #{bottleneck_forward.7} parent=5 // pred_check
        _
      $region42: #{bottleneck_forward.7} parent=5 // pred_check_branch
        %231 = sbr.rel (%p228) target = $region44
      $region43: #{bottleneck_forward.7} parent=5 // pred_region
        %s232 = ssub.s32 %s15, 1
        %s233 = smul.u32 16, %s20
        %p234 = scmp.lt.s32.totalorder %s233, 63
        %s235 = scalar_select %p234, %s233, 63
        %s236 = smul.addr %s235, 4
        %s237 = scalar_lea.vmem %s0, %s236
        %p238 = pneg %p41
        %p239 = pneg %p38
        %p240 = pneg %p62
        %p241 = pneg %p59
        %p242 = pneg %p83
        %p243 = pneg %p80
        %p244 = pneg %p104
        %p245 = pneg %p101
        %p246 = pneg %p125
        %p247 = pneg %p122
        %s248 = smul.u32 16, %s20
        %p249 = scmp.lt.s32.totalorder %s248, 63
        %s250 = scalar_select %p249, %s248, 63
        %s251 = smul.addr %s250, 8
        %s252 = scalar_lea.vmem %s5, %s251
        %p253 = pneg %p151
        %p254 = pneg %p148
        %p255 = pneg %p177
        %p256 = pneg %p174
        %s257 = sand.u32 %s164, 1
        %s258 = scalar_lea.sflag [#allocation3], %s257
        %s259 = sand.u32 %s164, 1
        %s260 = smul.addr %s259, 128
        %s261 = scalar_lea.vmem [#allocation2], %s260
        %s262 = smul.u32 16, %s20
        %p263 = scmp.lt.s32.totalorder %s262, 63
        %s264 = scalar_select %p263, %s262, 63
        %s265 = smul.addr %s264, 4
        %s266 = scalar_lea.vmem %s0, %s265
        %s267 = smul.u32 16, %s20
        %s268 = smul.u32 16, %s20
        %p269 = scmp.lt.s32.totalorder %s268, 63
        %s270 = scalar_select %p269, %s268, 63
        %s271 = smul.addr %s270, 8
        %s272 = scalar_lea.vmem %s5, %s271
        %s273 = smul.u32 16, %s20
        %s274 = smul.u32 16, %s20
        %v275 = vld [vmem:[%s1] sm:$0x1]
        %v276 = vld [vmem:[%s1 + $0x1] sm:$0x1]
        %v277 = vld [vmem:[%s1 + $0x2] sm:$0x1]
        %v278 = vld [vmem:[%s1 + $0x3] sm:$0x1]
        %vm279 = vcmask 1040384
        %v280 = vsel %vm279, %v275, 0.0
        %v281 = vsel %vm279, %v276, 0.0
        %v282 = vadd.f32 %v280, %v281
        %v283 = vsel %vm279, %v277, 0.0
        %v284 = vadd.f32 %v282, %v283
        %v285 = vsel %vm279, %v278, 0.0
        %v286 = vadd.f32 %v284, %v285
        %v287 = vld [vmem:[%s2] sm:$0x1]
        %v288 = vld [vmem:[%s2 + $0x1] sm:$0x1]
        %v289 = vld [vmem:[%s2 + $0x2] sm:$0x1]
        %v290 = vld [vmem:[%s2 + $0x3] sm:$0x1]
        %v291 = vsel %vm279, %v287, 0.0
        %v292 = vsel %vm279, %v288, 0.0
        %v293 = vadd.f32 %v291, %v292
        %v294 = vsel %vm279, %v289, 0.0
        %v295 = vadd.f32 %v293, %v294
        %v296 = vsel %vm279, %v290, 0.0
        %v297 = vadd.f32 %v295, %v296
        %v298 = vmul.f32 %v286, 0.001953125
        %v299 = vmul.f32 %v297, 0.001953125
        %v300 = vmul.f32 %v298, %v298
        %v301 = vsub.f32 %v299, %v300
        %v302 = vmax.f32 %v301, 0.0
        %v303 = vld [vmem:[%s3] sm:$0x1]
        %v304 = vadd.f32 %v302, 1e-05
        %v305 = vrsqrt.pop %v304
        %v306 = vmul.f32 %v303, %v305
        %v307 = vld [vmem:[%s4] sm:$0x1]
        %v308 = vmul.f32 %v298, %v306
        %v309 = vsub.f32 %v307, %v308
        %v310 = vld [vmem:[%s266] sm:$0xf]
        %v311 = vld [vmem:[%s266 + $0x4] sm:$0xf]
        %v312 = vld [vmem:[%s266 + $0x8] sm:$0xf]
        %v313 = vld [vmem:[%s266 + $0xc] sm:$0xf]
        %v314 = vld [vmem:[%s266 + $0x10] sm:$0xf]
        %v315 = vld [vmem:[%s266 + $0x14] sm:$0xf]
        %v316 = vld [vmem:[%s266 + $0x18] sm:$0xf]
        %v317 = vld [vmem:[%s266 + $0x1c] sm:$0xf]
        %v318 = vld [vmem:[%s266 + $0x20] sm:$0xf]
        %v319 = vld [vmem:[%s266 + $0x24] sm:$0xf]
        %v320 = vld [vmem:[%s266 + $0x28] sm:$0xf]
        %v321 = vld [vmem:[%s266 + $0x2c] sm:$0xf]
        %v322 = vld [vmem:[%s266 + $0x30] sm:$0xf]
        %v323 = vld [vmem:[%s266 + $0x34] sm:$0xf]
        %v324 = vld [vmem:[%s266 + $0x38] sm:$0xf]
        %v325 = vld [vmem:[%s266 + $0x3c] sm:$0xf]
        %v326 = vunpack.c.l.bf16 %v310
        %v327 = vunpack.c.l.bf16 %v311
        %v328 = vunpack.c.l.bf16 %v312
        %v329 = vunpack.c.l.bf16 %v313
        %v330 = vunpack.c.l.bf16 %v314
        %v331 = vunpack.c.l.bf16 %v315
        %v332 = vunpack.c.l.bf16 %v316
        %v333 = vunpack.c.l.bf16 %v317
        %v334 = vunpack.c.l.bf16 %v318
        %v335 = vunpack.c.l.bf16 %v319
        %v336 = vunpack.c.l.bf16 %v320
        %v337 = vunpack.c.l.bf16 %v321
        %v338 = vunpack.c.l.bf16 %v322
        %v339 = vunpack.c.l.bf16 %v323
        %v340 = vunpack.c.l.bf16 %v324
        %v341 = vunpack.c.l.bf16 %v325
        %v343 = vlaneseq
        %v344 = vshrl.u32 %v343, 7
        %v345 = vsub.s32 0, %v344
        %v346 = vrot.slane %v306, %v345
        %v348 = vmul.f32 %v326, %v346
        %v349 = vmul.f32 %v327, %v346
        %v350 = vmul.f32 %v328, %v346
        %v351 = vmul.f32 %v329, %v346
        %v352 = vmul.f32 %v330, %v346
        %v353 = vmul.f32 %v331, %v346
        %v354 = vmul.f32 %v332, %v346
        %v355 = vmul.f32 %v333, %v346
        %v356 = vmul.f32 %v334, %v346
        %v357 = vmul.f32 %v335, %v346
        %v358 = vmul.f32 %v336, %v346
        %v359 = vmul.f32 %v337, %v346
        %v360 = vmul.f32 %v338, %v346
        %v361 = vmul.f32 %v339, %v346
        %v362 = vmul.f32 %v340, %v346
        %v363 = vmul.f32 %v341, %v346
        %v365 = vlaneseq
        %v366 = vshrl.u32 %v365, 7
        %v367 = vsub.s32 0, %v366
        %v368 = vrot.slane %v309, %v367
        %v370 = vadd.f32 %v348, %v368
        %v371 = vadd.f32 %v349, %v368
        %v372 = vadd.f32 %v350, %v368
        %v373 = vadd.f32 %v351, %v368
        %v374 = vadd.f32 %v352, %v368
        %v375 = vadd.f32 %v353, %v368
        %v376 = vadd.f32 %v354, %v368
        %v377 = vadd.f32 %v355, %v368
        %v378 = vadd.f32 %v356, %v368
        %v379 = vadd.f32 %v357, %v368
        %v380 = vadd.f32 %v358, %v368
        %v381 = vadd.f32 %v359, %v368
        %v382 = vadd.f32 %v360, %v368
        %v383 = vadd.f32 %v361, %v368
        %v384 = vadd.f32 %v362, %v368
        %v385 = vadd.f32 %v363, %v368
        %v386 = vld [vmem:[%s272] sm:$0xff]
        %v387 = vld [vmem:[%s272 + $0x8] sm:$0xff]
        %v388 = vld [vmem:[%s272 + $0x10] sm:$0xff]
        %v389 = vld [vmem:[%s272 + $0x18] sm:$0xff]
        %v390 = vld [vmem:[%s272 + $0x20] sm:$0xff]
        %v391 = vld [vmem:[%s272 + $0x28] sm:$0xff]
        %v392 = vld [vmem:[%s272 + $0x30] sm:$0xff]
        %v393 = vld [vmem:[%s272 + $0x38] sm:$0xff]
        %v394 = vld [vmem:[%s272 + $0x40] sm:$0xff]
        %v395 = vld [vmem:[%s272 + $0x48] sm:$0xff]
        %v396 = vld [vmem:[%s272 + $0x50] sm:$0xff]
        %v397 = vld [vmem:[%s272 + $0x58] sm:$0xff]
        %v398 = vld [vmem:[%s272 + $0x60] sm:$0xff]
        %v399 = vld [vmem:[%s272 + $0x68] sm:$0xff]
        %v400 = vld [vmem:[%s272 + $0x70] sm:$0xff]
        %v401 = vld [vmem:[%s272 + $0x78] sm:$0xff]
        %v402 = vadd.f32 %v370, %v386
        %v403 = vadd.f32 %v371, %v387
        %v404 = vadd.f32 %v372, %v388
        %v405 = vadd.f32 %v373, %v389
        %v406 = vadd.f32 %v374, %v390
        %v407 = vadd.f32 %v375, %v391
        %v408 = vadd.f32 %v376, %v392
        %v409 = vadd.f32 %v377, %v393
        %v410 = vadd.f32 %v378, %v394
        %v411 = vadd.f32 %v379, %v395
        %v412 = vadd.f32 %v380, %v396
        %v413 = vadd.f32 %v381, %v397
        %v414 = vadd.f32 %v382, %v398
        %v415 = vadd.f32 %v383, %v399
        %v416 = vadd.f32 %v384, %v400
        %v417 = vadd.f32 %v385, %v401
        %v418 = vmax.f32 %v402, 0.0
        %v419 = vmax.f32 %v403, 0.0
        %v420 = vmax.f32 %v404, 0.0
        %v421 = vmax.f32 %v405, 0.0
        %v422 = vmax.f32 %v406, 0.0
        %v423 = vmax.f32 %v407, 0.0
        %v424 = vmax.f32 %v408, 0.0
        %v425 = vmax.f32 %v409, 0.0
        %v426 = vmax.f32 %v410, 0.0
        %v427 = vmax.f32 %v411, 0.0
        %v428 = vmax.f32 %v412, 0.0
        %v429 = vmax.f32 %v413, 0.0
        %v430 = vmax.f32 %v414, 0.0
        %v431 = vmax.f32 %v415, 0.0
        %v432 = vmax.f32 %v416, 0.0
        %v433 = vmax.f32 %v417, 0.0
        %434 = vst [vmem:[%s261] sm:$0xff] %v418
        %435 = vst [vmem:[%s261 + $0x8] sm:$0xff] %v419
        %436 = vst [vmem:[%s261 + $0x10] sm:$0xff] %v420
        %437 = vst [vmem:[%s261 + $0x18] sm:$0xff] %v421
        %438 = vst [vmem:[%s261 + $0x20] sm:$0xff] %v422
        %439 = vst [vmem:[%s261 + $0x28] sm:$0xff] %v423
        %440 = vst [vmem:[%s261 + $0x30] sm:$0xff] %v424
        %441 = vst [vmem:[%s261 + $0x38] sm:$0xff] %v425
        %442 = vst [vmem:[%s261 + $0x40] sm:$0xff] %v426
        %443 = vst [vmem:[%s261 + $0x48] sm:$0xff] %v427
        %444 = vst [vmem:[%s261 + $0x50] sm:$0xff] %v428
        %445 = vst [vmem:[%s261 + $0x58] sm:$0xff] %v429
        %446 = vst [vmem:[%s261 + $0x60] sm:$0xff] %v430
        %447 = vst [vmem:[%s261 + $0x68] sm:$0xff] %v431
        %448 = vst [vmem:[%s261 + $0x70] sm:$0xff] %v432
        %449 = vst [vmem:[%s261 + $0x78] sm:$0xff] %v433
        %s450 = sand.u32 %s164, 1
        %s451 = scalar_lea.sflag [#allocation3], %s450
        %s452 = sand.u32 %s164, 1
        %s453 = smul.addr %s452, 128
        %s454 = scalar_lea.vmem [#allocation2], %s453
        // Predicated region
        $region45: #{bottleneck_forward.7} parent=43 // pred_check
          %p455 = pneg %p174
        $region46: #{bottleneck_forward.7} parent=43 // pred_check_branch
          %457 = sbr.rel (%p455) target = $region48
        $region47: #{bottleneck_forward.7} parent=43 // pred_region
          %s458 = smul.u32 16, %s20
          %s460 = ssub.s32 2048, 2048
          %461 = vsyncadd %s451, %s460
          %s462 = smul.addr %s458, 128
          %s463 = scalar_lea.hbm %s6, %s462
          %s464 = sshll.u32 %s454, 4
          %s465 = int_to_ptr.vmem [resolvable:$true] %s464
          %470 = dma.vmem_to_hbm [thread:$0]  %s465, 2048, %s463, %s451, 128, 128, 8
        $region48: #{bottleneck_forward.7} parent=43 // pred_fallthru
          _
      $region44: #{bottleneck_forward.7} parent=5 // pred_fallthru
        _
      %p471 = scmp.le.s32.totalorder 2, %s15
      // Predicated region
      $region49: #{bottleneck_forward.7} parent=5 // pred_check
        %p472 = pneg %p471
      $region50: #{bottleneck_forward.7} parent=5 // pred_check_branch
        %474 = sbr.rel (%p472) target = $region52
      $region51: #{bottleneck_forward.7} parent=5 // pred_region
        %s475 = ssub.s32 %s15, 2
        // Predicated region
        $region53: #{bottleneck_forward.7} parent=51 // pred_check
          %p476 = pneg %p180
        $region54: #{bottleneck_forward.7} parent=51 // pred_check_branch
          %478 = sbr.rel (%p476) target = $region56
        $region55: #{bottleneck_forward.7} parent=51 // pred_region
          %s479 = sand.u32 %s165, 1
          %s480 = scalar_lea.sflag [#allocation3], %s479
          %s481 = sand.u32 %s165, 1
          %s482 = smul.addr %s481, 128
          %s483 = scalar_lea.vmem [#allocation2], %s482
          %484 = dma.done %s480, 2048
        $region56: #{bottleneck_forward.7} parent=51 // pred_fallthru
          _
      $region52: #{bottleneck_forward.7} parent=5 // pred_fallthru
        _
    $region6: #{bottleneck_forward.7} parent=1 // loop_footer
      %s19 = sadd.s32 1, %s15
    $region7: #{bottleneck_forward.7} parent=1 // loop_footer_branch
      %14 = sbr.rel target = $region3
    $region8: #{bottleneck_forward.7} parent=1 // loop_exit
      _
    %485 = vsyncpa [#allocation3], 1
    %s486 = scalar_lea.sflag [#allocation3], 1
    %487 = vsyncpa %s486, 1

// kernel: bottleneck_forward.5
$region0: #{bottleneck_forward.5}
  #allocation0 [shape = 'u32[]', space=smem, size = 0x4, offset = 0x4, fixed_abs, tag = 'smem constant byte address 0x4 - core index']
  #allocation1 [shape = 'u32[144,128]{1,0:T(1,128)}', space=vmem, size = 0x12000, scoped, tag = 'internal scratch']
  #allocation2 [shape = 'f32[18,18,128]{2,1,0:T(8,128)}', space=vmem, size = 0x36000, scoped, tag = 'scratch operand']
  #allocation3 [shape = 'bf16[3,18,16,128]{3,2,1,0:T(16,128)(2,1)}', space=vmem, size = 0x36000, scoped, tag = 'scratch operand']
  #allocation4 [shape = 'f32[256,128]{1,0:T(8,128)}', space=vmem, size = 0x20000, scoped, tag = 'scratch operand']
  %s0 = inlined_call_operand.vmem [shape: bf16[2,16,16,128], index: 0, kind: input, shape index: {}]
  %s1 = inlined_call_operand.vmem [shape: f32[4,1,128], index: 1, kind: input, shape index: {}]
  %s2 = inlined_call_operand.vmem [shape: f32[4,1,128], index: 2, kind: input, shape index: {}]
  %s3 = inlined_call_operand.vmem [shape: f32[1,128], index: 3, kind: input, shape index: {}]
  %s4 = inlined_call_operand.vmem [shape: f32[1,128], index: 4, kind: input, shape index: {}]
  %s5 = inlined_call_operand.vmem [shape: bf16[3,3,128,128], index: 5, kind: input, shape index: {}]
  %s6 = inlined_call_operand.vmem [shape: bf16[2,16,16,128], index: 6, kind: output, shape index: {0}]
  %s7 = inlined_call_operand.vmem [shape: f32[2,1,128], index: 7, kind: output, shape index: {1}]
  %s8 = inlined_call_operand.vmem [shape: f32[2,1,128], index: 8, kind: output, shape index: {2}]
  %9 = xla_tuple %s6, %s7, %s8
  %s10 = sld [smem:[#allocation0]]
  $region73: #{bottleneck_forward.5} parent=0
    _
  %s12 = ssub.s32 1, %s10
  %s13 = scalar_select 0, %s12, %s10
  loop: start=0, step=1, limit=4
  $region2: #{bottleneck_forward.5} parent=0 // loop_pre_header
    _
  $region3: #{bottleneck_forward.5} parent=0 // loop_header
    %s15 = sphi 0, %s19
    %p16 = scmp.ge.s32.totalorder %s15, 4
    %s25 = sphi 0, %s27
    %s28 = sphi 0, %s25
    %s29 = sphi 0, %s28
    %s45 = sphi 0, %s29
    %s49 = sphi 0, %s49
    %s51 = sphi 0, %s49
    %s52 = sphi 0, %s51
    %s66 = sphi 0, %s52
    %s70 = sphi 0, %s70
    %s72 = sphi 0, %s70
    %s73 = sphi 0, %s72
    %s87 = sphi 0, %s73
    %s91 = sphi 0, %s91
    %s93 = sphi 0, %s91
    %s94 = sphi 0, %s93
    %s108 = sphi 0, %s94
    %s112 = sphi 0, %s112
    %s114 = sphi 0, %s112
    %s115 = sphi 0, %s114
    %s129 = sphi 0, %s115
    %s133 = sphi 0, %s133
    %s135 = sphi 0, %s133
    %s136 = sphi 0, %s135
    %s150 = sphi 0, %s136
    %s156 = sphi 0, %s158
    %s159 = sphi 0, %s156
    %s160 = sphi 0, %s159
    %s176 = sphi 0, %s160
    %s182 = sphi 0, %s184
    %s185 = sphi 0, %s182
    %s186 = sphi 0, %s185
    %s202 = sphi 0, %s186
    %s208 = sphi 0, %s210
    %s211 = sphi 0, %s208
    %s212 = sphi 0, %s211
    %s228 = sphi 0, %s212
  $region4: #{bottleneck_forward.5} parent=0 // loop_header_branch
    %18 = sbr.rel (%p16) target = $region8
  $region5: #{bottleneck_forward.5} parent=0 // loop_body
    %s20 = ssub.s32 %s15, 1
    %s21 = ssub.s32 %s15, 2
    %s22 = sadd.s32 %s15, 1
    %s23 = ssub.s32 %s15, %s22
    %p24 = scmp.eq.s32.totalorder %s23, 0
    %s26 = sadd.s32 %s25, 1
    %s27 = scalar_select %p24, %s25, %s26
    %p30 = pneg %p24
    %p31 = scmp.eq.s32.totalorder %s15, 1
    %p32 = por %p30, %p31
    %p33 = scmp.ne.s32.totalorder %s25, %s28
    %p34 = scmp.eq.s32.totalorder %s15, 0
    %p35 = por %p33, %p34
    %p36 = scmp.ne.s32.totalorder %s25, %s28
    %p37 = scmp.eq.s32.totalorder %s20, 1
    %p38 = por %p36, %p37
    %p39 = scmp.ne.s32.totalorder %s28, %s29
    %p40 = scmp.eq.s32.totalorder %s20, 0
    %p41 = por %p39, %p40
    %p42 = scmp.ne.s32.totalorder %s28, %s29
    %p43 = scmp.eq.s32.totalorder %s21, 1
    %p44 = por %p42, %p43
    %p46 = scmp.ne.s32.totalorder %s29, %s45
    %p47 = scmp.eq.s32.totalorder %s21, 0
    %p48 = por %p46, %p47
    %s50 = sadd.s32 %s49, 1
    %p53 = scmp.eq.s32.totalorder %s15, 1
    %p54 = scmp.ne.s32.totalorder %s49, %s51
    %p55 = scmp.eq.s32.totalorder %s15, 0
    %p56 = por %p54, %p55
    %p57 = scmp.ne.s32.totalorder %s49, %s51
    %p58 = scmp.eq.s32.totalorder %s20, 1
    %p59 = por %p57, %p58
    %p60 = scmp.ne.s32.totalorder %s51, %s52
    %p61 = scmp.eq.s32.totalorder %s20, 0
    %p62 = por %p60, %p61
    %p63 = scmp.ne.s32.totalorder %s51, %s52
    %p64 = scmp.eq.s32.totalorder %s21, 1
    %p65 = por %p63, %p64
    %p67 = scmp.ne.s32.totalorder %s52, %s66
    %p68 = scmp.eq.s32.totalorder %s21, 0
    %p69 = por %p67, %p68
    %s71 = sadd.s32 %s70, 1
    %p74 = scmp.eq.s32.totalorder %s15, 1
    %p75 = scmp.ne.s32.totalorder %s70, %s72
    %p76 = scmp.eq.s32.totalorder %s15, 0
    %p77 = por %p75, %p76
    %p78 = scmp.ne.s32.totalorder %s70, %s72
    %p79 = scmp.eq.s32.totalorder %s20, 1
    %p80 = por %p78, %p79
    %p81 = scmp.ne.s32.totalorder %s72, %s73
    %p82 = scmp.eq.s32.totalorder %s20, 0
    %p83 = por %p81, %p82
    %p84 = scmp.ne.s32.totalorder %s72, %s73
    %p85 = scmp.eq.s32.totalorder %s21, 1
    %p86 = por %p84, %p85
    %p88 = scmp.ne.s32.totalorder %s73, %s87
    %p89 = scmp.eq.s32.totalorder %s21, 0
    %p90 = por %p88, %p89
    %s92 = sadd.s32 %s91, 1
    %p95 = scmp.eq.s32.totalorder %s15, 1
    %p96 = scmp.ne.s32.totalorder %s91, %s93
    %p97 = scmp.eq.s32.totalorder %s15, 0
    %p98 = por %p96, %p97
    %p99 = scmp.ne.s32.totalorder %s91, %s93
    %p100 = scmp.eq.s32.totalorder %s20, 1
    %p101 = por %p99, %p100
    %p102 = scmp.ne.s32.totalorder %s93, %s94
    %p103 = scmp.eq.s32.totalorder %s20, 0
    %p104 = por %p102, %p103
    %p105 = scmp.ne.s32.totalorder %s93, %s94
    %p106 = scmp.eq.s32.totalorder %s21, 1
    %p107 = por %p105, %p106
    %p109 = scmp.ne.s32.totalorder %s94, %s108
    %p110 = scmp.eq.s32.totalorder %s21, 0
    %p111 = por %p109, %p110
    %s113 = sadd.s32 %s112, 1
    %p116 = scmp.eq.s32.totalorder %s15, 1
    %p117 = scmp.ne.s32.totalorder %s112, %s114
    %p118 = scmp.eq.s32.totalorder %s15, 0
    %p119 = por %p117, %p118
    %p120 = scmp.ne.s32.totalorder %s112, %s114
    %p121 = scmp.eq.s32.totalorder %s20, 1
    %p122 = por %p120, %p121
    %p123 = scmp.ne.s32.totalorder %s114, %s115
    %p124 = scmp.eq.s32.totalorder %s20, 0
    %p125 = por %p123, %p124
    %p126 = scmp.ne.s32.totalorder %s114, %s115
    %p127 = scmp.eq.s32.totalorder %s21, 1
    %p128 = por %p126, %p127
    %p130 = scmp.ne.s32.totalorder %s115, %s129
    %p131 = scmp.eq.s32.totalorder %s21, 0
    %p132 = por %p130, %p131
    %s134 = sadd.s32 %s133, 1
    %p137 = scmp.eq.s32.totalorder %s15, 1
    %p138 = scmp.ne.s32.totalorder %s133, %s135
    %p139 = scmp.eq.s32.totalorder %s15, 0
    %p140 = por %p138, %p139
    %p141 = scmp.ne.s32.totalorder %s133, %s135
    %p142 = scmp.eq.s32.totalorder %s20, 1
    %p143 = por %p141, %p142
    %p144 = scmp.ne.s32.totalorder %s135, %s136
    %p145 = scmp.eq.s32.totalorder %s20, 0
    %p146 = por %p144, %p145
    %p147 = scmp.ne.s32.totalorder %s135, %s136
    %p148 = scmp.eq.s32.totalorder %s21, 1
    %p149 = por %p147, %p148
    %p151 = scmp.ne.s32.totalorder %s136, %s150
    %p152 = scmp.eq.s32.totalorder %s21, 0
    %p153 = por %p151, %p152
    %s154 = ssub.s32 %s15, %s22
    %p155 = scmp.eq.s32.totalorder %s154, 0
    %s157 = sadd.s32 %s156, 1
    %s158 = scalar_select %p155, %s156, %s157
    %p161 = pneg %p155
    %p162 = scmp.eq.s32.totalorder %s15, 1
    %p163 = por %p161, %p162
    %p164 = scmp.ne.s32.totalorder %s156, %s159
    %p165 = scmp.eq.s32.totalorder %s15, 0
    %p166 = por %p164, %p165
    %p167 = scmp.ne.s32.totalorder %s156, %s159
    %p168 = scmp.eq.s32.totalorder %s20, 1
    %p169 = por %p167, %p168
    %p170 = scmp.ne.s32.totalorder %s159, %s160
    %p171 = scmp.eq.s32.totalorder %s20, 0
    %p172 = por %p170, %p171
    %p173 = scmp.ne.s32.totalorder %s159, %s160
    %p174 = scmp.eq.s32.totalorder %s21, 1
    %p175 = por %p173, %p174
    %p177 = scmp.ne.s32.totalorder %s160, %s176
    %p178 = scmp.eq.s32.totalorder %s21, 0
    %p179 = por %p177, %p178
    %s180 = ssub.s32 %s15, %s22
    %p181 = scmp.eq.s32.totalorder %s180, 0
    %s183 = sadd.s32 %s182, 1
    %s184 = scalar_select %p181, %s182, %s183
    %p187 = pneg %p181
    %p188 = scmp.eq.s32.totalorder %s15, 1
    %p189 = por %p187, %p188
    %p190 = scmp.ne.s32.totalorder %s182, %s185
    %p191 = scmp.eq.s32.totalorder %s15, 0
    %p192 = por %p190, %p191
    %p193 = scmp.ne.s32.totalorder %s182, %s185
    %p194 = scmp.eq.s32.totalorder %s20, 1
    %p195 = por %p193, %p194
    %p196 = scmp.ne.s32.totalorder %s185, %s186
    %p197 = scmp.eq.s32.totalorder %s20, 0
    %p198 = por %p196, %p197
    %p199 = scmp.ne.s32.totalorder %s185, %s186
    %p200 = scmp.eq.s32.totalorder %s21, 1
    %p201 = por %p199, %p200
    %p203 = scmp.ne.s32.totalorder %s186, %s202
    %p204 = scmp.eq.s32.totalorder %s21, 0
    %p205 = por %p203, %p204
    %s206 = ssub.s32 %s15, %s22
    %p207 = scmp.eq.s32.totalorder %s206, 0
    %s209 = sadd.s32 %s208, 1
    %s210 = scalar_select %p207, %s208, %s209
    %p213 = pneg %p207
    %p214 = scmp.eq.s32.totalorder %s15, 1
    %p215 = por %p213, %p214
    %p216 = scmp.ne.s32.totalorder %s208, %s211
    %p217 = scmp.eq.s32.totalorder %s15, 0
    %p218 = por %p216, %p217
    %p219 = scmp.ne.s32.totalorder %s208, %s211
    %p220 = scmp.eq.s32.totalorder %s20, 1
    %p221 = por %p219, %p220
    %p222 = scmp.ne.s32.totalorder %s211, %s212
    %p223 = scmp.eq.s32.totalorder %s20, 0
    %p224 = por %p222, %p223
    %p225 = scmp.ne.s32.totalorder %s211, %s212
    %p226 = scmp.eq.s32.totalorder %s21, 1
    %p227 = por %p225, %p226
    %p229 = scmp.ne.s32.totalorder %s212, %s228
    %p230 = scmp.eq.s32.totalorder %s21, 0
    %p231 = por %p229, %p230
    %p232 = scmp.le.s32.totalorder 1, %s15
    %p233 = scmp.lt.s32.totalorder %s15, 3
    %p234 = pnand %p232, %p233
    %p235 = pneg %p234
    // Predicated region
    $region9: #{bottleneck_forward.5} parent=5 // pred_check
      _
    $region10: #{bottleneck_forward.5} parent=5 // pred_check_branch
      %237 = sbr.rel (%p234) target = $region12
    $region11: #{bottleneck_forward.5} parent=5 // pred_region
      %s238 = ssub.s32 %s15, 1
      // Predicated region
      $region13: #{bottleneck_forward.5} parent=11 // pred_check
        %p239 = pneg %p62
      $region14: #{bottleneck_forward.5} parent=11 // pred_check_branch
        %241 = sbr.rel (%p239) target = $region16
      $region15: #{bottleneck_forward.5} parent=11 // pred_region
        _
      $region16: #{bottleneck_forward.5} parent=11 // pred_fallthru
        _
      // Predicated region
      $region17: #{bottleneck_forward.5} parent=11 // pred_check
        %p242 = pneg %p83
      $region18: #{bottleneck_forward.5} parent=11 // pred_check_branch
        %244 = sbr.rel (%p242) target = $region20
      $region19: #{bottleneck_forward.5} parent=11 // pred_region
        _
      $region20: #{bottleneck_forward.5} parent=11 // pred_fallthru
        _
      // Predicated region
      $region21: #{bottleneck_forward.5} parent=11 // pred_check
        %p245 = pneg %p104
      $region22: #{bottleneck_forward.5} parent=11 // pred_check_branch
        %247 = sbr.rel (%p245) target = $region24
      $region23: #{bottleneck_forward.5} parent=11 // pred_region
        _
      $region24: #{bottleneck_forward.5} parent=11 // pred_fallthru
        _
      // Predicated region
      $region25: #{bottleneck_forward.5} parent=11 // pred_check
        %p248 = pneg %p125
      $region26: #{bottleneck_forward.5} parent=11 // pred_check_branch
        %250 = sbr.rel (%p248) target = $region28
      $region27: #{bottleneck_forward.5} parent=11 // pred_region
        _
      $region28: #{bottleneck_forward.5} parent=11 // pred_fallthru
        _
      // Predicated region
      $region29: #{bottleneck_forward.5} parent=11 // pred_check
        %p251 = pneg %p146
      $region30: #{bottleneck_forward.5} parent=11 // pred_check_branch
        %253 = sbr.rel (%p251) target = $region32
      $region31: #{bottleneck_forward.5} parent=11 // pred_region
        _
      $region32: #{bottleneck_forward.5} parent=11 // pred_fallthru
        _
    $region12: #{bottleneck_forward.5} parent=5 // pred_fallthru
      _
    %p254 = scmp.lt.s32.totalorder %s15, 2
    // Predicated region
    $region33: #{bottleneck_forward.5} parent=5 // pred_check
      %p255 = pneg %p254
    $region34: #{bottleneck_forward.5} parent=5 // pred_check_branch
      %257 = sbr.rel (%p255) target = $region36
    $region35: #{bottleneck_forward.5} parent=5 // pred_region
      // Predicated region
      $region37: #{bottleneck_forward.5} parent=35 // pred_check
        %p258 = pneg %p35
      $region38: #{bottleneck_forward.5} parent=35 // pred_check_branch
        %260 = sbr.rel (%p258) target = $region40
      $region39: #{bottleneck_forward.5} parent=35 // pred_region
        %p261 = scmp.lt.s32.totalorder %s15, 1
        %s262 = scalar_select %p261, %s15, 1
        %s263 = smul.addr %s262, 32
        %s264 = smul.addr %s263, 4
        %s265 = scalar_lea.vmem %s0, %s264
      $region40: #{bottleneck_forward.5} parent=35 // pred_fallthru
        _
    $region36: #{bottleneck_forward.5} parent=5 // pred_fallthru
      _
    %p266 = scmp.le.s32.totalorder 1, %s15
    %p267 = scmp.lt.s32.totalorder %s15, 3
    %p268 = pnand %p266, %p267
    %p269 = pneg %p268
    // Predicated region
    $region41: #{bottleneck_forward.5} parent=5 // pred_check
      _
    $region42: #{bottleneck_forward.5} parent=5 // pred_check_branch
      %271 = sbr.rel (%p268) target = $region44
    $region43: #{bottleneck_forward.5} parent=5 // pred_region
      %s272 = ssub.s32 %s15, 1
      %p273 = scmp.lt.s32.totalorder %s20, 1
      %s274 = scalar_select %p273, %s20, 1
      %s275 = smul.addr %s274, 32
      %s276 = smul.addr %s275, 4
      %s277 = scalar_lea.vmem %s0, %s276
      %p278 = pneg %p41
      %p279 = pneg %p38
      %p280 = pneg %p62
      %p281 = pneg %p59
      %p282 = pneg %p83
      %p283 = pneg %p80
      %p284 = pneg %p104
      %p285 = pneg %p101
      %p286 = pneg %p125
      %p287 = pneg %p122
      %p288 = pneg %p146
      %p289 = pneg %p143
      %p290 = pneg %p172
      %p291 = pneg %p169
      %p292 = scmp.lt.s32.totalorder %s20, 1
      %s293 = scalar_select %p292, %s20, 1
      %s294 = smul.addr %s293, 32
      %s295 = smul.addr %s294, 4
      %s296 = scalar_lea.vmem %s6, %s295
      %p297 = pneg %p198
      %p298 = pneg %p195
      %p299 = scmp.lt.s32.totalorder %s20, 1
      %s300 = scalar_select %p299, %s20, 1
      %s301 = scalar_lea.vmem %s7, %s300
      %p302 = pneg %p224
      %p303 = pneg %p221
      %p304 = scmp.lt.s32.totalorder %s20, 1
      %s305 = scalar_select %p304, %s20, 1
      %s306 = scalar_lea.vmem %s8, %s305
      %p307 = scmp.lt.s32.totalorder %s20, 1
      %s308 = scalar_select %p307, %s20, 1
      %s309 = smul.addr %s308, 32
      %s310 = smul.addr %s309, 4
      %s311 = scalar_lea.vmem %s0, %s310
      %p312 = scmp.lt.s32.totalorder %s20, 1
      %s313 = scalar_select %p312, %s20, 1
      %s314 = smul.addr %s313, 32
      %s315 = smul.addr %s314, 4
      %s316 = scalar_lea.vmem %s6, %s315
      %p317 = scmp.lt.s32.totalorder %s20, 1
      %s318 = scalar_select %p317, %s20, 1
      %s319 = scalar_lea.vmem %s7, %s318
      %p320 = scmp.lt.s32.totalorder %s20, 1
      %s321 = scalar_select %p320, %s20, 1
      %s322 = scalar_lea.vmem %s8, %s321
      %v324 = vld [vmem:[%s1] sm:$0x1]
      %v325 = vld [vmem:[%s1 + $0x1] sm:$0x1]
      %v326 = vld [vmem:[%s1 + $0x2] sm:$0x1]
      %v327 = vld [vmem:[%s1 + $0x3] sm:$0x1]
      %vm328 = vcmask 1040384
      %v329 = vsel %vm328, %v324, 0.0
      %v330 = vsel %vm328, %v325, 0.0
      %v331 = vadd.f32 %v329, %v330
      %v332 = vsel %vm328, %v326, 0.0
      %v333 = vadd.f32 %v331, %v332
      %v334 = vsel %vm328, %v327, 0.0
      %v335 = vadd.f32 %v333, %v334
      %v336 = vld [vmem:[%s2] sm:$0x1]
      %v337 = vld [vmem:[%s2 + $0x1] sm:$0x1]
      %v338 = vld [vmem:[%s2 + $0x2] sm:$0x1]
      %v339 = vld [vmem:[%s2 + $0x3] sm:$0x1]
      %v340 = vsel %vm328, %v336, 0.0
      %v341 = vsel %vm328, %v337, 0.0
      %v342 = vadd.f32 %v340, %v341
      %v343 = vsel %vm328, %v338, 0.0
      %v344 = vadd.f32 %v342, %v343
      %v345 = vsel %vm328, %v339, 0.0
      %v346 = vadd.f32 %v344, %v345
      %v347 = vmul.f32 %v335, 0.001953125
      %v348 = vmul.f32 %v346, 0.001953125
      %v349 = vmul.f32 %v347, %v347
      %v350 = vsub.f32 %v348, %v349
      %v351 = vmax.f32 %v350, 0.0
      %v352 = vld [vmem:[%s3] sm:$0x1]
      %v353 = vadd.f32 %v351, 1e-05
      %v354 = vrsqrt.pop %v353
      %v355 = vmul.f32 %v352, %v354
      %v356 = vld [vmem:[%s4] sm:$0x1]
      %v357 = vmul.f32 %v347, %v355
      %v358 = vsub.f32 %v356, %v357
      %v359 = vld [vmem:[%s311] sm:$0xf]
      %v360 = vld [vmem:[%s311 + $0x4] sm:$0xf]
      %v361 = vld [vmem:[%s311 + $0x8] sm:$0xf]
      %v362 = vld [vmem:[%s311 + $0xc] sm:$0xf]
      %v363 = vld [vmem:[%s311 + $0x10] sm:$0xf]
      %v364 = vld [vmem:[%s311 + $0x14] sm:$0xf]
      %v365 = vld [vmem:[%s311 + $0x18] sm:$0xf]
      %v366 = vld [vmem:[%s311 + $0x1c] sm:$0xf]
      %v367 = vld [vmem:[%s311 + $0x20] sm:$0xf]
      %v368 = vld [vmem:[%s311 + $0x24] sm:$0xf]
      %v369 = vld [vmem:[%s311 + $0x28] sm:$0xf]
      %v370 = vld [vmem:[%s311 + $0x2c] sm:$0xf]
      %v371 = vld [vmem:[%s311 + $0x30] sm:$0xf]
      %v372 = vld [vmem:[%s311 + $0x34] sm:$0xf]
      %v373 = vld [vmem:[%s311 + $0x38] sm:$0xf]
      %v374 = vld [vmem:[%s311 + $0x3c] sm:$0xf]
      %v375 = vld [vmem:[%s311 + $0x40] sm:$0xf]
      %v376 = vld [vmem:[%s311 + $0x44] sm:$0xf]
      %v377 = vld [vmem:[%s311 + $0x48] sm:$0xf]
      %v378 = vld [vmem:[%s311 + $0x4c] sm:$0xf]
      %v379 = vld [vmem:[%s311 + $0x50] sm:$0xf]
      %v380 = vld [vmem:[%s311 + $0x54] sm:$0xf]
      %v381 = vld [vmem:[%s311 + $0x58] sm:$0xf]
      %v382 = vld [vmem:[%s311 + $0x5c] sm:$0xf]
      %v383 = vld [vmem:[%s311 + $0x60] sm:$0xf]
      %v384 = vld [vmem:[%s311 + $0x64] sm:$0xf]
      %v385 = vld [vmem:[%s311 + $0x68] sm:$0xf]
      %v386 = vld [vmem:[%s311 + $0x6c] sm:$0xf]
      %v387 = vld [vmem:[%s311 + $0x70] sm:$0xf]
      %v388 = vld [vmem:[%s311 + $0x74] sm:$0xf]
      %v389 = vld [vmem:[%s311 + $0x78] sm:$0xf]
      %v390 = vld [vmem:[%s311 + $0x7c] sm:$0xf]
      %v391 = vunpack.c.l.bf16 %v359
      %v392 = vunpack.c.l.bf16 %v360
      %v393 = vunpack.c.l.bf16 %v361
      %v394 = vunpack.c.l.bf16 %v362
      %v395 = vunpack.c.l.bf16 %v363
      %v396 = vunpack.c.l.bf16 %v364
      %v397 = vunpack.c.l.bf16 %v365
      %v398 = vunpack.c.l.bf16 %v366
      %v399 = vunpack.c.l.bf16 %v367
      %v400 = vunpack.c.l.bf16 %v368
      %v401 = vunpack.c.l.bf16 %v369
      %v402 = vunpack.c.l.bf16 %v370
      %v403 = vunpack.c.l.bf16 %v371
      %v404 = vunpack.c.l.bf16 %v372
      %v405 = vunpack.c.l.bf16 %v373
      %v406 = vunpack.c.l.bf16 %v374
      %v407 = vunpack.c.l.bf16 %v375
      %v408 = vunpack.c.l.bf16 %v376
      %v409 = vunpack.c.l.bf16 %v377
      %v410 = vunpack.c.l.bf16 %v378
      %v411 = vunpack.c.l.bf16 %v379
      %v412 = vunpack.c.l.bf16 %v380
      %v413 = vunpack.c.l.bf16 %v381
      %v414 = vunpack.c.l.bf16 %v382
      %v415 = vunpack.c.l.bf16 %v383
      %v416 = vunpack.c.l.bf16 %v384
      %v417 = vunpack.c.l.bf16 %v385
      %v418 = vunpack.c.l.bf16 %v386
      %v419 = vunpack.c.l.bf16 %v387
      %v420 = vunpack.c.l.bf16 %v388
      %v421 = vunpack.c.l.bf16 %v389
      %v422 = vunpack.c.l.bf16 %v390
      %v424 = vlaneseq
      %v425 = vshrl.u32 %v424, 7
      %v426 = vsub.s32 0, %v425
      %v427 = vrot.slane %v355, %v426
      %v429 = vmul.f32 %v391, %v427
      %v430 = vmul.f32 %v392, %v427
      %v431 = vmul.f32 %v393, %v427
      %v432 = vmul.f32 %v394, %v427
      %v433 = vmul.f32 %v395, %v427
      %v434 = vmul.f32 %v396, %v427
      %v435 = vmul.f32 %v397, %v427
      %v436 = vmul.f32 %v398, %v427
      %v437 = vmul.f32 %v399, %v427
      %v438 = vmul.f32 %v400, %v427
      %v439 = vmul.f32 %v401, %v427
      %v440 = vmul.f32 %v402, %v427
      %v441 = vmul.f32 %v403, %v427
      %v442 = vmul.f32 %v404, %v427
      %v443 = vmul.f32 %v405, %v427
      %v444 = vmul.f32 %v406, %v427
      %v445 = vmul.f32 %v407, %v427
      %v446 = vmul.f32 %v408, %v427
      %v447 = vmul.f32 %v409, %v427
      %v448 = vmul.f32 %v410, %v427
      %v449 = vmul.f32 %v411, %v427
      %v450 = vmul.f32 %v412, %v427
      %v451 = vmul.f32 %v413, %v427
      %v452 = vmul.f32 %v414, %v427
      %v453 = vmul.f32 %v415, %v427
      %v454 = vmul.f32 %v416, %v427
      %v455 = vmul.f32 %v417, %v427
      %v456 = vmul.f32 %v418, %v427
      %v457 = vmul.f32 %v419, %v427
      %v458 = vmul.f32 %v420, %v427
      %v459 = vmul.f32 %v421, %v427
      %v460 = vmul.f32 %v422, %v427
      %v462 = vlaneseq
      %v463 = vshrl.u32 %v462, 7
      %v464 = vsub.s32 0, %v463
      %v465 = vrot.slane %v358, %v464
      %v467 = vadd.f32 %v429, %v465
      %v468 = vadd.f32 %v430, %v465
      %v469 = vadd.f32 %v431, %v465
      %v470 = vadd.f32 %v432, %v465
      %v471 = vadd.f32 %v433, %v465
      %v472 = vadd.f32 %v434, %v465
      %v473 = vadd.f32 %v435, %v465
      %v474 = vadd.f32 %v436, %v465
      %v475 = vadd.f32 %v437, %v465
      %v476 = vadd.f32 %v438, %v465
      %v477 = vadd.f32 %v439, %v465
      %v478 = vadd.f32 %v440, %v465
      %v479 = vadd.f32 %v441, %v465
      %v480 = vadd.f32 %v442, %v465
      %v481 = vadd.f32 %v443, %v465
      %v482 = vadd.f32 %v444, %v465
      %v483 = vadd.f32 %v445, %v465
      %v484 = vadd.f32 %v446, %v465
      %v485 = vadd.f32 %v447, %v465
      %v486 = vadd.f32 %v448, %v465
      %v487 = vadd.f32 %v449, %v465
      %v488 = vadd.f32 %v450, %v465
      %v489 = vadd.f32 %v451, %v465
      %v490 = vadd.f32 %v452, %v465
      %v491 = vadd.f32 %v453, %v465
      %v492 = vadd.f32 %v454, %v465
      %v493 = vadd.f32 %v455, %v465
      %v494 = vadd.f32 %v456, %v465
      %v495 = vadd.f32 %v457, %v465
      %v496 = vadd.f32 %v458, %v465
      %v497 = vadd.f32 %v459, %v465
      %v498 = vadd.f32 %v460, %v465
      %v499 = vmax.f32 %v467, 0.0
      %v500 = vmax.f32 %v468, 0.0
      %v501 = vmax.f32 %v469, 0.0
      %v502 = vmax.f32 %v470, 0.0
      %v503 = vmax.f32 %v471, 0.0
      %v504 = vmax.f32 %v472, 0.0
      %v505 = vmax.f32 %v473, 0.0
      %v506 = vmax.f32 %v474, 0.0
      %v507 = vmax.f32 %v475, 0.0
      %v508 = vmax.f32 %v476, 0.0
      %v509 = vmax.f32 %v477, 0.0
      %v510 = vmax.f32 %v478, 0.0
      %v511 = vmax.f32 %v479, 0.0
      %v512 = vmax.f32 %v480, 0.0
      %v513 = vmax.f32 %v481, 0.0
      %v514 = vmax.f32 %v482, 0.0
      %v515 = vmax.f32 %v483, 0.0
      %v516 = vmax.f32 %v484, 0.0
      %v517 = vmax.f32 %v485, 0.0
      %v518 = vmax.f32 %v486, 0.0
      %v519 = vmax.f32 %v487, 0.0
      %v520 = vmax.f32 %v488, 0.0
      %v521 = vmax.f32 %v489, 0.0
      %v522 = vmax.f32 %v490, 0.0
      %v523 = vmax.f32 %v491, 0.0
      %v524 = vmax.f32 %v492, 0.0
      %v525 = vmax.f32 %v493, 0.0
      %v526 = vmax.f32 %v494, 0.0
      %v527 = vmax.f32 %v495, 0.0
      %v528 = vmax.f32 %v496, 0.0
      %v529 = vmax.f32 %v497, 0.0
      %v530 = vmax.f32 %v498, 0.0
      %531 = vst [vmem:[#allocation2] sm:$0xff] 0.0
      %532 = vst [vmem:[#allocation2 + $0x8] sm:$0xff] 0.0
      %533 = vst [vmem:[#allocation2 + $0x10] sm:$0x3] 0.0
      %534 = vst [vmem:[#allocation2 + $0x18] sm:$0xff] 0.0
      %535 = vst [vmem:[#allocation2 + $0x20] sm:$0xff] 0.0
      %536 = vst [vmem:[#allocation2 + $0x28] sm:$0x3] 0.0
      %537 = vst [vmem:[#allocation2 + $0x30] sm:$0xff] 0.0
      %538 = vst [vmem:[#allocation2 + $0x38] sm:$0xff] 0.0
      %539 = vst [vmem:[#allocation2 + $0x40] sm:$0x3] 0.0
      %540 = vst [vmem:[#allocation2 + $0x48] sm:$0xff] 0.0
      %541 = vst [vmem:[#allocation2 + $0x50] sm:$0xff] 0.0
      %542 = vst [vmem:[#allocation2 + $0x58] sm:$0x3] 0.0
      %543 = vst [vmem:[#allocation2 + $0x60] sm:$0xff] 0.0
      %544 = vst [vmem:[#allocation2 + $0x68] sm:$0xff] 0.0
      %545 = vst [vmem:[#allocation2 + $0x70] sm:$0x3] 0.0
      %546 = vst [vmem:[#allocation2 + $0x78] sm:$0xff] 0.0
      %547 = vst [vmem:[#allocation2 + $0x80] sm:$0xff] 0.0
      %548 = vst [vmem:[#allocation2 + $0x88] sm:$0x3] 0.0
      %549 = vst [vmem:[#allocation2 + $0x90] sm:$0xff] 0.0
      %550 = vst [vmem:[#allocation2 + $0x98] sm:$0xff] 0.0
      %551 = vst [vmem:[#allocation2 + $0xa0] sm:$0x3] 0.0
      %552 = vst [vmem:[#allocation2 + $0xa8] sm:$0xff] 0.0
      %553 = vst [vmem:[#allocation2 + $0xb0] sm:$0xff] 0.0
      %554 = vst [vmem:[#allocation2 + $0xb8] sm:$0x3] 0.0
      %555 = vst [vmem:[#allocation2 + $0xc0] sm:$0xff] 0.0
      %556 = vst [vmem:[#allocation2 + $0xc8] sm:$0xff] 0.0
      %557 = vst [vmem:[#allocation2 + $0xd0] sm:$0x3] 0.0
      %558 = vst [vmem:[#allocation2 + $0xd8] sm:$0xff] 0.0
      %559 = vst [vmem:[#allocation2 + $0xe0] sm:$0xff] 0.0
      %560 = vst [vmem:[#allocation2 + $0xe8] sm:$0x3] 0.0
      %561 = vst [vmem:[#allocation2 + $0xf0] sm:$0xff] 0.0
      %562 = vst [vmem:[#allocation2 + $0xf8] sm:$0xff] 0.0
      %563 = vst [vmem:[#allocation2 + $0x100] sm:$0x3] 0.0
      %564 = vst [vmem:[#allocation2 + $0x108] sm:$0xff] 0.0
      %565 = vst [vmem:[#allocation2 + $0x110] sm:$0xff] 0.0
      %566 = vst [vmem:[#allocation2 + $0x118] sm:$0x3] 0.0
      %567 = vst [vmem:[#allocation2 + $0x120] sm:$0xff] 0.0
      %568 = vst [vmem:[#allocation2 + $0x128] sm:$0xff] 0.0
      %569 = vst [vmem:[#allocation2 + $0x130] sm:$0x3] 0.0
      %570 = vst [vmem:[#allocation2 + $0x138] sm:$0xff] 0.0
      %571 = vst [vmem:[#allocation2 + $0x140] sm:$0xff] 0.0
      %572 = vst [vmem:[#allocation2 + $0x148] sm:$0x3] 0.0
      %573 = vst [vmem:[#allocation2 + $0x150] sm:$0xff] 0.0
      %574 = vst [vmem:[#allocation2 + $0x158] sm:$0xff] 0.0
      %575 = vst [vmem:[#allocation2 + $0x160] sm:$0x3] 0.0
      %576 = vst [vmem:[#allocation2 + $0x168] sm:$0xff] 0.0
      %577 = vst [vmem:[#allocation2 + $0x170] sm:$0xff] 0.0
      %578 = vst [vmem:[#allocation2 + $0x178] sm:$0x3] 0.0
      %579 = vst [vmem:[#allocation2 + $0x180] sm:$0xff] 0.0
      %580 = vst [vmem:[#allocation2 + $0x188] sm:$0xff] 0.0
      %581 = vst [vmem:[#allocation2 + $0x190] sm:$0x3] 0.0
      %582 = vst [vmem:[#allocation2 + $0x198] sm:$0xff] 0.0
      %583 = vst [vmem:[#allocation2 + $0x1a0] sm:$0xff] 0.0
      %584 = vst [vmem:[#allocation2 + $0x1a8] sm:$0x3] 0.0
      %s585 = scalar_lea.vmem [#allocation2], 24
      %586 = vst [vmem:[%s585 + $0x1] sm:$0xff] %v499
      %587 = vst [vmem:[%s585 + $0x9] sm:$0xff] %v500
      %588 = vst [vmem:[%s585 + $0x19] sm:$0xff] %v501
      %589 = vst [vmem:[%s585 + $0x21] sm:$0xff] %v502
      %590 = vst [vmem:[%s585 + $0x31] sm:$0xff] %v503
      %591 = vst [vmem:[%s585 + $0x39] sm:$0xff] %v504
      %592 = vst [vmem:[%s585 + $0x49] sm:$0xff] %v505
      %593 = vst [vmem:[%s585 + $0x51] sm:$0xff] %v506
      %594 = vst [vmem:[%s585 + $0x61] sm:$0xff] %v507
      %595 = vst [vmem:[%s585 + $0x69] sm:$0xff] %v508
      %596 = vst [vmem:[%s585 + $0x79] sm:$0xff] %v509
      %597 = vst [vmem:[%s585 + $0x81] sm:$0xff] %v510
      %598 = vst [vmem:[%s585 + $0x91] sm:$0xff] %v511
      %599 = vst [vmem:[%s585 + $0x99] sm:$0xff] %v512
      %600 = vst [vmem:[%s585 + $0xa9] sm:$0xff] %v513
      %601 = vst [vmem:[%s585 + $0xb1] sm:$0xff] %v514
      %602 = vst [vmem:[%s585 + $0xc1] sm:$0xff] %v515
      %603 = vst [vmem:[%s585 + $0xc9] sm:$0xff] %v516
      %604 = vst [vmem:[%s585 + $0xd9] sm:$0xff] %v517
      %605 = vst [vmem:[%s585 + $0xe1] sm:$0xff] %v518
      %606 = vst [vmem:[%s585 + $0xf1] sm:$0xff] %v519
      %607 = vst [vmem:[%s585 + $0xf9] sm:$0xff] %v520
      %608 = vst [vmem:[%s585 + $0x109] sm:$0xff] %v521
      %609 = vst [vmem:[%s585 + $0x111] sm:$0xff] %v522
      %610 = vst [vmem:[%s585 + $0x121] sm:$0xff] %v523
      %611 = vst [vmem:[%s585 + $0x129] sm:$0xff] %v524
      %612 = vst [vmem:[%s585 + $0x139] sm:$0xff] %v525
      %613 = vst [vmem:[%s585 + $0x141] sm:$0xff] %v526
      %614 = vst [vmem:[%s585 + $0x151] sm:$0xff] %v527
      %615 = vst [vmem:[%s585 + $0x159] sm:$0xff] %v528
      %616 = vst [vmem:[%s585 + $0x169] sm:$0xff] %v529
      %617 = vst [vmem:[%s585 + $0x171] sm:$0xff] %v530
      %v618 = vld [vmem:[#allocation2] sm:$0xff]
      %v619 = vld [vmem:[#allocation2 + $0x8] sm:$0xff]
      %v620 = vld [vmem:[#allocation2 + $0x18] sm:$0xff]
      %v621 = vld [vmem:[#allocation2 + $0x20] sm:$0xff]
      %v622 = vld [vmem:[#allocation2 + $0x30] sm:$0xff]
      %v623 = vld [vmem:[#allocation2 + $0x38] sm:$0xff]
      %v624 = vld [vmem:[#allocation2 + $0x48] sm:$0xff]
      %v625 = vld [vmem:[#allocation2 + $0x50] sm:$0xff]
      %v626 = vld [vmem:[#allocation2 + $0x60] sm:$0xff]
      %v627 = vld [vmem:[#allocation2 + $0x68] sm:$0xff]
      %v628 = vld [vmem:[#allocation2 + $0x78] sm:$0xff]
      %v629 = vld [vmem:[#allocation2 + $0x80] sm:$0xff]
      %v630 = vld [vmem:[#allocation2 + $0x90] sm:$0xff]
      %v631 = vld [vmem:[#allocation2 + $0x98] sm:$0xff]
      %v632 = vld [vmem:[#allocation2 + $0xa8] sm:$0xff]
      %v633 = vld [vmem:[#allocation2 + $0xb0] sm:$0xff]
      %v634 = vld [vmem:[#allocation2 + $0xc0] sm:$0xff]
      %v635 = vld [vmem:[#allocation2 + $0xc8] sm:$0xff]
      %v636 = vld [vmem:[#allocation2 + $0xd8] sm:$0xff]
      %v637 = vld [vmem:[#allocation2 + $0xe0] sm:$0xff]
      %v638 = vld [vmem:[#allocation2 + $0xf0] sm:$0xff]
      %v639 = vld [vmem:[#allocation2 + $0xf8] sm:$0xff]
      %v640 = vld [vmem:[#allocation2 + $0x108] sm:$0xff]
      %v641 = vld [vmem:[#allocation2 + $0x110] sm:$0xff]
      %v642 = vld [vmem:[#allocation2 + $0x120] sm:$0xff]
      %v643 = vld [vmem:[#allocation2 + $0x128] sm:$0xff]
      %v644 = vld [vmem:[#allocation2 + $0x138] sm:$0xff]
      %v645 = vld [vmem:[#allocation2 + $0x140] sm:$0xff]
      %v646 = vld [vmem:[#allocation2 + $0x150] sm:$0xff]
      %v647 = vld [vmem:[#allocation2 + $0x158] sm:$0xff]
      %v648 = vld [vmem:[#allocation2 + $0x168] sm:$0xff]
      %v649 = vld [vmem:[#allocation2 + $0x170] sm:$0xff]
      %v650 = vld [vmem:[#allocation2 + $0x180] sm:$0xff]
      %v651 = vld [vmem:[#allocation2 + $0x188] sm:$0xff]
      %v652 = vld [vmem:[#allocation2 + $0x198] sm:$0xff]
      %v653 = vld [vmem:[#allocation2 + $0x1a0] sm:$0xff]
      %v654 = vpack.c.bf16 %v619, %v618
      %v655 = vpack.c.bf16 %v621, %v620
      %v656 = vpack.c.bf16 %v623, %v622
      %v657 = vpack.c.bf16 %v625, %v624
      %v658 = vpack.c.bf16 %v627, %v626
      %v659 = vpack.c.bf16 %v629, %v628
      %v660 = vpack.c.bf16 %v631, %v630
      %v661 = vpack.c.bf16 %v633, %v632
      %v662 = vpack.c.bf16 %v635, %v634
      %v663 = vpack.c.bf16 %v637, %v636
      %v664 = vpack.c.bf16 %v639, %v638
      %v665 = vpack.c.bf16 %v641, %v640
      %v666 = vpack.c.bf16 %v643, %v642
      %v667 = vpack.c.bf16 %v645, %v644
      %v668 = vpack.c.bf16 %v647, %v646
      %v669 = vpack.c.bf16 %v649, %v648
      %v670 = vpack.c.bf16 %v651, %v650
      %v671 = vpack.c.bf16 %v653, %v652
      %672 = vst [vmem:[#allocation3] sm:$0xff] %v654
      %673 = vst [vmem:[#allocation3 + $0x8] sm:$0xff] %v655
      %674 = vst [vmem:[#allocation3 + $0x10] sm:$0xff] %v656
      %675 = vst [vmem:[#allocation3 + $0x18] sm:$0xff] %v657
      %676 = vst [vmem:[#allocation3 + $0x20] sm:$0xff] %v658
      %677 = vst [vmem:[#allocation3 + $0x28] sm:$0xff] %v659
      %678 = vst [vmem:[#allocation3 + $0x30] sm:$0xff] %v660
      %679 = vst [vmem:[#allocation3 + $0x38] sm:$0xff] %v661
      %680 = vst [vmem:[#allocation3 + $0x40] sm:$0xff] %v662
      %681 = vst [vmem:[#allocation3 + $0x48] sm:$0xff] %v663
      %682 = vst [vmem:[#allocation3 + $0x50] sm:$0xff] %v664
      %683 = vst [vmem:[#allocation3 + $0x58] sm:$0xff] %v665
      %684 = vst [vmem:[#allocation3 + $0x60] sm:$0xff] %v666
      %685 = vst [vmem:[#allocation3 + $0x68] sm:$0xff] %v667
      %686 = vst [vmem:[#allocation3 + $0x70] sm:$0xff] %v668
      %687 = vst [vmem:[#allocation3 + $0x78] sm:$0xff] %v669
      %688 = vst [vmem:[#allocation3 + $0x80] sm:$0xff] %v670
      %689 = vst [vmem:[#allocation3 + $0x88] sm:$0xff] %v671
      %v690 = vld [vmem:[#allocation2 + $0x1] sm:$0xff]
      %v691 = vld [vmem:[#allocation2 + $0x9] sm:$0xff]
      %v692 = vld [vmem:[#allocation2 + $0x19] sm:$0xff]
      %v693 = vld [vmem:[#allocation2 + $0x21] sm:$0xff]
      %v694 = vld [vmem:[#allocation2 + $0x31] sm:$0xff]
      %v695 = vld [vmem:[#allocation2 + $0x39] sm:$0xff]
      %v696 = vld [vmem:[#allocation2 + $0x49] sm:$0xff]
      %v697 = vld [vmem:[#allocation2 + $0x51] sm:$0xff]
      %v698 = vld [vmem:[#allocation2 + $0x61] sm:$0xff]
      %v699 = vld [vmem:[#allocation2 + $0x69] sm:$0xff]
      %v700 = vld [vmem:[#allocation2 + $0x79] sm:$0xff]
      %v701 = vld [vmem:[#allocation2 + $0x81] sm:$0xff]
      %v702 = vld [vmem:[#allocation2 + $0x91] sm:$0xff]
      %v703 = vld [vmem:[#allocation2 + $0x99] sm:$0xff]
      %v704 = vld [vmem:[#allocation2 + $0xa9] sm:$0xff]
      %v705 = vld [vmem:[#allocation2 + $0xb1] sm:$0xff]
      %v706 = vld [vmem:[#allocation2 + $0xc1] sm:$0xff]
      %v707 = vld [vmem:[#allocation2 + $0xc9] sm:$0xff]
      %v708 = vld [vmem:[#allocation2 + $0xd9] sm:$0xff]
      %v709 = vld [vmem:[#allocation2 + $0xe1] sm:$0xff]
      %v710 = vld [vmem:[#allocation2 + $0xf1] sm:$0xff]
      %v711 = vld [vmem:[#allocation2 + $0xf9] sm:$0xff]
      %v712 = vld [vmem:[#allocation2 + $0x109] sm:$0xff]
      %v713 = vld [vmem:[#allocation2 + $0x111] sm:$0xff]
      %v714 = vld [vmem:[#allocation2 + $0x121] sm:$0xff]
      %v715 = vld [vmem:[#allocation2 + $0x129] sm:$0xff]
      %v716 = vld [vmem:[#allocation2 + $0x139] sm:$0xff]
      %v717 = vld [vmem:[#allocation2 + $0x141] sm:$0xff]
      %v718 = vld [vmem:[#allocation2 + $0x151] sm:$0xff]
      %v719 = vld [vmem:[#allocation2 + $0x159] sm:$0xff]
      %v720 = vld [vmem:[#allocation2 + $0x169] sm:$0xff]
      %v721 = vld [vmem:[#allocation2 + $0x171] sm:$0xff]
      %v722 = vld [vmem:[#allocation2 + $0x181] sm:$0xff]
      %v723 = vld [vmem:[#allocation2 + $0x189] sm:$0xff]
      %v724 = vld [vmem:[#allocation2 + $0x199] sm:$0xff]
      %v725 = vld [vmem:[#allocation2 + $0x1a1] sm:$0xff]
      %v726 = vpack.c.bf16 %v691, %v690
      %v727 = vpack.c.bf16 %v693, %v692
      %v728 = vpack.c.bf16 %v695, %v694
      %v729 = vpack.c.bf16 %v697, %v696
      %v730 = vpack.c.bf16 %v699, %v698
      %v731 = vpack.c.bf16 %v701, %v700
      %v732 = vpack.c.bf16 %v703, %v702
      %v733 = vpack.c.bf16 %v705, %v704
      %v734 = vpack.c.bf16 %v707, %v706
      %v735 = vpack.c.bf16 %v709, %v708
      %v736 = vpack.c.bf16 %v711, %v710
      %v737 = vpack.c.bf16 %v713, %v712
      %v738 = vpack.c.bf16 %v715, %v714
      %v739 = vpack.c.bf16 %v717, %v716
      %v740 = vpack.c.bf16 %v719, %v718
      %v741 = vpack.c.bf16 %v721, %v720
      %v742 = vpack.c.bf16 %v723, %v722
      %v743 = vpack.c.bf16 %v725, %v724
      %s744 = scalar_lea.vmem [#allocation3], 144
      %745 = vst [vmem:[%s744] sm:$0xff] %v726
      %746 = vst [vmem:[%s744 + $0x8] sm:$0xff] %v727
      %747 = vst [vmem:[%s744 + $0x10] sm:$0xff] %v728
      %748 = vst [vmem:[%s744 + $0x18] sm:$0xff] %v729
      %749 = vst [vmem:[%s744 + $0x20] sm:$0xff] %v730
      %750 = vst [vmem:[%s744 + $0x28] sm:$0xff] %v731
      %751 = vst [vmem:[%s744 + $0x30] sm:$0xff] %v732
      %752 = vst [vmem:[%s744 + $0x38] sm:$0xff] %v733
      %753 = vst [vmem:[%s744 + $0x40] sm:$0xff] %v734
      %754 = vst [vmem:[%s744 + $0x48] sm:$0xff] %v735
      %755 = vst [vmem:[%s744 + $0x50] sm:$0xff] %v736
      %756 = vst [vmem:[%s744 + $0x58] sm:$0xff] %v737
      %757 = vst [vmem:[%s744 + $0x60] sm:$0xff] %v738
      %758 = vst [vmem:[%s744 + $0x68] sm:$0xff] %v739
      %759 = vst [vmem:[%s744 + $0x70] sm:$0xff] %v740
      %760 = vst [vmem:[%s744 + $0x78] sm:$0xff] %v741
      %761 = vst [vmem:[%s744 + $0x80] sm:$0xff] %v742
      %762 = vst [vmem:[%s744 + $0x88] sm:$0xff] %v743
      %v763 = vld [vmem:[#allocation2 + $0x2] sm:$0xff]
      %v764 = vld [vmem:[#allocation2 + $0xa] sm:$0xff]
      %v765 = vld [vmem:[#allocation2 + $0x1a] sm:$0xff]
      %v766 = vld [vmem:[#allocation2 + $0x22] sm:$0xff]
      %v767 = vld [vmem:[#allocation2 + $0x32] sm:$0xff]
      %v768 = vld [vmem:[#allocation2 + $0x3a] sm:$0xff]
      %v769 = vld [vmem:[#allocation2 + $0x4a] sm:$0xff]
      %v770 = vld [vmem:[#allocation2 + $0x52] sm:$0xff]
      %v771 = vld [vmem:[#allocation2 + $0x62] sm:$0xff]
      %v772 = vld [vmem:[#allocation2 + $0x6a] sm:$0xff]
      %v773 = vld [vmem:[#allocation2 + $0x7a] sm:$0xff]
      %v774 = vld [vmem:[#allocation2 + $0x82] sm:$0xff]
      %v775 = vld [vmem:[#allocation2 + $0x92] sm:$0xff]
      %v776 = vld [vmem:[#allocation2 + $0x9a] sm:$0xff]
      %v777 = vld [vmem:[#allocation2 + $0xaa] sm:$0xff]
      %v778 = vld [vmem:[#allocation2 + $0xb2] sm:$0xff]
      %v779 = vld [vmem:[#allocation2 + $0xc2] sm:$0xff]
      %v780 = vld [vmem:[#allocation2 + $0xca] sm:$0xff]
      %v781 = vld [vmem:[#allocation2 + $0xda] sm:$0xff]
      %v782 = vld [vmem:[#allocation2 + $0xe2] sm:$0xff]
      %v783 = vld [vmem:[#allocation2 + $0xf2] sm:$0xff]
      %v784 = vld [vmem:[#allocation2 + $0xfa] sm:$0xff]
      %v785 = vld [vmem:[#allocation2 + $0x10a] sm:$0xff]
      %v786 = vld [vmem:[#allocation2 + $0x112] sm:$0xff]
      %v787 = vld [vmem:[#allocation2 + $0x122] sm:$0xff]
      %v788 = vld [vmem:[#allocation2 + $0x12a] sm:$0xff]
      %v789 = vld [vmem:[#allocation2 + $0x13a] sm:$0xff]
      %v790 = vld [vmem:[#allocation2 + $0x142] sm:$0xff]
      %v791 = vld [vmem:[#allocation2 + $0x152] sm:$0xff]
      %v792 = vld [vmem:[#allocation2 + $0x15a] sm:$0xff]
      %v793 = vld [vmem:[#allocation2 + $0x16a] sm:$0xff]
      %v794 = vld [vmem:[#allocation2 + $0x172] sm:$0xff]
      %v795 = vld [vmem:[#allocation2 + $0x182] sm:$0xff]
      %v796 = vld [vmem:[#allocation2 + $0x18a] sm:$0xff]
      %v797 = vld [vmem:[#allocation2 + $0x19a] sm:$0xff]
      %v798 = vld [vmem:[#allocation2 + $0x1a2] sm:$0xff]
      %v799 = vpack.c.bf16 %v764, %v763
      %v800 = vpack.c.bf16 %v766, %v765
      %v801 = vpack.c.bf16 %v768, %v767
      %v802 = vpack.c.bf16 %v770, %v769
      %v803 = vpack.c.bf16 %v772, %v771
      %v804 = vpack.c.bf16 %v774, %v773
      %v805 = vpack.c.bf16 %v776, %v775
      %v806 = vpack.c.bf16 %v778, %v777
      %v807 = vpack.c.bf16 %v780, %v779
      %v808 = vpack.c.bf16 %v782, %v781
      %v809 = vpack.c.bf16 %v784, %v783
      %v810 = vpack.c.bf16 %v786, %v785
      %v811 = vpack.c.bf16 %v788, %v787
      %v812 = vpack.c.bf16 %v790, %v789
      %v813 = vpack.c.bf16 %v792, %v791
      %v814 = vpack.c.bf16 %v794, %v793
      %v815 = vpack.c.bf16 %v796, %v795
      %v816 = vpack.c.bf16 %v798, %v797
      %s817 = scalar_lea.vmem [#allocation3], 288
      %818 = vst [vmem:[%s817] sm:$0xff] %v799
      %819 = vst [vmem:[%s817 + $0x8] sm:$0xff] %v800
      %820 = vst [vmem:[%s817 + $0x10] sm:$0xff] %v801
      %821 = vst [vmem:[%s817 + $0x18] sm:$0xff] %v802
      %822 = vst [vmem:[%s817 + $0x20] sm:$0xff] %v803
      %823 = vst [vmem:[%s817 + $0x28] sm:$0xff] %v804
      %824 = vst [vmem:[%s817 + $0x30] sm:$0xff] %v805
      %825 = vst [vmem:[%s817 + $0x38] sm:$0xff] %v806
      %826 = vst [vmem:[%s817 + $0x40] sm:$0xff] %v807
      %827 = vst [vmem:[%s817 + $0x48] sm:$0xff] %v808
      %828 = vst [vmem:[%s817 + $0x50] sm:$0xff] %v809
      %829 = vst [vmem:[%s817 + $0x58] sm:$0xff] %v810
      %830 = vst [vmem:[%s817 + $0x60] sm:$0xff] %v811
      %831 = vst [vmem:[%s817 + $0x68] sm:$0xff] %v812
      %832 = vst [vmem:[%s817 + $0x70] sm:$0xff] %v813
      %833 = vst [vmem:[%s817 + $0x78] sm:$0xff] %v814
      %834 = vst [vmem:[%s817 + $0x80] sm:$0xff] %v815
      %835 = vst [vmem:[%s817 + $0x88] sm:$0xff] %v816
      %836 = vst [vmem:[#allocation4] sm:$0xff] 0.0
      %837 = vst [vmem:[#allocation4 + $0x8] sm:$0xff] 0.0
      %838 = vst [vmem:[#allocation4 + $0x10] sm:$0xff] 0.0
      %839 = vst [vmem:[#allocation4 + $0x18] sm:$0xff] 0.0
      %840 = vst [vmem:[#allocation4 + $0x20] sm:$0xff] 0.0
      %841 = vst [vmem:[#allocation4 + $0x28] sm:$0xff] 0.0
      %842 = vst [vmem:[#allocation4 + $0x30] sm:$0xff] 0.0
      %843 = vst [vmem:[#allocation4 + $0x38] sm:$0xff] 0.0
      %844 = vst [vmem:[#allocation4 + $0x40] sm:$0xff] 0.0
      %845 = vst [vmem:[#allocation4 + $0x48] sm:$0xff] 0.0
      %846 = vst [vmem:[#allocation4 + $0x50] sm:$0xff] 0.0
      %847 = vst [vmem:[#allocation4 + $0x58] sm:$0xff] 0.0
      %848 = vst [vmem:[#allocation4 + $0x60] sm:$0xff] 0.0
      %849 = vst [vmem:[#allocation4 + $0x68] sm:$0xff] 0.0
      %850 = vst [vmem:[#allocation4 + $0x70] sm:$0xff] 0.0
      %851 = vst [vmem:[#allocation4 + $0x78] sm:$0xff] 0.0
      %852 = vst [vmem:[#allocation4 + $0x80] sm:$0xff] 0.0
      %853 = vst [vmem:[#allocation4 + $0x88] sm:$0xff] 0.0
      %854 = vst [vmem:[#allocation4 + $0x90] sm:$0xff] 0.0
      %855 = vst [vmem:[#allocation4 + $0x98] sm:$0xff] 0.0
      %856 = vst [vmem:[#allocation4 + $0xa0] sm:$0xff] 0.0
      %857 = vst [vmem:[#allocation4 + $0xa8] sm:$0xff] 0.0
      %858 = vst [vmem:[#allocation4 + $0xb0] sm:$0xff] 0.0
      %859 = vst [vmem:[#allocation4 + $0xb8] sm:$0xff] 0.0
      %860 = vst [vmem:[#allocation4 + $0xc0] sm:$0xff] 0.0
      %861 = vst [vmem:[#allocation4 + $0xc8] sm:$0xff] 0.0
      %862 = vst [vmem:[#allocation4 + $0xd0] sm:$0xff] 0.0
      %863 = vst [vmem:[#allocation4 + $0xd8] sm:$0xff] 0.0
      %864 = vst [vmem:[#allocation4 + $0xe0] sm:$0xff] 0.0
      %865 = vst [vmem:[#allocation4 + $0xe8] sm:$0xff] 0.0
      %866 = vst [vmem:[#allocation4 + $0xf0] sm:$0xff] 0.0
      %867 = vst [vmem:[#allocation4 + $0xf8] sm:$0xff] 0.0
      %v868 = vld [vmem:[#allocation3] sm:$0xff]
      %v869 = vld [vmem:[#allocation3 + $0x8] sm:$0xff]
      %v870 = vld [vmem:[#allocation3 + $0x10] sm:$0xff]
      %v871 = vld [vmem:[#allocation3 + $0x18] sm:$0xff]
      %v872 = vld [vmem:[#allocation3 + $0x20] sm:$0xff]
      %v873 = vld [vmem:[#allocation3 + $0x28] sm:$0xff]
      %v874 = vld [vmem:[#allocation3 + $0x30] sm:$0xff]
      %v875 = vld [vmem:[#allocation3 + $0x38] sm:$0xff]
      %v876 = vld [vmem:[#allocation3 + $0x40] sm:$0xff]
      %v877 = vld [vmem:[#allocation3 + $0x48] sm:$0xff]
      %v878 = vld [vmem:[#allocation3 + $0x50] sm:$0xff]
      %v879 = vld [vmem:[#allocation3 + $0x58] sm:$0xff]
      %v880 = vld [vmem:[#allocation3 + $0x60] sm:$0xff]
      %v881 = vld [vmem:[#allocation3 + $0x68] sm:$0xff]
      %v882 = vld [vmem:[#allocation3 + $0x70] sm:$0xff]
      %v883 = vld [vmem:[#allocation3 + $0x78] sm:$0xff]
      %v884 = vld [vmem:[#allocation4] sm:$0xff]
      %v885 = vld [vmem:[#allocation4 + $0x8] sm:$0xff]
      %v886 = vld [vmem:[#allocation4 + $0x10] sm:$0xff]
      %v887 = vld [vmem:[#allocation4 + $0x18] sm:$0xff]
      %v888 = vld [vmem:[#allocation4 + $0x20] sm:$0xff]
      %v889 = vld [vmem:[#allocation4 + $0x28] sm:$0xff]
      %v890 = vld [vmem:[#allocation4 + $0x30] sm:$0xff]
      %v891 = vld [vmem:[#allocation4 + $0x38] sm:$0xff]
      %v892 = vld [vmem:[#allocation4 + $0x40] sm:$0xff]
      %v893 = vld [vmem:[#allocation4 + $0x48] sm:$0xff]
      %v894 = vld [vmem:[#allocation4 + $0x50] sm:$0xff]
      %v895 = vld [vmem:[#allocation4 + $0x58] sm:$0xff]
      %v896 = vld [vmem:[#allocation4 + $0x60] sm:$0xff]
      %v897 = vld [vmem:[#allocation4 + $0x68] sm:$0xff]
      %v898 = vld [vmem:[#allocation4 + $0x70] sm:$0xff]
      %v899 = vld [vmem:[#allocation4 + $0x78] sm:$0xff]
      %v900 = vld [vmem:[#allocation4 + $0x80] sm:$0xff]
      %v901 = vld [vmem:[#allocation4 + $0x88] sm:$0xff]
      %v902 = vld [vmem:[#allocation4 + $0x90] sm:$0xff]
      %v903 = vld [vmem:[#allocation4 + $0x98] sm:$0xff]
      %v904 = vld [vmem:[#allocation4 + $0xa0] sm:$0xff]
      %v905 = vld [vmem:[#allocation4 + $0xa8] sm:$0xff]
      %v906 = vld [vmem:[#allocation4 + $0xb0] sm:$0xff]
      %v907 = vld [vmem:[#allocation4 + $0xb8] sm:$0xff]
      %v908 = vld [vmem:[#allocation4 + $0xc0] sm:$0xff]
      %v909 = vld [vmem:[#allocation4 + $0xc8] sm:$0xff]
      %v910 = vld [vmem:[#allocation4 + $0xd0] sm:$0xff]
      %v911 = vld [vmem:[#allocation4 + $0xd8] sm:$0xff]
      %v912 = vld [vmem:[#allocation4 + $0xe0] sm:$0xff]
      %v913 = vld [vmem:[#allocation4 + $0xe8] sm:$0xff]
      %v914 = vld [vmem:[#allocation4 + $0xf0] sm:$0xff]
      %v915 = vld [vmem:[#allocation4 + $0xf8] sm:$0xff]
      %v916 = vld [vmem:[%s5] sm:$0xf]
      %v917 = vld [vmem:[%s5 + $0x4] sm:$0xf]
      %v918 = vld [vmem:[%s5 + $0x8] sm:$0xf]
      %v919 = vld [vmem:[%s5 + $0xc] sm:$0xf]
      %v920 = vld [vmem:[%s5 + $0x10] sm:$0xf]
      %v921 = vld [vmem:[%s5 + $0x14] sm:$0xf]
      %v922 = vld [vmem:[%s5 + $0x18] sm:$0xf]
      %v923 = vld [vmem:[%s5 + $0x1c] sm:$0xf]
      %v924 = vld [vmem:[%s5 + $0x20] sm:$0xf]
      %v925 = vld [vmem:[%s5 + $0x24] sm:$0xf]
      %v926 = vld [vmem:[%s5 + $0x28] sm:$0xf]
      %v927 = vld [vmem:[%s5 + $0x2c] sm:$0xf]
      %v928 = vld [vmem:[%s5 + $0x30] sm:$0xf]
      %v929 = vld [vmem:[%s5 + $0x34] sm:$0xf]
      %v930 = vld [vmem:[%s5 + $0x38] sm:$0xf]
      %v931 = vld [vmem:[%s5 + $0x3c] sm:$0xf]
      %v948 = vunpack.c.l.b16 %v916
      %v949 = vunpack.c.l.b16 %v917
      %v950 = vunpack.c.l.b16 %v918
      %v951 = vunpack.c.l.b16 %v919
      %v952 = vunpack.c.l.b16 %v920
      %v953 = vunpack.c.l.b16 %v921
      %v954 = vunpack.c.l.b16 %v922
      %v955 = vunpack.c.l.b16 %v923
      %v956 = vunpack.c.l.b16 %v924
      %v957 = vunpack.c.l.b16 %v925
      %v958 = vunpack.c.l.b16 %v926
      %v959 = vunpack.c.l.b16 %v927
      %v960 = vunpack.c.l.b16 %v928
      %v961 = vunpack.c.l.b16 %v929
      %v962 = vunpack.c.l.b16 %v930
      %v963 = vunpack.c.l.b16 %v931
      %v964 = vpack.c.b16 %v949, %v948
      %v965 = vpack.c.b16 %v951, %v950
      %v966 = vpack.c.b16 %v953, %v952
      %v967 = vpack.c.b16 %v955, %v954
      %v968 = vpack.c.b16 %v957, %v956
      %v969 = vpack.c.b16 %v959, %v958
      %v970 = vpack.c.b16 %v961, %v960
      %v971 = vpack.c.b16 %v963, %v962
      %980 = vmatprep.subr.bf16.mxu0 0
      %981 = vmatpush1.bf16.msra.mxu0 %v964
      %982 = vmatprep.subr.bf16.mxu0 0
      %983 = vmatpush1.bf16.msra.mxu0 %v965
      %984 = vmatprep.subr.bf16.mxu0 0
      %985 = vmatpush1.bf16.msra.mxu0 %v966
      %986 = vmatprep.subr.bf16.mxu0 0
      %987 = vmatpush1.bf16.msra.mxu0 %v967
      %988 = vmatprep.subr.bf16.mxu0 0
      %989 = vmatpush1.bf16.msra.mxu0 %v968
      %990 = vmatprep.subr.bf16.mxu0 0
      %991 = vmatpush1.bf16.msra.mxu0 %v969
      %992 = vmatprep.subr.bf16.mxu0 0
      %993 = vmatpush1.bf16.msra.mxu0 %v970
      %994 = vmatprep.subr.bf16.mxu0 0
      %995 = vmatpush1.bf16.msra.mxu0 %v971
      %996 = vmatprep.subr.bf16.mxu0 0
      %997 = vmatpush1.bf16.msra.mxu0 0
      %998 = vmatprep.subr.bf16.mxu0 0
      %999 = vmatpush1.bf16.msra.mxu0 0
      %1000 = vmatprep.subr.bf16.mxu0 0
      %1001 = vmatpush1.bf16.msra.mxu0 0
      %1002 = vmatprep.subr.bf16.mxu0 0
      %1003 = vmatpush1.bf16.msra.mxu0 0
      %1004 = vmatprep.subr.bf16.mxu0 0
      %1005 = vmatpush1.bf16.msra.mxu0 0
      %1006 = vmatprep.subr.bf16.mxu0 0
      %1007 = vmatpush1.bf16.msra.mxu0 0
      %1008 = vmatprep.subr.bf16.mxu0 0
      %1009 = vmatpush1.bf16.msra.mxu0 0
      %1010 = vmatprep.subr.bf16.mxu0 0
      %1011 = vmatpush1.bf16.msra.mxu0 0
      %1012 = vmatprep.mubr.bf16.mxu0 0
      %1013 = vmatmul.mubr.bf16.gmra.mrb[0].mxu0 %v868
      %v1014 = vpop.f32.mrb[0].mxu0
      %v1015 = vadd.f32 0.0, %v1014
      %v1016 = vpop.f32.mrb[0].mxu0
      %v1017 = vpop.f32.mrb[0].mxu0
      %v1018 = vadd.f32 0.0, %v1017
      %v1019 = vpop.f32.mrb[0].mxu0
      %1020 = vmatprep.mubr.bf16.mxu0 0
      %1021 = vmatmul.mubr.bf16.gmra.mrb[0].mxu0 %v869
      %v1022 = vpop.f32.mrb[0].mxu0
      %v1023 = vadd.f32 0.0, %v1022
      %v1024 = vpop.f32.mrb[0].mxu0
      %v1025 = vpop.f32.mrb[0].mxu0
      %v1026 = vadd.f32 0.0, %v1025
      %v1027 = vpop.f32.mrb[0].mxu0
      %1028 = vmatprep.mubr.bf16.mxu0 0
      %1029 = vmatmul.mubr.bf16.gmra.mrb[0].mxu0 %v870
      %v1030 = vpop.f32.mrb[0].mxu0
      %v1031 = vadd.f32 0.0, %v1030
      %v1032 = vpop.f32.mrb[0].mxu0
      %v1033 = vpop.f32.mrb[0].mxu0
      %v1034 = vadd.f32 0.0, %v1033
      %v1035 = vpop.f32.mrb[0].mxu0
      %1036 = vmatprep.mubr.bf16.mxu0 0
      %1037 = vmatmul.mubr.bf16.gmra.mrb[0].mxu0 %v871
      %v1038 = vpop.f32.mrb[0].mxu0
      %v1039 = vadd.f32 0.0, %v1038
      %v1040 = vpop.f32.mrb[0].mxu0
      %v1041 = vpop.f32.mrb[0].mxu0
      %v1042 = vadd.f32 0.0, %v1041
      %v1043 = vpop.f32.mrb[0].mxu0
      %1044 = vmatprep.mubr.bf16.mxu0 0
      %1045 = vmatmul.mubr.bf16.gmra.mrb[0].mxu0 %v872
      %v1046 = vpop.f32.mrb[0].mxu0
      %v1047 = vadd.f32 0.0, %v1046
      %v1048 = vpop.f32.mrb[0].mxu0
      %v1049 = vpop.f32.mrb[0].mxu0
      %v1050 = vadd.f32 0.0, %v1049
      %v1051 = vpop.f32.mrb[0].mxu0
      %1052 = vmatprep.mubr.bf16.mxu0 0
      %1053 = vmatmul.mubr.bf16.gmra.mrb[0].mxu0 %v873
      %v1054 = vpop.f32.mrb[0].mxu0
      %v1055 = vadd.f32 0.0, %v1054
      %v1056 = vpop.f32.mrb[0].mxu0
      %v1057 = vpop.f32.mrb[0].mxu0
      %v1058 = vadd.f32 0.0, %v1057
      %v1059 = vpop.f32.mrb[0].mxu0
      %1060 = vmatprep.mubr.bf16.mxu0 0
      %1061 = vmatmul.mubr.bf16.gmra.mrb[0].mxu0 %v874
      %v1062 = vpop.f32.mrb[0].mxu0
      %v1063 = vadd.f32 0.0, %v1062
      %v1064 = vpop.f32.mrb[0].mxu0
      %v1065 = vpop.f32.mrb[0].mxu0
      %v1066 = vadd.f32 0.0, %v1065
      %v1067 = vpop.f32.mrb[0].mxu0
      %1068 = vmatprep.mubr.bf16.mxu0 0
      %1069 = vmatmul.mubr.bf16.gmra.mrb[0].mxu0 %v875
      %v1070 = vpop.f32.mrb[0].mxu0
      %v1071 = vadd.f32 0.0, %v1070
      %v1072 = vpop.f32.mrb[0].mxu0
      %v1073 = vpop.f32.mrb[0].mxu0
      %v1074 = vadd.f32 0.0, %v1073
      %v1075 = vpop.f32.mrb[0].mxu0
      %1076 = vmatprep.mubr.bf16.mxu0 0
      %1077 = vmatmul.mubr.bf16.gmra.mrb[0].mxu0 %v876
      %v1078 = vpop.f32.mrb[0].mxu0
      %v1079 = vadd.f32 0.0, %v1078
      %v1080 = vpop.f32.mrb[0].mxu0
      %v1081 = vpop.f32.mrb[0].mxu0
      %v1082 = vadd.f32 0.0, %v1081
      %v1083 = vpop.f32.mrb[0].mxu0
      %1084 = vmatprep.mubr.bf16.mxu0 0
      %1085 = vmatmul.mubr.bf16.gmra.mrb[0].mxu0 %v877
      %v1086 = vpop.f32.mrb[0].mxu0
      %v1087 = vadd.f32 0.0, %v1086
      %v1088 = vpop.f32.mrb[0].mxu0
      %v1089 = vpop.f32.mrb[0].mxu0
      %v1090 = vadd.f32 0.0, %v1089
      %v1091 = vpop.f32.mrb[0].mxu0
      %1092 = vmatprep.mubr.bf16.mxu0 0
      %1093 = vmatmul.mubr.bf16.gmra.mrb[0].mxu0 %v878
      %v1094 = vpop.f32.mrb[0].mxu0
      %v1095 = vadd.f32 0.0, %v1094
      %v1096 = vpop.f32.mrb[0].mxu0
      %v1097 = vpop.f32.mrb[0].mxu0
      %v1098 = vadd.f32 0.0, %v1097
      %v1099 = vpop.f32.mrb[0].mxu0
      %1100 = vmatprep.mubr.bf16.mxu0 0
      %1101 = vmatmul.mubr.bf16.gmra.mrb[0].mxu0 %v879
      %v1102 = vpop.f32.mrb[0].mxu0
      %v1103 = vadd.f32 0.0, %v1102
      %v1104 = vpop.f32.mrb[0].mxu0
      %v1105 = vpop.f32.mrb[0].mxu0
      %v1106 = vadd.f32 0.0, %v1105
      %v1107 = vpop.f32.mrb[0].mxu0
      %1108 = vmatprep.mubr.bf16.mxu0 0
      %1109 = vmatmul.mubr.bf16.gmra.mrb[0].mxu0 %v880
      %v1110 = vpop.f32.mrb[0].mxu0
      %v1111 = vadd.f32 0.0, %v1110
      %v1112 = vpop.f32.mrb[0].mxu0
      %v1113 = vpop.f32.mrb[0].mxu0
      %v1114 = vadd.f32 0.0, %v1113
      %v1115 = vpop.f32.mrb[0].mxu0
      %1116 = vmatprep.mubr.bf16.mxu0 0
      %1117 = vmatmul.mubr.bf16.gmra.mrb[0].mxu0 %v881
      %v1118 = vpop.f32.mrb[0].mxu0
      %v1119 = vadd.f32 0.0, %v1118
      %v1120 = vpop.f32.mrb[0].mxu0
      %v1121 = vpop.f32.mrb[0].mxu0
      %v1122 = vadd.f32 0.0, %v1121
      %v1123 = vpop.f32.mrb[0].mxu0
      %1124 = vmatprep.mubr.bf16.mxu0 0
      %1125 = vmatmul.mubr.bf16.gmra.mrb[0].mxu0 %v882
      %v1126 = vpop.f32.mrb[0].mxu0
      %v1127 = vadd.f32 0.0, %v1126
      %v1128 = vpop.f32.mrb[0].mxu0
      %v1129 = vpop.f32.mrb[0].mxu0
      %v1130 = vadd.f32 0.0, %v1129
      %v1131 = vpop.f32.mrb[0].mxu0
      %1132 = vmatprep.mubr.bf16.mxu0 0
      %1133 = vmatmul.mubr.bf16.gmra.mrb[0].mxu0 %v883
      %v1134 = vpop.f32.mrb[0].mxu0
      %v1135 = vadd.f32 0.0, %v1134
      %v1136 = vpop.f32.mrb[0].mxu0
      %v1137 = vpop.f32.mrb[0].mxu0
      %v1138 = vadd.f32 0.0, %v1137
      %v1139 = vpop.f32.mrb[0].mxu0
      %1140 = vdwg.mxu0
      %v1141 = vadd.f32 %v884, %v1015
      %v1142 = vadd.f32 %v885, %v1018
      %v1143 = vadd.f32 %v886, %v1023
      %v1144 = vadd.f32 %v887, %v1026
      %v1145 = vadd.f32 %v888, %v1031
      %v1146 = vadd.f32 %v889, %v1034
      %v1147 = vadd.f32 %v890, %v1039
      %v1148 = vadd.f32 %v891, %v1042
      %v1149 = vadd.f32 %v892, %v1047
      %v1150 = vadd.f32 %v893, %v1050
      %v1151 = vadd.f32 %v894, %v1055
      %v1152 = vadd.f32 %v895, %v1058
      %v1153 = vadd.f32 %v896, %v1063
      %v1154 = vadd.f32 %v897, %v1066
      %v1155 = vadd.f32 %v898, %v1071
      %v1156 = vadd.f32 %v899, %v1074
      %v1157 = vadd.f32 %v900, %v1079
      %v1158 = vadd.f32 %v901, %v1082
      %v1159 = vadd.f32 %v902, %v1087
      %v1160 = vadd.f32 %v903, %v1090
      %v1161 = vadd.f32 %v904, %v1095
      %v1162 = vadd.f32 %v905, %v1098
      %v1163 = vadd.f32 %v906, %v1103
      %v1164 = vadd.f32 %v907, %v1106
      %v1165 = vadd.f32 %v908, %v1111
      %v1166 = vadd.f32 %v909, %v1114
      %v1167 = vadd.f32 %v910, %v1119
      %v1168 = vadd.f32 %v911, %v1122
      %v1169 = vadd.f32 %v912, %v1127
      %v1170 = vadd.f32 %v913, %v1130
      %v1171 = vadd.f32 %v914, %v1135
      %v1172 = vadd.f32 %v915, %v1138
      %1173 = vst [vmem:[#allocation4] sm:$0xff] %v1141
      %1174 = vst [vmem:[#allocation4 + $0x8] sm:$0xff] %v1142
      %1175 = vst [vmem:[#allocation4 + $0x10] sm:$0xff] %v1143
      %1176 = vst [vmem:[#allocation4 + $0x18] sm:$0xff] %v1144
      %1177 = vst [vmem:[#allocation4 + $0x20] sm:$0xff] %v1145
      %1178 = vst [vmem:[#allocation4 + $0x28] sm:$0xff] %v1146
      %1179 = vst [vmem:[#allocation4 + $0x30] sm:$0xff] %v1147
      %1180 = vst [vmem:[#allocation4 + $0x38] sm:$0xff] %v1148
      %1181 = vst [vmem:[#allocation4 + $0x40] sm:$0xff] %v1149
      %1182 = vst [vmem:[#allocation4 + $0x48] sm:$0xff] %v1150
      %1183 = vst [vmem:[#allocation4 + $0x50] sm:$0xff] %v1151
      %1184 = vst [vmem:[#allocation4 + $0x58] sm:$0xff] %v1152
      %1185 = vst [vmem:[#allocation4 + $0x60] sm:$0xff] %v1153
      %1186 = vst [vmem:[#allocation4 + $0x68] sm:$0xff] %v1154
      %1187 = vst [vmem:[#allocation4 + $0x70] sm:$0xff] %v1155
      %1188 = vst [vmem:[#allocation4 + $0x78] sm:$0xff] %v1156
      %1189 = vst [vmem:[#allocation4 + $0x80] sm:$0xff] %v1157
      %1190 = vst [vmem:[#allocation4 + $0x88] sm:$0xff] %v1158
      %1191 = vst [vmem:[#allocation4 + $0x90] sm:$0xff] %v1159
      %1192 = vst [vmem:[#allocation4 + $0x98] sm:$0xff] %v1160
      %1193 = vst [vmem:[#allocation4 + $0xa0] sm:$0xff] %v1161
      %1194 = vst [vmem:[#allocation4 + $0xa8] sm:$0xff] %v1162
      %1195 = vst [vmem:[#allocation4 + $0xb0] sm:$0xff] %v1163
      %1196 = vst [vmem:[#allocation4 + $0xb8] sm:$0xff] %v1164
      %1197 = vst [vmem:[#allocation4 + $0xc0] sm:$0xff] %v1165
      %1198 = vst [vmem:[#allocation4 + $0xc8] sm:$0xff] %v1166
      %1199 = vst [vmem:[#allocation4 + $0xd0] sm:$0xff] %v1167
      %1200 = vst [vmem:[#allocation4 + $0xd8] sm:$0xff] %v1168
      %1201 = vst [vmem:[#allocation4 + $0xe0] sm:$0xff] %v1169
      %1202 = vst [vmem:[#allocation4 + $0xe8] sm:$0xff] %v1170
      %1203 = vst [vmem:[#allocation4 + $0xf0] sm:$0xff] %v1171
      %1204 = vst [vmem:[#allocation4 + $0xf8] sm:$0xff] %v1172
      %v1205 = vld [vmem:[%s744] sm:$0xff]
      %v1206 = vld [vmem:[%s744 + $0x8] sm:$0xff]
      %v1207 = vld [vmem:[%s744 + $0x10] sm:$0xff]
      %v1208 = vld [vmem:[%s744 + $0x18] sm:$0xff]
      %v1209 = vld [vmem:[%s744 + $0x20] sm:$0xff]
      %v1210 = vld [vmem:[%s744 + $0x28] sm:$0xff]
      %v1211 = vld [vmem:[%s744 + $0x30] sm:$0xff]
      %v1212 = vld [vmem:[%s744 + $0x38] sm:$0xff]
      %v1213 = vld [vmem:[%s744 + $0x40] sm:$0xff]
      %v1214 = vld [vmem:[%s744 + $0x48] sm:$0xff]
      %v1215 = vld [vmem:[%s744 + $0x50] sm:$0xff]
      %v1216 = vld [vmem:[%s744 + $0x58] sm:$0xff]
      %v1217 = vld [vmem:[%s744 + $0x60] sm:$0xff]
      %v1218 = vld [vmem:[%s744 + $0x68] sm:$0xff]
      %v1219 = vld [vmem:[%s744 + $0x70] sm:$0xff]
      %v1220 = vld [vmem:[%s744 + $0x78] sm:$0xff]
      %v1221 = vld [vmem:[#allocation4] sm:$0xff]
      %v1222 = vld [vmem:[#allocation4 + $0x8] sm:$0xff]
      %v1223 = vld [vmem:[#allocation4 + $0x10] sm:$0xff]
      %v1224 = vld [vmem:[#allocation4 + $0x18] sm:$0xff]
      %v1225 = vld [vmem:[#allocation4 + $0x20] sm:$0xff]
      %v1226 = vld [vmem:[#allocation4 + $0x28] sm:$0xff]
      %v1227 = vld [vmem:[#allocation4 + $0x30] sm:$0xff]
      %v1228 = vld [vmem:[#allocation4 + $0x38] sm:$0xff]
      %v1229 = vld [vmem:[#allocation4 + $0x40] sm:$0xff]
      %v1230 = vld [vmem:[#allocation4 + $0x48] sm:$0xff]
      %v1231 = vld [vmem:[#allocation4 + $0x50] sm:$0xff]
      %v1232 = vld [vmem:[#allocation4 + $0x58] sm:$0xff]
      %v1233 = vld [vmem:[#allocation4 + $0x60] sm:$0xff]
      %v1234 = vld [vmem:[#allocation4 + $0x68] sm:$0xff]
      %v1235 = vld [vmem:[#allocation4 + $0x70] sm:$0xff]
      %v1236 = vld [vmem:[#allocation4 + $0x78] sm:$0xff]
      %v1237 = vld [vmem:[#allocation4 + $0x80] sm:$0xff]
      %v1238 = vld [vmem:[#allocation4 + $0x88] sm:$0xff]
      %v1239 = vld [vmem:[#allocation4 + $0x90] sm:$0xff]
      %v1240 = vld [vmem:[#allocation4 + $0x98] sm:$0xff]
      %v1241 = vld [vmem:[#allocation4 + $0xa0] sm:$0xff]
      %v1242 = vld [vmem:[#allocation4 + $0xa8] sm:$0xff]
      %v1243 = vld [vmem:[#allocation4 + $0xb0] sm:$0xff]
      %v1244 = vld [vmem:[#allocation4 + $0xb8] sm:$0xff]
      %v1245 = vld [vmem:[#allocation4 + $0xc0] sm:$0xff]
      %v1246 = vld [vmem:[#allocation4 + $0xc8] sm:$0xff]
      %v1247 = vld [vmem:[#allocation4 + $0xd0] sm:$0xff]
      %v1248 = vld [vmem:[#allocation4 + $0xd8] sm:$0xff]
      %v1249 = vld [vmem:[#allocation4 + $0xe0] sm:$0xff]
      %v1250 = vld [vmem:[#allocation4 + $0xe8] sm:$0xff]
      %v1251 = vld [vmem:[#allocation4 + $0xf0] sm:$0xff]
      %v1252 = vld [vmem:[#allocation4 + $0xf8] sm:$0xff]
      %s1253 = scalar_lea.vmem %s5, 64
      %v1254 = vld [vmem:[%s1253] sm:$0xf]
      %v1255 = vld [vmem:[%s1253 + $0x4] sm:$0xf]
      %v1256 = vld [vmem:[%s1253 + $0x8] sm:$0xf]
      %v1257 = vld [vmem:[%s1253 + $0xc] sm:$0xf]
      %v1258 = vld [vmem:[%s1253 + $0x10] sm:$0xf]
      %v1259 = vld [vmem:[%s1253 + $0x14] sm:$0xf]
      %v1260 = vld [vmem:[%s1253 + $0x18] sm:$0xf]
      %v1261 = vld [vmem:[%s1253 + $0x1c] sm:$0xf]
      %v1262 = vld [vmem:[%s1253 + $0x20] sm:$0xf]
      %v1263 = vld [vmem:[%s1253 + $0x24] sm:$0xf]
      %v1264 = vld [vmem:[%s1253 + $0x28] sm:$0xf]
      %v1265 = vld [vmem:[%s1253 + $0x2c] sm:$0xf]
      %v1266 = vld [vmem:[%s1253 + $0x30] sm:$0xf]
      %v1267 = vld [vmem:[%s1253 + $0x34] sm:$0xf]
      %v1268 = vld [vmem:[%s1253 + $0x38] sm:$0xf]
      %v1269 = vld [vmem:[%s1253 + $0x3c] sm:$0xf]
      %v1286 = vunpack.c.l.b16 %v1254
      %v1287 = vunpack.c.l.b16 %v1255
      %v1288 = vunpack.c.l.b16 %v1256
      %v1289 = vunpack.c.l.b16 %v1257
      %v1290 = vunpack.c.l.b16 %v1258
      %v1291 = vunpack.c.l.b16 %v1259
      %v1292 = vunpack.c.l.b16 %v1260
      %v1293 = vunpack.c.l.b16 %v1261
      %v1294 = vunpack.c.l.b16 %v1262
      %v1295 = vunpack.c.l.b16 %v1263
      %v1296 = vunpack.c.l.b16 %v1264
      %v1297 = vunpack.c.l.b16 %v1265
      %v1298 = vunpack.c.l.b16 %v1266
      %v1299 = vunpack.c.l.b16 %v1267
      %v1300 = vunpack.c.l.b16 %v1268
      %v1301 = vunpack.c.l.b16 %v1269
      %v1302 = vpack.c.b16 %v1287, %v1286
      %v1303 = vpack.c.b16 %v1289, %v1288
      %v1304 = vpack.c.b16 %v1291, %v1290
      %v1305 = vpack.c.b16 %v1293, %v1292
      %v1306 = vpack.c.b16 %v1295, %v1294
      %v1307 = vpack.c.b16 %v1297, %v1296
      %v1308 = vpack.c.b16 %v1299, %v1298
      %v1309 = vpack.c.b16 %v1301, %v1300
      %1318 = vmatprep.subr.bf16.mxu0 0
      %1319 = vmatpush1.bf16.msra.mxu0 %v1302
      %1320 = vmatprep.subr.bf16.mxu0 0
      %1321 = vmatpush1.bf16.msra.mxu0 %v1303
      %1322 = vmatprep.subr.bf16.mxu0 0
      %1323 = vmatpush1.bf16.msra.mxu0 %v1304
      %1324 = vmatprep.subr.bf16.mxu0 0
      %1325 = vmatpush1.bf16.msra.mxu0 %v1305
      %1326 = vmatprep.subr.bf16.mxu0 0
      %1327 = vmatpush1.bf16.msra.mxu0 %v1306
      %1328 = vmatprep.subr.bf16.mxu0 0
      %1329 = vmatpush1.bf16.msra.mxu0 %v1307
      %1330 = vmatprep.subr.bf16.mxu0 0
      %1331 = vmatpush1.bf16.msra.mxu0 %v1308
      %1332 = vmatprep.subr.bf16.mxu0 0
      %1333 = vmatpush1.bf16.msra.mxu0 %v1309
      %1334 = vmatprep.subr.bf16.mxu0 0
      %1335 = vmatpush1.bf16.msra.mxu0 0
      %1336 = vmatprep.subr.bf16.mxu0 0
      %1337 = vmatpush1.bf16.msra.mxu0 0
      %1338 = vmatprep.subr.bf16.mxu0 0
      %1339 = vmatpush1.bf16.msra.mxu0 0
      %1340 = vmatprep.subr.bf16.mxu0 0
      %1341 = vmatpush1.bf16.msra.mxu0 0
      %1342 = vmatprep.subr.bf16.mxu0 0
      %1343 = vmatpush1.bf16.msra.mxu0 0
      %1344 = vmatprep.subr.bf16.mxu0 0
      %1345 = vmatpush1.bf16.msra.mxu0 0
      %1346 = vmatprep.subr.bf16.mxu0 0
      %1347 = vmatpush1.bf16.msra.mxu0 0
      %1348 = vmatprep.subr.bf16.mxu0 0
      %1349 = vmatpush1.bf16.msra.mxu0 0
      %1350 = vmatprep.mubr.bf16.mxu0 0
      %1351 = vmatmul.mubr.bf16.gmra.mrb[0].mxu0 %v1205
      %v1352 = vpop.f32.mrb[0].mxu0
      %v1353 = vadd.f32 0.0, %v1352
      %v1354 = vpop.f32.mrb[0].mxu0
      %v1355 = vpop.f32.mrb[0].mxu0
      %v1356 = vadd.f32 0.0, %v1355
      %v1357 = vpop.f32.mrb[0].mxu0
      %1358 = vmatprep.mubr.bf16.mxu0 0
      %1359 = vmatmul.mubr.bf16.gmra.mrb[0].mxu0 %v1206
      %v1360 = vpop.f32.mrb[0].mxu0
      %v1361 = vadd.f32 0.0, %v1360
      %v1362 = vpop.f32.mrb[0].mxu0
      %v1363 = vpop.f32.mrb[0].mxu0
      %v1364 = vadd.f32 0.0, %v1363
      %v1365 = vpop.f32.mrb[0].mxu0
      %1366 = vmatprep.mubr.bf16.mxu0 0
      %1367 = vmatmul.mubr.bf16.gmra.mrb[0].mxu0 %v1207
      %v1368 = vpop.f32.mrb[0].mxu0
      %v1369 = vadd.f32 0.0, %v1368
      %v1370 = vpop.f32.mrb[0].mxu0
      %v1371 = vpop.f32.mrb[0].mxu0
      %v1372 = vadd.f32 0.0, %v1371
      %v1373 = vpop.f32.mrb[0].mxu0
      %1374 = vmatprep.mubr.bf16.mxu0 0
      %1375 = vmatmul.mubr.bf16.gmra.mrb[0].mxu0 %v1208
      %v1376 = vpop.f32.mrb[0].mxu0
      %v1377 = vadd.f32 0.0, %v1376
      %v1378 = vpop.f32.mrb[0].mxu0
      %v1379 = vpop.f32.mrb[0].mxu0
      %v1380 = vadd.f32 0.0, %v1379
      %v1381 = vpop.f32.mrb[0].mxu0
      %1382 = vmatprep.mubr.bf16.mxu0 0
      %1383 = vmatmul.mubr.bf16.gmra.mrb[0].mxu0 %v1209
      %v1384 = vpop.f32.mrb[0].mxu0
      %v1385 = vadd.f32 0.0, %v1384
      %v1386 = vpop.f32.mrb[0].mxu0
      %v1387 = vpop.f32.mrb[0].mxu0
      %v1388 = vadd.f32 0.0, %v1387
      %v1389 = vpop.f32.mrb[0].mxu0
      %1390 = vmatprep.mubr.bf16.mxu0 0
      %1391 = vmatmul.mubr.bf16.gmra.mrb[0].mxu0 %v1210
      %v1392 = vpop.f32.mrb[0].mxu0
      %v1393 = vadd.f32 0.0, %v1392
      %v1394 = vpop.f32.mrb[0].mxu0
      %v1395 = vpop.f32.mrb[0].mxu0
      %v1396 = vadd.f32 0.0, %v1395
      %v1397 = vpop.f32.mrb[0].mxu0
      %1398 = vmatprep.mubr.bf16.mxu0 0
      %1399 = vmatmul.mubr.bf16.gmra.mrb[0].mxu0 %v1211
      %v1400 = vpop.f32.mrb[0].mxu0
      %v1401 = vadd.f32 0.0, %v1400
      %v1402 = vpop.f32.mrb[0].mxu0
      %v1403 = vpop.f32.mrb[0].mxu0
      %v1404 = vadd.f32 0.0, %v1403
      %v1405 = vpop.f32.mrb[0].mxu0
      %1406 = vmatprep.mubr.bf16.mxu0 0
      %1407 = vmatmul.mubr.bf16.gmra.mrb[0].mxu0 %v1212
      %v1408 = vpop.f32.mrb[0].mxu0
      %v1409 = vadd.f32 0.0, %v1408
      %v1410 = vpop.f32.mrb[0].mxu0
      %v1411 = vpop.f32.mrb[0].mxu0
      %v1412 = vadd.f32 0.0, %v1411
      %v1413 = vpop.f32.mrb[0].mxu0
      %1414 = vmatprep.mubr.bf16.mxu0 0
      %1415 = vmatmul.mubr.bf16.gmra.mrb[0].mxu0 %v1213
      %v1416 = vpop.f32.mrb[0].mxu0
      %v1417 = vadd.f32 0.0, %v1416
      %v1418 = vpop.f32.mrb[0].mxu0
      %v1419 = vpop.f32.mrb[0].mxu0
      %v1420 = vadd.f32 0.0, %v1419
      %v1421 = vpop.f32.mrb[0].mxu0
      %1422 = vmatprep.mubr.bf16.mxu0 0
      %1423 = vmatmul.mubr.bf16.gmra.mrb[0].mxu0 %v1214
      %v1424 = vpop.f32.mrb[0].mxu0
      %v1425 = vadd.f32 0.0, %v1424
      %v1426 = vpop.f32.mrb[0].mxu0
      %v1427 = vpop.f32.mrb[0].mxu0
      %v1428 = vadd.f32 0.0, %v1427
      %v1429 = vpop.f32.mrb[0].mxu0
      %1430 = vmatprep.mubr.bf16.mxu0 0
      %1431 = vmatmul.mubr.bf16.gmra.mrb[0].mxu0 %v1215
      %v1432 = vpop.f32.mrb[0].mxu0
      %v1433 = vadd.f32 0.0, %v1432
      %v1434 = vpop.f32.mrb[0].mxu0
      %v1435 = vpop.f32.mrb[0].mxu0
      %v1436 = vadd.f32 0.0, %v1435
      %v1437 = vpop.f32.mrb[0].mxu0
      %1438 = vmatprep.mubr.bf16.mxu0 0
      %1439 = vmatmul.mubr.bf16.gmra.mrb[0].mxu0 %v1216
      %v1440 = vpop.f32.mrb[0].mxu0
      %v1441 = vadd.f32 0.0, %v1440
      %v1442 = vpop.f32.mrb[0].mxu0
      %v1443 = vpop.f32.mrb[0].mxu0
      %v1444 = vadd.f32 0.0, %v1443
      %v1445 = vpop.f32.mrb[0].mxu0
      %1446 = vmatprep.mubr.bf16.mxu0 0
      %1447 = vmatmul.mubr.bf16.gmra.mrb[0].mxu0 %v1217
      %v1448 = vpop.f32.mrb[0].mxu0
      %v1449 = vadd.f32 0.0, %v1448
      %v1450 = vpop.f32.mrb[0].mxu0
      %v1451 = vpop.f32.mrb[0].mxu0
      %v1452 = vadd.f32 0.0, %v1451
      %v1453 = vpop.f32.mrb[0].mxu0
      %1454 = vmatprep.mubr.bf16.mxu0 0
      %1455 = vmatmul.mubr.bf16.gmra.mrb[0].mxu0 %v1218
      %v1456 = vpop.f32.mrb[0].mxu0
      %v1457 = vadd.f32 0.0, %v1456
      %v1458 = vpop.f32.mrb[0].mxu0
      %v1459 = vpop.f32.mrb[0].mxu0
      %v1460 = vadd.f32 0.0, %v1459
      %v1461 = vpop.f32.mrb[0].mxu0
      %1462 = vmatprep.mubr.bf16.mxu0 0
      %1463 = vmatmul.mubr.bf16.gmra.mrb[0].mxu0 %v1219
      %v1464 = vpop.f32.mrb[0].mxu0
      %v1465 = vadd.f32 0.0, %v1464
      %v1466 = vpop.f32.mrb[0].mxu0
      %v1467 = vpop.f32.mrb[0].mxu0
      %v1468 = vadd.f32 0.0, %v1467
      %v1469 = vpop.f32.mrb[0].mxu0
      %1470 = vmatprep.mubr.bf16.mxu0 0
      %1471 = vmatmul.mubr.bf16.gmra.mrb[0].mxu0 %v1220
      %v1472 = vpop.f32.mrb[0].mxu0
      %v1473 = vadd.f32 0.0, %v1472
      %v1474 = vpop.f32.mrb[0].mxu0
      %v1475 = vpop.f32.mrb[0].mxu0
      %v1476 = vadd.f32 0.0, %v1475
      %v1477 = vpop.f32.mrb[0].mxu0
      %1478 = vdwg.mxu0
      %v1479 = vadd.f32 %v1221, %v1353
      %v1480 = vadd.f32 %v1222, %v1356
      %v1481 = vadd.f32 %v1223, %v1361
      %v1482 = vadd.f32 %v1224, %v1364
      %v1483 = vadd.f32 %v1225, %v1369
      %v1484 = vadd.f32 %v1226, %v1372
      %v1485 = vadd.f32 %v1227, %v1377
      %v1486 = vadd.f32 %v1228, %v1380
      %v1487 = vadd.f32 %v1229, %v1385
      %v1488 = vadd.f32 %v1230, %v1388
      %v1489 = vadd.f32 %v1231, %v1393
      %v1490 = vadd.f32 %v1232, %v1396
      %v1491 = vadd.f32 %v1233, %v1401
      %v1492 = vadd.f32 %v1234, %v1404
      %v1493 = vadd.f32 %v1235, %v1409
      %v1494 = vadd.f32 %v1236, %v1412
      %v1495 = vadd.f32 %v1237, %v1417
      %v1496 = vadd.f32 %v1238, %v1420
      %v1497 = vadd.f32 %v1239, %v1425
      %v1498 = vadd.f32 %v1240, %v1428
      %v1499 = vadd.f32 %v1241, %v1433
      %v1500 = vadd.f32 %v1242, %v1436
      %v1501 = vadd.f32 %v1243, %v1441
      %v1502 = vadd.f32 %v1244, %v1444
      %v1503 = vadd.f32 %v1245, %v1449
      %v1504 = vadd.f32 %v1246, %v1452
      %v1505 = vadd.f32 %v1247, %v1457
      %v1506 = vadd.f32 %v1248, %v1460
      %v1507 = vadd.f32 %v1249, %v1465
      %v1508 = vadd.f32 %v1250, %v1468
      %v1509 = vadd.f32 %v1251, %v1473
      %v1510 = vadd.f32 %v1252, %v1476
      %1511 = vst [vmem:[#allocation4] sm:$0xff] %v1479
      %1512 = vst [vmem:[#allocation4 + $0x8] sm:$0xff] %v1480
      %1513 = vst [vmem:[#allocation4 + $0x10] sm:$0xff] %v1481
      %1514 = vst [vmem:[#allocation4 + $0x18] sm:$0xff] %v1482
      %1515 = vst [vmem:[#allocation4 + $0x20] sm:$0xff] %v1483
      %1516 = vst [vmem:[#allocation4 + $0x28] sm:$0xff] %v1484
      %1517 = vst [vmem:[#allocation4 + $0x30] sm:$0xff] %v1485
      %1518 = vst [vmem:[#allocation4 + $0x38] sm:$0xff] %v1486
      %1519 = vst [vmem:[#allocation4 + $0x40] sm:$0xff] %v1487
      %1520 = vst [vmem:[#allocation4 + $0x48] sm:$0xff] %v1488
      %1521 = vst [vmem:[#allocation4 + $0x50] sm:$0xff] %v1489
      %1522 = vst [vmem:[#allocation4 + $0x58] sm:$0xff] %v1490
      %1523 = vst [vmem:[#allocation4 + $0x60] sm:$0xff] %v1491
      %1524 = vst [vmem:[#allocation4 + $0x68] sm:$0xff] %v1492
      %1525 = vst [vmem:[#allocation4 + $0x70] sm:$0xff] %v1493
      %1526 = vst [vmem:[#allocation4 + $0x78] sm:$0xff] %v1494
      %1527 = vst [vmem:[#allocation4 + $0x80] sm:$0xff] %v1495
      %1528 = vst [vmem:[#allocation4 + $0x88] sm:$0xff] %v1496
      %1529 = vst [vmem:[#allocation4 + $0x90] sm:$0xff] %v1497
      %1530 = vst [vmem:[#allocation4 + $0x98] sm:$0xff] %v1498
      %1531 = vst [vmem:[#allocation4 + $0xa0] sm:$0xff] %v1499
      %1532 = vst [vmem:[#allocation4 + $0xa8] sm:$0xff] %v1500
      %1533 = vst [vmem:[#allocation4 + $0xb0] sm:$0xff] %v1501
      %1534 = vst [vmem:[#allocation4 + $0xb8] sm:$0xff] %v1502
      %1535 = vst [vmem:[#allocation4 + $0xc0] sm:$0xff] %v1503
      %1536 = vst [vmem:[#allocation4 + $0xc8] sm:$0xff] %v1504
      %1537 = vst [vmem:[#allocation4 + $0xd0] sm:$0xff] %v1505
      %1538 = vst [vmem:[#allocation4 + $0xd8] sm:$0xff] %v1506
      %1539 = vst [vmem:[#allocation4 + $0xe0] sm:$0xff] %v1507
      %1540 = vst [vmem:[#allocation4 + $0xe8] sm:$0xff] %v1508
      %1541 = vst [vmem:[#allocation4 + $0xf0] sm:$0xff] %v1509
      %1542 = vst [vmem:[#allocation4 + $0xf8] sm:$0xff] %v1510
      %v1543 = vld [vmem:[%s817] sm:$0xff]
      %v1544 = vld [vmem:[%s817 + $0x8] sm:$0xff]
      %v1545 = vld [vmem:[%s817 + $0x10] sm:$0xff]
      %v1546 = vld [vmem:[%s817 + $0x18] sm:$0xff]
      %v1547 = vld [vmem:[%s817 + $0x20] sm:$0xff]
      %v1548 = vld [vmem:[%s817 + $0x28] sm:$0xff]
      %v1549 = vld [vmem:[%s817 + $0x30] sm:$0xff]
      %v1550 = vld [vmem:[%s817 + $0x38] sm:$0xff]
      %v1551 = vld [vmem:[%s817 + $0x40] sm:$0xff]
      %v1552 = vld [vmem:[%s817 + $0x48] sm:$0xff]
      %v1553 = vld [vmem:[%s817 + $0x50] sm:$0xff]
      %v1554 = vld [vmem:[%s817 + $0x58] sm:$0xff]
      %v1555 = vld [vmem:[%s817 + $0x60] sm:$0xff]
      %v1556 = vld [vmem:[%s817 + $0x68] sm:$0xff]
      %v1557 = vld [vmem:[%s817 + $0x70] sm:$0xff]
      %v1558 = vld [vmem:[%s817 + $0x78] sm:$0xff]
      %v1559 = vld [vmem:[#allocation4] sm:$0xff]
      %v1560 = vld [vmem:[#allocation4 + $0x8] sm:$0xff]
      %v1561 = vld [vmem:[#allocation4 + $0x10] sm:$0xff]
      %v1562 = vld [vmem:[#allocation4 + $0x18] sm:$0xff]
      %v1563 = vld [vmem:[#allocation4 + $0x20] sm:$0xff]
      %v1564 = vld [vmem:[#allocation4 + $0x28] sm:$0xff]
      %v1565 = vld [vmem:[#allocation4 + $0x30] sm:$0xff]
      %v1566 = vld [vmem:[#allocation4 + $0x38] sm:$0xff]
      %v1567 = vld [vmem:[#allocation4 + $0x40] sm:$0xff]
      %v1568 = vld [vmem:[#allocation4 + $0x48] sm:$0xff]
      %v1569 = vld [vmem:[#allocation4 + $0x50] sm:$0xff]
      %v1570 = vld [vmem:[#allocation4 + $0x58] sm:$0xff]
      %v1571 = vld [vmem:[#allocation4 + $0x60] sm:$0xff]
      %v1572 = vld [vmem:[#allocation4 + $0x68] sm:$0xff]
      %v1573 = vld [vmem:[#allocation4 + $0x70] sm:$0xff]
      %v1574 = vld [vmem:[#allocation4 + $0x78] sm:$0xff]
      %v1575 = vld [vmem:[#allocation4 + $0x80] sm:$0xff]
      %v1576 = vld [vmem:[#allocation4 + $0x88] sm:$0xff]
      %v1577 = vld [vmem:[#allocation4 + $0x90] sm:$0xff]
      %v1578 = vld [vmem:[#allocation4 + $0x98] sm:$0xff]
      %v1579 = vld [vmem:[#allocation4 + $0xa0] sm:$0xff]
      %v1580 = vld [vmem:[#allocation4 + $0xa8] sm:$0xff]
      %v1581 = vld [vmem:[#allocation4 + $0xb0] sm:$0xff]
      %v1582 = vld [vmem:[#allocation4 + $0xb8] sm:$0xff]
      %v1583 = vld [vmem:[#allocation4 + $0xc0] sm:$0xff]
      %v1584 = vld [vmem:[#allocation4 + $0xc8] sm:$0xff]
      %v1585 = vld [vmem:[#allocation4 + $0xd0] sm:$0xff]
      %v1586 = vld [vmem:[#allocation4 + $0xd8] sm:$0xff]
      %v1587 = vld [vmem:[#allocation4 + $0xe0] sm:$0xff]
      %v1588 = vld [vmem:[#allocation4 + $0xe8] sm:$0xff]
      %v1589 = vld [vmem:[#allocation4 + $0xf0] sm:$0xff]
      %v1590 = vld [vmem:[#allocation4 + $0xf8] sm:$0xff]
      %s1591 = scalar_lea.vmem %s5, 128
      %v1592 = vld [vmem:[%s1591] sm:$0xf]
      %v1593 = vld [vmem:[%s1591 + $0x4] sm:$0xf]
      %v1594 = vld [vmem:[%s1591 + $0x8] sm:$0xf]
      %v1595 = vld [vmem:[%s1591 + $0xc] sm:$0xf]
      %v1596 = vld [vmem:[%s1591 + $0x10] sm:$0xf]
      %v1597 = vld [vmem:[%s1591 + $0x14] sm:$0xf]
      %v1598 = vld [vmem:[%s1591 + $0x18] sm:$0xf]
      %v1599 = vld [vmem:[%s1591 + $0x1c] sm:$0xf]
      %v1600 = vld [vmem:[%s1591 + $0x20] sm:$0xf]
      %v1601 = vld [vmem:[%s1591 + $0x24] sm:$0xf]
      %v1602 = vld [vmem:[%s1591 + $0x28] sm:$0xf]
      %v1603 = vld [vmem:[%s1591 + $0x2c] sm:$0xf]
      %v1604 = vld [vmem:[%s1591 + $0x30] sm:$0xf]
      %v1605 = vld [vmem:[%s1591 + $0x34] sm:$0xf]
      %v1606 = vld [vmem:[%s1591 + $0x38] sm:$0xf]
      %v1607 = vld [vmem:[%s1591 + $0x3c] sm:$0xf]
      %v1624 = vunpack.c.l.b16 %v1592
      %v1625 = vunpack.c.l.b16 %v1593
      %v1626 = vunpack.c.l.b16 %v1594
      %v1627 = vunpack.c.l.b16 %v1595
      %v1628 = vunpack.c.l.b16 %v1596
      %v1629 = vunpack.c.l.b16 %v1597
      %v1630 = vunpack.c.l.b16 %v1598
      %v1631 = vunpack.c.l.b16 %v1599
      %v1632 = vunpack.c.l.b16 %v1600
      %v1633 = vunpack.c.l.b16 %v1601
      %v1634 = vunpack.c.l.b16 %v1602
      %v1635 = vunpack.c.l.b16 %v1603
      %v1636 = vunpack.c.l.b16 %v1604
      %v1637 = vunpack.c.l.b16 %v1605
      %v1638 = vunpack.c.l.b16 %v1606
      %v1639 = vunpack.c.l.b16 %v1607
      %v1640 = vpack.c.b16 %v1625, %v1624
      %v1641 = vpack.c.b16 %v1627, %v1626
      %v1642 = vpack.c.b16 %v1629, %v1628
      %v1643 = vpack.c.b16 %v1631, %v1630
      %v1644 = vpack.c.b16 %v1633, %v1632
      %v1645 = vpack.c.b16 %v1635, %v1634
      %v1646 = vpack.c.b16 %v1637, %v1636
      %v1647 = vpack.c.b16 %v1639, %v1638
      %1656 = vmatprep.subr.bf16.mxu0 0
      %1657 = vmatpush1.bf16.msra.mxu0 %v1640
      %1658 = vmatprep.subr.bf16.mxu0 0
      %1659 = vmatpush1.bf16.msra.mxu0 %v1641
      %1660 = vmatprep.subr.bf16.mxu0 0
      %1661 = vmatpush1.bf16.msra.mxu0 %v1642
      %1662 = vmatprep.subr.bf16.mxu0 0
      %1663 = vmatpush1.bf16.msra.mxu0 %v1643
      %1664 = vmatprep.subr.bf16.mxu0 0
      %1665 = vmatpush1.bf16.msra.mxu0 %v1644
      %1666 = vmatprep.subr.bf16.mxu0 0
      %1667 = vmatpush1.bf16.msra.mxu0 %v1645
      %1668 = vmatprep.subr.bf16.mxu0 0
      %1669 = vmatpush1.bf16.msra.mxu0 %v1646
      %1670 = vmatprep.subr.bf16.mxu0 0
      %1671 = vmatpush1.bf16.msra.mxu0 %v1647
      %1672 = vmatprep.subr.bf16.mxu0 0
      %1673 = vmatpush1.bf16.msra.mxu0 0
      %1674 = vmatprep.subr.bf16.mxu0 0
      %1675 = vmatpush1.bf16.msra.mxu0 0
      %1676 = vmatprep.subr.bf16.mxu0 0
      %1677 = vmatpush1.bf16.msra.mxu0 0
      %1678 = vmatprep.subr.bf16.mxu0 0
      %1679 = vmatpush1.bf16.msra.mxu0 0
      %1680 = vmatprep.subr.bf16.mxu0 0
      %1681 = vmatpush1.bf16.msra.mxu0 0
      %1682 = vmatprep.subr.bf16.mxu0 0
      %1683 = vmatpush1.bf16.msra.mxu0 0
      %1684 = vmatprep.subr.bf16.mxu0 0
      %1685 = vmatpush1.bf16.msra.mxu0 0
      %1686 = vmatprep.subr.bf16.mxu0 0
      %1687 = vmatpush1.bf16.msra.mxu0 0
      %1688 = vmatprep.mubr.bf16.mxu0 0
      %1689 = vmatmul.mubr.bf16.gmra.mrb[0].mxu0 %v1543
      %v1690 = vpop.f32.mrb[0].mxu0
      %v1691 = vadd.f32 0.0, %v1690
      %v1692 = vpop.f32.mrb[0].mxu0
      %v1693 = vpop.f32.mrb[0].mxu0
      %v1694 = vadd.f32 0.0, %v1693
      %v1695 = vpop.f32.mrb[0].mxu0
      %1696 = vmatprep.mubr.bf16.mxu0 0
      %1697 = vmatmul.mubr.bf16.gmra.mrb[0].mxu0 %v1544
      %v1698 = vpop.f32.mrb[0].mxu0
      %v1699 = vadd.f32 0.0, %v1698
      %v1700 = vpop.f32.mrb[0].mxu0
      %v1701 = vpop.f32.mrb[0].mxu0
      %v1702 = vadd.f32 0.0, %v1701
      %v1703 = vpop.f32.mrb[0].mxu0
      %1704 = vmatprep.mubr.bf16.mxu0 0
      %1705 = vmatmul.mubr.bf16.gmra.mrb[0].mxu0 %v1545
      %v1706 = vpop.f32.mrb[0].mxu0
      %v1707 = vadd.f32 0.0, %v1706
      %v1708 = vpop.f32.mrb[0].mxu0
      %v1709 = vpop.f32.mrb[0].mxu0
      %v1710 = vadd.f32 0.0, %v1709
      %v1711 = vpop.f32.mrb[0].mxu0
      %1712 = vmatprep.mubr.bf16.mxu0 0
      %1713 = vmatmul.mubr.bf16.gmra.mrb[0].mxu0 %v1546
      %v1714 = vpop.f32.mrb[0].mxu0
      %v1715 = vadd.f32 0.0, %v1714
      %v1716 = vpop.f32.mrb[0].mxu0
      %v1717 = vpop.f32.mrb[0].mxu0
      %v1718 = vadd.f32 0.0, %v1717
      %v1719 = vpop.f32.mrb[0].mxu0
      %1720 = vmatprep.mubr.bf16.mxu0 0
      %1721 = vmatmul.mubr.bf16.gmra.mrb[0].mxu0 %v1547
      %v1722 = vpop.f32.mrb[0].mxu0
      %v1723 = vadd.f32 0.0, %v1722
      %v1724 = vpop.f32.mrb[0].mxu0
      %v1725 = vpop.f32.mrb[0].mxu0
      %v1726 = vadd.f32 0.0, %v1725
      %v1727 = vpop.f32.mrb[0].mxu0
      %1728 = vmatprep.mubr.bf16.mxu0 0
      %1729 = vmatmul.mubr.bf16.gmra.mrb[0].mxu0 %v1548
      %v1730 = vpop.f32.mrb[0].mxu0
      %v1731 = vadd.f32 0.0, %v1730
      %v1732 = vpop.f32.mrb[0].mxu0
      %v1733 = vpop.f32.mrb[0].mxu0
      %v1734 = vadd.f32 0.0, %v1733
      %v1735 = vpop.f32.mrb[0].mxu0
      %1736 = vmatprep.mubr.bf16.mxu0 0
      %1737 = vmatmul.mubr.bf16.gmra.mrb[0].mxu0 %v1549
      %v1738 = vpop.f32.mrb[0].mxu0
      %v1739 = vadd.f32 0.0, %v1738
      %v1740 = vpop.f32.mrb[0].mxu0
      %v1741 = vpop.f32.mrb[0].mxu0
      %v1742 = vadd.f32 0.0, %v1741
      %v1743 = vpop.f32.mrb[0].mxu0
      %1744 = vmatprep.mubr.bf16.mxu0 0
      %1745 = vmatmul.mubr.bf16.gmra.mrb[0].mxu0 %v1550
      %v1746 = vpop.f32.mrb[0].mxu0
      %v1747 = vadd.f32 0.0, %v1746
      %v1748 = vpop.f32.mrb[0].mxu0
      %v1749 = vpop.f32.mrb[0].mxu0
      %v1750 = vadd.f32 0.0, %v1749
      %v1751 = vpop.f32.mrb[0].mxu0
      %1752 = vmatprep.mubr.bf16.mxu0 0
      %1753 = vmatmul.mubr.bf16.gmra.mrb[0].mxu0 %v1551
      %v1754 = vpop.f32.mrb[0].mxu0
      %v1755 = vadd.f32 0.0, %v1754
      %v1756 = vpop.f32.mrb[0].mxu0
      %v1757 = vpop.f32.mrb[0].mxu0
      %v1758 = vadd.f32 0.0, %v1757
      %v1759 = vpop.f32.mrb[0].mxu0
      %1760 = vmatprep.mubr.bf16.mxu0 0
      %1761 = vmatmul.mubr.bf16.gmra.mrb[0].mxu0 %v1552
      %v1762 = vpop.f32.mrb[0].mxu0
      %v1763 = vadd.f32 0.0, %v1762
      %v1764 = vpop.f32.mrb[0].mxu0
      %v1765 = vpop.f32.mrb[0].mxu0
      %v1766 = vadd.f32 0.0, %v1765
      %v1767 = vpop.f32.mrb[0].mxu0
      %1768 = vmatprep.mubr.bf16.mxu0 0
      %1769 = vmatmul.mubr.bf16.gmra.mrb[0].mxu0 %v1553
      %v1770 = vpop.f32.mrb[0].mxu0
      %v1771 = vadd.f32 0.0, %v1770
      %v1772 = vpop.f32.mrb[0].mxu0
      %v1773 = vpop.f32.mrb[0].mxu0
      %v1774 = vadd.f32 0.0, %v1773
      %v1775 = vpop.f32.mrb[0].mxu0
      %1776 = vmatprep.mubr.bf16.mxu0 0
      %1777 = vmatmul.mubr.bf16.gmra.mrb[0].mxu0 %v1554
      %v1778 = vpop.f32.mrb[0].mxu0
      %v1779 = vadd.f32 0.0, %v1778
      %v1780 = vpop.f32.mrb[0].mxu0
      %v1781 = vpop.f32.mrb[0].mxu0
      %v1782 = vadd.f32 0.0, %v1781
      %v1783 = vpop.f32.mrb[0].mxu0
      %1784 = vmatprep.mubr.bf16.mxu0 0
      %1785 = vmatmul.mubr.bf16.gmra.mrb[0].mxu0 %v1555
      %v1786 = vpop.f32.mrb[0].mxu0
      %v1787 = vadd.f32 0.0, %v1786
      %v1788 = vpop.f32.mrb[0].mxu0
      %v1789 = vpop.f32.mrb[0].mxu0
      %v1790 = vadd.f32 0.0, %v1789
      %v1791 = vpop.f32.mrb[0].mxu0
      %1792 = vmatprep.mubr.bf16.mxu0 0
      %1793 = vmatmul.mubr.bf16.gmra.mrb[0].mxu0 %v1556
      %v1794 = vpop.f32.mrb[0].mxu0
      %v1795 = vadd.f32 0.0, %v1794
      %v1796 = vpop.f32.mrb[0].mxu0
      %v1797 = vpop.f32.mrb[0].mxu0
      %v1798 = vadd.f32 0.0, %v1797
      %v1799 = vpop.f32.mrb[0].mxu0
      %1800 = vmatprep.mubr.bf16.mxu0 0
      %1801 = vmatmul.mubr.bf16.gmra.mrb[0].mxu0 %v1557
      %v1802 = vpop.f32.mrb[0].mxu0
      %v1803 = vadd.f32 0.0, %v1802
      %v1804 = vpop.f32.mrb[0].mxu0
      %v1805 = vpop.f32.mrb[0].mxu0
      %v1806 = vadd.f32 0.0, %v1805
      %v1807 = vpop.f32.mrb[0].mxu0
      %1808 = vmatprep.mubr.bf16.mxu0 0
      %1809 = vmatmul.mubr.bf16.gmra.mrb[0].mxu0 %v1558
      %v1810 = vpop.f32.mrb[0].mxu0
      %v1811 = vadd.f32 0.0, %v1810
      %v1812 = vpop.f32.mrb[0].mxu0
      %v1813 = vpop.f32.mrb[0].mxu0
      %v1814 = vadd.f32 0.0, %v1813
      %v1815 = vpop.f32.mrb[0].mxu0
      %1816 = vdwg.mxu0
      %v1817 = vadd.f32 %v1559, %v1691
      %v1818 = vadd.f32 %v1560, %v1694
      %v1819 = vadd.f32 %v1561, %v1699
      %v1820 = vadd.f32 %v1562, %v1702
      %v1821 = vadd.f32 %v1563, %v1707
      %v1822 = vadd.f32 %v1564, %v1710
      %v1823 = vadd.f32 %v1565, %v1715
      %v1824 = vadd.f32 %v1566, %v1718
      %v1825 = vadd.f32 %v1567, %v1723
      %v1826 = vadd.f32 %v1568, %v1726
      %v1827 = vadd.f32 %v1569, %v1731
      %v1828 = vadd.f32 %v1570, %v1734
      %v1829 = vadd.f32 %v1571, %v1739
      %v1830 = vadd.f32 %v1572, %v1742
      %v1831 = vadd.f32 %v1573, %v1747
      %v1832 = vadd.f32 %v1574, %v1750
      %v1833 = vadd.f32 %v1575, %v1755
      %v1834 = vadd.f32 %v1576, %v1758
      %v1835 = vadd.f32 %v1577, %v1763
      %v1836 = vadd.f32 %v1578, %v1766
      %v1837 = vadd.f32 %v1579, %v1771
      %v1838 = vadd.f32 %v1580, %v1774
      %v1839 = vadd.f32 %v1581, %v1779
      %v1840 = vadd.f32 %v1582, %v1782
      %v1841 = vadd.f32 %v1583, %v1787
      %v1842 = vadd.f32 %v1584, %v1790
      %v1843 = vadd.f32 %v1585, %v1795
      %v1844 = vadd.f32 %v1586, %v1798
      %v1845 = vadd.f32 %v1587, %v1803
      %v1846 = vadd.f32 %v1588, %v1806
      %v1847 = vadd.f32 %v1589, %v1811
      %v1848 = vadd.f32 %v1590, %v1814
      %1849 = vst [vmem:[#allocation4] sm:$0xff] %v1817
      %1850 = vst [vmem:[#allocation4 + $0x8] sm:$0xff] %v1818
      %1851 = vst [vmem:[#allocation4 + $0x10] sm:$0xff] %v1819
      %1852 = vst [vmem:[#allocation4 + $0x18] sm:$0xff] %v1820
      %1853 = vst [vmem:[#allocation4 + $0x20] sm:$0xff] %v1821
      %1854 = vst [vmem:[#allocation4 + $0x28] sm:$0xff] %v1822
      %1855 = vst [vmem:[#allocation4 + $0x30] sm:$0xff] %v1823
      %1856 = vst [vmem:[#allocation4 + $0x38] sm:$0xff] %v1824
      %1857 = vst [vmem:[#allocation4 + $0x40] sm:$0xff] %v1825
      %1858 = vst [vmem:[#allocation4 + $0x48] sm:$0xff] %v1826
      %1859 = vst [vmem:[#allocation4 + $0x50] sm:$0xff] %v1827
      %1860 = vst [vmem:[#allocation4 + $0x58] sm:$0xff] %v1828
      %1861 = vst [vmem:[#allocation4 + $0x60] sm:$0xff] %v1829
      %1862 = vst [vmem:[#allocation4 + $0x68] sm:$0xff] %v1830
      %1863 = vst [vmem:[#allocation4 + $0x70] sm:$0xff] %v1831
      %1864 = vst [vmem:[#allocation4 + $0x78] sm:$0xff] %v1832
      %1865 = vst [vmem:[#allocation4 + $0x80] sm:$0xff] %v1833
      %1866 = vst [vmem:[#allocation4 + $0x88] sm:$0xff] %v1834
      %1867 = vst [vmem:[#allocation4 + $0x90] sm:$0xff] %v1835
      %1868 = vst [vmem:[#allocation4 + $0x98] sm:$0xff] %v1836
      %1869 = vst [vmem:[#allocation4 + $0xa0] sm:$0xff] %v1837
      %1870 = vst [vmem:[#allocation4 + $0xa8] sm:$0xff] %v1838
      %1871 = vst [vmem:[#allocation4 + $0xb0] sm:$0xff] %v1839
      %1872 = vst [vmem:[#allocation4 + $0xb8] sm:$0xff] %v1840
      %1873 = vst [vmem:[#allocation4 + $0xc0] sm:$0xff] %v1841
      %1874 = vst [vmem:[#allocation4 + $0xc8] sm:$0xff] %v1842
      %1875 = vst [vmem:[#allocation4 + $0xd0] sm:$0xff] %v1843
      %1876 = vst [vmem:[#allocation4 + $0xd8] sm:$0xff] %v1844
      %1877 = vst [vmem:[#allocation4 + $0xe0] sm:$0xff] %v1845
      %1878 = vst [vmem:[#allocation4 + $0xe8] sm:$0xff] %v1846
      %1879 = vst [vmem:[#allocation4 + $0xf0] sm:$0xff] %v1847
      %1880 = vst [vmem:[#allocation4 + $0xf8] sm:$0xff] %v1848
      %s1881 = scalar_lea.vmem [#allocation3], 8
      %v1882 = vld [vmem:[%s1881] sm:$0xff]
      %v1883 = vld [vmem:[%s1881 + $0x8] sm:$0xff]
      %v1884 = vld [vmem:[%s1881 + $0x10] sm:$0xff]
      %v1885 = vld [vmem:[%s1881 + $0x18] sm:$0xff]
      %v1886 = vld [vmem:[%s1881 + $0x20] sm:$0xff]
      %v1887 = vld [vmem:[%s1881 + $0x28] sm:$0xff]
      %v1888 = vld [vmem:[%s1881 + $0x30] sm:$0xff]
      %v1889 = vld [vmem:[%s1881 + $0x38] sm:$0xff]
      %v1890 = vld [vmem:[%s1881 + $0x40] sm:$0xff]
      %v1891 = vld [vmem:[%s1881 + $0x48] sm:$0xff]
      %v1892 = vld [vmem:[%s1881 + $0x50] sm:$0xff]
      %v1893 = vld [vmem:[%s1881 + $0x58] sm:$0xff]
      %v1894 = vld [vmem:[%s1881 + $0x60] sm:$0xff]
      %v1895 = vld [vmem:[%s1881 + $0x68] sm:$0xff]
      %v1896 = vld [vmem:[%s1881 + $0x70] sm:$0xff]
      %v1897 = vld [vmem:[%s1881 + $0x78] sm:$0xff]
      %v1898 = vld [vmem:[#allocation4] sm:$0xff]
      %v1899 = vld [vmem:[#allocation4 + $0x8] sm:$0xff]
      %v1900 = vld [vmem:[#allocation4 + $0x10] sm:$0xff]
      %v1901 = vld [vmem:[#allocation4 + $0x18] sm:$0xff]
      %v1902 = vld [vmem:[#allocation4 + $0x20] sm:$0xff]
      %v1903 = vld [vmem:[#allocation4 + $0x28] sm:$0xff]
      %v1904 = vld [vmem:[#allocation4 + $0x30] sm:$0xff]
      %v1905 = vld [vmem:[#allocation4 + $0x38] sm:$0xff]
      %v1906 = vld [vmem:[#allocation4 + $0x40] sm:$0xff]
      %v1907 = vld [vmem:[#allocation4 + $0x48] sm:$0xff]
      %v1908 = vld [vmem:[#allocation4 + $0x50] sm:$0xff]
      %v1909 = vld [vmem:[#allocation4 + $0x58] sm:$0xff]
      %v1910 = vld [vmem:[#allocation4 + $0x60] sm:$0xff]
      %v1911 = vld [vmem:[#allocation4 + $0x68] sm:$0xff]
      %v1912 = vld [vmem:[#allocation4 + $0x70] sm:$0xff]
      %v1913 = vld [vmem:[#allocation4 + $0x78] sm:$0xff]
      %v1914 = vld [vmem:[#allocation4 + $0x80] sm:$0xff]
      %v1915 = vld [vmem:[#allocation4 + $0x88] sm:$0xff]
      %v1916 = vld [vmem:[#allocation4 + $0x90] sm:$0xff]
      %v1917 = vld [vmem:[#allocation4 + $0x98] sm:$0xff]
      %v1918 = vld [vmem:[#allocation4 + $0xa0] sm:$0xff]
      %v1919 = vld [vmem:[#allocation4 + $0xa8] sm:$0xff]
      %v1920 = vld [vmem:[#allocation4 + $0xb0] sm:$0xff]
      %v1921 = vld [vmem:[#allocation4 + $0xb8] sm:$0xff]
      %v1922 = vld [vmem:[#allocation4 + $0xc0] sm:$0xff]
      %v1923 = vld [vmem:[#allocation4 + $0xc8] sm:$0xff]
      %v1924 = vld [vmem:[#allocation4 + $0xd0] sm:$0xff]
      %v1925 = vld [vmem:[#allocation4 + $0xd8] sm:$0xff]
      %v1926 = vld [vmem:[#allocation4 + $0xe0] sm:$0xff]
      %v1927 = vld [vmem:[#allocation4 + $0xe8] sm:$0xff]
      %v1928 = vld [vmem:[#allocation4 + $0xf0] sm:$0xff]
      %v1929 = vld [vmem:[#allocation4 + $0xf8] sm:$0xff]
      %s1930 = scalar_lea.vmem %s5, 192
      %v1931 = vld [vmem:[%s1930] sm:$0xf]
      %v1932 = vld [vmem:[%s1930 + $0x4] sm:$0xf]
      %v1933 = vld [vmem:[%s1930 + $0x8] sm:$0xf]
      %v1934 = vld [vmem:[%s1930 + $0xc] sm:$0xf]
      %v1935 = vld [vmem:[%s1930 + $0x10] sm:$0xf]
      %v1936 = vld [vmem:[%s1930 + $0x14] sm:$0xf]
      %v1937 = vld [vmem:[%s1930 + $0x18] sm:$0xf]
      %v1938 = vld [vmem:[%s1930 + $0x1c] sm:$0xf]
      %v1939 = vld [vmem:[%s1930 + $0x20] sm:$0xf]
      %v1940 = vld [vmem:[%s1930 + $0x24] sm:$0xf]
      %v1941 = vld [vmem:[%s1930 + $0x28] sm:$0xf]
      %v1942 = vld [vmem:[%s1930 + $0x2c] sm:$0xf]
      %v1943 = vld [vmem:[%s1930 + $0x30] sm:$0xf]
      %v1944 = vld [vmem:[%s1930 + $0x34] sm:$0xf]
      %v1945 = vld [vmem:[%s1930 + $0x38] sm:$0xf]
      %v1946 = vld [vmem:[%s1930 + $0x3c] sm:$0xf]
      %v1963 = vunpack.c.l.b16 %v1931
      %v1964 = vunpack.c.l.b16 %v1932
      %v1965 = vunpack.c.l.b16 %v1933
      %v1966 = vunpack.c.l.b16 %v1934
      %v1967 = vunpack.c.l.b16 %v1935
      %v1968 = vunpack.c.l.b16 %v1936
      %v1969 = vunpack.c.l.b16 %v1937
      %v1970 = vunpack.c.l.b16 %v1938
      %v1971 = vunpack.c.l.b16 %v1939
      %v1972 = vunpack.c.l.b16 %v1940
      %v1973 = vunpack.c.l.b16 %v1941
      %v1974 = vunpack.c.l.b16 %v1942
      %v1975 = vunpack.c.l.b16 %v1943
      %v1976 = vunpack.c.l.b16 %v1944
      %v1977 = vunpack.c.l.b16 %v1945
      %v1978 = vunpack.c.l.b16 %v1946
      %v1979 = vpack.c.b16 %v1964, %v1963
      %v1980 = vpack.c.b16 %v1966, %v1965
      %v1981 = vpack.c.b16 %v1968, %v1967
      %v1982 = vpack.c.b16 %v1970, %v1969
      %v1983 = vpack.c.b16 %v1972, %v1971
      %v1984 = vpack.c.b16 %v1974, %v1973
      %v1985 = vpack.c.b16 %v1976, %v1975
      %v1986 = vpack.c.b16 %v1978, %v1977
      %1995 = vmatprep.subr.bf16.mxu0 0
      %1996 = vmatpush1.bf16.msra.mxu0 %v1979
      %1997 = vmatprep.subr.bf16.mxu0 0
      %1998 = vmatpush1.bf16.msra.mxu0 %v1980
      %1999 = vmatprep.subr.bf16.mxu0 0
      %2000 = vmatpush1.bf16.msra.mxu0 %v1981
      %2001 = vmatprep.subr.bf16.mxu0 0
      %2002 = vmatpush1.bf16.msra.mxu0 %v1982
      %2003 = vmatprep.subr.bf16.mxu0 0
      %2004 = vmatpush1.bf16.msra.mxu0 %v1983
      %2005 = vmatprep.subr.bf16.mxu0 0
      %2006 = vmatpush1.bf16.msra.mxu0 %v1984
      %2007 = vmatprep.subr.bf16.mxu0 0
      %2008 = vmatpush1.bf16.msra.mxu0 %v1985
      %2009 = vmatprep.subr.bf16.mxu0 0
      %2010 = vmatpush1.bf16.msra.mxu0 %v1986
      %2011 = vmatprep.subr.bf16.mxu0 0
      %2012 = vmatpush1.bf16.msra.mxu0 0
      %2013 = vmatprep.subr.bf16.mxu0 0
      %2014 = vmatpush1.bf16.msra.mxu0 0
      %2015 = vmatprep.subr.bf16.mxu0 0
      %2016 = vmatpush1.bf16.msra.mxu0 0
      %2017 = vmatprep.subr.bf16.mxu0 0
      %2018 = vmatpush1.bf16.msra.mxu0 0
      %2019 = vmatprep.subr.bf16.mxu0 0
      %2020 = vmatpush1.bf16.msra.mxu0 0
      %2021 = vmatprep.subr.bf16.mxu0 0
      %2022 = vmatpush1.bf16.msra.mxu0 0
      %2023 = vmatprep.subr.bf16.mxu0 0
      %2024 = vmatpush1.bf16.msra.mxu0 0
      %2025 = vmatprep.subr.bf16.mxu0 0
      %2026 = vmatpush1.bf16.msra.mxu0 0
      %2027 = vmatprep.mubr.bf16.mxu0 0
      %2028 = vmatmul.mubr.bf16.gmra.mrb[0].mxu0 %v1882
      %v2029 = vpop.f32.mrb[0].mxu0
      %v2030 = vadd.f32 0.0, %v2029
      %v2031 = vpop.f32.mrb[0].mxu0
      %v2032 = vpop.f32.mrb[0].mxu0
      %v2033 = vadd.f32 0.0, %v2032
      %v2034 = vpop.f32.mrb[0].mxu0
      %2035 = vmatprep.mubr.bf16.mxu0 0
      %2036 = vmatmul.mubr.bf16.gmra.mrb[0].mxu0 %v1883
      %v2037 = vpop.f32.mrb[0].mxu0
      %v2038 = vadd.f32 0.0, %v2037
      %v2039 = vpop.f32.mrb[0].mxu0
      %v2040 = vpop.f32.mrb[0].mxu0
      %v2041 = vadd.f32 0.0, %v2040
      %v2042 = vpop.f32.mrb[0].mxu0
      %2043 = vmatprep.mubr.bf16.mxu0 0
      %2044 = vmatmul.mubr.bf16.gmra.mrb[0].mxu0 %v1884
      %v2045 = vpop.f32.mrb[0].mxu0
      %v2046 = vadd.f32 0.0, %v2045
      %v2047 = vpop.f32.mrb[0].mxu0
      %v2048 = vpop.f32.mrb[0].mxu0
      %v2049 = vadd.f32 0.0, %v2048
      %v2050 = vpop.f32.mrb[0].mxu0
      %2051 = vmatprep.mubr.bf16.mxu0 0
      %2052 = vmatmul.mubr.bf16.gmra.mrb[0].mxu0 %v1885
      %v2053 = vpop.f32.mrb[0].mxu0
      %v2054 = vadd.f32 0.0, %v2053
      %v2055 = vpop.f32.mrb[0].mxu0
      %v2056 = vpop.f32.mrb[0].mxu0
      %v2057 = vadd.f32 0.0, %v2056
      %v2058 = vpop.f32.mrb[0].mxu0
      %2059 = vmatprep.mubr.bf16.mxu0 0
      %2060 = vmatmul.mubr.bf16.gmra.mrb[0].mxu0 %v1886
      %v2061 = vpop.f32.mrb[0].mxu0
      %v2062 = vadd.f32 0.0, %v2061
      %v2063 = vpop.f32.mrb[0].mxu0
      %v2064 = vpop.f32.mrb[0].mxu0
      %v2065 = vadd.f32 0.0, %v2064
      %v2066 = vpop.f32.mrb[0].mxu0
      %2067 = vmatprep.mubr.bf16.mxu0 0
      %2068 = vmatmul.mubr.bf16.gmra.mrb[0].mxu0 %v1887
      %v2069 = vpop.f32.mrb[0].mxu0
      %v2070 = vadd.f32 0.0, %v2069
      %v2071 = vpop.f32.mrb[0].mxu0
      %v2072 = vpop.f32.mrb[0].mxu0
      %v2073 = vadd.f32 0.0, %v2072
      %v2074 = vpop.f32.mrb[0].mxu0
      %2075 = vmatprep.mubr.bf16.mxu0 0
      %2076 = vmatmul.mubr.bf16.gmra.mrb[0].mxu0 %v1888
      %v2077 = vpop.f32.mrb[0].mxu0
      %v2078 = vadd.f32 0.0, %v2077
      %v2079 = vpop.f32.mrb[0].mxu0
      %v2080 = vpop.f32.mrb[0].mxu0
      %v2081 = vadd.f32 0.0, %v2080
      %v2082 = vpop.f32.mrb[0].mxu0
      %2083 = vmatprep.mubr.bf16.mxu0 0
      %2084 = vmatmul.mubr.bf16.gmra.mrb[0].mxu0 %v1889
      %v2085 = vpop.f32.mrb[0].mxu0
      %v2086 = vadd.f32 0.0, %v2085
      %v2087 = vpop.f32.mrb[0].mxu0
      %v2088 = vpop.f32.mrb[0].mxu0
      %v2089 = vadd.f32 0.0, %v2088
      %v2090 = vpop.f32.mrb[0].mxu0
      %2091 = vmatprep.mubr.bf16.mxu0 0
      %2092 = vmatmul.mubr.bf16.gmra.mrb[0].mxu0 %v1890
      %v2093 = vpop.f32.mrb[0].mxu0
      %v2094 = vadd.f32 0.0, %v2093
      %v2095 = vpop.f32.mrb[0].mxu0
      %v2096 = vpop.f32.mrb[0].mxu0
      %v2097 = vadd.f32 0.0, %v2096
      %v2098 = vpop.f32.mrb[0].mxu0
      %2099 = vmatprep.mubr.bf16.mxu0 0
      %2100 = vmatmul.mubr.bf16.gmra.mrb[0].mxu0 %v1891
      %v2101 = vpop.f32.mrb[0].mxu0
      %v2102 = vadd.f32 0.0, %v2101
      %v2103 = vpop.f32.mrb[0].mxu0
      %v2104 = vpop.f32.mrb[0].mxu0
      %v2105 = vadd.f32 0.0, %v2104
      %v2106 = vpop.f32.mrb[0].mxu0
      %2107 = vmatprep.mubr.bf16.mxu0 0
      %2108 = vmatmul.mubr.bf16.gmra.mrb[0].mxu0 %v1892
      %v2109 = vpop.f32.mrb[0].mxu0
      %v2110 = vadd.f32 0.0, %v2109
      %v2111 = vpop.f32.mrb[0].mxu0
      %v2112 = vpop.f32.mrb[0].mxu0
      %v2113 = vadd.f32 0.0, %v2112
      %v2114 = vpop.f32.mrb[0].mxu0
      %2115 = vmatprep.mubr.bf16.mxu0 0
      %2116 = vmatmul.mubr.bf16.gmra.mrb[0].mxu0 %v1893
      %v2117 = vpop.f32.mrb[0].mxu0
      %v2118 = vadd.f32 0.0, %v2117
      %v2119 = vpop.f32.mrb[0].mxu0
      %v2120 = vpop.f32.mrb[0].mxu0
      %v2121 = vadd.f32 0.0, %v2120
      %v2122 = vpop.f32.mrb[0].mxu0
      %2123 = vmatprep.mubr.bf16.mxu0 0
      %2124 = vmatmul.mubr.bf16.gmra.mrb[0].mxu0 %v1894
      %v2125 = vpop.f32.mrb[0].mxu0
      %v2126 = vadd.f32 0.0, %v2125
      %v2127 = vpop.f32.mrb[0].mxu0
      %v2128 = vpop.f32.mrb[0].mxu0
      %v2129 = vadd.f32 0.0, %v2128
      %v2130 = vpop.f32.mrb[0].mxu0
      %2131 = vmatprep.mubr.bf16.mxu0 0
      %2132 = vmatmul.mubr.bf16.gmra.mrb[0].mxu0 %v1895
      %v2133 = vpop.f32.mrb[0].mxu0
      %v2134 = vadd.f32 0.0, %v2133
      %v2135 = vpop.f32.mrb[0].mxu0
      %v2136 = vpop.f32.mrb[0].mxu0
      %v2137 = vadd.f32 0.0, %v2136
      %v2138 = vpop.f32.mrb[0].mxu0
      %2139 = vmatprep.mubr.bf16.mxu0 0
      %2140 = vmatmul.mubr.bf16.gmra.mrb[0].mxu0 %v1896
      %v2141 = vpop.f32.mrb[0].mxu0
      %v2142 = vadd.f32 0.0, %v2141
      %v2143 = vpop.f32.mrb[0].mxu0
      %v2144 = vpop.f32.mrb[0].mxu0
      %v2145 = vadd.f32 0.0, %v2144
      %v2146 = vpop.f32.mrb[0].mxu0
      %2147 = vmatprep.mubr.bf16.mxu0 0
      %2148 = vmatmul.mubr.bf16.gmra.mrb[0].mxu0 %v1897
      %v2149 = vpop.f32.mrb[0].mxu0
      %v2150 = vadd.f32 0.0, %v2149
      %v2151 = vpop.f32.mrb[0].mxu0
      %v2152 = vpop.f32.mrb[0].mxu0
      %v2153 = vadd.f32 0.0, %v2152
      %v2154 = vpop.f32.mrb[0].mxu0
      %2155 = vdwg.mxu0
      %v2156 = vadd.f32 %v1898, %v2030
      %v2157 = vadd.f32 %v1899, %v2033
      %v2158 = vadd.f32 %v1900, %v2038
      %v2159 = vadd.f32 %v1901, %v2041
      %v2160 = vadd.f32 %v1902, %v2046
      %v2161 = vadd.f32 %v1903, %v2049
      %v2162 = vadd.f32 %v1904, %v2054
      %v2163 = vadd.f32 %v1905, %v2057
      %v2164 = vadd.f32 %v1906, %v2062
      %v2165 = vadd.f32 %v1907, %v2065
      %v2166 = vadd.f32 %v1908, %v2070
      %v2167 = vadd.f32 %v1909, %v2073
      %v2168 = vadd.f32 %v1910, %v2078
      %v2169 = vadd.f32 %v1911, %v2081
      %v2170 = vadd.f32 %v1912, %v2086
      %v2171 = vadd.f32 %v1913, %v2089
      %v2172 = vadd.f32 %v1914, %v2094
      %v2173 = vadd.f32 %v1915, %v2097
      %v2174 = vadd.f32 %v1916, %v2102
      %v2175 = vadd.f32 %v1917, %v2105
      %v2176 = vadd.f32 %v1918, %v2110
      %v2177 = vadd.f32 %v1919, %v2113
      %v2178 = vadd.f32 %v1920, %v2118
      %v2179 = vadd.f32 %v1921, %v2121
      %v2180 = vadd.f32 %v1922, %v2126
      %v2181 = vadd.f32 %v1923, %v2129
      %v2182 = vadd.f32 %v1924, %v2134
      %v2183 = vadd.f32 %v1925, %v2137
      %v2184 = vadd.f32 %v1926, %v2142
      %v2185 = vadd.f32 %v1927, %v2145
      %v2186 = vadd.f32 %v1928, %v2150
      %v2187 = vadd.f32 %v1929, %v2153
      %2188 = vst [vmem:[#allocation4] sm:$0xff] %v2156
      %2189 = vst [vmem:[#allocation4 + $0x8] sm:$0xff] %v2157
      %2190 = vst [vmem:[#allocation4 + $0x10] sm:$0xff] %v2158
      %2191 = vst [vmem:[#allocation4 + $0x18] sm:$0xff] %v2159
      %2192 = vst [vmem:[#allocation4 + $0x20] sm:$0xff] %v2160
      %2193 = vst [vmem:[#allocation4 + $0x28] sm:$0xff] %v2161
      %2194 = vst [vmem:[#allocation4 + $0x30] sm:$0xff] %v2162
      %2195 = vst [vmem:[#allocation4 + $0x38] sm:$0xff] %v2163
      %2196 = vst [vmem:[#allocation4 + $0x40] sm:$0xff] %v2164
      %2197 = vst [vmem:[#allocation4 + $0x48] sm:$0xff] %v2165
      %2198 = vst [vmem:[#allocation4 + $0x50] sm:$0xff] %v2166
      %2199 = vst [vmem:[#allocation4 + $0x58] sm:$0xff] %v2167
      %2200 = vst [vmem:[#allocation4 + $0x60] sm:$0xff] %v2168
      %2201 = vst [vmem:[#allocation4 + $0x68] sm:$0xff] %v2169
      %2202 = vst [vmem:[#allocation4 + $0x70] sm:$0xff] %v2170
      %2203 = vst [vmem:[#allocation4 + $0x78] sm:$0xff] %v2171
      %2204 = vst [vmem:[#allocation4 + $0x80] sm:$0xff] %v2172
      %2205 = vst [vmem:[#allocation4 + $0x88] sm:$0xff] %v2173
      %2206 = vst [vmem:[#allocation4 + $0x90] sm:$0xff] %v2174
      %2207 = vst [vmem:[#allocation4 + $0x98] sm:$0xff] %v2175
      %2208 = vst [vmem:[#allocation4 + $0xa0] sm:$0xff] %v2176
      %2209 = vst [vmem:[#allocation4 + $0xa8] sm:$0xff] %v2177
      %2210 = vst [vmem:[#allocation4 + $0xb0] sm:$0xff] %v2178
      %2211 = vst [vmem:[#allocation4 + $0xb8] sm:$0xff] %v2179
      %2212 = vst [vmem:[#allocation4 + $0xc0] sm:$0xff] %v2180
      %2213 = vst [vmem:[#allocation4 + $0xc8] sm:$0xff] %v2181
      %2214 = vst [vmem:[#allocation4 + $0xd0] sm:$0xff] %v2182
      %2215 = vst [vmem:[#allocation4 + $0xd8] sm:$0xff] %v2183
      %2216 = vst [vmem:[#allocation4 + $0xe0] sm:$0xff] %v2184
      %2217 = vst [vmem:[#allocation4 + $0xe8] sm:$0xff] %v2185
      %2218 = vst [vmem:[#allocation4 + $0xf0] sm:$0xff] %v2186
      %2219 = vst [vmem:[#allocation4 + $0xf8] sm:$0xff] %v2187
      %s2220 = scalar_lea.vmem [#allocation3], 152
      %v2221 = vld [vmem:[%s2220] sm:$0xff]
      %v2222 = vld [vmem:[%s2220 + $0x8] sm:$0xff]
      %v2223 = vld [vmem:[%s2220 + $0x10] sm:$0xff]
      %v2224 = vld [vmem:[%s2220 + $0x18] sm:$0xff]
      %v2225 = vld [vmem:[%s2220 + $0x20] sm:$0xff]
      %v2226 = vld [vmem:[%s2220 + $0x28] sm:$0xff]
      %v2227 = vld [vmem:[%s2220 + $0x30] sm:$0xff]
      %v2228 = vld [vmem:[%s2220 + $0x38] sm:$0xff]
      %v2229 = vld [vmem:[%s2220 + $0x40] sm:$0xff]
      %v2230 = vld [vmem:[%s2220 + $0x48] sm:$0xff]
      %v2231 = vld [vmem:[%s2220 + $0x50] sm:$0xff]
      %v2232 = vld [vmem:[%s2220 + $0x58] sm:$0xff]
      %v2233 = vld [vmem:[%s2220 + $0x60] sm:$0xff]
      %v2234 = vld [vmem:[%s2220 + $0x68] sm:$0xff]
      %v2235 = vld [vmem:[%s2220 + $0x70] sm:$0xff]
      %v2236 = vld [vmem:[%s2220 + $0x78] sm:$0xff]
      %v2237 = vld [vmem:[#allocation4] sm:$0xff]
      %v2238 = vld [vmem:[#allocation4 + $0x8] sm:$0xff]
      %v2239 = vld [vmem:[#allocation4 + $0x10] sm:$0xff]
      %v2240 = vld [vmem:[#allocation4 + $0x18] sm:$0xff]
      %v2241 = vld [vmem:[#allocation4 + $0x20] sm:$0xff]
      %v2242 = vld [vmem:[#allocation4 + $0x28] sm:$0xff]
      %v2243 = vld [vmem:[#allocation4 + $0x30] sm:$0xff]
      %v2244 = vld [vmem:[#allocation4 + $0x38] sm:$0xff]
      %v2245 = vld [vmem:[#allocation4 + $0x40] sm:$0xff]
      %v2246 = vld [vmem:[#allocation4 + $0x48] sm:$0xff]
      %v2247 = vld [vmem:[#allocation4 + $0x50] sm:$0xff]
      %v2248 = vld [vmem:[#allocation4 + $0x58] sm:$0xff]
      %v2249 = vld [vmem:[#allocation4 + $0x60] sm:$0xff]
      %v2250 = vld [vmem:[#allocation4 + $0x68] sm:$0xff]
      %v2251 = vld [vmem:[#allocation4 + $0x70] sm:$0xff]
      %v2252 = vld [vmem:[#allocation4 + $0x78] sm:$0xff]
      %v2253 = vld [vmem:[#allocation4 + $0x80] sm:$0xff]
      %v2254 = vld [vmem:[#allocation4 + $0x88] sm:$0xff]
      %v2255 = vld [vmem:[#allocation4 + $0x90] sm:$0xff]
      %v2256 = vld [vmem:[#allocation4 + $0x98] sm:$0xff]
      %v2257 = vld [vmem:[#allocation4 + $0xa0] sm:$0xff]
      %v2258 = vld [vmem:[#allocation4 + $0xa8] sm:$0xff]
      %v2259 = vld [vmem:[#allocation4 + $0xb0] sm:$0xff]
      %v2260 = vld [vmem:[#allocation4 + $0xb8] sm:$0xff]
      %v2261 = vld [vmem:[#allocation4 + $0xc0] sm:$0xff]
      %v2262 = vld [vmem:[#allocation4 + $0xc8] sm:$0xff]
      %v2263 = vld [vmem:[#allocation4 + $0xd0] sm:$0xff]
      %v2264 = vld [vmem:[#allocation4 + $0xd8] sm:$0xff]
      %v2265 = vld [vmem:[#allocation4 + $0xe0] sm:$0xff]
      %v2266 = vld [vmem:[#allocation4 + $0xe8] sm:$0xff]
      %v2267 = vld [vmem:[#allocation4 + $0xf0] sm:$0xff]
      %v2268 = vld [vmem:[#allocation4 + $0xf8] sm:$0xff]
      %s2269 = scalar_lea.vmem %s5, 256
      %v2270 = vld [vmem:[%s2269] sm:$0xf]
      %v2271 = vld [vmem:[%s2269 + $0x4] sm:$0xf]
      %v2272 = vld [vmem:[%s2269 + $0x8] sm:$0xf]
      %v2273 = vld [vmem:[%s2269 + $0xc] sm:$0xf]
      %v2274 = vld [vmem:[%s2269 + $0x10] sm:$0xf]
      %v2275 = vld [vmem:[%s2269 + $0x14] sm:$0xf]
      %v2276 = vld [vmem:[%s2269 + $0x18] sm:$0xf]
      %v2277 = vld [vmem:[%s2269 + $0x1c] sm:$0xf]
      %v2278 = vld [vmem:[%s2269 + $0x20] sm:$0xf]
      %v2279 = vld [vmem:[%s2269 + $0x24] sm:$0xf]
      %v2280 = vld [vmem:[%s2269 + $0x28] sm:$0xf]
      %v2281 = vld [vmem:[%s2269 + $0x2c] sm:$0xf]
      %v2282 = vld [vmem:[%s2269 + $0x30] sm:$0xf]
      %v2283 = vld [vmem:[%s2269 + $0x34] sm:$0xf]
      %v2284 = vld [vmem:[%s2269 + $0x38] sm:$0xf]
      %v2285 = vld [vmem:[%s2269 + $0x3c] sm:$0xf]
      %v2302 = vunpack.c.l.b16 %v2270
      %v2303 = vunpack.c.l.b16 %v2271
      %v2304 = vunpack.c.l.b16 %v2272
      %v2305 = vunpack.c.l.b16 %v2273
      %v2306 = vunpack.c.l.b16 %v2274
      %v2307 = vunpack.c.l.b16 %v2275
      %v2308 = vunpack.c.l.b16 %v2276
      %v2309 = vunpack.c.l.b16 %v2277
      %v2310 = vunpack.c.l.b16 %v2278
      %v2311 = vunpack.c.l.b16 %v2279
      %v2312 = vunpack.c.l.b16 %v2280
      %v2313 = vunpack.c.l.b16 %v2281
      %v2314 = vunpack.c.l.b16 %v2282
      %v2315 = vunpack.c.l.b16 %v2283
      %v2316 = vunpack.c.l.b16 %v2284
      %v2317 = vunpack.c.l.b16 %v2285
      %v2318 = vpack.c.b16 %v2303, %v2302
      %v2319 = vpack.c.b16 %v2305, %v2304
      %v2320 = vpack.c.b16 %v2307, %v2306
      %v2321 = vpack.c.b16 %v2309, %v2308
      %v2322 = vpack.c.b16 %v2311, %v2310
      %v2323 = vpack.c.b16 %v2313, %v2312
      %v2324 = vpack.c.b16 %v2315, %v2314
      %v2325 = vpack.c.b16 %v2317, %v2316
      %2334 = vmatprep.subr.bf16.mxu0 0
      %2335 = vmatpush1.bf16.msra.mxu0 %v2318
      %2336 = vmatprep.subr.bf16.mxu0 0
      %2337 = vmatpush1.bf16.msra.mxu0 %v2319
      %2338 = vmatprep.subr.bf16.mxu0 0
      %2339 = vmatpush1.bf16.msra.mxu0 %v2320
      %2340 = vmatprep.subr.bf16.mxu0 0
      %2341 = vmatpush1.bf16.msra.mxu0 %v2321
      %2342 = vmatprep.subr.bf16.mxu0 0
      %2343 = vmatpush1.bf16.msra.mxu0 %v2322
      %2344 = vmatprep.subr.bf16.mxu0 0
      %2345 = vmatpush1.bf16.msra.mxu0 %v2323
      %2346 = vmatprep.subr.bf16.mxu0 0
      %2347 = vmatpush1.bf16.msra.mxu0 %v2324
      %2348 = vmatprep.subr.bf16.mxu0 0
      %2349 = vmatpush1.bf16.msra.mxu0 %v2325
      %2350 = vmatprep.subr.bf16.mxu0 0
      %2351 = vmatpush1.bf16.msra.mxu0 0
      %2352 = vmatprep.subr.bf16.mxu0 0
      %2353 = vmatpush1.bf16.msra.mxu0 0
      %2354 = vmatprep.subr.bf16.mxu0 0
      %2355 = vmatpush1.bf16.msra.mxu0 0
      %2356 = vmatprep.subr.bf16.mxu0 0
      %2357 = vmatpush1.bf16.msra.mxu0 0
      %2358 = vmatprep.subr.bf16.mxu0 0
      %2359 = vmatpush1.bf16.msra.mxu0 0
      %2360 = vmatprep.subr.bf16.mxu0 0
      %2361 = vmatpush1.bf16.msra.mxu0 0
      %2362 = vmatprep.subr.bf16.mxu0 0
      %2363 = vmatpush1.bf16.msra.mxu0 0
      %2364 = vmatprep.subr.bf16.mxu0 0
      %2365 = vmatpush1.bf16.msra.mxu0 0
      %2366 = vmatprep.mubr.bf16.mxu0 0
      %2367 = vmatmul.mubr.bf16.gmra.mrb[0].mxu0 %v2221
      %v2368 = vpop.f32.mrb[0].mxu0
      %v2369 = vadd.f32 0.0, %v2368
      %v2370 = vpop.f32.mrb[0].mxu0
      %v2371 = vpop.f32.mrb[0].mxu0
      %v2372 = vadd.f32 0.0, %v2371
      %v2373 = vpop.f32.mrb[0].mxu0
      %2374 = vmatprep.mubr.bf16.mxu0 0
      %2375 = vmatmul.mubr.bf16.gmra.mrb[0].mxu0 %v2222
      %v2376 = vpop.f32.mrb[0].mxu0
      %v2377 = vadd.f32 0.0, %v2376
      %v2378 = vpop.f32.mrb[0].mxu0
      %v2379 = vpop.f32.mrb[0].mxu0
      %v2380 = vadd.f32 0.0, %v2379
      %v2381 = vpop.f32.mrb[0].mxu0
      %2382 = vmatprep.mubr.bf16.mxu0 0
      %2383 = vmatmul.mubr.bf16.gmra.mrb[0].mxu0 %v2223
      %v2384 = vpop.f32.mrb[0].mxu0
      %v2385 = vadd.f32 0.0, %v2384
      %v2386 = vpop.f32.mrb[0].mxu0
      %v2387 = vpop.f32.mrb[0].mxu0
      %v2388 = vadd.f32 0.0, %v2387
      %v2389 = vpop.f32.mrb[0].mxu0
      %2390 = vmatprep.mubr.bf16.mxu0 0
      %2391 = vmatmul.mubr.bf16.gmra.mrb[0].mxu0 %v2224
      %v2392 = vpop.f32.mrb[0].mxu0
      %v2393 = vadd.f32 0.0, %v2392
      %v2394 = vpop.f32.mrb[0].mxu0
      %v2395 = vpop.f32.mrb[0].mxu0
      %v2396 = vadd.f32 0.0, %v2395
      %v2397 = vpop.f32.mrb[0].mxu0
      %2398 = vmatprep.mubr.bf16.mxu0 0
      %2399 = vmatmul.mubr.bf16.gmra.mrb[0].mxu0 %v2225
      %v2400 = vpop.f32.mrb[0].mxu0
      %v2401 = vadd.f32 0.0, %v2400
      %v2402 = vpop.f32.mrb[0].mxu0
      %v2403 = vpop.f32.mrb[0].mxu0
      %v2404 = vadd.f32 0.0, %v2403
      %v2405 = vpop.f32.mrb[0].mxu0
      %2406 = vmatprep.mubr.bf16.mxu0 0
      %2407 = vmatmul.mubr.bf16.gmra.mrb[0].mxu0 %v2226
      %v2408 = vpop.f32.mrb[0].mxu0
      %v2409 = vadd.f32 0.0, %v2408
      %v2410 = vpop.f32.mrb[0].mxu0
      %v2411 = vpop.f32.mrb[0].mxu0
      %v2412 = vadd.f32 0.0, %v2411
      %v2413 = vpop.f32.mrb[0].mxu0
      %2414 = vmatprep.mubr.bf16.mxu0 0
      %2415 = vmatmul.mubr.bf16.gmra.mrb[0].mxu0 %v2227
      %v2416 = vpop.f32.mrb[0].mxu0
      %v2417 = vadd.f32 0.0, %v2416
      %v2418 = vpop.f32.mrb[0].mxu0
      %v2419 = vpop.f32.mrb[0].mxu0
      %v2420 = vadd.f32 0.0, %v2419
      %v2421 = vpop.f32.mrb[0].mxu0
      %2422 = vmatprep.mubr.bf16.mxu0 0
      %2423 = vmatmul.mubr.bf16.gmra.mrb[0].mxu0 %v2228
      %v2424 = vpop.f32.mrb[0].mxu0
      %v2425 = vadd.f32 0.0, %v2424
      %v2426 = vpop.f32.mrb[0].mxu0
      %v2427 = vpop.f32.mrb[0].mxu0
      %v2428 = vadd.f32 0.0, %v2427
      %v2429 = vpop.f32.mrb[0].mxu0
      %2430 = vmatprep.mubr.bf16.mxu0 0
      %2431 = vmatmul.mubr.bf16.gmra.mrb[0].mxu0 %v2229
      %v2432 = vpop.f32.mrb[0].mxu0
      %v2433 = vadd.f32 0.0, %v2432
      %v2434 = vpop.f32.mrb[0].mxu0
      %v2435 = vpop.f32.mrb[0].mxu0
      %v2436 = vadd.f32 0.0, %v2435
      %v2437 = vpop.f32.mrb[0].mxu0
      %2438 = vmatprep.mubr.bf16.mxu0 0
      %2439 = vmatmul.mubr.bf16.gmra.mrb[0].mxu0 %v2230
      %v2440 = vpop.f32.mrb[0].mxu0
      %v2441 = vadd.f32 0.0, %v2440
      %v2442 = vpop.f32.mrb[0].mxu0
      %v2443 = vpop.f32.mrb[0].mxu0
      %v2444 = vadd.f32 0.0, %v2443
      %v2445 = vpop.f32.mrb[0].mxu0
      %2446 = vmatprep.mubr.bf16.mxu0 0
      %2447 = vmatmul.mubr.bf16.gmra.mrb[0].mxu0 %v2231
      %v2448 = vpop.f32.mrb[0].mxu0
      %v2449 = vadd.f32 0.0, %v2448
      %v2450 = vpop.f32.mrb[0].mxu0
      %v2451 = vpop.f32.mrb[0].mxu0
      %v2452 = vadd.f32 0.0, %v2451
      %v2453 = vpop.f32.mrb[0].mxu0
      %2454 = vmatprep.mubr.bf16.mxu0 0
      %2455 = vmatmul.mubr.bf16.gmra.mrb[0].mxu0 %v2232
      %v2456 = vpop.f32.mrb[0].mxu0
      %v2457 = vadd.f32 0.0, %v2456
      %v2458 = vpop.f32.mrb[0].mxu0
      %v2459 = vpop.f32.mrb[0].mxu0
      %v2460 = vadd.f32 0.0, %v2459
      %v2461 = vpop.f32.mrb[0].mxu0
      %2462 = vmatprep.mubr.bf16.mxu0 0
      %2463 = vmatmul.mubr.bf16.gmra.mrb[0].mxu0 %v2233
      %v2464 = vpop.f32.mrb[0].mxu0
      %v2465 = vadd.f32 0.0, %v2464
      %v2466 = vpop.f32.mrb[0].mxu0
      %v2467 = vpop.f32.mrb[0].mxu0
      %v2468 = vadd.f32 0.0, %v2467
      %v2469 = vpop.f32.mrb[0].mxu0
      %2470 = vmatprep.mubr.bf16.mxu0 0
      %2471 = vmatmul.mubr.bf16.gmra.mrb[0].mxu0 %v2234
      %v2472 = vpop.f32.mrb[0].mxu0
      %v2473 = vadd.f32 0.0, %v2472
      %v2474 = vpop.f32.mrb[0].mxu0
      %v2475 = vpop.f32.mrb[0].mxu0
      %v2476 = vadd.f32 0.0, %v2475
      %v2477 = vpop.f32.mrb[0].mxu0
      %2478 = vmatprep.mubr.bf16.mxu0 0
      %2479 = vmatmul.mubr.bf16.gmra.mrb[0].mxu0 %v2235
      %v2480 = vpop.f32.mrb[0].mxu0
      %v2481 = vadd.f32 0.0, %v2480
      %v2482 = vpop.f32.mrb[0].mxu0
      %v2483 = vpop.f32.mrb[0].mxu0
      %v2484 = vadd.f32 0.0, %v2483
      %v2485 = vpop.f32.mrb[0].mxu0
      %2486 = vmatprep.mubr.bf16.mxu0 0
      %2487 = vmatmul.mubr.bf16.gmra.mrb[0].mxu0 %v2236
      %v2488 = vpop.f32.mrb[0].mxu0
      %v2489 = vadd.f32 0.0, %v2488
      %v2490 = vpop.f32.mrb[0].mxu0
      %v2491 = vpop.f32.mrb[0].mxu0
      %v2492 = vadd.f32 0.0, %v2491
      %v2493 = vpop.f32.mrb[0].mxu0
      %2494 = vdwg.mxu0
      %v2495 = vadd.f32 %v2237, %v2369
      %v2496 = vadd.f32 %v2238, %v2372
      %v2497 = vadd.f32 %v2239, %v2377
      %v2498 = vadd.f32 %v2240, %v2380
      %v2499 = vadd.f32 %v2241, %v2385
      %v2500 = vadd.f32 %v2242, %v2388
      %v2501 = vadd.f32 %v2243, %v2393
      %v2502 = vadd.f32 %v2244, %v2396
      %v2503 = vadd.f32 %v2245, %v2401
      %v2504 = vadd.f32 %v2246, %v2404
      %v2505 = vadd.f32 %v2247, %v2409
      %v2506 = vadd.f32 %v2248, %v2412
      %v2507 = vadd.f32 %v2249, %v2417
      %v2508 = vadd.f32 %v2250, %v2420
      %v2509 = vadd.f32 %v2251, %v2425
      %v2510 = vadd.f32 %v2252, %v2428
      %v2511 = vadd.f32 %v2253, %v2433
      %v2512 = vadd.f32 %v2254, %v2436
      %v2513 = vadd.f32 %v2255, %v2441
      %v2514 = vadd.f32 %v2256, %v2444
      %v2515 = vadd.f32 %v2257, %v2449
      %v2516 = vadd.f32 %v2258, %v2452
      %v2517 = vadd.f32 %v2259, %v2457
      %v2518 = vadd.f32 %v2260, %v2460
      %v2519 = vadd.f32 %v2261, %v2465
      %v2520 = vadd.f32 %v2262, %v2468
      %v2521 = vadd.f32 %v2263, %v2473
      %v2522 = vadd.f32 %v2264, %v2476
      %v2523 = vadd.f32 %v2265, %v2481
      %v2524 = vadd.f32 %v2266, %v2484
      %v2525 = vadd.f32 %v2267, %v2489
      %v2526 = vadd.f32 %v2268, %v2492
      %2527 = vst [vmem:[#allocation4] sm:$0xff] %v2495
      %2528 = vst [vmem:[#allocation4 + $0x8] sm:$0xff] %v2496
      %2529 = vst [vmem:[#allocation4 + $0x10] sm:$0xff] %v2497
      %2530 = vst [vmem:[#allocation4 + $0x18] sm:$0xff] %v2498
      %2531 = vst [vmem:[#allocation4 + $0x20] sm:$0xff] %v2499
      %2532 = vst [vmem:[#allocation4 + $0x28] sm:$0xff] %v2500
      %2533 = vst [vmem:[#allocation4 + $0x30] sm:$0xff] %v2501
      %2534 = vst [vmem:[#allocation4 + $0x38] sm:$0xff] %v2502
      %2535 = vst [vmem:[#allocation4 + $0x40] sm:$0xff] %v2503
      %2536 = vst [vmem:[#allocation4 + $0x48] sm:$0xff] %v2504
      %2537 = vst [vmem:[#allocation4 + $0x50] sm:$0xff] %v2505
      %2538 = vst [vmem:[#allocation4 + $0x58] sm:$0xff] %v2506
      %2539 = vst [vmem:[#allocation4 + $0x60] sm:$0xff] %v2507
      %2540 = vst [vmem:[#allocation4 + $0x68] sm:$0xff] %v2508
      %2541 = vst [vmem:[#allocation4 + $0x70] sm:$0xff] %v2509
      %2542 = vst [vmem:[#allocation4 + $0x78] sm:$0xff] %v2510
      %2543 = vst [vmem:[#allocation4 + $0x80] sm:$0xff] %v2511
      %2544 = vst [vmem:[#allocation4 + $0x88] sm:$0xff] %v2512
      %2545 = vst [vmem:[#allocation4 + $0x90] sm:$0xff] %v2513
      %2546 = vst [vmem:[#allocation4 + $0x98] sm:$0xff] %v2514
      %2547 = vst [vmem:[#allocation4 + $0xa0] sm:$0xff] %v2515
      %2548 = vst [vmem:[#allocation4 + $0xa8] sm:$0xff] %v2516
      %2549 = vst [vmem:[#allocation4 + $0xb0] sm:$0xff] %v2517
      %2550 = vst [vmem:[#allocation4 + $0xb8] sm:$0xff] %v2518
      %2551 = vst [vmem:[#allocation4 + $0xc0] sm:$0xff] %v2519
      %2552 = vst [vmem:[#allocation4 + $0xc8] sm:$0xff] %v2520
      %2553 = vst [vmem:[#allocation4 + $0xd0] sm:$0xff] %v2521
      %2554 = vst [vmem:[#allocation4 + $0xd8] sm:$0xff] %v2522
      %2555 = vst [vmem:[#allocation4 + $0xe0] sm:$0xff] %v2523
      %2556 = vst [vmem:[#allocation4 + $0xe8] sm:$0xff] %v2524
      %2557 = vst [vmem:[#allocation4 + $0xf0] sm:$0xff] %v2525
      %2558 = vst [vmem:[#allocation4 + $0xf8] sm:$0xff] %v2526
      %s2559 = scalar_lea.vmem [#allocation3], 296
      %v2560 = vld [vmem:[%s2559] sm:$0xff]
      %v2561 = vld [vmem:[%s2559 + $0x8] sm:$0xff]
      %v2562 = vld [vmem:[%s2559 + $0x10] sm:$0xff]
      %v2563 = vld [vmem:[%s2559 + $0x18] sm:$0xff]
      %v2564 = vld [vmem:[%s2559 + $0x20] sm:$0xff]
      %v2565 = vld [vmem:[%s2559 + $0x28] sm:$0xff]
      %v2566 = vld [vmem:[%s2559 + $0x30] sm:$0xff]
      %v2567 = vld [vmem:[%s2559 + $0x38] sm:$0xff]
      %v2568 = vld [vmem:[%s2559 + $0x40] sm:$0xff]
      %v2569 = vld [vmem:[%s2559 + $0x48] sm:$0xff]
      %v2570 = vld [vmem:[%s2559 + $0x50] sm:$0xff]
      %v2571 = vld [vmem:[%s2559 + $0x58] sm:$0xff]
      %v2572 = vld [vmem:[%s2559 + $0x60] sm:$0xff]
      %v2573 = vld [vmem:[%s2559 + $0x68] sm:$0xff]
      %v2574 = vld [vmem:[%s2559 + $0x70] sm:$0xff]
      %v2575 = vld [vmem:[%s2559 + $0x78] sm:$0xff]
      %v2576 = vld [vmem:[#allocation4] sm:$0xff]
      %v2577 = vld [vmem:[#allocation4 + $0x8] sm:$0xff]
      %v2578 = vld [vmem:[#allocation4 + $0x10] sm:$0xff]
      %v2579 = vld [vmem:[#allocation4 + $0x18] sm:$0xff]
      %v2580 = vld [vmem:[#allocation4 + $0x20] sm:$0xff]
      %v2581 = vld [vmem:[#allocation4 + $0x28] sm:$0xff]
      %v2582 = vld [vmem:[#allocation4 + $0x30] sm:$0xff]
      %v2583 = vld [vmem:[#allocation4 + $0x38] sm:$0xff]
      %v2584 = vld [vmem:[#allocation4 + $0x40] sm:$0xff]
      %v2585 = vld [vmem:[#allocation4 + $0x48] sm:$0xff]
      %v2586 = vld [vmem:[#allocation4 + $0x50] sm:$0xff]
      %v2587 = vld [vmem:[#allocation4 + $0x58] sm:$0xff]
      %v2588 = vld [vmem:[#allocation4 + $0x60] sm:$0xff]
      %v2589 = vld [vmem:[#allocation4 + $0x68] sm:$0xff]
      %v2590 = vld [vmem:[#allocation4 + $0x70] sm:$0xff]
      %v2591 = vld [vmem:[#allocation4 + $0x78] sm:$0xff]
      %v2592 = vld [vmem:[#allocation4 + $0x80] sm:$0xff]
      %v2593 = vld [vmem:[#allocation4 + $0x88] sm:$0xff]
      %v2594 = vld [vmem:[#allocation4 + $0x90] sm:$0xff]
      %v2595 = vld [vmem:[#allocation4 + $0x98] sm:$0xff]
      %v2596 = vld [vmem:[#allocation4 + $0xa0] sm:$0xff]
      %v2597 = vld [vmem:[#allocation4 + $0xa8] sm:$0xff]
      %v2598 = vld [vmem:[#allocation4 + $0xb0] sm:$0xff]
      %v2599 = vld [vmem:[#allocation4 + $0xb8] sm:$0xff]
      %v2600 = vld [vmem:[#allocation4 + $0xc0] sm:$0xff]
      %v2601 = vld [vmem:[#allocation4 + $0xc8] sm:$0xff]
      %v2602 = vld [vmem:[#allocation4 + $0xd0] sm:$0xff]
      %v2603 = vld [vmem:[#allocation4 + $0xd8] sm:$0xff]
      %v2604 = vld [vmem:[#allocation4 + $0xe0] sm:$0xff]
      %v2605 = vld [vmem:[#allocation4 + $0xe8] sm:$0xff]
      %v2606 = vld [vmem:[#allocation4 + $0xf0] sm:$0xff]
      %v2607 = vld [vmem:[#allocation4 + $0xf8] sm:$0xff]
      %s2608 = scalar_lea.vmem %s5, 320
      %v2609 = vld [vmem:[%s2608] sm:$0xf]
      %v2610 = vld [vmem:[%s2608 + $0x4] sm:$0xf]
      %v2611 = vld [vmem:[%s2608 + $0x8] sm:$0xf]
      %v2612 = vld [vmem:[%s2608 + $0xc] sm:$0xf]
      %v2613 = vld [vmem:[%s2608 + $0x10] sm:$0xf]
      %v2614 = vld [vmem:[%s2608 + $0x14] sm:$0xf]
      %v2615 = vld [vmem:[%s2608 + $0x18] sm:$0xf]
      %v2616 = vld [vmem:[%s2608 + $0x1c] sm:$0xf]
      %v2617 = vld [vmem:[%s2608 + $0x20] sm:$0xf]
      %v2618 = vld [vmem:[%s2608 + $0x24] sm:$0xf]
      %v2619 = vld [vmem:[%s2608 + $0x28] sm:$0xf]
      %v2620 = vld [vmem:[%s2608 + $0x2c] sm:$0xf]
      %v2621 = vld [vmem:[%s2608 + $0x30] sm:$0xf]
      %v2622 = vld [vmem:[%s2608 + $0x34] sm:$0xf]
      %v2623 = vld [vmem:[%s2608 + $0x38] sm:$0xf]
      %v2624 = vld [vmem:[%s2608 + $0x3c] sm:$0xf]
      %v2641 = vunpack.c.l.b16 %v2609
      %v2642 = vunpack.c.l.b16 %v2610
      %v2643 = vunpack.c.l.b16 %v2611
      %v2644 = vunpack.c.l.b16 %v2612
      %v2645 = vunpack.c.l.b16 %v2613
      %v2646 = vunpack.c.l.b16 %v2614
      %v2647 = vunpack.c.l.b16 %v2615
      %v2648 = vunpack.c.l.b16 %v2616
      %v2649 = vunpack.c.l.b16 %v2617
      %v2650 = vunpack.c.l.b16 %v2618
      %v2651 = vunpack.c.l.b16 %v2619
      %v2652 = vunpack.c.l.b16 %v2620
      %v2653 = vunpack.c.l.b16 %v2621
      %v2654 = vunpack.c.l.b16 %v2622
      %v2655 = vunpack.c.l.b16 %v2623
      %v2656 = vunpack.c.l.b16 %v2624
      %v2657 = vpack.c.b16 %v2642, %v2641
      %v2658 = vpack.c.b16 %v2644, %v2643
      %v2659 = vpack.c.b16 %v2646, %v2645
      %v2660 = vpack.c.b16 %v2648, %v2647
      %v2661 = vpack.c.b16 %v2650, %v2649
      %v2662 = vpack.c.b16 %v2652, %v2651
      %v2663 = vpack.c.b16 %v2654, %v2653
      %v2664 = vpack.c.b16 %v2656, %v2655
      %2673 = vmatprep.subr.bf16.mxu0 0
      %2674 = vmatpush1.bf16.msra.mxu0 %v2657
      %2675 = vmatprep.subr.bf16.mxu0 0
      %2676 = vmatpush1.bf16.msra.mxu0 %v2658
      %2677 = vmatprep.subr.bf16.mxu0 0
      %2678 = vmatpush1.bf16.msra.mxu0 %v2659
      %2679 = vmatprep.subr.bf16.mxu0 0
      %2680 = vmatpush1.bf16.msra.mxu0 %v2660
      %2681 = vmatprep.subr.bf16.mxu0 0
      %2682 = vmatpush1.bf16.msra.mxu0 %v2661
      %2683 = vmatprep.subr.bf16.mxu0 0
      %2684 = vmatpush1.bf16.msra.mxu0 %v2662
      %2685 = vmatprep.subr.bf16.mxu0 0
      %2686 = vmatpush1.bf16.msra.mxu0 %v2663
      %2687 = vmatprep.subr.bf16.mxu0 0
      %2688 = vmatpush1.bf16.msra.mxu0 %v2664
      %2689 = vmatprep.subr.bf16.mxu0 0
      %2690 = vmatpush1.bf16.msra.mxu0 0
      %2691 = vmatprep.subr.bf16.mxu0 0
      %2692 = vmatpush1.bf16.msra.mxu0 0
      %2693 = vmatprep.subr.bf16.mxu0 0
      %2694 = vmatpush1.bf16.msra.mxu0 0
      %2695 = vmatprep.subr.bf16.mxu0 0
      %2696 = vmatpush1.bf16.msra.mxu0 0
      %2697 = vmatprep.subr.bf16.mxu0 0
      %2698 = vmatpush1.bf16.msra.mxu0 0
      %2699 = vmatprep.subr.bf16.mxu0 0
      %2700 = vmatpush1.bf16.msra.mxu0 0
      %2701 = vmatprep.subr.bf16.mxu0 0
      %2702 = vmatpush1.bf16.msra.mxu0 0
      %2703 = vmatprep.subr.bf16.mxu0 0
      %2704 = vmatpush1.bf16.msra.mxu0 0
      %2705 = vmatprep.mubr.bf16.mxu0 0
      %2706 = vmatmul.mubr.bf16.gmra.mrb[0].mxu0 %v2560
      %v2707 = vpop.f32.mrb[0].mxu0
      %v2708 = vadd.f32 0.0, %v2707
      %v2709 = vpop.f32.mrb[0].mxu0
      %v2710 = vpop.f32.mrb[0].mxu0
      %v2711 = vadd.f32 0.0, %v2710
      %v2712 = vpop.f32.mrb[0].mxu0
      %2713 = vmatprep.mubr.bf16.mxu0 0
      %2714 = vmatmul.mubr.bf16.gmra.mrb[0].mxu0 %v2561
      %v2715 = vpop.f32.mrb[0].mxu0
      %v2716 = vadd.f32 0.0, %v2715
      %v2717 = vpop.f32.mrb[0].mxu0
      %v2718 = vpop.f32.mrb[0].mxu0
      %v2719 = vadd.f32 0.0, %v2718
      %v2720 = vpop.f32.mrb[0].mxu0
      %2721 = vmatprep.mubr.bf16.mxu0 0
      %2722 = vmatmul.mubr.bf16.gmra.mrb[0].mxu0 %v2562
      %v2723 = vpop.f32.mrb[0].mxu0
      %v2724 = vadd.f32 0.0, %v2723
      %v2725 = vpop.f32.mrb[0].mxu0
      %v2726 = vpop.f32.mrb[0].mxu0
      %v2727 = vadd.f32 0.0, %v2726
      %v2728 = vpop.f32.mrb[0].mxu0
      %2729 = vmatprep.mubr.bf16.mxu0 0
      %2730 = vmatmul.mubr.bf16.gmra.mrb[0].mxu0 %v2563
      %v2731 = vpop.f32.mrb[0].mxu0
      %v2732 = vadd.f32 0.0, %v2731
      %v2733 = vpop.f32.mrb[0].mxu0
      %v2734 = vpop.f32.mrb[0].mxu0
      %v2735 = vadd.f32 0.0, %v2734
      %v2736 = vpop.f32.mrb[0].mxu0
      %2737 = vmatprep.mubr.bf16.mxu0 0
      %2738 = vmatmul.mubr.bf16.gmra.mrb[0].mxu0 %v2564
      %v2739 = vpop.f32.mrb[0].mxu0
      %v2740 = vadd.f32 0.0, %v2739
      %v2741 = vpop.f32.mrb[0].mxu0
      %v2742 = vpop.f32.mrb[0].mxu0
      %v2743 = vadd.f32 0.0, %v2742
      %v2744 = vpop.f32.mrb[0].mxu0
      %2745 = vmatprep.mubr.bf16.mxu0 0
      %2746 = vmatmul.mubr.bf16.gmra.mrb[0].mxu0 %v2565
      %v2747 = vpop.f32.mrb[0].mxu0
      %v2748 = vadd.f32 0.0, %v2747
      %v2749 = vpop.f32.mrb[0].mxu0
      %v2750 = vpop.f32.mrb[0].mxu0
      %v2751 = vadd.f32 0.0, %v2750
      %v2752 = vpop.f32.mrb[0].mxu0
      %2753 = vmatprep.mubr.bf16.mxu0 0
      %2754 = vmatmul.mubr.bf16.gmra.mrb[0].mxu0 %v2566
      %v2755 = vpop.f32.mrb[0].mxu0
      %v2756 = vadd.f32 0.0, %v2755
      %v2757 = vpop.f32.mrb[0].mxu0
      %v2758 = vpop.f32.mrb[0].mxu0
      %v2759 = vadd.f32 0.0, %v2758
      %v2760 = vpop.f32.mrb[0].mxu0
      %2761 = vmatprep.mubr.bf16.mxu0 0
      %2762 = vmatmul.mubr.bf16.gmra.mrb[0].mxu0 %v2567
      %v2763 = vpop.f32.mrb[0].mxu0
      %v2764 = vadd.f32 0.0, %v2763
      %v2765 = vpop.f32.mrb[0].mxu0
      %v2766 = vpop.f32.mrb[0].mxu0
      %v2767 = vadd.f32 0.0, %v2766
      %v2768 = vpop.f32.mrb[0].mxu0
      %2769 = vmatprep.mubr.bf16.mxu0 0
      %2770 = vmatmul.mubr.bf16.gmra.mrb[0].mxu0 %v2568
      %v2771 = vpop.f32.mrb[0].mxu0
      %v2772 = vadd.f32 0.0, %v2771
      %v2773 = vpop.f32.mrb[0].mxu0
      %v2774 = vpop.f32.mrb[0].mxu0
      %v2775 = vadd.f32 0.0, %v2774
      %v2776 = vpop.f32.mrb[0].mxu0
      %2777 = vmatprep.mubr.bf16.mxu0 0
      %2778 = vmatmul.mubr.bf16.gmra.mrb[0].mxu0 %v2569
      %v2779 = vpop.f32.mrb[0].mxu0
      %v2780 = vadd.f32 0.0, %v2779
      %v2781 = vpop.f32.mrb[0].mxu0
      %v2782 = vpop.f32.mrb[0].mxu0
      %v2783 = vadd.f32 0.0, %v2782
      %v2784 = vpop.f32.mrb[0].mxu0
      %2785 = vmatprep.mubr.bf16.mxu0 0
      %2786 = vmatmul.mubr.bf16.gmra.mrb[0].mxu0 %v2570
      %v2787 = vpop.f32.mrb[0].mxu0
      %v2788 = vadd.f32 0.0, %v2787
      %v2789 = vpop.f32.mrb[0].mxu0
      %v2790 = vpop.f32.mrb[0].mxu0
      %v2791 = vadd.f32 0.0, %v2790
      %v2792 = vpop.f32.mrb[0].mxu0
      %2793 = vmatprep.mubr.bf16.mxu0 0
      %2794 = vmatmul.mubr.bf16.gmra.mrb[0].mxu0 %v2571
      %v2795 = vpop.f32.mrb[0].mxu0
      %v2796 = vadd.f32 0.0, %v2795
      %v2797 = vpop.f32.mrb[0].mxu0
      %v2798 = vpop.f32.mrb[0].mxu0
      %v2799 = vadd.f32 0.0, %v2798
      %v2800 = vpop.f32.mrb[0].mxu0
      %2801 = vmatprep.mubr.bf16.mxu0 0
      %2802 = vmatmul.mubr.bf16.gmra.mrb[0].mxu0 %v2572
      %v2803 = vpop.f32.mrb[0].mxu0
      %v2804 = vadd.f32 0.0, %v2803
      %v2805 = vpop.f32.mrb[0].mxu0
      %v2806 = vpop.f32.mrb[0].mxu0
      %v2807 = vadd.f32 0.0, %v2806
      %v2808 = vpop.f32.mrb[0].mxu0
      %2809 = vmatprep.mubr.bf16.mxu0 0
      %2810 = vmatmul.mubr.bf16.gmra.mrb[0].mxu0 %v2573
      %v2811 = vpop.f32.mrb[0].mxu0
      %v2812 = vadd.f32 0.0, %v2811
      %v2813 = vpop.f32.mrb[0].mxu0
      %v2814 = vpop.f32.mrb[0].mxu0
      %v2815 = vadd.f32 0.0, %v2814
      %v2816 = vpop.f32.mrb[0].mxu0
      %2817 = vmatprep.mubr.bf16.mxu0 0
      %2818 = vmatmul.mubr.bf16.gmra.mrb[0].mxu0 %v2574
      %v2819 = vpop.f32.mrb[0].mxu0
      %v2820 = vadd.f32 0.0, %v2819
      %v2821 = vpop.f32.mrb[0].mxu0
      %v2822 = vpop.f32.mrb[0].mxu0
      %v2823 = vadd.f32 0.0, %v2822
      %v2824 = vpop.f32.mrb[0].mxu0
      %2825 = vmatprep.mubr.bf16.mxu0 0
      %2826 = vmatmul.mubr.bf16.gmra.mrb[0].mxu0 %v2575
      %v2827 = vpop.f32.mrb[0].mxu0
      %v2828 = vadd.f32 0.0, %v2827
      %v2829 = vpop.f32.mrb[0].mxu0
      %v2830 = vpop.f32.mrb[0].mxu0
      %v2831 = vadd.f32 0.0, %v2830
      %v2832 = vpop.f32.mrb[0].mxu0
      %2833 = vdwg.mxu0
      %v2834 = vadd.f32 %v2576, %v2708
      %v2835 = vadd.f32 %v2577, %v2711
      %v2836 = vadd.f32 %v2578, %v2716
      %v2837 = vadd.f32 %v2579, %v2719
      %v2838 = vadd.f32 %v2580, %v2724
      %v2839 = vadd.f32 %v2581, %v2727
      %v2840 = vadd.f32 %v2582, %v2732
      %v2841 = vadd.f32 %v2583, %v2735
      %v2842 = vadd.f32 %v2584, %v2740
      %v2843 = vadd.f32 %v2585, %v2743
      %v2844 = vadd.f32 %v2586, %v2748
      %v2845 = vadd.f32 %v2587, %v2751
      %v2846 = vadd.f32 %v2588, %v2756
      %v2847 = vadd.f32 %v2589, %v2759
      %v2848 = vadd.f32 %v2590, %v2764
      %v2849 = vadd.f32 %v2591, %v2767
      %v2850 = vadd.f32 %v2592, %v2772
      %v2851 = vadd.f32 %v2593, %v2775
      %v2852 = vadd.f32 %v2594, %v2780
      %v2853 = vadd.f32 %v2595, %v2783
      %v2854 = vadd.f32 %v2596, %v2788
      %v2855 = vadd.f32 %v2597, %v2791
      %v2856 = vadd.f32 %v2598, %v2796
      %v2857 = vadd.f32 %v2599, %v2799
      %v2858 = vadd.f32 %v2600, %v2804
      %v2859 = vadd.f32 %v2601, %v2807
      %v2860 = vadd.f32 %v2602, %v2812
      %v2861 = vadd.f32 %v2603, %v2815
      %v2862 = vadd.f32 %v2604, %v2820
      %v2863 = vadd.f32 %v2605, %v2823
      %v2864 = vadd.f32 %v2606, %v2828
      %v2865 = vadd.f32 %v2607, %v2831
      %2866 = vst [vmem:[#allocation4] sm:$0xff] %v2834
      %2867 = vst [vmem:[#allocation4 + $0x8] sm:$0xff] %v2835
      %2868 = vst [vmem:[#allocation4 + $0x10] sm:$0xff] %v2836
      %2869 = vst [vmem:[#allocation4 + $0x18] sm:$0xff] %v2837
      %2870 = vst [vmem:[#allocation4 + $0x20] sm:$0xff] %v2838
      %2871 = vst [vmem:[#allocation4 + $0x28] sm:$0xff] %v2839
      %2872 = vst [vmem:[#allocation4 + $0x30] sm:$0xff] %v2840
      %2873 = vst [vmem:[#allocation4 + $0x38] sm:$0xff] %v2841
      %2874 = vst [vmem:[#allocation4 + $0x40] sm:$0xff] %v2842
      %2875 = vst [vmem:[#allocation4 + $0x48] sm:$0xff] %v2843
      %2876 = vst [vmem:[#allocation4 + $0x50] sm:$0xff] %v2844
      %2877 = vst [vmem:[#allocation4 + $0x58] sm:$0xff] %v2845
      %2878 = vst [vmem:[#allocation4 + $0x60] sm:$0xff] %v2846
      %2879 = vst [vmem:[#allocation4 + $0x68] sm:$0xff] %v2847
      %2880 = vst [vmem:[#allocation4 + $0x70] sm:$0xff] %v2848
      %2881 = vst [vmem:[#allocation4 + $0x78] sm:$0xff] %v2849
      %2882 = vst [vmem:[#allocation4 + $0x80] sm:$0xff] %v2850
      %2883 = vst [vmem:[#allocation4 + $0x88] sm:$0xff] %v2851
      %2884 = vst [vmem:[#allocation4 + $0x90] sm:$0xff] %v2852
      %2885 = vst [vmem:[#allocation4 + $0x98] sm:$0xff] %v2853
      %2886 = vst [vmem:[#allocation4 + $0xa0] sm:$0xff] %v2854
      %2887 = vst [vmem:[#allocation4 + $0xa8] sm:$0xff] %v2855
      %2888 = vst [vmem:[#allocation4 + $0xb0] sm:$0xff] %v2856
      %2889 = vst [vmem:[#allocation4 + $0xb8] sm:$0xff] %v2857
      %2890 = vst [vmem:[#allocation4 + $0xc0] sm:$0xff] %v2858
      %2891 = vst [vmem:[#allocation4 + $0xc8] sm:$0xff] %v2859
      %2892 = vst [vmem:[#allocation4 + $0xd0] sm:$0xff] %v2860
      %2893 = vst [vmem:[#allocation4 + $0xd8] sm:$0xff] %v2861
      %2894 = vst [vmem:[#allocation4 + $0xe0] sm:$0xff] %v2862
      %2895 = vst [vmem:[#allocation4 + $0xe8] sm:$0xff] %v2863
      %2896 = vst [vmem:[#allocation4 + $0xf0] sm:$0xff] %v2864
      %2897 = vst [vmem:[#allocation4 + $0xf8] sm:$0xff] %v2865
      %s2898 = scalar_lea.vmem [#allocation3], 16
      %v2899 = vld [vmem:[%s2898] sm:$0xff]
      %v2900 = vld [vmem:[%s2898 + $0x8] sm:$0xff]
      %v2901 = vld [vmem:[%s2898 + $0x10] sm:$0xff]
      %v2902 = vld [vmem:[%s2898 + $0x18] sm:$0xff]
      %v2903 = vld [vmem:[%s2898 + $0x20] sm:$0xff]
      %v2904 = vld [vmem:[%s2898 + $0x28] sm:$0xff]
      %v2905 = vld [vmem:[%s2898 + $0x30] sm:$0xff]
      %v2906 = vld [vmem:[%s2898 + $0x38] sm:$0xff]
      %v2907 = vld [vmem:[%s2898 + $0x40] sm:$0xff]
      %v2908 = vld [vmem:[%s2898 + $0x48] sm:$0xff]
      %v2909 = vld [vmem:[%s2898 + $0x50] sm:$0xff]
      %v2910 = vld [vmem:[%s2898 + $0x58] sm:$0xff]
      %v2911 = vld [vmem:[%s2898 + $0x60] sm:$0xff]
      %v2912 = vld [vmem:[%s2898 + $0x68] sm:$0xff]
      %v2913 = vld [vmem:[%s2898 + $0x70] sm:$0xff]
      %v2914 = vld [vmem:[%s2898 + $0x78] sm:$0xff]
      %v2915 = vld [vmem:[#allocation4] sm:$0xff]
      %v2916 = vld [vmem:[#allocation4 + $0x8] sm:$0xff]
      %v2917 = vld [vmem:[#allocation4 + $0x10] sm:$0xff]
      %v2918 = vld [vmem:[#allocation4 + $0x18] sm:$0xff]
      %v2919 = vld [vmem:[#allocation4 + $0x20] sm:$0xff]
      %v2920 = vld [vmem:[#allocation4 + $0x28] sm:$0xff]
      %v2921 = vld [vmem:[#allocation4 + $0x30] sm:$0xff]
      %v2922 = vld [vmem:[#allocation4 + $0x38] sm:$0xff]
      %v2923 = vld [vmem:[#allocation4 + $0x40] sm:$0xff]
      %v2924 = vld [vmem:[#allocation4 + $0x48] sm:$0xff]
      %v2925 = vld [vmem:[#allocation4 + $0x50] sm:$0xff]
      %v2926 = vld [vmem:[#allocation4 + $0x58] sm:$0xff]
      %v2927 = vld [vmem:[#allocation4 + $0x60] sm:$0xff]
      %v2928 = vld [vmem:[#allocation4 + $0x68] sm:$0xff]
      %v2929 = vld [vmem:[#allocation4 + $0x70] sm:$0xff]
      %v2930 = vld [vmem:[#allocation4 + $0x78] sm:$0xff]
      %v2931 = vld [vmem:[#allocation4 + $0x80] sm:$0xff]
      %v2932 = vld [vmem:[#allocation4 + $0x88] sm:$0xff]
      %v2933 = vld [vmem:[#allocation4 + $0x90] sm:$0xff]
      %v2934 = vld [vmem:[#allocation4 + $0x98] sm:$0xff]
      %v2935 = vld [vmem:[#allocation4 + $0xa0] sm:$0xff]
      %v2936 = vld [vmem:[#allocation4 + $0xa8] sm:$0xff]
      %v2937 = vld [vmem:[#allocation4 + $0xb0] sm:$0xff]
      %v2938 = vld [vmem:[#allocation4 + $0xb8] sm:$0xff]
      %v2939 = vld [vmem:[#allocation4 + $0xc0] sm:$0xff]
      %v2940 = vld [vmem:[#allocation4 + $0xc8] sm:$0xff]
      %v2941 = vld [vmem:[#allocation4 + $0xd0] sm:$0xff]
      %v2942 = vld [vmem:[#allocation4 + $0xd8] sm:$0xff]
      %v2943 = vld [vmem:[#allocation4 + $0xe0] sm:$0xff]
      %v2944 = vld [vmem:[#allocation4 + $0xe8] sm:$0xff]
      %v2945 = vld [vmem:[#allocation4 + $0xf0] sm:$0xff]
      %v2946 = vld [vmem:[#allocation4 + $0xf8] sm:$0xff]
      %s2947 = scalar_lea.vmem %s5, 384
      %v2948 = vld [vmem:[%s2947] sm:$0xf]
      %v2949 = vld [vmem:[%s2947 + $0x4] sm:$0xf]
      %v2950 = vld [vmem:[%s2947 + $0x8] sm:$0xf]
      %v2951 = vld [vmem:[%s2947 + $0xc] sm:$0xf]
      %v2952 = vld [vmem:[%s2947 + $0x10] sm:$0xf]
      %v2953 = vld [vmem:[%s2947 + $0x14] sm:$0xf]
      %v2954 = vld [vmem:[%s2947 + $0x18] sm:$0xf]
      %v2955 = vld [vmem:[%s2947 + $0x1c] sm:$0xf]
      %v2956 = vld [vmem:[%s2947 + $0x20] sm:$0xf]
      %v2957 = vld [vmem:[%s2947 + $0x24] sm:$0xf]
      %v2958 = vld [vmem:[%s2947 + $0x28] sm:$0xf]
      %v2959 = vld [vmem:[%s2947 + $0x2c] sm:$0xf]
      %v2960 = vld [vmem:[%s2947 + $0x30] sm:$0xf]
      %v2961 = vld [vmem:[%s2947 + $0x34] sm:$0xf]
      %v2962 = vld [vmem:[%s2947 + $0x38] sm:$0xf]
      %v2963 = vld [vmem:[%s2947 + $0x3c] sm:$0xf]
      %v2980 = vunpack.c.l.b16 %v2948
      %v2981 = vunpack.c.l.b16 %v2949
      %v2982 = vunpack.c.l.b16 %v2950
      %v2983 = vunpack.c.l.b16 %v2951
      %v2984 = vunpack.c.l.b16 %v2952
      %v2985 = vunpack.c.l.b16 %v2953
      %v2986 = vunpack.c.l.b16 %v2954
      %v2987 = vunpack.c.l.b16 %v2955
      %v2988 = vunpack.c.l.b16 %v2956
      %v2989 = vunpack.c.l.b16 %v2957
      %v2990 = vunpack.c.l.b16 %v2958
      %v2991 = vunpack.c.l.b16 %v2959
      %v2992 = vunpack.c.l.b16 %v2960
      %v2993 = vunpack.c.l.b16 %v2961
      %v2994 = vunpack.c.l.b16 %v2962
      %v2995 = vunpack.c.l.b16 %v2963
      %v2996 = vpack.c.b16 %v2981, %v2980
      %v2997 = vpack.c.b16 %v2983, %v2982
      %v2998 = vpack.c.b16 %v2985, %v2984
      %v2999 = vpack.c.b16 %v2987, %v2986
      %v3000 = vpack.c.b16 %v2989, %v2988
      %v3001 = vpack.c.b16 %v2991, %v2990
      %v3002 = vpack.c.b16 %v2993, %v2992
      %v3003 = vpack.c.b16 %v2995, %v2994
      %3012 = vmatprep.subr.bf16.mxu0 0
      %3013 = vmatpush1.bf16.msra.mxu0 %v2996
      %3014 = vmatprep.subr.bf16.mxu0 0
      %3015 = vmatpush1.bf16.msra.mxu0 %v2997
      %3016 = vmatprep.subr.bf16.mxu0 0
      %3017 = vmatpush1.bf16.msra.mxu0 %v2998
      %3018 = vmatprep.subr.bf16.mxu0 0
      %3019 = vmatpush1.bf16.msra.mxu0 %v2999
      %3020 = vmatprep.subr.bf16.mxu0 0
      %3021 = vmatpush1.bf16.msra.mxu0 %v3000
      %3022 = vmatprep.subr.bf16.mxu0 0
      %3023 = vmatpush1.bf16.msra.mxu0 %v3001
      %3024 = vmatprep.subr.bf16.mxu0 0
      %3025 = vmatpush1.bf16.msra.mxu0 %v3002
      %3026 = vmatprep.subr.bf16.mxu0 0
      %3027 = vmatpush1.bf16.msra.mxu0 %v3003
      %3028 = vmatprep.subr.bf16.mxu0 0
      %3029 = vmatpush1.bf16.msra.mxu0 0
      %3030 = vmatprep.subr.bf16.mxu0 0
      %3031 = vmatpush1.bf16.msra.mxu0 0
      %3032 = vmatprep.subr.bf16.mxu0 0
      %3033 = vmatpush1.bf16.msra.mxu0 0
      %3034 = vmatprep.subr.bf16.mxu0 0
      %3035 = vmatpush1.bf16.msra.mxu0 0
      %3036 = vmatprep.subr.bf16.mxu0 0
      %3037 = vmatpush1.bf16.msra.mxu0 0
      %3038 = vmatprep.subr.bf16.mxu0 0
      %3039 = vmatpush1.bf16.msra.mxu0 0
      %3040 = vmatprep.subr.bf16.mxu0 0
      %3041 = vmatpush1.bf16.msra.mxu0 0
      %3042 = vmatprep.subr.bf16.mxu0 0
      %3043 = vmatpush1.bf16.msra.mxu0 0
      %3044 = vmatprep.mubr.bf16.mxu0 0
      %3045 = vmatmul.mubr.bf16.gmra.mrb[0].mxu0 %v2899
      %v3046 = vpop.f32.mrb[0].mxu0
      %v3047 = vadd.f32 0.0, %v3046
      %v3048 = vpop.f32.mrb[0].mxu0
      %v3049 = vpop.f32.mrb[0].mxu0
      %v3050 = vadd.f32 0.0, %v3049
      %v3051 = vpop.f32.mrb[0].mxu0
      %3052 = vmatprep.mubr.bf16.mxu0 0
      %3053 = vmatmul.mubr.bf16.gmra.mrb[0].mxu0 %v2900
      %v3054 = vpop.f32.mrb[0].mxu0
      %v3055 = vadd.f32 0.0, %v3054
      %v3056 = vpop.f32.mrb[0].mxu0
      %v3057 = vpop.f32.mrb[0].mxu0
      %v3058 = vadd.f32 0.0, %v3057
      %v3059 = vpop.f32.mrb[0].mxu0
      %3060 = vmatprep.mubr.bf16.mxu0 0
      %3061 = vmatmul.mubr.bf16.gmra.mrb[0].mxu0 %v2901
      %v3062 = vpop.f32.mrb[0].mxu0
      %v3063 = vadd.f32 0.0, %v3062
      %v3064 = vpop.f32.mrb[0].mxu0
      %v3065 = vpop.f32.mrb[0].mxu0
      %v3066 = vadd.f32 0.0, %v3065
      %v3067 = vpop.f32.mrb[0].mxu0
      %3068 = vmatprep.mubr.bf16.mxu0 0
      %3069 = vmatmul.mubr.bf16.gmra.mrb[0].mxu0 %v2902
      %v3070 = vpop.f32.mrb[0].mxu0
      %v3071 = vadd.f32 0.0, %v3070
      %v3072 = vpop.f32.mrb[0].mxu0
      %v3073 = vpop.f32.mrb[0].mxu0
      %v3074 = vadd.f32 0.0, %v3073
      %v3075 = vpop.f32.mrb[0].mxu0
      %3076 = vmatprep.mubr.bf16.mxu0 0
      %3077 = vmatmul.mubr.bf16.gmra.mrb[0].mxu0 %v2903
      %v3078 = vpop.f32.mrb[0].mxu0
      %v3079 = vadd.f32 0.0, %v3078
      %v3080 = vpop.f32.mrb[0].mxu0
      %v3081 = vpop.f32.mrb[0].mxu0
      %v3082 = vadd.f32 0.0, %v3081
      %v3083 = vpop.f32.mrb[0].mxu0
      %3084 = vmatprep.mubr.bf16.mxu0 0
      %3085 = vmatmul.mubr.bf16.gmra.mrb[0].mxu0 %v2904
      %v3086 = vpop.f32.mrb[0].mxu0
      %v3087 = vadd.f32 0.0, %v3086
      %v3088 = vpop.f32.mrb[0].mxu0
      %v3089 = vpop.f32.mrb[0].mxu0
      %v3090 = vadd.f32 0.0, %v3089
      %v3091 = vpop.f32.mrb[0].mxu0
      %3092 = vmatprep.mubr.bf16.mxu0 0
      %3093 = vmatmul.mubr.bf16.gmra.mrb[0].mxu0 %v2905
      %v3094 = vpop.f32.mrb[0].mxu0
      %v3095 = vadd.f32 0.0, %v3094
      %v3096 = vpop.f32.mrb[0].mxu0
      %v3097 = vpop.f32.mrb[0].mxu0
      %v3098 = vadd.f32 0.0, %v3097
      %v3099 = vpop.f32.mrb[0].mxu0
      %3100 = vmatprep.mubr.bf16.mxu0 0
      %3101 = vmatmul.mubr.bf16.gmra.mrb[0].mxu0 %v2906
      %v3102 = vpop.f32.mrb[0].mxu0
      %v3103 = vadd.f32 0.0, %v3102
      %v3104 = vpop.f32.mrb[0].mxu0
      %v3105 = vpop.f32.mrb[0].mxu0
      %v3106 = vadd.f32 0.0, %v3105
      %v3107 = vpop.f32.mrb[0].mxu0
      %3108 = vmatprep.mubr.bf16.mxu0 0
      %3109 = vmatmul.mubr.bf16.gmra.mrb[0].mxu0 %v2907
      %v3110 = vpop.f32.mrb[0].mxu0
      %v3111 = vadd.f32 0.0, %v3110
      %v3112 = vpop.f32.mrb[0].mxu0
      %v3113 = vpop.f32.mrb[0].mxu0
      %v3114 = vadd.f32 0.0, %v3113
      %v3115 = vpop.f32.mrb[0].mxu0
      %3116 = vmatprep.mubr.bf16.mxu0 0
      %3117 = vmatmul.mubr.bf16.gmra.mrb[0].mxu0 %v2908
      %v3118 = vpop.f32.mrb[0].mxu0
      %v3119 = vadd.f32 0.0, %v3118
      %v3120 = vpop.f32.mrb[0].mxu0
      %v3121 = vpop.f32.mrb[0].mxu0
      %v3122 = vadd.f32 0.0, %v3121
      %v3123 = vpop.f32.mrb[0].mxu0
      %3124 = vmatprep.mubr.bf16.mxu0 0
      %3125 = vmatmul.mubr.bf16.gmra.mrb[0].mxu0 %v2909
      %v3126 = vpop.f32.mrb[0].mxu0
      %v3127 = vadd.f32 0.0, %v3126
      %v3128 = vpop.f32.mrb[0].mxu0
      %v3129 = vpop.f32.mrb[0].mxu0
      %v3130 = vadd.f32 0.0, %v3129
      %v3131 = vpop.f32.mrb[0].mxu0
      %3132 = vmatprep.mubr.bf16.mxu0 0
      %3133 = vmatmul.mubr.bf16.gmra.mrb[0].mxu0 %v2910
      %v3134 = vpop.f32.mrb[0].mxu0
      %v3135 = vadd.f32 0.0, %v3134
      %v3136 = vpop.f32.mrb[0].mxu0
      %v3137 = vpop.f32.mrb[0].mxu0
      %v3138 = vadd.f32 0.0, %v3137
      %v3139 = vpop.f32.mrb[0].mxu0
      %3140 = vmatprep.mubr.bf16.mxu0 0
      %3141 = vmatmul.mubr.bf16.gmra.mrb[0].mxu0 %v2911
      %v3142 = vpop.f32.mrb[0].mxu0
      %v3143 = vadd.f32 0.0, %v3142
      %v3144 = vpop.f32.mrb[0].mxu0
      %v3145 = vpop.f32.mrb[0].mxu0
      %v3146 = vadd.f32 0.0, %v3145
      %v3147 = vpop.f32.mrb[0].mxu0
      %3148 = vmatprep.mubr.bf16.mxu0 0
      %3149 = vmatmul.mubr.bf16.gmra.mrb[0].mxu0 %v2912
      %v3150 = vpop.f32.mrb[0].mxu0
      %v3151 = vadd.f32 0.0, %v3150
      %v3152 = vpop.f32.mrb[0].mxu0
      %v3153 = vpop.f32.mrb[0].mxu0
      %v3154 = vadd.f32 0.0, %v3153
      %v3155 = vpop.f32.mrb[0].mxu0
      %3156 = vmatprep.mubr.bf16.mxu0 0
      %3157 = vmatmul.mubr.bf16.gmra.mrb[0].mxu0 %v2913
      %v3158 = vpop.f32.mrb[0].mxu0
      %v3159 = vadd.f32 0.0, %v3158
      %v3160 = vpop.f32.mrb[0].mxu0
      %v3161 = vpop.f32.mrb[0].mxu0
      %v3162 = vadd.f32 0.0, %v3161
      %v3163 = vpop.f32.mrb[0].mxu0
      %3164 = vmatprep.mubr.bf16.mxu0 0
      %3165 = vmatmul.mubr.bf16.gmra.mrb[0].mxu0 %v2914
      %v3166 = vpop.f32.mrb[0].mxu0
      %v3167 = vadd.f32 0.0, %v3166
      %v3168 = vpop.f32.mrb[0].mxu0
      %v3169 = vpop.f32.mrb[0].mxu0
      %v3170 = vadd.f32 0.0, %v3169
      %v3171 = vpop.f32.mrb[0].mxu0
      %3172 = vdwg.mxu0
      %v3173 = vadd.f32 %v2915, %v3047
      %v3174 = vadd.f32 %v2916, %v3050
      %v3175 = vadd.f32 %v2917, %v3055
      %v3176 = vadd.f32 %v2918, %v3058
      %v3177 = vadd.f32 %v2919, %v3063
      %v3178 = vadd.f32 %v2920, %v3066
      %v3179 = vadd.f32 %v2921, %v3071
      %v3180 = vadd.f32 %v2922, %v3074
      %v3181 = vadd.f32 %v2923, %v3079
      %v3182 = vadd.f32 %v2924, %v3082
      %v3183 = vadd.f32 %v2925, %v3087
      %v3184 = vadd.f32 %v2926, %v3090
      %v3185 = vadd.f32 %v2927, %v3095
      %v3186 = vadd.f32 %v2928, %v3098
      %v3187 = vadd.f32 %v2929, %v3103
      %v3188 = vadd.f32 %v2930, %v3106
      %v3189 = vadd.f32 %v2931, %v3111
      %v3190 = vadd.f32 %v2932, %v3114
      %v3191 = vadd.f32 %v2933, %v3119
      %v3192 = vadd.f32 %v2934, %v3122
      %v3193 = vadd.f32 %v2935, %v3127
      %v3194 = vadd.f32 %v2936, %v3130
      %v3195 = vadd.f32 %v2937, %v3135
      %v3196 = vadd.f32 %v2938, %v3138
      %v3197 = vadd.f32 %v2939, %v3143
      %v3198 = vadd.f32 %v2940, %v3146
      %v3199 = vadd.f32 %v2941, %v3151
      %v3200 = vadd.f32 %v2942, %v3154
      %v3201 = vadd.f32 %v2943, %v3159
      %v3202 = vadd.f32 %v2944, %v3162
      %v3203 = vadd.f32 %v2945, %v3167
      %v3204 = vadd.f32 %v2946, %v3170
      %3205 = vst [vmem:[#allocation4] sm:$0xff] %v3173
      %3206 = vst [vmem:[#allocation4 + $0x8] sm:$0xff] %v3174
      %3207 = vst [vmem:[#allocation4 + $0x10] sm:$0xff] %v3175
      %3208 = vst [vmem:[#allocation4 + $0x18] sm:$0xff] %v3176
      %3209 = vst [vmem:[#allocation4 + $0x20] sm:$0xff] %v3177
      %3210 = vst [vmem:[#allocation4 + $0x28] sm:$0xff] %v3178
      %3211 = vst [vmem:[#allocation4 + $0x30] sm:$0xff] %v3179
      %3212 = vst [vmem:[#allocation4 + $0x38] sm:$0xff] %v3180
      %3213 = vst [vmem:[#allocation4 + $0x40] sm:$0xff] %v3181
      %3214 = vst [vmem:[#allocation4 + $0x48] sm:$0xff] %v3182
      %3215 = vst [vmem:[#allocation4 + $0x50] sm:$0xff] %v3183
      %3216 = vst [vmem:[#allocation4 + $0x58] sm:$0xff] %v3184
      %3217 = vst [vmem:[#allocation4 + $0x60] sm:$0xff] %v3185
      %3218 = vst [vmem:[#allocation4 + $0x68] sm:$0xff] %v3186
      %3219 = vst [vmem:[#allocation4 + $0x70] sm:$0xff] %v3187
      %3220 = vst [vmem:[#allocation4 + $0x78] sm:$0xff] %v3188
      %3221 = vst [vmem:[#allocation4 + $0x80] sm:$0xff] %v3189
      %3222 = vst [vmem:[#allocation4 + $0x88] sm:$0xff] %v3190
      %3223 = vst [vmem:[#allocation4 + $0x90] sm:$0xff] %v3191
      %3224 = vst [vmem:[#allocation4 + $0x98] sm:$0xff] %v3192
      %3225 = vst [vmem:[#allocation4 + $0xa0] sm:$0xff] %v3193
      %3226 = vst [vmem:[#allocation4 + $0xa8] sm:$0xff] %v3194
      %3227 = vst [vmem:[#allocation4 + $0xb0] sm:$0xff] %v3195
      %3228 = vst [vmem:[#allocation4 + $0xb8] sm:$0xff] %v3196
      %3229 = vst [vmem:[#allocation4 + $0xc0] sm:$0xff] %v3197
      %3230 = vst [vmem:[#allocation4 + $0xc8] sm:$0xff] %v3198
      %3231 = vst [vmem:[#allocation4 + $0xd0] sm:$0xff] %v3199
      %3232 = vst [vmem:[#allocation4 + $0xd8] sm:$0xff] %v3200
      %3233 = vst [vmem:[#allocation4 + $0xe0] sm:$0xff] %v3201
      %3234 = vst [vmem:[#allocation4 + $0xe8] sm:$0xff] %v3202
      %3235 = vst [vmem:[#allocation4 + $0xf0] sm:$0xff] %v3203
      %3236 = vst [vmem:[#allocation4 + $0xf8] sm:$0xff] %v3204
      %s3237 = scalar_lea.vmem [#allocation3], 160
      %v3238 = vld [vmem:[%s3237] sm:$0xff]
      %v3239 = vld [vmem:[%s3237 + $0x8] sm:$0xff]
      %v3240 = vld [vmem:[%s3237 + $0x10] sm:$0xff]
      %v3241 = vld [vmem:[%s3237 + $0x18] sm:$0xff]
      %v3242 = vld [vmem:[%s3237 + $0x20] sm:$0xff]
      %v3243 = vld [vmem:[%s3237 + $0x28] sm:$0xff]
      %v3244 = vld [vmem:[%s3237 + $0x30] sm:$0xff]
      %v3245 = vld [vmem:[%s3237 + $0x38] sm:$0xff]
      %v3246 = vld [vmem:[%s3237 + $0x40] sm:$0xff]
      %v3247 = vld [vmem:[%s3237 + $0x48] sm:$0xff]
      %v3248 = vld [vmem:[%s3237 + $0x50] sm:$0xff]
      %v3249 = vld [vmem:[%s3237 + $0x58] sm:$0xff]
      %v3250 = vld [vmem:[%s3237 + $0x60] sm:$0xff]
      %v3251 = vld [vmem:[%s3237 + $0x68] sm:$0xff]
      %v3252 = vld [vmem:[%s3237 + $0x70] sm:$0xff]
      %v3253 = vld [vmem:[%s3237 + $0x78] sm:$0xff]
      %v3254 = vld [vmem:[#allocation4] sm:$0xff]
      %v3255 = vld [vmem:[#allocation4 + $0x8] sm:$0xff]
      %v3256 = vld [vmem:[#allocation4 + $0x10] sm:$0xff]
      %v3257 = vld [vmem:[#allocation4 + $0x18] sm:$0xff]
      %v3258 = vld [vmem:[#allocation4 + $0x20] sm:$0xff]
      %v3259 = vld [vmem:[#allocation4 + $0x28] sm:$0xff]
      %v3260 = vld [vmem:[#allocation4 + $0x30] sm:$0xff]
      %v3261 = vld [vmem:[#allocation4 + $0x38] sm:$0xff]
      %v3262 = vld [vmem:[#allocation4 + $0x40] sm:$0xff]
      %v3263 = vld [vmem:[#allocation4 + $0x48] sm:$0xff]
      %v3264 = vld [vmem:[#allocation4 + $0x50] sm:$0xff]
      %v3265 = vld [vmem:[#allocation4 + $0x58] sm:$0xff]
      %v3266 = vld [vmem:[#allocation4 + $0x60] sm:$0xff]
      %v3267 = vld [vmem:[#allocation4 + $0x68] sm:$0xff]
      %v3268 = vld [vmem:[#allocation4 + $0x70] sm:$0xff]
      %v3269 = vld [vmem:[#allocation4 + $0x78] sm:$0xff]
      %v3270 = vld [vmem:[#allocation4 + $0x80] sm:$0xff]
      %v3271 = vld [vmem:[#allocation4 + $0x88] sm:$0xff]
      %v3272 = vld [vmem:[#allocation4 + $0x90] sm:$0xff]
      %v3273 = vld [vmem:[#allocation4 + $0x98] sm:$0xff]
      %v3274 = vld [vmem:[#allocation4 + $0xa0] sm:$0xff]
      %v3275 = vld [vmem:[#allocation4 + $0xa8] sm:$0xff]
      %v3276 = vld [vmem:[#allocation4 + $0xb0] sm:$0xff]
      %v3277 = vld [vmem:[#allocation4 + $0xb8] sm:$0xff]
      %v3278 = vld [vmem:[#allocation4 + $0xc0] sm:$0xff]
      %v3279 = vld [vmem:[#allocation4 + $0xc8] sm:$0xff]
      %v3280 = vld [vmem:[#allocation4 + $0xd0] sm:$0xff]
      %v3281 = vld [vmem:[#allocation4 + $0xd8] sm:$0xff]
      %v3282 = vld [vmem:[#allocation4 + $0xe0] sm:$0xff]
      %v3283 = vld [vmem:[#allocation4 + $0xe8] sm:$0xff]
      %v3284 = vld [vmem:[#allocation4 + $0xf0] sm:$0xff]
      %v3285 = vld [vmem:[#allocation4 + $0xf8] sm:$0xff]
      %s3286 = scalar_lea.vmem %s5, 448
      %v3287 = vld [vmem:[%s3286] sm:$0xf]
      %v3288 = vld [vmem:[%s3286 + $0x4] sm:$0xf]
      %v3289 = vld [vmem:[%s3286 + $0x8] sm:$0xf]
      %v3290 = vld [vmem:[%s3286 + $0xc] sm:$0xf]
      %v3291 = vld [vmem:[%s3286 + $0x10] sm:$0xf]
      %v3292 = vld [vmem:[%s3286 + $0x14] sm:$0xf]
      %v3293 = vld [vmem:[%s3286 + $0x18] sm:$0xf]
      %v3294 = vld [vmem:[%s3286 + $0x1c] sm:$0xf]
      %v3295 = vld [vmem:[%s3286 + $0x20] sm:$0xf]
      %v3296 = vld [vmem:[%s3286 + $0x24] sm:$0xf]
      %v3297 = vld [vmem:[%s3286 + $0x28] sm:$0xf]
      %v3298 = vld [vmem:[%s3286 + $0x2c] sm:$0xf]
      %v3299 = vld [vmem:[%s3286 + $0x30] sm:$0xf]
      %v3300 = vld [vmem:[%s3286 + $0x34] sm:$0xf]
      %v3301 = vld [vmem:[%s3286 + $0x38] sm:$0xf]
      %v3302 = vld [vmem:[%s3286 + $0x3c] sm:$0xf]
      %v3319 = vunpack.c.l.b16 %v3287
      %v3320 = vunpack.c.l.b16 %v3288
      %v3321 = vunpack.c.l.b16 %v3289
      %v3322 = vunpack.c.l.b16 %v3290
      %v3323 = vunpack.c.l.b16 %v3291
      %v3324 = vunpack.c.l.b16 %v3292
      %v3325 = vunpack.c.l.b16 %v3293
      %v3326 = vunpack.c.l.b16 %v3294
      %v3327 = vunpack.c.l.b16 %v3295
      %v3328 = vunpack.c.l.b16 %v3296
      %v3329 = vunpack.c.l.b16 %v3297
      %v3330 = vunpack.c.l.b16 %v3298
      %v3331 = vunpack.c.l.b16 %v3299
      %v3332 = vunpack.c.l.b16 %v3300
      %v3333 = vunpack.c.l.b16 %v3301
      %v3334 = vunpack.c.l.b16 %v3302
      %v3335 = vpack.c.b16 %v3320, %v3319
      %v3336 = vpack.c.b16 %v3322, %v3321
      %v3337 = vpack.c.b16 %v3324, %v3323
      %v3338 = vpack.c.b16 %v3326, %v3325
      %v3339 = vpack.c.b16 %v3328, %v3327
      %v3340 = vpack.c.b16 %v3330, %v3329
      %v3341 = vpack.c.b16 %v3332, %v3331
      %v3342 = vpack.c.b16 %v3334, %v3333
      %3351 = vmatprep.subr.bf16.mxu0 0
      %3352 = vmatpush1.bf16.msra.mxu0 %v3335
      %3353 = vmatprep.subr.bf16.mxu0 0
      %3354 = vmatpush1.bf16.msra.mxu0 %v3336
      %3355 = vmatprep.subr.bf16.mxu0 0
      %3356 = vmatpush1.bf16.msra.mxu0 %v3337
      %3357 = vmatprep.subr.bf16.mxu0 0
      %3358 = vmatpush1.bf16.msra.mxu0 %v3338
      %3359 = vmatprep.subr.bf16.mxu0 0
      %3360 = vmatpush1.bf16.msra.mxu0 %v3339
      %3361 = vmatprep.subr.bf16.mxu0 0
      %3362 = vmatpush1.bf16.msra.mxu0 %v3340
      %3363 = vmatprep.subr.bf16.mxu0 0
      %3364 = vmatpush1.bf16.msra.mxu0 %v3341
      %3365 = vmatprep.subr.bf16.mxu0 0
      %3366 = vmatpush1.bf16.msra.mxu0 %v3342
      %3367 = vmatprep.subr.bf16.mxu0 0
      %3368 = vmatpush1.bf16.msra.mxu0 0
      %3369 = vmatprep.subr.bf16.mxu0 0
      %3370 = vmatpush1.bf16.msra.mxu0 0
      %3371 = vmatprep.subr.bf16.mxu0 0
      %3372 = vmatpush1.bf16.msra.mxu0 0
      %3373 = vmatprep.subr.bf16.mxu0 0
      %3374 = vmatpush1.bf16.msra.mxu0 0
      %3375 = vmatprep.subr.bf16.mxu0 0
      %3376 = vmatpush1.bf16.msra.mxu0 0
      %3377 = vmatprep.subr.bf16.mxu0 0
      %3378 = vmatpush1.bf16.msra.mxu0 0
      %3379 = vmatprep.subr.bf16.mxu0 0
      %3380 = vmatpush1.bf16.msra.mxu0 0
      %3381 = vmatprep.subr.bf16.mxu0 0
      %3382 = vmatpush1.bf16.msra.mxu0 0
      %3383 = vmatprep.mubr.bf16.mxu0 0
      %3384 = vmatmul.mubr.bf16.gmra.mrb[0].mxu0 %v3238
      %v3385 = vpop.f32.mrb[0].mxu0
      %v3386 = vadd.f32 0.0, %v3385
      %v3387 = vpop.f32.mrb[0].mxu0
      %v3388 = vpop.f32.mrb[0].mxu0
      %v3389 = vadd.f32 0.0, %v3388
      %v3390 = vpop.f32.mrb[0].mxu0
      %3391 = vmatprep.mubr.bf16.mxu0 0
      %3392 = vmatmul.mubr.bf16.gmra.mrb[0].mxu0 %v3239
      %v3393 = vpop.f32.mrb[0].mxu0
      %v3394 = vadd.f32 0.0, %v3393
      %v3395 = vpop.f32.mrb[0].mxu0
      %v3396 = vpop.f32.mrb[0].mxu0
      %v3397 = vadd.f32 0.0, %v3396
      %v3398 = vpop.f32.mrb[0].mxu0
      %3399 = vmatprep.mubr.bf16.mxu0 0
      %3400 = vmatmul.mubr.bf16.gmra.mrb[0].mxu0 %v3240
      %v3401 = vpop.f32.mrb[0].mxu0
      %v3402 = vadd.f32 0.0, %v3401
      %v3403 = vpop.f32.mrb[0].mxu0
      %v3404 = vpop.f32.mrb[0].mxu0
      %v3405 = vadd.f32 0.0, %v3404
      %v3406 = vpop.f32.mrb[0].mxu0
      %3407 = vmatprep.mubr.bf16.mxu0 0
      %3408 = vmatmul.mubr.bf16.gmra.mrb[0].mxu0 %v3241
      %v3409 = vpop.f32.mrb[0].mxu0
      %v3410 = vadd.f32 0.0, %v3409
      %v3411 = vpop.f32.mrb[0].mxu0
      %v3412 = vpop.f32.mrb[0].mxu0
      %v3413 = vadd.f32 0.0, %v3412
      %v3414 = vpop.f32.mrb[0].mxu0
      %3415 = vmatprep.mubr.bf16.mxu0 0
      %3416 = vmatmul.mubr.bf16.gmra.mrb[0].mxu0 %v3242
      %v3417 = vpop.f32.mrb[0].mxu0
      %v3418 = vadd.f32 0.0, %v3417
      %v3419 = vpop.f32.mrb[0].mxu0
      %v3420 = vpop.f32.mrb[0].mxu0
      %v3421 = vadd.f32 0.0, %v3420
      %v3422 = vpop.f32.mrb[0].mxu0
      %3423 = vmatprep.mubr.bf16.mxu0 0
      %3424 = vmatmul.mubr.bf16.gmra.mrb[0].mxu0 %v3243
      %v3425 = vpop.f32.mrb[0].mxu0
      %v3426 = vadd.f32 0.0, %v3425
      %v3427 = vpop.f32.mrb[0].mxu0
      %v3428 = vpop.f32.mrb[0].mxu0
      %v3429 = vadd.f32 0.0, %v3428
      %v3430 = vpop.f32.mrb[0].mxu0
      %3431 = vmatprep.mubr.bf16.mxu0 0
      %3432 = vmatmul.mubr.bf16.gmra.mrb[0].mxu0 %v3244
      %v3433 = vpop.f32.mrb[0].mxu0
      %v3434 = vadd.f32 0.0, %v3433
      %v3435 = vpop.f32.mrb[0].mxu0
      %v3436 = vpop.f32.mrb[0].mxu0
      %v3437 = vadd.f32 0.0, %v3436
      %v3438 = vpop.f32.mrb[0].mxu0
      %3439 = vmatprep.mubr.bf16.mxu0 0
      %3440 = vmatmul.mubr.bf16.gmra.mrb[0].mxu0 %v3245
      %v3441 = vpop.f32.mrb[0].mxu0
      %v3442 = vadd.f32 0.0, %v3441
      %v3443 = vpop.f32.mrb[0].mxu0
      %v3444 = vpop.f32.mrb[0].mxu0
      %v3445 = vadd.f32 0.0, %v3444
      %v3446 = vpop.f32.mrb[0].mxu0
      %3447 = vmatprep.mubr.bf16.mxu0 0
      %3448 = vmatmul.mubr.bf16.gmra.mrb[0].mxu0 %v3246
      %v3449 = vpop.f32.mrb[0].mxu0
      %v3450 = vadd.f32 0.0, %v3449
      %v3451 = vpop.f32.mrb[0].mxu0
      %v3452 = vpop.f32.mrb[0].mxu0
      %v3453 = vadd.f32 0.0, %v3452
      %v3454 = vpop.f32.mrb[0].mxu0
      %3455 = vmatprep.mubr.bf16.mxu0 0
      %3456 = vmatmul.mubr.bf16.gmra.mrb[0].mxu0 %v3247
      %v3457 = vpop.f32.mrb[0].mxu0
      %v3458 = vadd.f32 0.0, %v3457
      %v3459 = vpop.f32.mrb[0].mxu0
      %v3460 = vpop.f32.mrb[0].mxu0
      %v3461 = vadd.f32 0.0, %v3460
      %v3462 = vpop.f32.mrb[0].mxu0
      %3463 = vmatprep.mubr.bf16.mxu0 0
      %3464 = vmatmul.mubr.bf16.gmra.mrb[0].mxu0 %v3248
      %v3465 = vpop.f32.mrb[0].mxu0
      %v3466 = vadd.f32 0.0, %v3465
      %v3467 = vpop.f32.mrb[0].mxu0
      %v3468 = vpop.f32.mrb[0].mxu0
      %v3469 = vadd.f32 0.0, %v3468
      %v3470 = vpop.f32.mrb[0].mxu0
      %3471 = vmatprep.mubr.bf16.mxu0 0
      %3472 = vmatmul.mubr.bf16.gmra.mrb[0].mxu0 %v3249
      %v3473 = vpop.f32.mrb[0].mxu0
      %v3474 = vadd.f32 0.0, %v3473
      %v3475 = vpop.f32.mrb[0].mxu0
      %v3476 = vpop.f32.mrb[0].mxu0
      %v3477 = vadd.f32 0.0, %v3476
      %v3478 = vpop.f32.mrb[0].mxu0
      %3479 = vmatprep.mubr.bf16.mxu0 0
      %3480 = vmatmul.mubr.bf16.gmra.mrb[0].mxu0 %v3250
      %v3481 = vpop.f32.mrb[0].mxu0
      %v3482 = vadd.f32 0.0, %v3481
      %v3483 = vpop.f32.mrb[0].mxu0
      %v3484 = vpop.f32.mrb[0].mxu0
      %v3485 = vadd.f32 0.0, %v3484
      %v3486 = vpop.f32.mrb[0].mxu0
      %3487 = vmatprep.mubr.bf16.mxu0 0
      %3488 = vmatmul.mubr.bf16.gmra.mrb[0].mxu0 %v3251
      %v3489 = vpop.f32.mrb[0].mxu0
      %v3490 = vadd.f32 0.0, %v3489
      %v3491 = vpop.f32.mrb[0].mxu0
      %v3492 = vpop.f32.mrb[0].mxu0
      %v3493 = vadd.f32 0.0, %v3492
      %v3494 = vpop.f32.mrb[0].mxu0
      %3495 = vmatprep.mubr.bf16.mxu0 0
      %3496 = vmatmul.mubr.bf16.gmra.mrb[0].mxu0 %v3252
      %v3497 = vpop.f32.mrb[0].mxu0
      %v3498 = vadd.f32 0.0, %v3497
      %v3499 = vpop.f32.mrb[0].mxu0
      %v3500 = vpop.f32.mrb[0].mxu0
      %v3501 = vadd.f32 0.0, %v3500
      %v3502 = vpop.f32.mrb[0].mxu0
      %3503 = vmatprep.mubr.bf16.mxu0 0
      %3504 = vmatmul.mubr.bf16.gmra.mrb[0].mxu0 %v3253
      %v3505 = vpop.f32.mrb[0].mxu0
      %v3506 = vadd.f32 0.0, %v3505
      %v3507 = vpop.f32.mrb[0].mxu0
      %v3508 = vpop.f32.mrb[0].mxu0
      %v3509 = vadd.f32 0.0, %v3508
      %v3510 = vpop.f32.mrb[0].mxu0
      %3511 = vdwg.mxu0
      %v3512 = vadd.f32 %v3254, %v3386
      %v3513 = vadd.f32 %v3255, %v3389
      %v3514 = vadd.f32 %v3256, %v3394
      %v3515 = vadd.f32 %v3257, %v3397
      %v3516 = vadd.f32 %v3258, %v3402
      %v3517 = vadd.f32 %v3259, %v3405
      %v3518 = vadd.f32 %v3260, %v3410
      %v3519 = vadd.f32 %v3261, %v3413
      %v3520 = vadd.f32 %v3262, %v3418
      %v3521 = vadd.f32 %v3263, %v3421
      %v3522 = vadd.f32 %v3264, %v3426
      %v3523 = vadd.f32 %v3265, %v3429
      %v3524 = vadd.f32 %v3266, %v3434
      %v3525 = vadd.f32 %v3267, %v3437
      %v3526 = vadd.f32 %v3268, %v3442
      %v3527 = vadd.f32 %v3269, %v3445
      %v3528 = vadd.f32 %v3270, %v3450
      %v3529 = vadd.f32 %v3271, %v3453
      %v3530 = vadd.f32 %v3272, %v3458
      %v3531 = vadd.f32 %v3273, %v3461
      %v3532 = vadd.f32 %v3274, %v3466
      %v3533 = vadd.f32 %v3275, %v3469
      %v3534 = vadd.f32 %v3276, %v3474
      %v3535 = vadd.f32 %v3277, %v3477
      %v3536 = vadd.f32 %v3278, %v3482
      %v3537 = vadd.f32 %v3279, %v3485
      %v3538 = vadd.f32 %v3280, %v3490
      %v3539 = vadd.f32 %v3281, %v3493
      %v3540 = vadd.f32 %v3282, %v3498
      %v3541 = vadd.f32 %v3283, %v3501
      %v3542 = vadd.f32 %v3284, %v3506
      %v3543 = vadd.f32 %v3285, %v3509
      %3544 = vst [vmem:[#allocation4] sm:$0xff] %v3512
      %3545 = vst [vmem:[#allocation4 + $0x8] sm:$0xff] %v3513
      %3546 = vst [vmem:[#allocation4 + $0x10] sm:$0xff] %v3514
      %3547 = vst [vmem:[#allocation4 + $0x18] sm:$0xff] %v3515
      %3548 = vst [vmem:[#allocation4 + $0x20] sm:$0xff] %v3516
      %3549 = vst [vmem:[#allocation4 + $0x28] sm:$0xff] %v3517
      %3550 = vst [vmem:[#allocation4 + $0x30] sm:$0xff] %v3518
      %3551 = vst [vmem:[#allocation4 + $0x38] sm:$0xff] %v3519
      %3552 = vst [vmem:[#allocation4 + $0x40] sm:$0xff] %v3520
      %3553 = vst [vmem:[#allocation4 + $0x48] sm:$0xff] %v3521
      %3554 = vst [vmem:[#allocation4 + $0x50] sm:$0xff] %v3522
      %3555 = vst [vmem:[#allocation4 + $0x58] sm:$0xff] %v3523
      %3556 = vst [vmem:[#allocation4 + $0x60] sm:$0xff] %v3524
      %3557 = vst [vmem:[#allocation4 + $0x68] sm:$0xff] %v3525
      %3558 = vst [vmem:[#allocation4 + $0x70] sm:$0xff] %v3526
      %3559 = vst [vmem:[#allocation4 + $0x78] sm:$0xff] %v3527
      %3560 = vst [vmem:[#allocation4 + $0x80] sm:$0xff] %v3528
      %3561 = vst [vmem:[#allocation4 + $0x88] sm:$0xff] %v3529
      %3562 = vst [vmem:[#allocation4 + $0x90] sm:$0xff] %v3530
      %3563 = vst [vmem:[#allocation4 + $0x98] sm:$0xff] %v3531
      %3564 = vst [vmem:[#allocation4 + $0xa0] sm:$0xff] %v3532
      %3565 = vst [vmem:[#allocation4 + $0xa8] sm:$0xff] %v3533
      %3566 = vst [vmem:[#allocation4 + $0xb0] sm:$0xff] %v3534
      %3567 = vst [vmem:[#allocation4 + $0xb8] sm:$0xff] %v3535
      %3568 = vst [vmem:[#allocation4 + $0xc0] sm:$0xff] %v3536
      %3569 = vst [vmem:[#allocation4 + $0xc8] sm:$0xff] %v3537
      %3570 = vst [vmem:[#allocation4 + $0xd0] sm:$0xff] %v3538
      %3571 = vst [vmem:[#allocation4 + $0xd8] sm:$0xff] %v3539
      %3572 = vst [vmem:[#allocation4 + $0xe0] sm:$0xff] %v3540
      %3573 = vst [vmem:[#allocation4 + $0xe8] sm:$0xff] %v3541
      %3574 = vst [vmem:[#allocation4 + $0xf0] sm:$0xff] %v3542
      %3575 = vst [vmem:[#allocation4 + $0xf8] sm:$0xff] %v3543
      %s3576 = scalar_lea.vmem [#allocation3], 304
      %v3577 = vld [vmem:[%s3576] sm:$0xff]
      %v3578 = vld [vmem:[%s3576 + $0x8] sm:$0xff]
      %v3579 = vld [vmem:[%s3576 + $0x10] sm:$0xff]
      %v3580 = vld [vmem:[%s3576 + $0x18] sm:$0xff]
      %v3581 = vld [vmem:[%s3576 + $0x20] sm:$0xff]
      %v3582 = vld [vmem:[%s3576 + $0x28] sm:$0xff]
      %v3583 = vld [vmem:[%s3576 + $0x30] sm:$0xff]
      %v3584 = vld [vmem:[%s3576 + $0x38] sm:$0xff]
      %v3585 = vld [vmem:[%s3576 + $0x40] sm:$0xff]
      %v3586 = vld [vmem:[%s3576 + $0x48] sm:$0xff]
      %v3587 = vld [vmem:[%s3576 + $0x50] sm:$0xff]
      %v3588 = vld [vmem:[%s3576 + $0x58] sm:$0xff]
      %v3589 = vld [vmem:[%s3576 + $0x60] sm:$0xff]
      %v3590 = vld [vmem:[%s3576 + $0x68] sm:$0xff]
      %v3591 = vld [vmem:[%s3576 + $0x70] sm:$0xff]
      %v3592 = vld [vmem:[%s3576 + $0x78] sm:$0xff]
      %v3593 = vld [vmem:[#allocation4] sm:$0xff]
      %v3594 = vld [vmem:[#allocation4 + $0x8] sm:$0xff]
      %v3595 = vld [vmem:[#allocation4 + $0x10] sm:$0xff]
      %v3596 = vld [vmem:[#allocation4 + $0x18] sm:$0xff]
      %v3597 = vld [vmem:[#allocation4 + $0x20] sm:$0xff]
      %v3598 = vld [vmem:[#allocation4 + $0x28] sm:$0xff]
      %v3599 = vld [vmem:[#allocation4 + $0x30] sm:$0xff]
      %v3600 = vld [vmem:[#allocation4 + $0x38] sm:$0xff]
      %v3601 = vld [vmem:[#allocation4 + $0x40] sm:$0xff]
      %v3602 = vld [vmem:[#allocation4 + $0x48] sm:$0xff]
      %v3603 = vld [vmem:[#allocation4 + $0x50] sm:$0xff]
      %v3604 = vld [vmem:[#allocation4 + $0x58] sm:$0xff]
      %v3605 = vld [vmem:[#allocation4 + $0x60] sm:$0xff]
      %v3606 = vld [vmem:[#allocation4 + $0x68] sm:$0xff]
      %v3607 = vld [vmem:[#allocation4 + $0x70] sm:$0xff]
      %v3608 = vld [vmem:[#allocation4 + $0x78] sm:$0xff]
      %v3609 = vld [vmem:[#allocation4 + $0x80] sm:$0xff]
      %v3610 = vld [vmem:[#allocation4 + $0x88] sm:$0xff]
      %v3611 = vld [vmem:[#allocation4 + $0x90] sm:$0xff]
      %v3612 = vld [vmem:[#allocation4 + $0x98] sm:$0xff]
      %v3613 = vld [vmem:[#allocation4 + $0xa0] sm:$0xff]
      %v3614 = vld [vmem:[#allocation4 + $0xa8] sm:$0xff]
      %v3615 = vld [vmem:[#allocation4 + $0xb0] sm:$0xff]
      %v3616 = vld [vmem:[#allocation4 + $0xb8] sm:$0xff]
      %v3617 = vld [vmem:[#allocation4 + $0xc0] sm:$0xff]
      %v3618 = vld [vmem:[#allocation4 + $0xc8] sm:$0xff]
      %v3619 = vld [vmem:[#allocation4 + $0xd0] sm:$0xff]
      %v3620 = vld [vmem:[#allocation4 + $0xd8] sm:$0xff]
      %v3621 = vld [vmem:[#allocation4 + $0xe0] sm:$0xff]
      %v3622 = vld [vmem:[#allocation4 + $0xe8] sm:$0xff]
      %v3623 = vld [vmem:[#allocation4 + $0xf0] sm:$0xff]
      %v3624 = vld [vmem:[#allocation4 + $0xf8] sm:$0xff]
      %s3625 = scalar_lea.vmem %s5, 512
      %v3626 = vld [vmem:[%s3625] sm:$0xf]
      %v3627 = vld [vmem:[%s3625 + $0x4] sm:$0xf]
      %v3628 = vld [vmem:[%s3625 + $0x8] sm:$0xf]
      %v3629 = vld [vmem:[%s3625 + $0xc] sm:$0xf]
      %v3630 = vld [vmem:[%s3625 + $0x10] sm:$0xf]
      %v3631 = vld [vmem:[%s3625 + $0x14] sm:$0xf]
      %v3632 = vld [vmem:[%s3625 + $0x18] sm:$0xf]
      %v3633 = vld [vmem:[%s3625 + $0x1c] sm:$0xf]
      %v3634 = vld [vmem:[%s3625 + $0x20] sm:$0xf]
      %v3635 = vld [vmem:[%s3625 + $0x24] sm:$0xf]
      %v3636 = vld [vmem:[%s3625 + $0x28] sm:$0xf]
      %v3637 = vld [vmem:[%s3625 + $0x2c] sm:$0xf]
      %v3638 = vld [vmem:[%s3625 + $0x30] sm:$0xf]
      %v3639 = vld [vmem:[%s3625 + $0x34] sm:$0xf]
      %v3640 = vld [vmem:[%s3625 + $0x38] sm:$0xf]
      %v3641 = vld [vmem:[%s3625 + $0x3c] sm:$0xf]
      %v3658 = vunpack.c.l.b16 %v3626
      %v3659 = vunpack.c.l.b16 %v3627
      %v3660 = vunpack.c.l.b16 %v3628
      %v3661 = vunpack.c.l.b16 %v3629
      %v3662 = vunpack.c.l.b16 %v3630
      %v3663 = vunpack.c.l.b16 %v3631
      %v3664 = vunpack.c.l.b16 %v3632
      %v3665 = vunpack.c.l.b16 %v3633
      %v3666 = vunpack.c.l.b16 %v3634
      %v3667 = vunpack.c.l.b16 %v3635
      %v3668 = vunpack.c.l.b16 %v3636
      %v3669 = vunpack.c.l.b16 %v3637
      %v3670 = vunpack.c.l.b16 %v3638
      %v3671 = vunpack.c.l.b16 %v3639
      %v3672 = vunpack.c.l.b16 %v3640
      %v3673 = vunpack.c.l.b16 %v3641
      %v3674 = vpack.c.b16 %v3659, %v3658
      %v3675 = vpack.c.b16 %v3661, %v3660
      %v3676 = vpack.c.b16 %v3663, %v3662
      %v3677 = vpack.c.b16 %v3665, %v3664
      %v3678 = vpack.c.b16 %v3667, %v3666
      %v3679 = vpack.c.b16 %v3669, %v3668
      %v3680 = vpack.c.b16 %v3671, %v3670
      %v3681 = vpack.c.b16 %v3673, %v3672
      %3690 = vmatprep.subr.bf16.mxu0 0
      %3691 = vmatpush1.bf16.msra.mxu0 %v3674
      %3692 = vmatprep.subr.bf16.mxu0 0
      %3693 = vmatpush1.bf16.msra.mxu0 %v3675
      %3694 = vmatprep.subr.bf16.mxu0 0
      %3695 = vmatpush1.bf16.msra.mxu0 %v3676
      %3696 = vmatprep.subr.bf16.mxu0 0
      %3697 = vmatpush1.bf16.msra.mxu0 %v3677
      %3698 = vmatprep.subr.bf16.mxu0 0
      %3699 = vmatpush1.bf16.msra.mxu0 %v3678
      %3700 = vmatprep.subr.bf16.mxu0 0
      %3701 = vmatpush1.bf16.msra.mxu0 %v3679
      %3702 = vmatprep.subr.bf16.mxu0 0
      %3703 = vmatpush1.bf16.msra.mxu0 %v3680
      %3704 = vmatprep.subr.bf16.mxu0 0
      %3705 = vmatpush1.bf16.msra.mxu0 %v3681
      %3706 = vmatprep.subr.bf16.mxu0 0
      %3707 = vmatpush1.bf16.msra.mxu0 0
      %3708 = vmatprep.subr.bf16.mxu0 0
      %3709 = vmatpush1.bf16.msra.mxu0 0
      %3710 = vmatprep.subr.bf16.mxu0 0
      %3711 = vmatpush1.bf16.msra.mxu0 0
      %3712 = vmatprep.subr.bf16.mxu0 0
      %3713 = vmatpush1.bf16.msra.mxu0 0
      %3714 = vmatprep.subr.bf16.mxu0 0
      %3715 = vmatpush1.bf16.msra.mxu0 0
      %3716 = vmatprep.subr.bf16.mxu0 0
      %3717 = vmatpush1.bf16.msra.mxu0 0
      %3718 = vmatprep.subr.bf16.mxu0 0
      %3719 = vmatpush1.bf16.msra.mxu0 0
      %3720 = vmatprep.subr.bf16.mxu0 0
      %3721 = vmatpush1.bf16.msra.mxu0 0
      %3722 = vmatprep.mubr.bf16.mxu0 0
      %3723 = vmatmul.mubr.bf16.gmra.mrb[0].mxu0 %v3577
      %v3724 = vpop.f32.mrb[0].mxu0
      %v3725 = vadd.f32 0.0, %v3724
      %v3726 = vpop.f32.mrb[0].mxu0
      %v3727 = vpop.f32.mrb[0].mxu0
      %v3728 = vadd.f32 0.0, %v3727
      %v3729 = vpop.f32.mrb[0].mxu0
      %3730 = vmatprep.mubr.bf16.mxu0 0
      %3731 = vmatmul.mubr.bf16.gmra.mrb[0].mxu0 %v3578
      %v3732 = vpop.f32.mrb[0].mxu0
      %v3733 = vadd.f32 0.0, %v3732
      %v3734 = vpop.f32.mrb[0].mxu0
      %v3735 = vpop.f32.mrb[0].mxu0
      %v3736 = vadd.f32 0.0, %v3735
      %v3737 = vpop.f32.mrb[0].mxu0
      %3738 = vmatprep.mubr.bf16.mxu0 0
      %3739 = vmatmul.mubr.bf16.gmra.mrb[0].mxu0 %v3579
      %v3740 = vpop.f32.mrb[0].mxu0
      %v3741 = vadd.f32 0.0, %v3740
      %v3742 = vpop.f32.mrb[0].mxu0
      %v3743 = vpop.f32.mrb[0].mxu0
      %v3744 = vadd.f32 0.0, %v3743
      %v3745 = vpop.f32.mrb[0].mxu0
      %3746 = vmatprep.mubr.bf16.mxu0 0
      %3747 = vmatmul.mubr.bf16.gmra.mrb[0].mxu0 %v3580
      %v3748 = vpop.f32.mrb[0].mxu0
      %v3749 = vadd.f32 0.0, %v3748
      %v3750 = vpop.f32.mrb[0].mxu0
      %v3751 = vpop.f32.mrb[0].mxu0
      %v3752 = vadd.f32 0.0, %v3751
      %v3753 = vpop.f32.mrb[0].mxu0
      %3754 = vmatprep.mubr.bf16.mxu0 0
      %3755 = vmatmul.mubr.bf16.gmra.mrb[0].mxu0 %v3581
      %v3756 = vpop.f32.mrb[0].mxu0
      %v3757 = vadd.f32 0.0, %v3756
      %v3758 = vpop.f32.mrb[0].mxu0
      %v3759 = vpop.f32.mrb[0].mxu0
      %v3760 = vadd.f32 0.0, %v3759
      %v3761 = vpop.f32.mrb[0].mxu0
      %3762 = vmatprep.mubr.bf16.mxu0 0
      %3763 = vmatmul.mubr.bf16.gmra.mrb[0].mxu0 %v3582
      %v3764 = vpop.f32.mrb[0].mxu0
      %v3765 = vadd.f32 0.0, %v3764
      %v3766 = vpop.f32.mrb[0].mxu0
      %v3767 = vpop.f32.mrb[0].mxu0
      %v3768 = vadd.f32 0.0, %v3767
      %v3769 = vpop.f32.mrb[0].mxu0
      %3770 = vmatprep.mubr.bf16.mxu0 0
      %3771 = vmatmul.mubr.bf16.gmra.mrb[0].mxu0 %v3583
      %v3772 = vpop.f32.mrb[0].mxu0
      %v3773 = vadd.f32 0.0, %v3772
      %v3774 = vpop.f32.mrb[0].mxu0
      %v3775 = vpop.f32.mrb[0].mxu0
      %v3776 = vadd.f32 0.0, %v3775
      %v3777 = vpop.f32.mrb[0].mxu0
      %3778 = vmatprep.mubr.bf16.mxu0 0
      %3779 = vmatmul.mubr.bf16.gmra.mrb[0].mxu0 %v3584
      %v3780 = vpop.f32.mrb[0].mxu0
      %v3781 = vadd.f32 0.0, %v3780
      %v3782 = vpop.f32.mrb[0].mxu0
      %v3783 = vpop.f32.mrb[0].mxu0
      %v3784 = vadd.f32 0.0, %v3783
      %v3785 = vpop.f32.mrb[0].mxu0
      %3786 = vmatprep.mubr.bf16.mxu0 0
      %3787 = vmatmul.mubr.bf16.gmra.mrb[0].mxu0 %v3585
      %v3788 = vpop.f32.mrb[0].mxu0
      %v3789 = vadd.f32 0.0, %v3788
      %v3790 = vpop.f32.mrb[0].mxu0
      %v3791 = vpop.f32.mrb[0].mxu0
      %v3792 = vadd.f32 0.0, %v3791
      %v3793 = vpop.f32.mrb[0].mxu0
      %3794 = vmatprep.mubr.bf16.mxu0 0
      %3795 = vmatmul.mubr.bf16.gmra.mrb[0].mxu0 %v3586
      %v3796 = vpop.f32.mrb[0].mxu0
      %v3797 = vadd.f32 0.0, %v3796
      %v3798 = vpop.f32.mrb[0].mxu0
      %v3799 = vpop.f32.mrb[0].mxu0
      %v3800 = vadd.f32 0.0, %v3799
      %v3801 = vpop.f32.mrb[0].mxu0
      %3802 = vmatprep.mubr.bf16.mxu0 0
      %3803 = vmatmul.mubr.bf16.gmra.mrb[0].mxu0 %v3587
      %v3804 = vpop.f32.mrb[0].mxu0
      %v3805 = vadd.f32 0.0, %v3804
      %v3806 = vpop.f32.mrb[0].mxu0
      %v3807 = vpop.f32.mrb[0].mxu0
      %v3808 = vadd.f32 0.0, %v3807
      %v3809 = vpop.f32.mrb[0].mxu0
      %3810 = vmatprep.mubr.bf16.mxu0 0
      %3811 = vmatmul.mubr.bf16.gmra.mrb[0].mxu0 %v3588
      %v3812 = vpop.f32.mrb[0].mxu0
      %v3813 = vadd.f32 0.0, %v3812
      %v3814 = vpop.f32.mrb[0].mxu0
      %v3815 = vpop.f32.mrb[0].mxu0
      %v3816 = vadd.f32 0.0, %v3815
      %v3817 = vpop.f32.mrb[0].mxu0
      %3818 = vmatprep.mubr.bf16.mxu0 0
      %3819 = vmatmul.mubr.bf16.gmra.mrb[0].mxu0 %v3589
      %v3820 = vpop.f32.mrb[0].mxu0
      %v3821 = vadd.f32 0.0, %v3820
      %v3822 = vpop.f32.mrb[0].mxu0
      %v3823 = vpop.f32.mrb[0].mxu0
      %v3824 = vadd.f32 0.0, %v3823
      %v3825 = vpop.f32.mrb[0].mxu0
      %3826 = vmatprep.mubr.bf16.mxu0 0
      %3827 = vmatmul.mubr.bf16.gmra.mrb[0].mxu0 %v3590
      %v3828 = vpop.f32.mrb[0].mxu0
      %v3829 = vadd.f32 0.0, %v3828
      %v3830 = vpop.f32.mrb[0].mxu0
      %v3831 = vpop.f32.mrb[0].mxu0
      %v3832 = vadd.f32 0.0, %v3831
      %v3833 = vpop.f32.mrb[0].mxu0
      %3834 = vmatprep.mubr.bf16.mxu0 0
      %3835 = vmatmul.mubr.bf16.gmra.mrb[0].mxu0 %v3591
      %v3836 = vpop.f32.mrb[0].mxu0
      %v3837 = vadd.f32 0.0, %v3836
      %v3838 = vpop.f32.mrb[0].mxu0
      %v3839 = vpop.f32.mrb[0].mxu0
      %v3840 = vadd.f32 0.0, %v3839
      %v3841 = vpop.f32.mrb[0].mxu0
      %3842 = vmatprep.mubr.bf16.mxu0 0
      %3843 = vmatmul.mubr.bf16.gmra.mrb[0].mxu0 %v3592
      %v3844 = vpop.f32.mrb[0].mxu0
      %v3845 = vadd.f32 0.0, %v3844
      %v3846 = vpop.f32.mrb[0].mxu0
      %v3847 = vpop.f32.mrb[0].mxu0
      %v3848 = vadd.f32 0.0, %v3847
      %v3849 = vpop.f32.mrb[0].mxu0
      %3850 = vdwg.mxu0
      %v3851 = vadd.f32 %v3593, %v3725
      %v3852 = vadd.f32 %v3594, %v3728
      %v3853 = vadd.f32 %v3595, %v3733
      %v3854 = vadd.f32 %v3596, %v3736
      %v3855 = vadd.f32 %v3597, %v3741
      %v3856 = vadd.f32 %v3598, %v3744
      %v3857 = vadd.f32 %v3599, %v3749
      %v3858 = vadd.f32 %v3600, %v3752
      %v3859 = vadd.f32 %v3601, %v3757
      %v3860 = vadd.f32 %v3602, %v3760
      %v3861 = vadd.f32 %v3603, %v3765
      %v3862 = vadd.f32 %v3604, %v3768
      %v3863 = vadd.f32 %v3605, %v3773
      %v3864 = vadd.f32 %v3606, %v3776
      %v3865 = vadd.f32 %v3607, %v3781
      %v3866 = vadd.f32 %v3608, %v3784
      %v3867 = vadd.f32 %v3609, %v3789
      %v3868 = vadd.f32 %v3610, %v3792
      %v3869 = vadd.f32 %v3611, %v3797
      %v3870 = vadd.f32 %v3612, %v3800
      %v3871 = vadd.f32 %v3613, %v3805
      %v3872 = vadd.f32 %v3614, %v3808
      %v3873 = vadd.f32 %v3615, %v3813
      %v3874 = vadd.f32 %v3616, %v3816
      %v3875 = vadd.f32 %v3617, %v3821
      %v3876 = vadd.f32 %v3618, %v3824
      %v3877 = vadd.f32 %v3619, %v3829
      %v3878 = vadd.f32 %v3620, %v3832
      %v3879 = vadd.f32 %v3621, %v3837
      %v3880 = vadd.f32 %v3622, %v3840
      %v3881 = vadd.f32 %v3623, %v3845
      %v3882 = vadd.f32 %v3624, %v3848
      %3883 = vst [vmem:[#allocation4] sm:$0xff] %v3851
      %3884 = vst [vmem:[#allocation4 + $0x8] sm:$0xff] %v3852
      %3885 = vst [vmem:[#allocation4 + $0x10] sm:$0xff] %v3853
      %3886 = vst [vmem:[#allocation4 + $0x18] sm:$0xff] %v3854
      %3887 = vst [vmem:[#allocation4 + $0x20] sm:$0xff] %v3855
      %3888 = vst [vmem:[#allocation4 + $0x28] sm:$0xff] %v3856
      %3889 = vst [vmem:[#allocation4 + $0x30] sm:$0xff] %v3857
      %3890 = vst [vmem:[#allocation4 + $0x38] sm:$0xff] %v3858
      %3891 = vst [vmem:[#allocation4 + $0x40] sm:$0xff] %v3859
      %3892 = vst [vmem:[#allocation4 + $0x48] sm:$0xff] %v3860
      %3893 = vst [vmem:[#allocation4 + $0x50] sm:$0xff] %v3861
      %3894 = vst [vmem:[#allocation4 + $0x58] sm:$0xff] %v3862
      %3895 = vst [vmem:[#allocation4 + $0x60] sm:$0xff] %v3863
      %3896 = vst [vmem:[#allocation4 + $0x68] sm:$0xff] %v3864
      %3897 = vst [vmem:[#allocation4 + $0x70] sm:$0xff] %v3865
      %3898 = vst [vmem:[#allocation4 + $0x78] sm:$0xff] %v3866
      %3899 = vst [vmem:[#allocation4 + $0x80] sm:$0xff] %v3867
      %3900 = vst [vmem:[#allocation4 + $0x88] sm:$0xff] %v3868
      %3901 = vst [vmem:[#allocation4 + $0x90] sm:$0xff] %v3869
      %3902 = vst [vmem:[#allocation4 + $0x98] sm:$0xff] %v3870
      %3903 = vst [vmem:[#allocation4 + $0xa0] sm:$0xff] %v3871
      %3904 = vst [vmem:[#allocation4 + $0xa8] sm:$0xff] %v3872
      %3905 = vst [vmem:[#allocation4 + $0xb0] sm:$0xff] %v3873
      %3906 = vst [vmem:[#allocation4 + $0xb8] sm:$0xff] %v3874
      %3907 = vst [vmem:[#allocation4 + $0xc0] sm:$0xff] %v3875
      %3908 = vst [vmem:[#allocation4 + $0xc8] sm:$0xff] %v3876
      %3909 = vst [vmem:[#allocation4 + $0xd0] sm:$0xff] %v3877
      %3910 = vst [vmem:[#allocation4 + $0xd8] sm:$0xff] %v3878
      %3911 = vst [vmem:[#allocation4 + $0xe0] sm:$0xff] %v3879
      %3912 = vst [vmem:[#allocation4 + $0xe8] sm:$0xff] %v3880
      %3913 = vst [vmem:[#allocation4 + $0xf0] sm:$0xff] %v3881
      %3914 = vst [vmem:[#allocation4 + $0xf8] sm:$0xff] %v3882
      %v3915 = vld [vmem:[#allocation4] sm:$0xff]
      %v3916 = vld [vmem:[#allocation4 + $0x8] sm:$0xff]
      %v3917 = vld [vmem:[#allocation4 + $0x10] sm:$0xff]
      %v3918 = vld [vmem:[#allocation4 + $0x18] sm:$0xff]
      %v3919 = vld [vmem:[#allocation4 + $0x20] sm:$0xff]
      %v3920 = vld [vmem:[#allocation4 + $0x28] sm:$0xff]
      %v3921 = vld [vmem:[#allocation4 + $0x30] sm:$0xff]
      %v3922 = vld [vmem:[#allocation4 + $0x38] sm:$0xff]
      %v3923 = vld [vmem:[#allocation4 + $0x40] sm:$0xff]
      %v3924 = vld [vmem:[#allocation4 + $0x48] sm:$0xff]
      %v3925 = vld [vmem:[#allocation4 + $0x50] sm:$0xff]
      %v3926 = vld [vmem:[#allocation4 + $0x58] sm:$0xff]
      %v3927 = vld [vmem:[#allocation4 + $0x60] sm:$0xff]
      %v3928 = vld [vmem:[#allocation4 + $0x68] sm:$0xff]
      %v3929 = vld [vmem:[#allocation4 + $0x70] sm:$0xff]
      %v3930 = vld [vmem:[#allocation4 + $0x78] sm:$0xff]
      %v3931 = vld [vmem:[#allocation4 + $0x80] sm:$0xff]
      %v3932 = vld [vmem:[#allocation4 + $0x88] sm:$0xff]
      %v3933 = vld [vmem:[#allocation4 + $0x90] sm:$0xff]
      %v3934 = vld [vmem:[#allocation4 + $0x98] sm:$0xff]
      %v3935 = vld [vmem:[#allocation4 + $0xa0] sm:$0xff]
      %v3936 = vld [vmem:[#allocation4 + $0xa8] sm:$0xff]
      %v3937 = vld [vmem:[#allocation4 + $0xb0] sm:$0xff]
      %v3938 = vld [vmem:[#allocation4 + $0xb8] sm:$0xff]
      %v3939 = vld [vmem:[#allocation4 + $0xc0] sm:$0xff]
      %v3940 = vld [vmem:[#allocation4 + $0xc8] sm:$0xff]
      %v3941 = vld [vmem:[#allocation4 + $0xd0] sm:$0xff]
      %v3942 = vld [vmem:[#allocation4 + $0xd8] sm:$0xff]
      %v3943 = vld [vmem:[#allocation4 + $0xe0] sm:$0xff]
      %v3944 = vld [vmem:[#allocation4 + $0xe8] sm:$0xff]
      %v3945 = vld [vmem:[#allocation4 + $0xf0] sm:$0xff]
      %v3946 = vld [vmem:[#allocation4 + $0xf8] sm:$0xff]
      %v3947 = vpack.c.bf16 %v3916, %v3915
      %v3948 = vpack.c.bf16 %v3918, %v3917
      %v3949 = vpack.c.bf16 %v3920, %v3919
      %v3950 = vpack.c.bf16 %v3922, %v3921
      %v3951 = vpack.c.bf16 %v3924, %v3923
      %v3952 = vpack.c.bf16 %v3926, %v3925
      %v3953 = vpack.c.bf16 %v3928, %v3927
      %v3954 = vpack.c.bf16 %v3930, %v3929
      %v3955 = vpack.c.bf16 %v3932, %v3931
      %v3956 = vpack.c.bf16 %v3934, %v3933
      %v3957 = vpack.c.bf16 %v3936, %v3935
      %v3958 = vpack.c.bf16 %v3938, %v3937
      %v3959 = vpack.c.bf16 %v3940, %v3939
      %v3960 = vpack.c.bf16 %v3942, %v3941
      %v3961 = vpack.c.bf16 %v3944, %v3943
      %v3962 = vpack.c.bf16 %v3946, %v3945
      %v3979 = vunpack.c.l.b16 %v3947
      %v3980 = vunpack.c.h.b16 %v3947
      %v3981 = vunpack.c.l.b16 %v3948
      %v3982 = vunpack.c.h.b16 %v3948
      %v3983 = vunpack.c.l.b16 %v3949
      %v3984 = vunpack.c.h.b16 %v3949
      %v3985 = vunpack.c.l.b16 %v3950
      %v3986 = vunpack.c.h.b16 %v3950
      %v3987 = vunpack.c.l.b16 %v3951
      %v3988 = vunpack.c.h.b16 %v3951
      %v3989 = vunpack.c.l.b16 %v3952
      %v3990 = vunpack.c.h.b16 %v3952
      %v3991 = vunpack.c.l.b16 %v3953
      %v3992 = vunpack.c.h.b16 %v3953
      %v3993 = vunpack.c.l.b16 %v3954
      %v3994 = vunpack.c.h.b16 %v3954
      %v3995 = vunpack.c.l.b16 %v3955
      %v3996 = vunpack.c.h.b16 %v3955
      %v3997 = vunpack.c.l.b16 %v3956
      %v3998 = vunpack.c.h.b16 %v3956
      %v3999 = vunpack.c.l.b16 %v3957
      %v4000 = vunpack.c.h.b16 %v3957
      %v4001 = vunpack.c.l.b16 %v3958
      %v4002 = vunpack.c.h.b16 %v3958
      %v4003 = vunpack.c.l.b16 %v3959
      %v4004 = vunpack.c.h.b16 %v3959
      %v4005 = vunpack.c.l.b16 %v3960
      %v4006 = vunpack.c.h.b16 %v3960
      %v4007 = vunpack.c.l.b16 %v3961
      %v4008 = vunpack.c.h.b16 %v3961
      %v4009 = vunpack.c.l.b16 %v3962
      %v4010 = vunpack.c.h.b16 %v3962
      %v4011 = vpack.c.b16 %v3979, %v3979
      %v4012 = vpack.c.b16 %v3980, %v3980
      %v4013 = vpack.c.b16 %v3981, %v3981
      %v4014 = vpack.c.b16 %v3982, %v3982
      %v4015 = vpack.c.b16 %v3983, %v3983
      %v4016 = vpack.c.b16 %v3984, %v3984
      %v4017 = vpack.c.b16 %v3985, %v3985
      %v4018 = vpack.c.b16 %v3986, %v3986
      %v4019 = vpack.c.b16 %v3987, %v3987
      %v4020 = vpack.c.b16 %v3988, %v3988
      %v4021 = vpack.c.b16 %v3989, %v3989
      %v4022 = vpack.c.b16 %v3990, %v3990
      %v4023 = vpack.c.b16 %v3991, %v3991
      %v4024 = vpack.c.b16 %v3992, %v3992
      %v4025 = vpack.c.b16 %v3993, %v3993
      %v4026 = vpack.c.b16 %v3994, %v3994
      %v4027 = vpack.c.b16 %v3995, %v3995
      %v4028 = vpack.c.b16 %v3996, %v3996
      %v4029 = vpack.c.b16 %v3997, %v3997
      %v4030 = vpack.c.b16 %v3998, %v3998
      %v4031 = vpack.c.b16 %v3999, %v3999
      %v4032 = vpack.c.b16 %v4000, %v4000
      %v4033 = vpack.c.b16 %v4001, %v4001
      %v4034 = vpack.c.b16 %v4002, %v4002
      %v4035 = vpack.c.b16 %v4003, %v4003
      %v4036 = vpack.c.b16 %v4004, %v4004
      %v4037 = vpack.c.b16 %v4005, %v4005
      %v4038 = vpack.c.b16 %v4006, %v4006
      %v4039 = vpack.c.b16 %v4007, %v4007
      %v4040 = vpack.c.b16 %v4008, %v4008
      %v4041 = vpack.c.b16 %v4009, %v4009
      %v4042 = vpack.c.b16 %v4010, %v4010
      %4075 = vst [vmem:[%s316] sm:$0xf] %v4011
      %4076 = vst [vmem:[%s316 + $0x4] sm:$0xf] %v4012
      %4077 = vst [vmem:[%s316 + $0x8] sm:$0xf] %v4013
      %4078 = vst [vmem:[%s316 + $0xc] sm:$0xf] %v4014
      %4079 = vst [vmem:[%s316 + $0x10] sm:$0xf] %v4015
      %4080 = vst [vmem:[%s316 + $0x14] sm:$0xf] %v4016
      %4081 = vst [vmem:[%s316 + $0x18] sm:$0xf] %v4017
      %4082 = vst [vmem:[%s316 + $0x1c] sm:$0xf] %v4018
      %4083 = vst [vmem:[%s316 + $0x20] sm:$0xf] %v4019
      %4084 = vst [vmem:[%s316 + $0x24] sm:$0xf] %v4020
      %4085 = vst [vmem:[%s316 + $0x28] sm:$0xf] %v4021
      %4086 = vst [vmem:[%s316 + $0x2c] sm:$0xf] %v4022
      %4087 = vst [vmem:[%s316 + $0x30] sm:$0xf] %v4023
      %4088 = vst [vmem:[%s316 + $0x34] sm:$0xf] %v4024
      %4089 = vst [vmem:[%s316 + $0x38] sm:$0xf] %v4025
      %4090 = vst [vmem:[%s316 + $0x3c] sm:$0xf] %v4026
      %4091 = vst [vmem:[%s316 + $0x40] sm:$0xf] %v4027
      %4092 = vst [vmem:[%s316 + $0x44] sm:$0xf] %v4028
      %4093 = vst [vmem:[%s316 + $0x48] sm:$0xf] %v4029
      %4094 = vst [vmem:[%s316 + $0x4c] sm:$0xf] %v4030
      %4095 = vst [vmem:[%s316 + $0x50] sm:$0xf] %v4031
      %4096 = vst [vmem:[%s316 + $0x54] sm:$0xf] %v4032
      %4097 = vst [vmem:[%s316 + $0x58] sm:$0xf] %v4033
      %4098 = vst [vmem:[%s316 + $0x5c] sm:$0xf] %v4034
      %4099 = vst [vmem:[%s316 + $0x60] sm:$0xf] %v4035
      %4100 = vst [vmem:[%s316 + $0x64] sm:$0xf] %v4036
      %4101 = vst [vmem:[%s316 + $0x68] sm:$0xf] %v4037
      %4102 = vst [vmem:[%s316 + $0x6c] sm:$0xf] %v4038
      %4103 = vst [vmem:[%s316 + $0x70] sm:$0xf] %v4039
      %4104 = vst [vmem:[%s316 + $0x74] sm:$0xf] %v4040
      %4105 = vst [vmem:[%s316 + $0x78] sm:$0xf] %v4041
      %4106 = vst [vmem:[%s316 + $0x7c] sm:$0xf] %v4042
      %v4107 = vadd.f32 %v3915, %v3916
      %v4108 = vadd.f32 %v4107, %v3917
      %v4109 = vadd.f32 %v4108, %v3918
      %v4110 = vadd.f32 %v4109, %v3919
      %v4111 = vadd.f32 %v4110, %v3920
      %v4112 = vadd.f32 %v4111, %v3921
      %v4113 = vadd.f32 %v4112, %v3922
      %v4114 = vadd.f32 %v4113, %v3923
      %v4115 = vadd.f32 %v4114, %v3924
      %v4116 = vadd.f32 %v4115, %v3925
      %v4117 = vadd.f32 %v4116, %v3926
      %v4118 = vadd.f32 %v4117, %v3927
      %v4119 = vadd.f32 %v4118, %v3928
      %v4120 = vadd.f32 %v4119, %v3929
      %v4121 = vadd.f32 %v4120, %v3930
      %v4122 = vadd.f32 %v4121, %v3931
      %v4123 = vadd.f32 %v4122, %v3932
      %v4124 = vadd.f32 %v4123, %v3933
      %v4125 = vadd.f32 %v4124, %v3934
      %v4126 = vadd.f32 %v4125, %v3935
      %v4127 = vadd.f32 %v4126, %v3936
      %v4128 = vadd.f32 %v4127, %v3937
      %v4129 = vadd.f32 %v4128, %v3938
      %v4130 = vadd.f32 %v4129, %v3939
      %v4131 = vadd.f32 %v4130, %v3940
      %v4132 = vadd.f32 %v4131, %v3941
      %v4133 = vadd.f32 %v4132, %v3942
      %v4134 = vadd.f32 %v4133, %v3943
      %v4135 = vadd.f32 %v4134, %v3944
      %v4136 = vadd.f32 %v4135, %v3945
      %v4137 = vadd.f32 %v4136, %v3946
      %v4138 = vrot.slane %v4137, 4
      %v4139 = vadd.f32 %v4137, %v4138
      %v4140 = vrot.slane %v4139, 2
      %v4141 = vadd.f32 %v4139, %v4140
      %v4142 = vrot.slane %v4141, 1
      %v4143 = vadd.f32 %v4141, %v4142
      %4144 = vst [vmem:[%s319] sm:$0x1] %v4143
      %v4145 = vmul.f32 %v3915, %v3915
      %v4146 = vmul.f32 %v3916, %v3916
      %v4147 = vmul.f32 %v3917, %v3917
      %v4148 = vmul.f32 %v3918, %v3918
      %v4149 = vmul.f32 %v3919, %v3919
      %v4150 = vmul.f32 %v3920, %v3920
      %v4151 = vmul.f32 %v3921, %v3921
      %v4152 = vmul.f32 %v3922, %v3922
      %v4153 = vmul.f32 %v3923, %v3923
      %v4154 = vmul.f32 %v3924, %v3924
      %v4155 = vmul.f32 %v3925, %v3925
      %v4156 = vmul.f32 %v3926, %v3926
      %v4157 = vmul.f32 %v3927, %v3927
      %v4158 = vmul.f32 %v3928, %v3928
      %v4159 = vmul.f32 %v3929, %v3929
      %v4160 = vmul.f32 %v3930, %v3930
      %v4161 = vmul.f32 %v3931, %v3931
      %v4162 = vmul.f32 %v3932, %v3932
      %v4163 = vmul.f32 %v3933, %v3933
      %v4164 = vmul.f32 %v3934, %v3934
      %v4165 = vmul.f32 %v3935, %v3935
      %v4166 = vmul.f32 %v3936, %v3936
      %v4167 = vmul.f32 %v3937, %v3937
      %v4168 = vmul.f32 %v3938, %v3938
      %v4169 = vmul.f32 %v3939, %v3939
      %v4170 = vmul.f32 %v3940, %v3940
      %v4171 = vmul.f32 %v3941, %v3941
      %v4172 = vmul.f32 %v3942, %v3942
      %v4173 = vmul.f32 %v3943, %v3943
      %v4174 = vmul.f32 %v3944, %v3944
      %v4175 = vmul.f32 %v3945, %v3945
      %v4176 = vmul.f32 %v3946, %v3946
      %v4177 = vadd.f32 %v4145, %v4146
      %v4178 = vadd.f32 %v4177, %v4147
      %v4179 = vadd.f32 %v4178, %v4148
      %v4180 = vadd.f32 %v4179, %v4149
      %v4181 = vadd.f32 %v4180, %v4150
      %v4182 = vadd.f32 %v4181, %v4151
      %v4183 = vadd.f32 %v4182, %v4152
      %v4184 = vadd.f32 %v4183, %v4153
      %v4185 = vadd.f32 %v4184, %v4154
      %v4186 = vadd.f32 %v4185, %v4155
      %v4187 = vadd.f32 %v4186, %v4156
      %v4188 = vadd.f32 %v4187, %v4157
      %v4189 = vadd.f32 %v4188, %v4158
      %v4190 = vadd.f32 %v4189, %v4159
      %v4191 = vadd.f32 %v4190, %v4160
      %v4192 = vadd.f32 %v4191, %v4161
      %v4193 = vadd.f32 %v4192, %v4162
      %v4194 = vadd.f32 %v4193, %v4163
      %v4195 = vadd.f32 %v4194, %v4164
      %v4196 = vadd.f32 %v4195, %v4165
      %v4197 = vadd.f32 %v4196, %v4166
      %v4198 = vadd.f32 %v4197, %v4167
      %v4199 = vadd.f32 %v4198, %v4168
      %v4200 = vadd.f32 %v4199, %v4169
      %v4201 = vadd.f32 %v4200, %v4170
      %v4202 = vadd.f32 %v4201, %v4171
      %v4203 = vadd.f32 %v4202, %v4172
      %v4204 = vadd.f32 %v4203, %v4173
      %v4205 = vadd.f32 %v4204, %v4174
      %v4206 = vadd.f32 %v4205, %v4175
      %v4207 = vadd.f32 %v4206, %v4176
      %v4208 = vrot.slane %v4207, 4
      %v4209 = vadd.f32 %v4207, %v4208
      %v4210 = vrot.slane %v4209, 2
      %v4211 = vadd.f32 %v4209, %v4210
      %v4212 = vrot.slane %v4211, 1
      %v4213 = vadd.f32 %v4211, %v4212
      %4214 = vst [vmem:[%s322] sm:$0x1] %v4213
      %p4215 = scmp.lt.s32.totalorder %s20, 1
      %s4216 = scalar_select %p4215, %s20, 1
      %s4217 = smul.addr %s4216, 32
      %s4218 = smul.addr %s4217, 4
      %s4219 = scalar_lea.vmem %s6, %s4218
      %p4220 = scmp.lt.s32.totalorder %s20, 1
      %s4221 = scalar_select %p4220, %s20, 1
      %s4222 = scalar_lea.vmem %s7, %s4221
      %p4223 = scmp.lt.s32.totalorder %s20, 1
      %s4224 = scalar_select %p4223, %s20, 1
      %s4225 = scalar_lea.vmem %s8, %s4224
      // Predicated region
      $region45: #{bottleneck_forward.5} parent=43 // pred_check
        %p4226 = pneg %p169
      $region46: #{bottleneck_forward.5} parent=43 // pred_check_branch
        %4228 = sbr.rel (%p4226) target = $region48
      $region47: #{bottleneck_forward.5} parent=43 // pred_region
        _
      $region48: #{bottleneck_forward.5} parent=43 // pred_fallthru
        _
      // Predicated region
      $region49: #{bottleneck_forward.5} parent=43 // pred_check
        %p4229 = pneg %p195
      $region50: #{bottleneck_forward.5} parent=43 // pred_check_branch
        %4231 = sbr.rel (%p4229) target = $region52
      $region51: #{bottleneck_forward.5} parent=43 // pred_region
        _
      $region52: #{bottleneck_forward.5} parent=43 // pred_fallthru
        _
      // Predicated region
      $region53: #{bottleneck_forward.5} parent=43 // pred_check
        %p4232 = pneg %p221
      $region54: #{bottleneck_forward.5} parent=43 // pred_check_branch
        %4234 = sbr.rel (%p4232) target = $region56
      $region55: #{bottleneck_forward.5} parent=43 // pred_region
        _
      $region56: #{bottleneck_forward.5} parent=43 // pred_fallthru
        _
    $region44: #{bottleneck_forward.5} parent=5 // pred_fallthru
      _
    %p4235 = scmp.le.s32.totalorder 2, %s15
    // Predicated region
    $region57: #{bottleneck_forward.5} parent=5 // pred_check
      %p4236 = pneg %p4235
    $region58: #{bottleneck_forward.5} parent=5 // pred_check_branch
      %4238 = sbr.rel (%p4236) target = $region60
    $region59: #{bottleneck_forward.5} parent=5 // pred_region
      %s4239 = ssub.s32 %s15, 2
      // Predicated region
      $region61: #{bottleneck_forward.5} parent=59 // pred_check
        %p4240 = pneg %p175
      $region62: #{bottleneck_forward.5} parent=59 // pred_check_branch
        %4242 = sbr.rel (%p4240) target = $region64
      $region63: #{bottleneck_forward.5} parent=59 // pred_region
        %p4243 = scmp.lt.s32.totalorder %s21, 1
        %s4244 = scalar_select %p4243, %s21, 1
        %s4245 = smul.addr %s4244, 32
        %s4246 = smul.addr %s4245, 4
        %s4247 = scalar_lea.vmem %s6, %s4246
      $region64: #{bottleneck_forward.5} parent=59 // pred_fallthru
        _
      // Predicated region
      $region65: #{bottleneck_forward.5} parent=59 // pred_check
        %p4248 = pneg %p201
      $region66: #{bottleneck_forward.5} parent=59 // pred_check_branch
        %4250 = sbr.rel (%p4248) target = $region68
      $region67: #{bottleneck_forward.5} parent=59 // pred_region
        %p4251 = scmp.lt.s32.totalorder %s21, 1
        %s4252 = scalar_select %p4251, %s21, 1
        %s4253 = scalar_lea.vmem %s7, %s4252
      $region68: #{bottleneck_forward.5} parent=59 // pred_fallthru
        _
      // Predicated region
      $region69: #{bottleneck_forward.5} parent=59 // pred_check
        %p4254 = pneg %p227
      $region70: #{bottleneck_forward.5} parent=59 // pred_check_branch
        %4256 = sbr.rel (%p4254) target = $region72
      $region71: #{bottleneck_forward.5} parent=59 // pred_region
        %p4257 = scmp.lt.s32.totalorder %s21, 1
        %s4258 = scalar_select %p4257, %s21, 1
        %s4259 = scalar_lea.vmem %s8, %s4258
      $region72: #{bottleneck_forward.5} parent=59 // pred_fallthru
        _
    $region60: #{bottleneck_forward.5} parent=5 // pred_fallthru
      _
  $region6: #{bottleneck_forward.5} parent=0 // loop_footer
    %s19 = sadd.s32 1, %s15
  $region7: #{bottleneck_forward.5} parent=0 // loop_footer_branch
    %14 = sbr.rel target = $region3
  $region8: #{bottleneck_forward.5} parent=0 // loop_exit
    _

</llo_original>
